<compile_context>
chip_gen: v5e
topology: v5e:2x2
jax: 0.10.0
libtpu: 0.0.40
codegen_flags: <defaults>
</compile_context>

<pallas_src>
import jax
import jax.numpy as jnp
from jax.experimental import pallas as pl
from jax.experimental.pallas import tpu as pltpu


# ------------------------------ parameters ----------------------------------

def init_params(key, in_channels, out_channels, kc, kt):
    """Random PyTorch-layout parameters + one-time prepack into the kernel's layouts."""
    c2 = in_channels // 2
    cin = in_channels
    ks = jax.random.split(key, 8)
    # PyTorch layouts: ConvTranspose2d weight (Cin, c2, kt, kt) + bias; Conv2d (Cout, Cin, k, k), bias=False.
    wt_pt = 0.1 * jax.random.normal(ks[0], (cin, c2, kt, kt), jnp.float32)
    bt = 0.1 * jax.random.normal(ks[1], (c2,), jnp.float32)
    w1_pt = 0.1 * jax.random.normal(ks[2], (out_channels, cin, kc, kc), jnp.float32)
    w2_pt = 0.1 * jax.random.normal(ks[3], (out_channels, out_channels, kc, kc), jnp.float32)
    g1 = 1.0 + 0.1 * jax.random.normal(ks[4], (out_channels,), jnp.float32)
    b1 = 0.1 * jax.random.normal(ks[5], (out_channels,), jnp.float32)
    g2 = 1.0 + 0.1 * jax.random.normal(ks[6], (out_channels,), jnp.float32)
    b2 = 0.1 * jax.random.normal(ks[7], (out_channels,), jnp.float32)

    # ---- one-time prepack (hoisted out of the forward pass) ----
    # ConvTranspose2d(stride=2) == VALID conv over the stride-2-dilated, padded input with
    # spatially flipped / in-out swapped weights.
    wt_taps = jnp.transpose(wt_pt[:, :, ::-1, ::-1], (2, 3, 0, 1))        # (kt, kt, Cin, c2) HWIO
    w1_hwio = jnp.transpose(w1_pt, (2, 3, 1, 0))                          # (kc, kc, Cin, Cout)
    w2_hwio = jnp.transpose(w2_pt, (2, 3, 1, 0))                          # (kc, kc, Cout, Cout)
    return dict(
        # HWIO forms (used by the XLA reference)
        wt=wt_taps, w1=w1_hwio, w2=w2_hwio,
        # folded-K forms (used by the fused kernel): ONE matmul per conv.
        # K ordering is (tap_row, tap_col, in_channel); for conv1 the in_channel order is
        # [x2's c2 channels, up's c2 channels], matching cat([x2, up]).
        wt_p=wt_taps.reshape(kt * kt * cin, c2),
        w1_p=w1_hwio.reshape(kc * kc * cin, out_channels),
        w2_p=w2_hwio.reshape(kc * kc * out_channels, out_channels),
        bt=bt.reshape(1, c2),
        g1=g1.reshape(1, out_channels), b1=b1.reshape(1, out_channels),
        g2=g2.reshape(1, out_channels), b2=b2.reshape(1, out_channels))


# ------------------------------ fused forward --------------------------------

def up_step(params, x1, x2):
    """Fused UpStep forward.

    x1: (N, Cin, h, w) NCHW (PyTorch layout), x2: (N, Cin//2, 2h, 2w) NCHW.
    Returns (N, Cout, 2h, 2w) NCHW.
    """
    N, cin, h, w = x1.shape
    c2 = cin // 2
    kt = params["wt"].shape[0]
    kc = params["w1"].shape[0]
    cout = params["w1"].shape[-1]
    H2, W2 = 2 * h, 2 * w
    Mb = H2 * W2                       # rows per batch tile
    M2 = N * Mb                        # total rows (BatchNorm denominator)
    pc = (kc - 1) // 2                 # Conv2d "same" padding
    p_t = (kt - 2) // 2                # ConvTranspose2d padding
    pad_t = kt - 1 - p_t               # equivalent forward-conv padding
    Hp, Wp = H2 + 2 * pc, W2 + 2 * pc              # padded intermediate tile size
    Hd, Wd = 2 * h - 1 + kt, 2 * w - 1 + kt        # dilated+padded x1 tile size
    eps = 1e-5
    inv_cnt = 1.0 / float(M2)

    # ---- tiny host-side layout prep: NCHW -> NHWC, stride-2 dilation + padding of x1 ----
    # TODO(synk): accept NHWC directly and do the x1 dilation in-kernel (strided ds store)
    # so no padded copy is materialized in HBM; x2 padding already happens inside the kernel.
    x1_nhwc = jnp.transpose(x1, (0, 2, 3, 1))
    x2_nhwc = jnp.transpose(x2, (0, 2, 3, 1))
    x1_dil = jax.lax.pad(x1_nhwc, jnp.float32(0),
                         ((0, 0, 0), (0, 0, 1), (0, 0, 1), (0, 0, 0)))
    x1_dp = jnp.pad(x1_dil, ((0, 0), (pad_t, pad_t), (pad_t, pad_t), (0, 0)))  # (N, Hd, Wd, Cin)

    def kernel(x1_ref, x2_ref, wtp_ref, bt_ref, w1p_ref, g1_ref, b1_ref,
               w2p_ref, g2_ref, b2_ref, o_ref,
               x2p_ref, upp_ref, y1p_ref, z1_ref, z2_ref,
               s1_ref, q1_ref, s2_ref, q2_ref):
        ph = pl.program_id(0)   # 0: up+conv1(+stats1)  1: BN1+ReLU+conv2(+stats2)  2: BN2+ReLU+store
        n = pl.program_id(1)    # batch tile (padding is per-image -> no cross-tile halos)

        @pl.when(jnp.logical_and(ph == 0, n == 0))
        def _init():
            # Zero once: pc-wide halos stay zero forever, interiors are overwritten each step.
            x2p_ref[...] = jnp.zeros_like(x2p_ref)
            upp_ref[...] = jnp.zeros_like(upp_ref)
            y1p_ref[...] = jnp.zeros_like(y1p_ref)
            s1_ref[...] = jnp.zeros_like(s1_ref)
            q1_ref[...] = jnp.zeros_like(q1_ref)
            s2_ref[...] = jnp.zeros_like(s2_ref)
            q2_ref[...] = jnp.zeros_like(q2_ref)

        def shifted(src_ref, di, dj, c):
            # (Mb, c) column block of the folded-K operand for tap (di, dj).
            return src_ref[di:di + H2, dj:dj + W2, :].reshape(Mb, c)

        @pl.when(ph == 0)
        def _phase0():
            # -- ConvTranspose2d as ONE folded-K matmul over the dilated/padded x1 tile --
            cols_t = [shifted(x1_ref, di, dj, cin)
                      for di in range(kt) for dj in range(kt)]
            up = jnp.dot(jnp.concatenate(cols_t, axis=1), wtp_ref[...],
                         preferred_element_type=jnp.float32) + bt_ref[...]

            # cat([x2, up]) never materializes: both halves land in padded VMEM tiles and the
            # packed conv1 weight consumes them per-tap in cat order.
            x2p_ref[pc:pc + H2, pc:pc + W2, :] = x2_ref[...]
            upp_ref[pc:pc + H2, pc:pc + W2, :] = up.reshape(H2, W2, c2)

            cols1 = []
            for di in range(kc):
                for dj in range(kc):
                    cols1.append(shifted(x2p_ref, di, dj, c2))
                    cols1.append(shifted(upp_ref, di, dj, c2))
            z1 = jnp.dot(jnp.concatenate(cols1, axis=1), w1p_ref[...],
                         preferred_element_type=jnp.float32)
            z1_ref[n] = z1
            s1_ref[...] += jnp.sum(z1, axis=0, keepdims=True)
            q1_ref[...] += jnp.sum(z1 * z1, axis=0, keepdims=True)

        @pl.when(ph == 1)
        def _phase1():
            # Finalize BN1 from global sums (all tiles done in phase 0), then conv2.
            m1 = s1_ref[...] * inv_cnt
            v1 = q1_ref[...] * inv_cnt - m1 * m1
            y1 = jnp.maximum((z1_ref[n] - m1) * jax.lax.rsqrt(v1 + eps)
                             * g1_ref[...] + b1_ref[...], 0.0)
            y1p_ref[pc:pc + H2, pc:pc + W2, :] = y1.reshape(H2, W2, cout)

            cols2 = [shifted(y1p_ref, di, dj, cout)
                     for di in range(kc) for dj in range(kc)]
            z2 = jnp.dot(jnp.concatenate(cols2, axis=1), w2p_ref[...],
                         preferred_element_type=jnp.float32)
            z2_ref[n] = z2
            s2_ref[...] += jnp.sum(z2, axis=0, keepdims=True)
            q2_ref[...] += jnp.sum(z2 * z2, axis=0, keepdims=True)

        @pl.when(ph == 2)
        def _phase2():
            m2 = s2_ref[...] * inv_cnt
            v2 = q2_ref[...] * inv_cnt - m2 * m2
            y2 = jnp.maximum((z2_ref[n] - m2) * jax.lax.rsqrt(v2 + eps)
                             * g2_ref[...] + b2_ref[...], 0.0)
            # Lane-dense store: (Cout, H2*W2) with 256 lanes -> unmasked vst.
            o_ref[...] = jnp.transpose(y2, (1, 0))

    wt_p, bt = params["wt_p"], params["bt"]
    w1_p, g1, b1 = params["w1_p"], params["g1"], params["b1"]
    w2_p, g2, b2 = params["w2_p"], params["g2"], params["b2"]

    in_specs = [
        pl.BlockSpec((None, Hd, Wd, cin), lambda p, n: (n, 0, 0, 0)),   # x1 dilated+padded tile
        pl.BlockSpec((None, H2, W2, c2), lambda p, n: (n, 0, 0, 0)),    # x2 tile (padded in-kernel)
        pl.BlockSpec(wt_p.shape, lambda p, n: (0, 0)),
        pl.BlockSpec(bt.shape, lambda p, n: (0, 0)),
        pl.BlockSpec(w1_p.shape, lambda p, n: (0, 0)),
        pl.BlockSpec(g1.shape, lambda p, n: (0, 0)),
        pl.BlockSpec(b1.shape, lambda p, n: (0, 0)),
        pl.BlockSpec(w2_p.shape, lambda p, n: (0, 0)),
        pl.BlockSpec(g2.shape, lambda p, n: (0, 0)),
        pl.BlockSpec(b2.shape, lambda p, n: (0, 0)),
    ]
    out_specs = pl.BlockSpec((None, cout, Mb), lambda p, n: (n, 0, 0))

    out = pl.pallas_call(
        kernel,
        out_shape=jax.ShapeDtypeStruct((N, cout, Mb), jnp.float32),
        grid=(3, N),
        in_specs=in_specs,
        out_specs=out_specs,
        scratch_shapes=[
            pltpu.VMEM((Hp, Wp, c2), jnp.float32),     # zero-padded x2 tile
            pltpu.VMEM((Hp, Wp, c2), jnp.float32),     # zero-padded "up" tile
            pltpu.VMEM((Hp, Wp, cout), jnp.float32),   # zero-padded y1 tile
            pltpu.VMEM((N, Mb, cout), jnp.float32),    # pre-BN conv1 output (all tiles)
            pltpu.VMEM((N, Mb, cout), jnp.float32),    # pre-BN conv2 output (all tiles)
            pltpu.VMEM((1, cout), jnp.float32),        # BN1 sum
            pltpu.VMEM((1, cout), jnp.float32),        # BN1 sum of squares
            pltpu.VMEM((1, cout), jnp.float32),        # BN2 sum
            pltpu.VMEM((1, cout), jnp.float32),        # BN2 sum of squares
        ],
        compiler_params=pltpu.CompilerParams(
            # Cross-tile BN statistics live in scratch -> phases and tiles must run in
            # order on one core.  TODO(synk): "parallel" tile axis + CMEM stats reduction
            # for v7x megacore once z1/z2 spill to HBM.
            dimension_semantics=("arbitrary", "arbitrary"),
            vmem_limit_bytes=32 * 1024 * 1024),
    )(x1_dp, x2_nhwc, wt_p, bt, w1_p, g1, b1, w2_p, g2, b2)

    # (N, Cout, H2*W2) -> NCHW, no transpose needed.
    return out.reshape(N, cout, H2, W2)


# ------------------------------ pure-JAX reference ---------------------------

def up_step_reference(params, x1, x2):
    """XLA-conv reference used to validate the fused Pallas kernel."""
    N, cin, h, w = x1.shape
    kt = params["wt"].shape[0]
    kc = params["w1"].shape[0]
    pc = (kc - 1) // 2
    p_t = (kt - 2) // 2
    pad_t = kt - 1 - p_t
    hp = jax.lax.Precision.HIGHEST

    x1_nhwc = jnp.transpose(x1, (0, 2, 3, 1))
    x2_nhwc = jnp.transpose(x2, (0, 2, 3, 1))
    x1_dil = jax.lax.pad(x1_nhwc, jnp.float32(0),
                         ((0, 0, 0), (0, 0, 1), (0, 0, 1), (0, 0, 0)))
    x1_dp = jnp.pad(x1_dil, ((0, 0), (pad_t, pad_t), (pad_t, pad_t), (0, 0)))

    def conv(x, w_hwio, padding):
        dn = jax.lax.conv_dimension_numbers(x.shape, w_hwio.shape, ("NHWC", "HWIO", "NHWC"))
        return jax.lax.conv_general_dilated(x, w_hwio, (1, 1), padding,
                                            dimension_numbers=dn, precision=hp)

    def bn_relu(y, g, b):
        m = jnp.mean(y, axis=(0, 1, 2), keepdims=True)
        v = jnp.mean((y - m) ** 2, axis=(0, 1, 2), keepdims=True)
        return jnp.maximum((y - m) * jax.lax.rsqrt(v + 1e-5) * g.reshape(1, 1, 1, -1)
                           + b.reshape(1, 1, 1, -1), 0.0)

    up = conv(x1_dp, params["wt"], "VALID") + params["bt"].reshape(1, 1, 1, -1)
    cat = jnp.concatenate([x2_nhwc, up], axis=-1)
    y1 = bn_relu(conv(cat, params["w1"], [(pc, pc), (pc, pc)]), params["g1"], params["b1"])
    y2 = bn_relu(conv(y1, params["w2"], [(pc, pc), (pc, pc)]), params["g2"], params["b2"])
    return jnp.transpose(y2, (0, 3, 1, 2))


# ---------------------------------- main -------------------------------------

if __name__ == "__main__":
    in_channels, out_channels = 8, 4
    conv_kernel_size, conv_transpose_kernel_size = 3, 2   # odd / even, as the module requires
    N, h = 2, 8

    key = jax.random.PRNGKey(0)
    k1, k2, kp = jax.random.split(key, 3)
    # NCHW inputs, matching the PyTorch module: x1 low-res full-channel, x2 skip at 2x resolution.
    x1 = jax.random.normal(k1, (N, in_channels, h, h), jnp.float32)
    x2 = jax.random.normal(k2, (N, in_channels // 2, 2 * h, 2 * h), jnp.float32)
    params = init_params(kp, in_channels, out_channels,
                         conv_kernel_size, conv_transpose_kernel_size)

    out = jax.jit(up_step)(params, x1, x2)
    jax.block_until_ready(out)
    assert out.shape == (N, out_channels, 2 * h, 2 * h)
    assert bool(jnp.all(jnp.isfinite(out)))

    ref = up_step_reference(params, x1, x2)
    max_err = float(jnp.max(jnp.abs(out - ref)))
    assert jnp.allclose(out, ref, atol=2e-3, rtol=2e-3), max_err
    print("KERNEL_OK")
</pallas_src>

<mosaic_0001>
module attributes {stable_mosaic.version = 11 : i64} {
  func.func @kernel(%arg0: i32, %arg1: i32, %arg2: memref<1x17x17x8xf32, #tpu.memory_space<vmem>>, %arg3: memref<1x16x16x4xf32, #tpu.memory_space<vmem>>, %arg4: memref<32x4xf32, #tpu.memory_space<vmem>>, %arg5: memref<1x4xf32, #tpu.memory_space<vmem>>, %arg6: memref<72x4xf32, #tpu.memory_space<vmem>>, %arg7: memref<1x4xf32, #tpu.memory_space<vmem>>, %arg8: memref<1x4xf32, #tpu.memory_space<vmem>>, %arg9: memref<36x4xf32, #tpu.memory_space<vmem>>, %arg10: memref<1x4xf32, #tpu.memory_space<vmem>>, %arg11: memref<1x4xf32, #tpu.memory_space<vmem>>, %arg12: memref<1x4x256xf32, #tpu.memory_space<vmem>>, %arg13: memref<18x18x4xf32, #tpu.memory_space<vmem>>, %arg14: memref<18x18x4xf32, #tpu.memory_space<vmem>>, %arg15: memref<18x18x4xf32, #tpu.memory_space<vmem>>, %arg16: memref<2x256x4xf32, #tpu.memory_space<vmem>>, %arg17: memref<2x256x4xf32, #tpu.memory_space<vmem>>, %arg18: memref<1x4xf32, #tpu.memory_space<vmem>>, %arg19: memref<1x4xf32, #tpu.memory_space<vmem>>, %arg20: memref<1x4xf32, #tpu.memory_space<vmem>>, %arg21: memref<1x4xf32, #tpu.memory_space<vmem>>) attributes {dimension_semantics = [#tpu.dimension_semantics<arbitrary>, #tpu.dimension_semantics<arbitrary>], iteration_bounds = array<i64: 3, 2>, scalar_prefetch = 0 : i64, scratch_operands = 9 : i64, tpu.core_type = #tpu.core_type<tc>, window_params = [{transform_indices = @transform_0, window_bounds = array<i64: 1, 17, 17, 8>}, {transform_indices = @transform_1, window_bounds = array<i64: 1, 16, 16, 4>}, {pipeline_mode = #tpu.pipeline_mode<synchronous>, transform_indices = @transform_2, window_bounds = array<i64: 32, 4>}, {pipeline_mode = #tpu.pipeline_mode<synchronous>, transform_indices = @transform_3, window_bounds = array<i64: 1, 4>}, {pipeline_mode = #tpu.pipeline_mode<synchronous>, transform_indices = @transform_4, window_bounds = array<i64: 72, 4>}, {pipeline_mode = #tpu.pipeline_mode<synchronous>, transform_indices = @transform_5, window_bounds = array<i64: 1, 4>}, {pipeline_mode = #tpu.pipeline_mode<synchronous>, transform_indices = @transform_6, window_bounds = array<i64: 1, 4>}, {pipeline_mode = #tpu.pipeline_mode<synchronous>, transform_indices = @transform_7, window_bounds = array<i64: 36, 4>}, {pipeline_mode = #tpu.pipeline_mode<synchronous>, transform_indices = @transform_8, window_bounds = array<i64: 1, 4>}, {pipeline_mode = #tpu.pipeline_mode<synchronous>, transform_indices = @transform_9, window_bounds = array<i64: 1, 4>}, {transform_indices = @transform_10, window_bounds = array<i64: 1, 4, 256>}]} {
    %c0_i32 = arith.constant 0 : i32
    %0 = arith.cmpi eq, %arg0, %c0_i32 : i32
    %c0_i32_0 = arith.constant 0 : i32
    %1 = arith.cmpi eq, %arg1, %c0_i32_0 : i32
    %2 = arith.andi %0, %1 : i1
    %3 = arith.extui %2 : i1 to i32
    %c0_i32_1 = arith.constant 0 : i32
    %4 = arith.cmpi ne, %3, %c0_i32_1 : i32
    scf.if %4 {
      %cst = arith.constant 0.000000e+00 : f32
      %14 = vector.broadcast %cst : f32 to vector<18x18x4xf32>
      %c0 = arith.constant 0 : index
      %c0_6 = arith.constant 0 : index
      %c0_7 = arith.constant 0 : index
      %15 = vector.load %arg13[%c0, %c0_6, %c0_7] : memref<18x18x4xf32, #tpu.memory_space<vmem>>, vector<18x18x4xf32>
      tpu.vector_store %arg13[%c0, %c0_6, %c0_7], %14 {strides = array<i32>} : memref<18x18x4xf32, #tpu.memory_space<vmem>>, vector<18x18x4xf32>,
      %cst_8 = arith.constant 0.000000e+00 : f32
      %16 = vector.broadcast %cst_8 : f32 to vector<18x18x4xf32>
      %c0_9 = arith.constant 0 : index
      %c0_10 = arith.constant 0 : index
      %c0_11 = arith.constant 0 : index
      %17 = vector.load %arg14[%c0_9, %c0_10, %c0_11] : memref<18x18x4xf32, #tpu.memory_space<vmem>>, vector<18x18x4xf32>
      tpu.vector_store %arg14[%c0_9, %c0_10, %c0_11], %16 {strides = array<i32>} : memref<18x18x4xf32, #tpu.memory_space<vmem>>, vector<18x18x4xf32>,
      %cst_12 = arith.constant 0.000000e+00 : f32
      %18 = vector.broadcast %cst_12 : f32 to vector<18x18x4xf32>
      %c0_13 = arith.constant 0 : index
      %c0_14 = arith.constant 0 : index
      %c0_15 = arith.constant 0 : index
      %19 = vector.load %arg15[%c0_13, %c0_14, %c0_15] : memref<18x18x4xf32, #tpu.memory_space<vmem>>, vector<18x18x4xf32>
      tpu.vector_store %arg15[%c0_13, %c0_14, %c0_15], %18 {strides = array<i32>} : memref<18x18x4xf32, #tpu.memory_space<vmem>>, vector<18x18x4xf32>,
      %cst_16 = arith.constant 0.000000e+00 : f32
      %20 = vector.broadcast %cst_16 : f32 to vector<1x4xf32>
      %c0_17 = arith.constant 0 : index
      %c0_18 = arith.constant 0 : index
      %21 = vector.load %arg18[%c0_17, %c0_18] : memref<1x4xf32, #tpu.memory_space<vmem>>, vector<1x4xf32>
      tpu.vector_store %arg18[%c0_17, %c0_18], %20 {strides = array<i32>} : memref<1x4xf32, #tpu.memory_space<vmem>>, vector<1x4xf32>,
      %cst_19 = arith.constant 0.000000e+00 : f32
      %22 = vector.broadcast %cst_19 : f32 to vector<1x4xf32>
      %c0_20 = arith.constant 0 : index
      %c0_21 = arith.constant 0 : index
      %23 = vector.load %arg19[%c0_20, %c0_21] : memref<1x4xf32, #tpu.memory_space<vmem>>, vector<1x4xf32>
      tpu.vector_store %arg19[%c0_20, %c0_21], %22 {strides = array<i32>} : memref<1x4xf32, #tpu.memory_space<vmem>>, vector<1x4xf32>,
      %cst_22 = arith.constant 0.000000e+00 : f32
      %24 = vector.broadcast %cst_22 : f32 to vector<1x4xf32>
      %c0_23 = arith.constant 0 : index
      %c0_24 = arith.constant 0 : index
      %25 = vector.load %arg20[%c0_23, %c0_24] : memref<1x4xf32, #tpu.memory_space<vmem>>, vector<1x4xf32>
      tpu.vector_store %arg20[%c0_23, %c0_24], %24 {strides = array<i32>} : memref<1x4xf32, #tpu.memory_space<vmem>>, vector<1x4xf32>,
      %cst_25 = arith.constant 0.000000e+00 : f32
      %26 = vector.broadcast %cst_25 : f32 to vector<1x4xf32>
      %c0_26 = arith.constant 0 : index
      %c0_27 = arith.constant 0 : index
      %27 = vector.load %arg21[%c0_26, %c0_27] : memref<1x4xf32, #tpu.memory_space<vmem>>, vector<1x4xf32>
      tpu.vector_store %arg21[%c0_26, %c0_27], %26 {strides = array<i32>} : memref<1x4xf32, #tpu.memory_space<vmem>>, vector<1x4xf32>,
    } else {
    }
    %c0_i32_2 = arith.constant 0 : i32
    %5 = arith.cmpi eq, %arg0, %c0_i32_2 : i32
    %6 = arith.extui %5 : i1 to i32
    %c0_i32_3 = arith.constant 0 : i32
    %7 = arith.cmpi ne, %6, %c0_i32_3 : i32
    scf.if %7 {
      %c0 = arith.constant 0 : index
      %c0_6 = arith.constant 0 : index
      %c0_7 = arith.constant 0 : index
      %c0_8 = arith.constant 0 : index
      %14 = vector.load %arg2[%c0, %c0_6, %c0_7, %c0_8] : memref<1x17x17x8xf32, #tpu.memory_space<vmem>>, vector<1x16x16x8xf32>
      %15 = vector.shape_cast %14 : vector<1x16x16x8xf32> to vector<16x16x8xf32>
      %16 = vector.shape_cast %15 : vector<16x16x8xf32> to vector<256x8xf32>
      %c0_9 = arith.constant 0 : index
      %c0_10 = arith.constant 0 : index
      %c1 = arith.constant 1 : index
      %c0_11 = arith.constant 0 : index
      %17 = vector.load %arg2[%c0_9, %c0_10, %c1, %c0_11] : memref<1x17x17x8xf32, #tpu.memory_space<vmem>>, vector<1x16x16x8xf32>
      %18 = vector.shape_cast %17 : vector<1x16x16x8xf32> to vector<16x16x8xf32>
      %19 = vector.shape_cast %18 : vector<16x16x8xf32> to vector<256x8xf32>
      %c0_12 = arith.constant 0 : index
      %c1_13 = arith.constant 1 : index
      %c0_14 = arith.constant 0 : index
      %c0_15 = arith.constant 0 : index
      %20 = vector.load %arg2[%c0_12, %c1_13, %c0_14, %c0_15] : memref<1x17x17x8xf32, #tpu.memory_space<vmem>>, vector<1x16x16x8xf32>
      %21 = vector.shape_cast %20 : vector<1x16x16x8xf32> to vector<16x16x8xf32>
      %22 = vector.shape_cast %21 : vector<16x16x8xf32> to vector<256x8xf32>
      %c0_16 = arith.constant 0 : index
      %c1_17 = arith.constant 1 : index
      %c1_18 = arith.constant 1 : index
      %c0_19 = arith.constant 0 : index
      %23 = vector.load %arg2[%c0_16, %c1_17, %c1_18, %c0_19] : memref<1x17x17x8xf32, #tpu.memory_space<vmem>>, vector<1x16x16x8xf32>
      %24 = vector.shape_cast %23 : vector<1x16x16x8xf32> to vector<16x16x8xf32>
      %25 = vector.shape_cast %24 : vector<16x16x8xf32> to vector<256x8xf32>
      %26 = tpu.concatenate %16, %19, %22, %25 in 1 : vector<256x8xf32>, vector<256x8xf32>, vector<256x8xf32>, vector<256x8xf32> -> vector<256x32xf32>
      %c0_20 = arith.constant 0 : index
      %c0_21 = arith.constant 0 : index
      %27 = vector.load %arg4[%c0_20, %c0_21] : memref<32x4xf32, #tpu.memory_space<vmem>>, vector<32x4xf32>
      %cst = arith.constant dense<0.000000e+00> : vector<256x4xf32>
      %28 = tpu.matmul %26, %27, %cst {dimension_numbers = #tpu.dot_dimension_numbers<[1], [0], [0], [1], [0, 0, 1, 1], [], []>} : vector<256x32xf32>, vector<32x4xf32>, vector<256x4xf32> -> vector<256x4xf32>
      %c0_22 = arith.constant 0 : index
      %c0_23 = arith.constant 0 : index
      %29 = vector.load %arg5[%c0_22, %c0_23] : memref<1x4xf32, #tpu.memory_space<vmem>>, vector<1x4xf32>
      %30 = vector.broadcast %29 : vector<1x4xf32> to vector<256x4xf32>
      %31 = arith.addf %28, %30 : vector<256x4xf32>
      %c0_24 = arith.constant 0 : index
      %c0_25 = arith.constant 0 : index
      %c0_26 = arith.constant 0 : index
      %c0_27 = arith.constant 0 : index
      %32 = vector.load %arg3[%c0_24, %c0_25, %c0_26, %c0_27] : memref<1x16x16x4xf32, #tpu.memory_space<vmem>>, vector<1x16x16x4xf32>
      %33 = vector.shape_cast %32 : vector<1x16x16x4xf32> to vector<16x16x4xf32>
      %c1_28 = arith.constant 1 : index
      %c1_29 = arith.constant 1 : index
      %c0_30 = arith.constant 0 : index
      %34 = vector.load %arg13[%c1_28, %c1_29, %c0_30] : memref<18x18x4xf32, #tpu.memory_space<vmem>>, vector<16x16x4xf32>
      tpu.vector_store %arg13[%c1_28, %c1_29, %c0_30], %33 {strides = array<i32>} : memref<18x18x4xf32, #tpu.memory_space<vmem>>, vector<16x16x4xf32>,
      %35 = vector.shape_cast %31 : vector<256x4xf32> to vector<16x16x4xf32>
      %c1_31 = arith.constant 1 : index
      %c1_32 = arith.constant 1 : index
      %c0_33 = arith.constant 0 : index
      %36 = vector.load %arg14[%c1_31, %c1_32, %c0_33] : memref<18x18x4xf32, #tpu.memory_space<vmem>>, vector<16x16x4xf32>
      tpu.vector_store %arg14[%c1_31, %c1_32, %c0_33], %35 {strides = array<i32>} : memref<18x18x4xf32, #tpu.memory_space<vmem>>, vector<16x16x4xf32>,
      %c0_34 = arith.constant 0 : index
      %c0_35 = arith.constant 0 : index
      %c0_36 = arith.constant 0 : index
      %37 = vector.load %arg13[%c0_34, %c0_35, %c0_36] : memref<18x18x4xf32, #tpu.memory_space<vmem>>, vector<16x16x4xf32>
      %38 = vector.shape_cast %37 : vector<16x16x4xf32> to vector<256x4xf32>
      %c0_37 = arith.constant 0 : index
      %c0_38 = arith.constant 0 : index
      %c0_39 = arith.constant 0 : index
      %39 = vector.load %arg14[%c0_37, %c0_38, %c0_39] : memref<18x18x4xf32, #tpu.memory_space<vmem>>, vector<16x16x4xf32>
      %40 = vector.shape_cast %39 : vector<16x16x4xf32> to vector<256x4xf32>
      %c0_40 = arith.constant 0 : index
      %c1_41 = arith.constant 1 : index
      %c0_42 = arith.constant 0 : index
      %41 = vector.load %arg13[%c0_40, %c1_41, %c0_42] : memref<18x18x4xf32, #tpu.memory_space<vmem>>, vector<16x16x4xf32>
      %42 = vector.shape_cast %41 : vector<16x16x4xf32> to vector<256x4xf32>
      %c0_43 = arith.constant 0 : index
      %c1_44 = arith.constant 1 : index
      %c0_45 = arith.constant 0 : index
      %43 = vector.load %arg14[%c0_43, %c1_44, %c0_45] : memref<18x18x4xf32, #tpu.memory_space<vmem>>, vector<16x16x4xf32>
      %44 = vector.shape_cast %43 : vector<16x16x4xf32> to vector<256x4xf32>
      %c0_46 = arith.constant 0 : index
      %c2 = arith.constant 2 : index
      %c0_47 = arith.constant 0 : index
      %45 = vector.load %arg13[%c0_46, %c2, %c0_47] : memref<18x18x4xf32, #tpu.memory_space<vmem>>, vector<16x16x4xf32>
      %46 = vector.shape_cast %45 : vector<16x16x4xf32> to vector<256x4xf32>
      %c0_48 = arith.constant 0 : index
      %c2_49 = arith.constant 2 : index
      %c0_50 = arith.constant 0 : index
      %47 = vector.load %arg14[%c0_48, %c2_49, %c0_50] : memref<18x18x4xf32, #tpu.memory_space<vmem>>, vector<16x16x4xf32>
      %48 = vector.shape_cast %47 : vector<16x16x4xf32> to vector<256x4xf32>
      %c1_51 = arith.constant 1 : index
      %c0_52 = arith.constant 0 : index
      %c0_53 = arith.constant 0 : index
      %49 = vector.load %arg13[%c1_51, %c0_52, %c0_53] : memref<18x18x4xf32, #tpu.memory_space<vmem>>, vector<16x16x4xf32>
      %50 = vector.shape_cast %49 : vector<16x16x4xf32> to vector<256x4xf32>
      %c1_54 = arith.constant 1 : index
      %c0_55 = arith.constant 0 : index
      %c0_56 = arith.constant 0 : index
      %51 = vector.load %arg14[%c1_54, %c0_55, %c0_56] : memref<18x18x4xf32, #tpu.memory_space<vmem>>, vector<16x16x4xf32>
      %52 = vector.shape_cast %51 : vector<16x16x4xf32> to vector<256x4xf32>
      %c1_57 = arith.constant 1 : index
      %c1_58 = arith.constant 1 : index
      %c0_59 = arith.constant 0 : index
      %53 = vector.load %arg13[%c1_57, %c1_58, %c0_59] : memref<18x18x4xf32, #tpu.memory_space<vmem>>, vector<16x16x4xf32>
      %54 = vector.shape_cast %53 : vector<16x16x4xf32> to vector<256x4xf32>
      %c1_60 = arith.constant 1 : index
      %c1_61 = arith.constant 1 : index
      %c0_62 = arith.constant 0 : index
      %55 = vector.load %arg14[%c1_60, %c1_61, %c0_62] : memref<18x18x4xf32, #tpu.memory_space<vmem>>, vector<16x16x4xf32>
      %56 = vector.shape_cast %55 : vector<16x16x4xf32> to vector<256x4xf32>
      %c1_63 = arith.constant 1 : index
      %c2_64 = arith.constant 2 : index
      %c0_65 = arith.constant 0 : index
      %57 = vector.load %arg13[%c1_63, %c2_64, %c0_65] : memref<18x18x4xf32, #tpu.memory_space<vmem>>, vector<16x16x4xf32>
      %58 = vector.shape_cast %57 : vector<16x16x4xf32> to vector<256x4xf32>
      %c1_66 = arith.constant 1 : index
      %c2_67 = arith.constant 2 : index
      %c0_68 = arith.constant 0 : index
      %59 = vector.load %arg14[%c1_66, %c2_67, %c0_68] : memref<18x18x4xf32, #tpu.memory_space<vmem>>, vector<16x16x4xf32>
      %60 = vector.shape_cast %59 : vector<16x16x4xf32> to vector<256x4xf32>
      %c2_69 = arith.constant 2 : index
      %c0_70 = arith.constant 0 : index
      %c0_71 = arith.constant 0 : index
      %61 = vector.load %arg13[%c2_69, %c0_70, %c0_71] : memref<18x18x4xf32, #tpu.memory_space<vmem>>, vector<16x16x4xf32>
      %62 = vector.shape_cast %61 : vector<16x16x4xf32> to vector<256x4xf32>
      %c2_72 = arith.constant 2 : index
      %c0_73 = arith.constant 0 : index
      %c0_74 = arith.constant 0 : index
      %63 = vector.load %arg14[%c2_72, %c0_73, %c0_74] : memref<18x18x4xf32, #tpu.memory_space<vmem>>, vector<16x16x4xf32>
      %64 = vector.shape_cast %63 : vector<16x16x4xf32> to vector<256x4xf32>
      %c2_75 = arith.constant 2 : index
      %c1_76 = arith.constant 1 : index
      %c0_77 = arith.constant 0 : index
      %65 = vector.load %arg13[%c2_75, %c1_76, %c0_77] : memref<18x18x4xf32, #tpu.memory_space<vmem>>, vector<16x16x4xf32>
      %66 = vector.shape_cast %65 : vector<16x16x4xf32> to vector<256x4xf32>
      %c2_78 = arith.constant 2 : index
      %c1_79 = arith.constant 1 : index
      %c0_80 = arith.constant 0 : index
      %67 = vector.load %arg14[%c2_78, %c1_79, %c0_80] : memref<18x18x4xf32, #tpu.memory_space<vmem>>, vector<16x16x4xf32>
      %68 = vector.shape_cast %67 : vector<16x16x4xf32> to vector<256x4xf32>
      %c2_81 = arith.constant 2 : index
      %c2_82 = arith.constant 2 : index
      %c0_83 = arith.constant 0 : index
      %69 = vector.load %arg13[%c2_81, %c2_82, %c0_83] : memref<18x18x4xf32, #tpu.memory_space<vmem>>, vector<16x16x4xf32>
      %70 = vector.shape_cast %69 : vector<16x16x4xf32> to vector<256x4xf32>
      %c2_84 = arith.constant 2 : index
      %c2_85 = arith.constant 2 : index
      %c0_86 = arith.constant 0 : index
      %71 = vector.load %arg14[%c2_84, %c2_85, %c0_86] : memref<18x18x4xf32, #tpu.memory_space<vmem>>, vector<16x16x4xf32>
      %72 = vector.shape_cast %71 : vector<16x16x4xf32> to vector<256x4xf32>
      %73 = tpu.concatenate %38, %40, %42, %44, %46, %48, %50, %52, %54, %56, %58, %60, %62, %64, %66, %68 in 1 : vector<256x4xf32>, vector<256x4xf32>, vector<256x4xf32>, vector<256x4xf32>, vector<256x4xf32>, vector<256x4xf32>, vector<256x4xf32>, vector<256x4xf32>, vector<256x4xf32>, vector<256x4xf32>, vector<256x4xf32>, vector<256x4xf32>, vector<256x4xf32>, vector<256x4xf32>, vector<256x4xf32>, vector<256x4xf32> -> vector<256x64xf32>
      %74 = tpu.concatenate %70, %72 in 1 : vector<256x4xf32>, vector<256x4xf32> -> vector<256x8xf32>
      %75 = tpu.concatenate %73, %74 in 1 : vector<256x64xf32>, vector<256x8xf32> -> vector<256x72xf32>
      %c0_87 = arith.constant 0 : index
      %c0_88 = arith.constant 0 : index
      %76 = vector.load %arg6[%c0_87, %c0_88] : memref<72x4xf32, #tpu.memory_space<vmem>>, vector<72x4xf32>
      %cst_89 = arith.constant dense<0.000000e+00> : vector<256x4xf32>
      %77 = tpu.matmul %75, %76, %cst_89 {dimension_numbers = #tpu.dot_dimension_numbers<[1], [0], [0], [1], [0, 0, 1, 1], [], []>} : vector<256x72xf32>, vector<72x4xf32>, vector<256x4xf32> -> vector<256x4xf32>
      %78 = arith.index_cast %arg1 : i32 to index
      %c0_90 = arith.constant 0 : index
      %c0_91 = arith.constant 0 : index
      %79 = vector.load %arg16[%78, %c0_90, %c0_91] : memref<2x256x4xf32, #tpu.memory_space<vmem>>, vector<1x256x4xf32>
      %80 = vector.shape_cast %79 : vector<1x256x4xf32> to vector<256x4xf32>
      %81 = vector.shape_cast %77 : vector<256x4xf32> to vector<1x256x4xf32>
      tpu.vector_store %arg16[%78, %c0_90, %c0_91], %81 {strides = array<i32>} : memref<2x256x4xf32, #tpu.memory_space<vmem>>, vector<1x256x4xf32>,
      %c0_92 = arith.constant 0 : index
      %c0_93 = arith.constant 0 : index
      %82 = vector.load %arg18[%c0_92, %c0_93] : memref<1x4xf32, #tpu.memory_space<vmem>>, vector<1x4xf32>
      %cst_94 = arith.constant dense<0.000000e+00> : vector<4xf32>
      %83 = vector.multi_reduction <add>, %77, %cst_94 [0] : vector<256x4xf32> to vector<4xf32>
      %84 = vector.shape_cast %83 : vector<4xf32> to vector<1x4xf32>
      %85 = arith.addf %82, %84 : vector<1x4xf32>
      %c0_95 = arith.constant 0 : index
      %c0_96 = arith.constant 0 : index
      %86 = vector.load %arg18[%c0_95, %c0_96] : memref<1x4xf32, #tpu.memory_space<vmem>>, vector<1x4xf32>
      tpu.vector_store %arg18[%c0_95, %c0_96], %85 {strides = array<i32>} : memref<1x4xf32, #tpu.memory_space<vmem>>, vector<1x4xf32>,
      %c0_97 = arith.constant 0 : index
      %c0_98 = arith.constant 0 : index
      %87 = vector.load %arg19[%c0_97, %c0_98] : memref<1x4xf32, #tpu.memory_space<vmem>>, vector<1x4xf32>
      %88 = arith.mulf %77, %77 : vector<256x4xf32>
      %cst_99 = arith.constant dense<0.000000e+00> : vector<4xf32>
      %89 = vector.multi_reduction <add>, %88, %cst_99 [0] : vector<256x4xf32> to vector<4xf32>
      %90 = vector.shape_cast %89 : vector<4xf32> to vector<1x4xf32>
      %91 = arith.addf %87, %90 : vector<1x4xf32>
      %c0_100 = arith.constant 0 : index
      %c0_101 = arith.constant 0 : index
      %92 = vector.load %arg19[%c0_100, %c0_101] : memref<1x4xf32, #tpu.memory_space<vmem>>, vector<1x4xf32>
      tpu.vector_store %arg19[%c0_100, %c0_101], %91 {strides = array<i32>} : memref<1x4xf32, #tpu.memory_space<vmem>>, vector<1x4xf32>,
    } else {
    }
    %c1_i32 = arith.constant 1 : i32
    %8 = arith.cmpi eq, %arg0, %c1_i32 : i32
    %9 = arith.extui %8 : i1 to i32
    %c0_i32_4 = arith.constant 0 : i32
    %10 = arith.cmpi ne, %9, %c0_i32_4 : i32
    scf.if %10 {
      %c0 = arith.constant 0 : index
      %c0_6 = arith.constant 0 : index
      %14 = vector.load %arg18[%c0, %c0_6] : memref<1x4xf32, #tpu.memory_space<vmem>>, vector<1x4xf32>
      %cst = arith.constant 0.001953125 : f32
      %15 = vector.broadcast %cst : f32 to vector<1x4xf32>
      %16 = arith.mulf %14, %15 : vector<1x4xf32>
      %c0_7 = arith.constant 0 : index
      %c0_8 = arith.constant 0 : index
      %17 = vector.load %arg19[%c0_7, %c0_8] : memref<1x4xf32, #tpu.memory_space<vmem>>, vector<1x4xf32>
      %cst_9 = arith.constant 0.001953125 : f32
      %18 = vector.broadcast %cst_9 : f32 to vector<1x4xf32>
      %19 = arith.mulf %17, %18 : vector<1x4xf32>
      %20 = arith.mulf %16, %16 : vector<1x4xf32>
      %21 = arith.subf %19, %20 : vector<1x4xf32>
      %22 = arith.index_cast %arg1 : i32 to index
      %c0_10 = arith.constant 0 : index
      %c0_11 = arith.constant 0 : index
      %23 = vector.load %arg16[%22, %c0_10, %c0_11] : memref<2x256x4xf32, #tpu.memory_space<vmem>>, vector<1x256x4xf32>
      %24 = vector.shape_cast %23 : vector<1x256x4xf32> to vector<256x4xf32>
      %25 = vector.broadcast %16 : vector<1x4xf32> to vector<256x4xf32>
      %26 = arith.subf %24, %25 : vector<256x4xf32>
      %cst_12 = arith.constant 9.99999974E-6 : f32
      %27 = vector.broadcast %cst_12 : f32 to vector<1x4xf32>
      %28 = arith.addf %21, %27 : vector<1x4xf32>
      %29 = math.rsqrt %28 : vector<1x4xf32>
      %30 = vector.broadcast %29 : vector<1x4xf32> to vector<256x4xf32>
      %31 = arith.mulf %26, %30 : vector<256x4xf32>
      %c0_13 = arith.constant 0 : index
      %c0_14 = arith.constant 0 : index
      %32 = vector.load %arg7[%c0_13, %c0_14] : memref<1x4xf32, #tpu.memory_space<vmem>>, vector<1x4xf32>
      %33 = vector.broadcast %32 : vector<1x4xf32> to vector<256x4xf32>
      %34 = arith.mulf %31, %33 : vector<256x4xf32>
      %c0_15 = arith.constant 0 : index
      %c0_16 = arith.constant 0 : index
      %35 = vector.load %arg8[%c0_15, %c0_16] : memref<1x4xf32, #tpu.memory_space<vmem>>, vector<1x4xf32>
      %36 = vector.broadcast %35 : vector<1x4xf32> to vector<256x4xf32>
      %37 = arith.addf %34, %36 : vector<256x4xf32>
      %cst_17 = arith.constant 0.000000e+00 : f32
      %38 = vector.broadcast %cst_17 : f32 to vector<256x4xf32>
      %39 = arith.maximumf %37, %38 : vector<256x4xf32>
      %40 = vector.shape_cast %39 : vector<256x4xf32> to vector<16x16x4xf32>
      %c1 = arith.constant 1 : index
      %c1_18 = arith.constant 1 : index
      %c0_19 = arith.constant 0 : index
      %41 = vector.load %arg15[%c1, %c1_18, %c0_19] : memref<18x18x4xf32, #tpu.memory_space<vmem>>, vector<16x16x4xf32>
      tpu.vector_store %arg15[%c1, %c1_18, %c0_19], %40 {strides = array<i32>} : memref<18x18x4xf32, #tpu.memory_space<vmem>>, vector<16x16x4xf32>,
      %c0_20 = arith.constant 0 : index
      %c0_21 = arith.constant 0 : index
      %c0_22 = arith.constant 0 : index
      %42 = vector.load %arg15[%c0_20, %c0_21, %c0_22] : memref<18x18x4xf32, #tpu.memory_space<vmem>>, vector<16x16x4xf32>
      %43 = vector.shape_cast %42 : vector<16x16x4xf32> to vector<256x4xf32>
      %c0_23 = arith.constant 0 : index
      %c1_24 = arith.constant 1 : index
      %c0_25 = arith.constant 0 : index
      %44 = vector.load %arg15[%c0_23, %c1_24, %c0_25] : memref<18x18x4xf32, #tpu.memory_space<vmem>>, vector<16x16x4xf32>
      %45 = vector.shape_cast %44 : vector<16x16x4xf32> to vector<256x4xf32>
      %c0_26 = arith.constant 0 : index
      %c2 = arith.constant 2 : index
      %c0_27 = arith.constant 0 : index
      %46 = vector.load %arg15[%c0_26, %c2, %c0_27] : memref<18x18x4xf32, #tpu.memory_space<vmem>>, vector<16x16x4xf32>
      %47 = vector.shape_cast %46 : vector<16x16x4xf32> to vector<256x4xf32>
      %c1_28 = arith.constant 1 : index
      %c0_29 = arith.constant 0 : index
      %c0_30 = arith.constant 0 : index
      %48 = vector.load %arg15[%c1_28, %c0_29, %c0_30] : memref<18x18x4xf32, #tpu.memory_space<vmem>>, vector<16x16x4xf32>
      %49 = vector.shape_cast %48 : vector<16x16x4xf32> to vector<256x4xf32>
      %c1_31 = arith.constant 1 : index
      %c1_32 = arith.constant 1 : index
      %c0_33 = arith.constant 0 : index
      %50 = vector.load %arg15[%c1_31, %c1_32, %c0_33] : memref<18x18x4xf32, #tpu.memory_space<vmem>>, vector<16x16x4xf32>
      %51 = vector.shape_cast %50 : vector<16x16x4xf32> to vector<256x4xf32>
      %c1_34 = arith.constant 1 : index
      %c2_35 = arith.constant 2 : index
      %c0_36 = arith.constant 0 : index
      %52 = vector.load %arg15[%c1_34, %c2_35, %c0_36] : memref<18x18x4xf32, #tpu.memory_space<vmem>>, vector<16x16x4xf32>
      %53 = vector.shape_cast %52 : vector<16x16x4xf32> to vector<256x4xf32>
      %c2_37 = arith.constant 2 : index
      %c0_38 = arith.constant 0 : index
      %c0_39 = arith.constant 0 : index
      %54 = vector.load %arg15[%c2_37, %c0_38, %c0_39] : memref<18x18x4xf32, #tpu.memory_space<vmem>>, vector<16x16x4xf32>
      %55 = vector.shape_cast %54 : vector<16x16x4xf32> to vector<256x4xf32>
      %c2_40 = arith.constant 2 : index
      %c1_41 = arith.constant 1 : index
      %c0_42 = arith.constant 0 : index
      %56 = vector.load %arg15[%c2_40, %c1_41, %c0_42] : memref<18x18x4xf32, #tpu.memory_space<vmem>>, vector<16x16x4xf32>
      %57 = vector.shape_cast %56 : vector<16x16x4xf32> to vector<256x4xf32>
      %c2_43 = arith.constant 2 : index
      %c2_44 = arith.constant 2 : index
      %c0_45 = arith.constant 0 : index
      %58 = vector.load %arg15[%c2_43, %c2_44, %c0_45] : memref<18x18x4xf32, #tpu.memory_space<vmem>>, vector<16x16x4xf32>
      %59 = vector.shape_cast %58 : vector<16x16x4xf32> to vector<256x4xf32>
      %60 = tpu.concatenate %43, %45, %47, %49, %51, %53, %55, %57, %59 in 1 : vector<256x4xf32>, vector<256x4xf32>, vector<256x4xf32>, vector<256x4xf32>, vector<256x4xf32>, vector<256x4xf32>, vector<256x4xf32>, vector<256x4xf32>, vector<256x4xf32> -> vector<256x36xf32>
      %c0_46 = arith.constant 0 : index
      %c0_47 = arith.constant 0 : index
      %61 = vector.load %arg9[%c0_46, %c0_47] : memref<36x4xf32, #tpu.memory_space<vmem>>, vector<36x4xf32>
      %cst_48 = arith.constant dense<0.000000e+00> : vector<256x4xf32>
      %62 = tpu.matmul %60, %61, %cst_48 {dimension_numbers = #tpu.dot_dimension_numbers<[1], [0], [0], [1], [0, 0, 1, 1], [], []>} : vector<256x36xf32>, vector<36x4xf32>, vector<256x4xf32> -> vector<256x4xf32>
      %63 = arith.index_cast %arg1 : i32 to index
      %c0_49 = arith.constant 0 : index
      %c0_50 = arith.constant 0 : index
      %64 = vector.load %arg17[%63, %c0_49, %c0_50] : memref<2x256x4xf32, #tpu.memory_space<vmem>>, vector<1x256x4xf32>
      %65 = vector.shape_cast %64 : vector<1x256x4xf32> to vector<256x4xf32>
      %66 = vector.shape_cast %62 : vector<256x4xf32> to vector<1x256x4xf32>
      tpu.vector_store %arg17[%63, %c0_49, %c0_50], %66 {strides = array<i32>} : memref<2x256x4xf32, #tpu.memory_space<vmem>>, vector<1x256x4xf32>,
      %c0_51 = arith.constant 0 : index
      %c0_52 = arith.constant 0 : index
      %67 = vector.load %arg20[%c0_51, %c0_52] : memref<1x4xf32, #tpu.memory_space<vmem>>, vector<1x4xf32>
      %cst_53 = arith.constant dense<0.000000e+00> : vector<4xf32>
      %68 = vector.multi_reduction <add>, %62, %cst_53 [0] : vector<256x4xf32> to vector<4xf32>
      %69 = vector.shape_cast %68 : vector<4xf32> to vector<1x4xf32>
      %70 = arith.addf %67, %69 : vector<1x4xf32>
      %c0_54 = arith.constant 0 : index
      %c0_55 = arith.constant 0 : index
      %71 = vector.load %arg20[%c0_54, %c0_55] : memref<1x4xf32, #tpu.memory_space<vmem>>, vector<1x4xf32>
      tpu.vector_store %arg20[%c0_54, %c0_55], %70 {strides = array<i32>} : memref<1x4xf32, #tpu.memory_space<vmem>>, vector<1x4xf32>,
      %c0_56 = arith.constant 0 : index
      %c0_57 = arith.constant 0 : index
      %72 = vector.load %arg21[%c0_56, %c0_57] : memref<1x4xf32, #tpu.memory_space<vmem>>, vector<1x4xf32>
      %73 = arith.mulf %62, %62 : vector<256x4xf32>
      %cst_58 = arith.constant dense<0.000000e+00> : vector<4xf32>
      %74 = vector.multi_reduction <add>, %73, %cst_58 [0] : vector<256x4xf32> to vector<4xf32>
      %75 = vector.shape_cast %74 : vector<4xf32> to vector<1x4xf32>
      %76 = arith.addf %72, %75 : vector<1x4xf32>
      %c0_59 = arith.constant 0 : index
      %c0_60 = arith.constant 0 : index
      %77 = vector.load %arg21[%c0_59, %c0_60] : memref<1x4xf32, #tpu.memory_space<vmem>>, vector<1x4xf32>
      tpu.vector_store %arg21[%c0_59, %c0_60], %76 {strides = array<i32>} : memref<1x4xf32, #tpu.memory_space<vmem>>, vector<1x4xf32>,
    } else {
    }
    %c2_i32 = arith.constant 2 : i32
    %11 = arith.cmpi eq, %arg0, %c2_i32 : i32
    %12 = arith.extui %11 : i1 to i32
    %c0_i32_5 = arith.constant 0 : i32
    %13 = arith.cmpi ne, %12, %c0_i32_5 : i32
    scf.if %13 {
      %c0 = arith.constant 0 : index
      %c0_6 = arith.constant 0 : index
      %14 = vector.load %arg20[%c0, %c0_6] : memref<1x4xf32, #tpu.memory_space<vmem>>, vector<1x4xf32>
      %cst = arith.constant 0.001953125 : f32
      %15 = vector.broadcast %cst : f32 to vector<1x4xf32>
      %16 = arith.mulf %14, %15 : vector<1x4xf32>
      %c0_7 = arith.constant 0 : index
      %c0_8 = arith.constant 0 : index
      %17 = vector.load %arg21[%c0_7, %c0_8] : memref<1x4xf32, #tpu.memory_space<vmem>>, vector<1x4xf32>
      %cst_9 = arith.constant 0.001953125 : f32
      %18 = vector.broadcast %cst_9 : f32 to vector<1x4xf32>
      %19 = arith.mulf %17, %18 : vector<1x4xf32>
      %20 = arith.mulf %16, %16 : vector<1x4xf32>
      %21 = arith.subf %19, %20 : vector<1x4xf32>
      %22 = arith.index_cast %arg1 : i32 to index
      %c0_10 = arith.constant 0 : index
      %c0_11 = arith.constant 0 : index
      %23 = vector.load %arg17[%22, %c0_10, %c0_11] : memref<2x256x4xf32, #tpu.memory_space<vmem>>, vector<1x256x4xf32>
      %24 = vector.shape_cast %23 : vector<1x256x4xf32> to vector<256x4xf32>
      %25 = vector.broadcast %16 : vector<1x4xf32> to vector<256x4xf32>
      %26 = arith.subf %24, %25 : vector<256x4xf32>
      %cst_12 = arith.constant 9.99999974E-6 : f32
      %27 = vector.broadcast %cst_12 : f32 to vector<1x4xf32>
      %28 = arith.addf %21, %27 : vector<1x4xf32>
      %29 = math.rsqrt %28 : vector<1x4xf32>
      %30 = vector.broadcast %29 : vector<1x4xf32> to vector<256x4xf32>
      %31 = arith.mulf %26, %30 : vector<256x4xf32>
      %c0_13 = arith.constant 0 : index
      %c0_14 = arith.constant 0 : index
      %32 = vector.load %arg10[%c0_13, %c0_14] : memref<1x4xf32, #tpu.memory_space<vmem>>, vector<1x4xf32>
      %33 = vector.broadcast %32 : vector<1x4xf32> to vector<256x4xf32>
      %34 = arith.mulf %31, %33 : vector<256x4xf32>
      %c0_15 = arith.constant 0 : index
      %c0_16 = arith.constant 0 : index
      %35 = vector.load %arg11[%c0_15, %c0_16] : memref<1x4xf32, #tpu.memory_space<vmem>>, vector<1x4xf32>
      %36 = vector.broadcast %35 : vector<1x4xf32> to vector<256x4xf32>
      %37 = arith.addf %34, %36 : vector<256x4xf32>
      %cst_17 = arith.constant 0.000000e+00 : f32
      %38 = vector.broadcast %cst_17 : f32 to vector<256x4xf32>
      %39 = arith.maximumf %37, %38 : vector<256x4xf32>
      %40 = tpu.transpose %39, [1, 0] : vector<256x4xf32> -> vector<4x256xf32>
      %c0_18 = arith.constant 0 : index
      %c0_19 = arith.constant 0 : index
      %c0_20 = arith.constant 0 : index
      %41 = vector.load %arg12[%c0_18, %c0_19, %c0_20] : memref<1x4x256xf32, #tpu.memory_space<vmem>>, vector<1x4x256xf32>
      %42 = vector.shape_cast %41 : vector<1x4x256xf32> to vector<4x256xf32>
      %43 = vector.shape_cast %40 : vector<4x256xf32> to vector<1x4x256xf32>
      tpu.vector_store %arg12[%c0_18, %c0_19, %c0_20], %43 {strides = array<i32>} : memref<1x4x256xf32, #tpu.memory_space<vmem>>, vector<1x4x256xf32>,
    } else {
    }
    return
  }
  func.func @transform_0(%arg0: i32, %arg1: i32) -> (i32, i32, i32, i32) {
    %c0_i32 = arith.constant 0 : i32
    %c0_i32_0 = arith.constant 0 : i32
    %c0_i32_1 = arith.constant 0 : i32
    %c0_i32_2 = arith.constant 0 : i32
    return %arg1, %c0_i32, %c0_i32_0, %c0_i32_1 : i32, i32, i32, i32
  }
  func.func @transform_1(%arg0: i32, %arg1: i32) -> (i32, i32, i32, i32) {
    %c0_i32 = arith.constant 0 : i32
    %c0_i32_0 = arith.constant 0 : i32
    %c0_i32_1 = arith.constant 0 : i32
    %c0_i32_2 = arith.constant 0 : i32
    return %arg1, %c0_i32, %c0_i32_0, %c0_i32_1 : i32, i32, i32, i32
  }
  func.func @transform_2(%arg0: i32, %arg1: i32) -> (i32, i32) {
    %c0_i32 = arith.constant 0 : i32
    %c0_i32_0 = arith.constant 0 : i32
    %c0_i32_1 = arith.constant 0 : i32
    return %c0_i32, %c0_i32_0 : i32, i32
  }
  func.func @transform_3(%arg0: i32, %arg1: i32) -> (i32, i32) {
    %c0_i32 = arith.constant 0 : i32
    %c0_i32_0 = arith.constant 0 : i32
    %c0_i32_1 = arith.constant 0 : i32
    return %c0_i32, %c0_i32_0 : i32, i32
  }
  func.func @transform_4(%arg0: i32, %arg1: i32) -> (i32, i32) {
    %c0_i32 = arith.constant 0 : i32
    %c0_i32_0 = arith.constant 0 : i32
    %c0_i32_1 = arith.constant 0 : i32
    return %c0_i32, %c0_i32_0 : i32, i32
  }
  func.func @transform_5(%arg0: i32, %arg1: i32) -> (i32, i32) {
    %c0_i32 = arith.constant 0 : i32
    %c0_i32_0 = arith.constant 0 : i32
    %c0_i32_1 = arith.constant 0 : i32
    return %c0_i32, %c0_i32_0 : i32, i32
  }
  func.func @transform_6(%arg0: i32, %arg1: i32) -> (i32, i32) {
    %c0_i32 = arith.constant 0 : i32
    %c0_i32_0 = arith.constant 0 : i32
    %c0_i32_1 = arith.constant 0 : i32
    return %c0_i32, %c0_i32_0 : i32, i32
  }
  func.func @transform_7(%arg0: i32, %arg1: i32) -> (i32, i32) {
    %c0_i32 = arith.constant 0 : i32
    %c0_i32_0 = arith.constant 0 : i32
    %c0_i32_1 = arith.constant 0 : i32
    return %c0_i32, %c0_i32_0 : i32, i32
  }
  func.func @transform_8(%arg0: i32, %arg1: i32) -> (i32, i32) {
    %c0_i32 = arith.constant 0 : i32
    %c0_i32_0 = arith.constant 0 : i32
    %c0_i32_1 = arith.constant 0 : i32
    return %c0_i32, %c0_i32_0 : i32, i32
  }
  func.func @transform_9(%arg0: i32, %arg1: i32) -> (i32, i32) {
    %c0_i32 = arith.constant 0 : i32
    %c0_i32_0 = arith.constant 0 : i32
    %c0_i32_1 = arith.constant 0 : i32
    return %c0_i32, %c0_i32_0 : i32, i32
  }
  func.func @transform_10(%arg0: i32, %arg1: i32) -> (i32, i32, i32) {
    %c0_i32 = arith.constant 0 : i32
    %c0_i32_0 = arith.constant 0 : i32
    %c0_i32_1 = arith.constant 0 : i32
    return %arg1, %c0_i32, %c0_i32_0 : i32, i32, i32
  }
}

</mosaic_0001>

<llo_original>
// kernel: up_step.1
$region0: #{up_step.1}
  #allocation0 [shape = 'u32[]', space=smem, size = 0x4, offset = 0x4, fixed_abs, tag = 'smem constant byte address 0x4 - core index']
  #allocation1 [shape = 'u32[72,128]{1,0:T(1,128)}', space=vmem, size = 0x9000, scoped, tag = 'internal scratch']
  #allocation2 [shape = 'f32[18,18,4]{2,1,0:T(8,128)}', space=vmem, size = 0x36000, scoped, tag = 'scratch operand']
  #allocation3 [shape = 'f32[18,18,4]{2,1,0:T(8,128)}', space=vmem, size = 0x36000, scoped, tag = 'scratch operand']
  #allocation4 [shape = 'f32[18,18,4]{2,1,0:T(8,128)}', space=vmem, size = 0x36000, scoped, tag = 'scratch operand']
  #allocation5 [shape = 'f32[2,256,4]{2,1,0:T(8,128)}', space=vmem, size = 0x40000, scoped, tag = 'scratch operand']
  #allocation6 [shape = 'f32[2,256,4]{2,1,0:T(8,128)}', space=vmem, size = 0x40000, scoped, tag = 'scratch operand']
  #allocation7 [shape = 'f32[1,4]{1,0:T(1,128)}', space=vmem, size = 0x200, scoped, tag = 'scratch operand']
  #allocation8 [shape = 'f32[1,4]{1,0:T(1,128)}', space=vmem, size = 0x200, scoped, tag = 'scratch operand']
  #allocation9 [shape = 'f32[1,4]{1,0:T(1,128)}', space=vmem, size = 0x200, scoped, tag = 'scratch operand']
  #allocation10 [shape = 'f32[1,4]{1,0:T(1,128)}', space=vmem, size = 0x200, scoped, tag = 'scratch operand']
  %s0 = inlined_call_operand.vmem [shape: f32[2,17,17,8], index: 0, kind: input, shape index: {}]
  %s1 = inlined_call_operand.vmem [shape: f32[2,16,16,4], index: 1, kind: input, shape index: {}]
  %s2 = inlined_call_operand.vmem [shape: f32[32,4], index: 2, kind: input, shape index: {}]
  %s3 = inlined_call_operand.vmem [shape: f32[1,4], index: 3, kind: input, shape index: {}]
  %s4 = inlined_call_operand.vmem [shape: f32[72,4], index: 4, kind: input, shape index: {}]
  %s5 = inlined_call_operand.vmem [shape: f32[1,4], index: 5, kind: input, shape index: {}]
  %s6 = inlined_call_operand.vmem [shape: f32[1,4], index: 6, kind: input, shape index: {}]
  %s7 = inlined_call_operand.vmem [shape: f32[36,4], index: 7, kind: input, shape index: {}]
  %s8 = inlined_call_operand.vmem [shape: f32[1,4], index: 8, kind: input, shape index: {}]
  %s9 = inlined_call_operand.vmem [shape: f32[1,4], index: 9, kind: input, shape index: {}]
  %s10 = inlined_call_operand.vmem [shape: f32[2,4,256], index: 10, kind: output, shape index: {}]
  %s11 = sld [smem:[#allocation0]]
  $region89: #{up_step.1} parent=0
    _
  %s13 = ssub.s32 1, %s11
  %s14 = scalar_select 0, %s13, %s11
  loop: start=0, step=1, limit=8
  $region2: #{up_step.1} parent=0 // loop_pre_header
    _
  $region3: #{up_step.1} parent=0 // loop_header
    %s16 = sphi 0, %s20
    %p17 = scmp.ge.s32.totalorder %s16, 8
    %s23 = sphi 0, %s35
    %s24 = sphi 0, %s31
    %s25 = sphi 0, %s23
    %s26 = sphi 0, %s24
    %s27 = sphi 0, %s25
    %s28 = sphi 0, %s26
    %s38 = sphi 0, %s40
    %s41 = sphi 0, %s38
    %s42 = sphi 0, %s41
    %s58 = sphi 0, %s42
    %s64 = sphi 0, %s66
    %s67 = sphi 0, %s64
    %s68 = sphi 0, %s67
    %s84 = sphi 0, %s68
    %s88 = sphi 0, %s88
    %s90 = sphi 0, %s88
    %s91 = sphi 0, %s90
    %s105 = sphi 0, %s91
    %s109 = sphi 0, %s109
    %s111 = sphi 0, %s109
    %s112 = sphi 0, %s111
    %s126 = sphi 0, %s112
    %s130 = sphi 0, %s130
    %s132 = sphi 0, %s130
    %s133 = sphi 0, %s132
    %s147 = sphi 0, %s133
    %s151 = sphi 0, %s151
    %s153 = sphi 0, %s151
    %s154 = sphi 0, %s153
    %s168 = sphi 0, %s154
    %s172 = sphi 0, %s172
    %s174 = sphi 0, %s172
    %s175 = sphi 0, %s174
    %s189 = sphi 0, %s175
    %s193 = sphi 0, %s193
    %s195 = sphi 0, %s193
    %s196 = sphi 0, %s195
    %s210 = sphi 0, %s196
    %s214 = sphi 0, %s214
    %s216 = sphi 0, %s214
    %s217 = sphi 0, %s216
    %s231 = sphi 0, %s217
    %s235 = sphi 0, %s235
    %s237 = sphi 0, %s235
    %s238 = sphi 0, %s237
    %s252 = sphi 0, %s238
    %s258 = sphi 0, %s260
    %s261 = sphi 0, %s258
    %s262 = sphi 0, %s261
    %s278 = sphi 0, %s262
  $region4: #{up_step.1} parent=0 // loop_header_branch
    %19 = sbr.rel (%p17) target = $region8
  $region5: #{up_step.1} parent=0 // loop_body
    %s21 = ssub.s32 %s16, 1
    %s22 = ssub.s32 %s16, 2
    %s29 = sadd.s32 1, %s24
    %p30 = scmp.ge.s32.totalorder %s29, 2
    %s31 = scalar_select %p30, 0, %s29
    %s32 = sadd.s32 1, %s23
    %s33 = scalar_select %p30, %s32, %s23
    %p34 = scmp.ge.s32.totalorder %s33, 3
    %s35 = scalar_select %p34, 0, %s33
    %s36 = ssub.s32 %s24, %s31
    %p37 = scmp.eq.s32.totalorder %s36, 0
    %s39 = sadd.s32 %s38, 1
    %s40 = scalar_select %p37, %s38, %s39
    %p43 = pneg %p37
    %p44 = scmp.eq.s32.totalorder %s16, 5
    %p45 = por %p43, %p44
    %p46 = scmp.ne.s32.totalorder %s38, %s41
    %p47 = scmp.eq.s32.totalorder %s16, 0
    %p48 = por %p46, %p47
    %p49 = scmp.ne.s32.totalorder %s38, %s41
    %p50 = scmp.eq.s32.totalorder %s21, 5
    %p51 = por %p49, %p50
    %p52 = scmp.ne.s32.totalorder %s41, %s42
    %p53 = scmp.eq.s32.totalorder %s21, 0
    %p54 = por %p52, %p53
    %p55 = scmp.ne.s32.totalorder %s41, %s42
    %p56 = scmp.eq.s32.totalorder %s22, 5
    %p57 = por %p55, %p56
    %p59 = scmp.ne.s32.totalorder %s42, %s58
    %p60 = scmp.eq.s32.totalorder %s22, 0
    %p61 = por %p59, %p60
    %s62 = ssub.s32 %s24, %s31
    %p63 = scmp.eq.s32.totalorder %s62, 0
    %s65 = sadd.s32 %s64, 1
    %s66 = scalar_select %p63, %s64, %s65
    %p69 = pneg %p63
    %p70 = scmp.eq.s32.totalorder %s16, 5
    %p71 = por %p69, %p70
    %p72 = scmp.ne.s32.totalorder %s64, %s67
    %p73 = scmp.eq.s32.totalorder %s16, 0
    %p74 = por %p72, %p73
    %p75 = scmp.ne.s32.totalorder %s64, %s67
    %p76 = scmp.eq.s32.totalorder %s21, 5
    %p77 = por %p75, %p76
    %p78 = scmp.ne.s32.totalorder %s67, %s68
    %p79 = scmp.eq.s32.totalorder %s21, 0
    %p80 = por %p78, %p79
    %p81 = scmp.ne.s32.totalorder %s67, %s68
    %p82 = scmp.eq.s32.totalorder %s22, 5
    %p83 = por %p81, %p82
    %p85 = scmp.ne.s32.totalorder %s68, %s84
    %p86 = scmp.eq.s32.totalorder %s22, 0
    %p87 = por %p85, %p86
    %s89 = sadd.s32 %s88, 1
    %p92 = scmp.eq.s32.totalorder %s16, 5
    %p93 = scmp.ne.s32.totalorder %s88, %s90
    %p94 = scmp.eq.s32.totalorder %s16, 0
    %p95 = por %p93, %p94
    %p96 = scmp.ne.s32.totalorder %s88, %s90
    %p97 = scmp.eq.s32.totalorder %s21, 5
    %p98 = por %p96, %p97
    %p99 = scmp.ne.s32.totalorder %s90, %s91
    %p100 = scmp.eq.s32.totalorder %s21, 0
    %p101 = por %p99, %p100
    %p102 = scmp.ne.s32.totalorder %s90, %s91
    %p103 = scmp.eq.s32.totalorder %s22, 5
    %p104 = por %p102, %p103
    %p106 = scmp.ne.s32.totalorder %s91, %s105
    %p107 = scmp.eq.s32.totalorder %s22, 0
    %p108 = por %p106, %p107
    %s110 = sadd.s32 %s109, 1
    %p113 = scmp.eq.s32.totalorder %s16, 5
    %p114 = scmp.ne.s32.totalorder %s109, %s111
    %p115 = scmp.eq.s32.totalorder %s16, 0
    %p116 = por %p114, %p115
    %p117 = scmp.ne.s32.totalorder %s109, %s111
    %p118 = scmp.eq.s32.totalorder %s21, 5
    %p119 = por %p117, %p118
    %p120 = scmp.ne.s32.totalorder %s111, %s112
    %p121 = scmp.eq.s32.totalorder %s21, 0
    %p122 = por %p120, %p121
    %p123 = scmp.ne.s32.totalorder %s111, %s112
    %p124 = scmp.eq.s32.totalorder %s22, 5
    %p125 = por %p123, %p124
    %p127 = scmp.ne.s32.totalorder %s112, %s126
    %p128 = scmp.eq.s32.totalorder %s22, 0
    %p129 = por %p127, %p128
    %s131 = sadd.s32 %s130, 1
    %p134 = scmp.eq.s32.totalorder %s16, 5
    %p135 = scmp.ne.s32.totalorder %s130, %s132
    %p136 = scmp.eq.s32.totalorder %s16, 0
    %p137 = por %p135, %p136
    %p138 = scmp.ne.s32.totalorder %s130, %s132
    %p139 = scmp.eq.s32.totalorder %s21, 5
    %p140 = por %p138, %p139
    %p141 = scmp.ne.s32.totalorder %s132, %s133
    %p142 = scmp.eq.s32.totalorder %s21, 0
    %p143 = por %p141, %p142
    %p144 = scmp.ne.s32.totalorder %s132, %s133
    %p145 = scmp.eq.s32.totalorder %s22, 5
    %p146 = por %p144, %p145
    %p148 = scmp.ne.s32.totalorder %s133, %s147
    %p149 = scmp.eq.s32.totalorder %s22, 0
    %p150 = por %p148, %p149
    %s152 = sadd.s32 %s151, 1
    %p155 = scmp.eq.s32.totalorder %s16, 5
    %p156 = scmp.ne.s32.totalorder %s151, %s153
    %p157 = scmp.eq.s32.totalorder %s16, 0
    %p158 = por %p156, %p157
    %p159 = scmp.ne.s32.totalorder %s151, %s153
    %p160 = scmp.eq.s32.totalorder %s21, 5
    %p161 = por %p159, %p160
    %p162 = scmp.ne.s32.totalorder %s153, %s154
    %p163 = scmp.eq.s32.totalorder %s21, 0
    %p164 = por %p162, %p163
    %p165 = scmp.ne.s32.totalorder %s153, %s154
    %p166 = scmp.eq.s32.totalorder %s22, 5
    %p167 = por %p165, %p166
    %p169 = scmp.ne.s32.totalorder %s154, %s168
    %p170 = scmp.eq.s32.totalorder %s22, 0
    %p171 = por %p169, %p170
    %s173 = sadd.s32 %s172, 1
    %p176 = scmp.eq.s32.totalorder %s16, 5
    %p177 = scmp.ne.s32.totalorder %s172, %s174
    %p178 = scmp.eq.s32.totalorder %s16, 0
    %p179 = por %p177, %p178
    %p180 = scmp.ne.s32.totalorder %s172, %s174
    %p181 = scmp.eq.s32.totalorder %s21, 5
    %p182 = por %p180, %p181
    %p183 = scmp.ne.s32.totalorder %s174, %s175
    %p184 = scmp.eq.s32.totalorder %s21, 0
    %p185 = por %p183, %p184
    %p186 = scmp.ne.s32.totalorder %s174, %s175
    %p187 = scmp.eq.s32.totalorder %s22, 5
    %p188 = por %p186, %p187
    %p190 = scmp.ne.s32.totalorder %s175, %s189
    %p191 = scmp.eq.s32.totalorder %s22, 0
    %p192 = por %p190, %p191
    %s194 = sadd.s32 %s193, 1
    %p197 = scmp.eq.s32.totalorder %s16, 5
    %p198 = scmp.ne.s32.totalorder %s193, %s195
    %p199 = scmp.eq.s32.totalorder %s16, 0
    %p200 = por %p198, %p199
    %p201 = scmp.ne.s32.totalorder %s193, %s195
    %p202 = scmp.eq.s32.totalorder %s21, 5
    %p203 = por %p201, %p202
    %p204 = scmp.ne.s32.totalorder %s195, %s196
    %p205 = scmp.eq.s32.totalorder %s21, 0
    %p206 = por %p204, %p205
    %p207 = scmp.ne.s32.totalorder %s195, %s196
    %p208 = scmp.eq.s32.totalorder %s22, 5
    %p209 = por %p207, %p208
    %p211 = scmp.ne.s32.totalorder %s196, %s210
    %p212 = scmp.eq.s32.totalorder %s22, 0
    %p213 = por %p211, %p212
    %s215 = sadd.s32 %s214, 1
    %p218 = scmp.eq.s32.totalorder %s16, 5
    %p219 = scmp.ne.s32.totalorder %s214, %s216
    %p220 = scmp.eq.s32.totalorder %s16, 0
    %p221 = por %p219, %p220
    %p222 = scmp.ne.s32.totalorder %s214, %s216
    %p223 = scmp.eq.s32.totalorder %s21, 5
    %p224 = por %p222, %p223
    %p225 = scmp.ne.s32.totalorder %s216, %s217
    %p226 = scmp.eq.s32.totalorder %s21, 0
    %p227 = por %p225, %p226
    %p228 = scmp.ne.s32.totalorder %s216, %s217
    %p229 = scmp.eq.s32.totalorder %s22, 5
    %p230 = por %p228, %p229
    %p232 = scmp.ne.s32.totalorder %s217, %s231
    %p233 = scmp.eq.s32.totalorder %s22, 0
    %p234 = por %p232, %p233
    %s236 = sadd.s32 %s235, 1
    %p239 = scmp.eq.s32.totalorder %s16, 5
    %p240 = scmp.ne.s32.totalorder %s235, %s237
    %p241 = scmp.eq.s32.totalorder %s16, 0
    %p242 = por %p240, %p241
    %p243 = scmp.ne.s32.totalorder %s235, %s237
    %p244 = scmp.eq.s32.totalorder %s21, 5
    %p245 = por %p243, %p244
    %p246 = scmp.ne.s32.totalorder %s237, %s238
    %p247 = scmp.eq.s32.totalorder %s21, 0
    %p248 = por %p246, %p247
    %p249 = scmp.ne.s32.totalorder %s237, %s238
    %p250 = scmp.eq.s32.totalorder %s22, 5
    %p251 = por %p249, %p250
    %p253 = scmp.ne.s32.totalorder %s238, %s252
    %p254 = scmp.eq.s32.totalorder %s22, 0
    %p255 = por %p253, %p254
    %s256 = ssub.s32 %s24, %s31
    %p257 = scmp.eq.s32.totalorder %s256, 0
    %s259 = sadd.s32 %s258, 1
    %s260 = scalar_select %p257, %s258, %s259
    %p263 = pneg %p257
    %p264 = scmp.eq.s32.totalorder %s16, 5
    %p265 = por %p263, %p264
    %p266 = scmp.ne.s32.totalorder %s258, %s261
    %p267 = scmp.eq.s32.totalorder %s16, 0
    %p268 = por %p266, %p267
    %p269 = scmp.ne.s32.totalorder %s258, %s261
    %p270 = scmp.eq.s32.totalorder %s21, 5
    %p271 = por %p269, %p270
    %p272 = scmp.ne.s32.totalorder %s261, %s262
    %p273 = scmp.eq.s32.totalorder %s21, 0
    %p274 = por %p272, %p273
    %p275 = scmp.ne.s32.totalorder %s261, %s262
    %p276 = scmp.eq.s32.totalorder %s22, 5
    %p277 = por %p275, %p276
    %p279 = scmp.ne.s32.totalorder %s262, %s278
    %p280 = scmp.eq.s32.totalorder %s22, 0
    %p281 = por %p279, %p280
    %p282 = scmp.le.s32.totalorder 1, %s16
    %p283 = scmp.lt.s32.totalorder %s16, 7
    %p284 = pnand %p282, %p283
    %p285 = pneg %p284
    // Predicated region
    $region9: #{up_step.1} parent=5 // pred_check
      _
    $region10: #{up_step.1} parent=5 // pred_check_branch
      %287 = sbr.rel (%p284) target = $region12
    $region11: #{up_step.1} parent=5 // pred_region
      %s288 = ssub.s32 %s16, 1
      // Predicated region
      $region13: #{up_step.1} parent=11 // pred_check
        %p289 = pneg %p101
      $region14: #{up_step.1} parent=11 // pred_check_branch
        %291 = sbr.rel (%p289) target = $region16
      $region15: #{up_step.1} parent=11 // pred_region
        _
      $region16: #{up_step.1} parent=11 // pred_fallthru
        _
      // Predicated region
      $region17: #{up_step.1} parent=11 // pred_check
        %p292 = pneg %p122
      $region18: #{up_step.1} parent=11 // pred_check_branch
        %294 = sbr.rel (%p292) target = $region20
      $region19: #{up_step.1} parent=11 // pred_region
        _
      $region20: #{up_step.1} parent=11 // pred_fallthru
        _
      // Predicated region
      $region21: #{up_step.1} parent=11 // pred_check
        %p295 = pneg %p143
      $region22: #{up_step.1} parent=11 // pred_check_branch
        %297 = sbr.rel (%p295) target = $region24
      $region23: #{up_step.1} parent=11 // pred_region
        _
      $region24: #{up_step.1} parent=11 // pred_fallthru
        _
      // Predicated region
      $region25: #{up_step.1} parent=11 // pred_check
        %p298 = pneg %p164
      $region26: #{up_step.1} parent=11 // pred_check_branch
        %300 = sbr.rel (%p298) target = $region28
      $region27: #{up_step.1} parent=11 // pred_region
        _
      $region28: #{up_step.1} parent=11 // pred_fallthru
        _
      // Predicated region
      $region29: #{up_step.1} parent=11 // pred_check
        %p301 = pneg %p185
      $region30: #{up_step.1} parent=11 // pred_check_branch
        %303 = sbr.rel (%p301) target = $region32
      $region31: #{up_step.1} parent=11 // pred_region
        _
      $region32: #{up_step.1} parent=11 // pred_fallthru
        _
      // Predicated region
      $region33: #{up_step.1} parent=11 // pred_check
        %p304 = pneg %p206
      $region34: #{up_step.1} parent=11 // pred_check_branch
        %306 = sbr.rel (%p304) target = $region36
      $region35: #{up_step.1} parent=11 // pred_region
        _
      $region36: #{up_step.1} parent=11 // pred_fallthru
        _
      // Predicated region
      $region37: #{up_step.1} parent=11 // pred_check
        %p307 = pneg %p227
      $region38: #{up_step.1} parent=11 // pred_check_branch
        %309 = sbr.rel (%p307) target = $region40
      $region39: #{up_step.1} parent=11 // pred_region
        _
      $region40: #{up_step.1} parent=11 // pred_fallthru
        _
      // Predicated region
      $region41: #{up_step.1} parent=11 // pred_check
        %p310 = pneg %p248
      $region42: #{up_step.1} parent=11 // pred_check_branch
        %312 = sbr.rel (%p310) target = $region44
      $region43: #{up_step.1} parent=11 // pred_region
        _
      $region44: #{up_step.1} parent=11 // pred_fallthru
        _
    $region12: #{up_step.1} parent=5 // pred_fallthru
      _
    %p313 = scmp.lt.s32.totalorder %s16, 6
    // Predicated region
    $region45: #{up_step.1} parent=5 // pred_check
      %p314 = pneg %p313
    $region46: #{up_step.1} parent=5 // pred_check_branch
      %316 = sbr.rel (%p314) target = $region48
    $region47: #{up_step.1} parent=5 // pred_region
      // Predicated region
      $region49: #{up_step.1} parent=47 // pred_check
        %p317 = pneg %p48
      $region50: #{up_step.1} parent=47 // pred_check_branch
        %319 = sbr.rel (%p317) target = $region52
      $region51: #{up_step.1} parent=47 // pred_region
        %p320 = scmp.lt.s32.totalorder %s24, 1
        %s321 = scalar_select %p320, %s24, 1
        %s322 = smul.addr %s321, 51
        %s323 = smul.addr %s322, 8
        %s324 = scalar_lea.vmem %s0, %s323
      $region52: #{up_step.1} parent=47 // pred_fallthru
        _
      // Predicated region
      $region53: #{up_step.1} parent=47 // pred_check
        %p325 = pneg %p74
      $region54: #{up_step.1} parent=47 // pred_check_branch
        %327 = sbr.rel (%p325) target = $region56
      $region55: #{up_step.1} parent=47 // pred_region
        %p328 = scmp.lt.s32.totalorder %s24, 1
        %s329 = scalar_select %p328, %s24, 1
        %s330 = smul.addr %s329, 32
        %s331 = smul.addr %s330, 8
        %s332 = scalar_lea.vmem %s1, %s331
      $region56: #{up_step.1} parent=47 // pred_fallthru
        _
    $region48: #{up_step.1} parent=5 // pred_fallthru
      _
    %p333 = scmp.le.s32.totalorder 1, %s16
    %p334 = scmp.lt.s32.totalorder %s16, 7
    %p335 = pnand %p333, %p334
    %p336 = pneg %p335
    // Predicated region
    $region57: #{up_step.1} parent=5 // pred_check
      _
    $region58: #{up_step.1} parent=5 // pred_check_branch
      %338 = sbr.rel (%p335) target = $region60
    $region59: #{up_step.1} parent=5 // pred_region
      %s339 = ssub.s32 %s16, 1
      %p340 = scmp.lt.s32.totalorder %s26, 1
      %s341 = scalar_select %p340, %s26, 1
      %s342 = smul.addr %s341, 51
      %s343 = smul.addr %s342, 8
      %s344 = scalar_lea.vmem %s0, %s343
      %p345 = pneg %p54
      %p346 = pneg %p51
      %p347 = scmp.lt.s32.totalorder %s26, 1
      %s348 = scalar_select %p347, %s26, 1
      %s349 = smul.addr %s348, 32
      %s350 = smul.addr %s349, 8
      %s351 = scalar_lea.vmem %s1, %s350
      %p352 = pneg %p80
      %p353 = pneg %p77
      %p354 = pneg %p101
      %p355 = pneg %p98
      %p356 = pneg %p122
      %p357 = pneg %p119
      %p358 = pneg %p143
      %p359 = pneg %p140
      %p360 = pneg %p164
      %p361 = pneg %p161
      %p362 = pneg %p185
      %p363 = pneg %p182
      %p364 = pneg %p206
      %p365 = pneg %p203
      %p366 = pneg %p227
      %p367 = pneg %p224
      %p368 = pneg %p248
      %p369 = pneg %p245
      %p370 = pneg %p274
      %p371 = pneg %p271
      %p372 = scmp.lt.s32.totalorder %s26, 1
      %s373 = scalar_select %p372, %s26, 1
      %s374 = smul.addr %s373, 2
      %s375 = smul.addr %s374, 4
      %s376 = scalar_lea.vmem %s10, %s375
      %p377 = scmp.lt.s32.totalorder %s26, 1
      %s378 = scalar_select %p377, %s26, 1
      %s379 = smul.addr %s378, 51
      %s380 = smul.addr %s379, 8
      %s381 = scalar_lea.vmem %s0, %s380
      %p382 = scmp.lt.s32.totalorder %s26, 1
      %s383 = scalar_select %p382, %s26, 1
      %s384 = smul.addr %s383, 32
      %s385 = smul.addr %s384, 8
      %s386 = scalar_lea.vmem %s1, %s385
      %p387 = scmp.lt.s32.totalorder %s26, 1
      %s388 = scalar_select %p387, %s26, 1
      %s389 = smul.addr %s388, 2
      %s390 = smul.addr %s389, 4
      %s391 = scalar_lea.vmem %s10, %s390
      %p392 = scmp.eq.s32.totalorder %s25, 0
      %p393 = scmp.eq.s32.totalorder %s26, 0
      %p394 = pnand %p392, %p393
      %p395 = pneg %p394
      // Predicated region
      $region61: #{up_step.1} parent=59 // pred_check
        _
      $region62: #{up_step.1} parent=59 // pred_check_branch
        %397 = sbr.rel (%p394) target = $region64
      $region63: #{up_step.1} parent=59 // pred_region
        %vm398 = vcmask 31744
        %399 = vst.msk [vmem:[#allocation2] sm:$0xff] %vm398, 0.0
        %400 = vst.msk [vmem:[#allocation2 + $0x8] sm:$0xff] %vm398, 0.0
        %vm401 = vcmask 25600
        %402 = vst.msk [vmem:[#allocation2 + $0x10] sm:$0x3] %vm401, 0.0
        %403 = vst.msk [vmem:[#allocation2 + $0x18] sm:$0xff] %vm398, 0.0
        %404 = vst.msk [vmem:[#allocation2 + $0x20] sm:$0xff] %vm398, 0.0
        %405 = vst.msk [vmem:[#allocation2 + $0x28] sm:$0x3] %vm401, 0.0
        %406 = vst.msk [vmem:[#allocation2 + $0x30] sm:$0xff] %vm398, 0.0
        %407 = vst.msk [vmem:[#allocation2 + $0x38] sm:$0xff] %vm398, 0.0
        %408 = vst.msk [vmem:[#allocation2 + $0x40] sm:$0x3] %vm401, 0.0
        %409 = vst.msk [vmem:[#allocation2 + $0x48] sm:$0xff] %vm398, 0.0
        %410 = vst.msk [vmem:[#allocation2 + $0x50] sm:$0xff] %vm398, 0.0
        %411 = vst.msk [vmem:[#allocation2 + $0x58] sm:$0x3] %vm401, 0.0
        %412 = vst.msk [vmem:[#allocation2 + $0x60] sm:$0xff] %vm398, 0.0
        %413 = vst.msk [vmem:[#allocation2 + $0x68] sm:$0xff] %vm398, 0.0
        %414 = vst.msk [vmem:[#allocation2 + $0x70] sm:$0x3] %vm401, 0.0
        %415 = vst.msk [vmem:[#allocation2 + $0x78] sm:$0xff] %vm398, 0.0
        %416 = vst.msk [vmem:[#allocation2 + $0x80] sm:$0xff] %vm398, 0.0
        %417 = vst.msk [vmem:[#allocation2 + $0x88] sm:$0x3] %vm401, 0.0
        %418 = vst.msk [vmem:[#allocation2 + $0x90] sm:$0xff] %vm398, 0.0
        %419 = vst.msk [vmem:[#allocation2 + $0x98] sm:$0xff] %vm398, 0.0
        %420 = vst.msk [vmem:[#allocation2 + $0xa0] sm:$0x3] %vm401, 0.0
        %421 = vst.msk [vmem:[#allocation2 + $0xa8] sm:$0xff] %vm398, 0.0
        %422 = vst.msk [vmem:[#allocation2 + $0xb0] sm:$0xff] %vm398, 0.0
        %423 = vst.msk [vmem:[#allocation2 + $0xb8] sm:$0x3] %vm401, 0.0
        %424 = vst.msk [vmem:[#allocation2 + $0xc0] sm:$0xff] %vm398, 0.0
        %425 = vst.msk [vmem:[#allocation2 + $0xc8] sm:$0xff] %vm398, 0.0
        %426 = vst.msk [vmem:[#allocation2 + $0xd0] sm:$0x3] %vm401, 0.0
        %427 = vst.msk [vmem:[#allocation2 + $0xd8] sm:$0xff] %vm398, 0.0
        %428 = vst.msk [vmem:[#allocation2 + $0xe0] sm:$0xff] %vm398, 0.0
        %429 = vst.msk [vmem:[#allocation2 + $0xe8] sm:$0x3] %vm401, 0.0
        %430 = vst.msk [vmem:[#allocation2 + $0xf0] sm:$0xff] %vm398, 0.0
        %431 = vst.msk [vmem:[#allocation2 + $0xf8] sm:$0xff] %vm398, 0.0
        %432 = vst.msk [vmem:[#allocation2 + $0x100] sm:$0x3] %vm401, 0.0
        %433 = vst.msk [vmem:[#allocation2 + $0x108] sm:$0xff] %vm398, 0.0
        %434 = vst.msk [vmem:[#allocation2 + $0x110] sm:$0xff] %vm398, 0.0
        %435 = vst.msk [vmem:[#allocation2 + $0x118] sm:$0x3] %vm401, 0.0
        %436 = vst.msk [vmem:[#allocation2 + $0x120] sm:$0xff] %vm398, 0.0
        %437 = vst.msk [vmem:[#allocation2 + $0x128] sm:$0xff] %vm398, 0.0
        %438 = vst.msk [vmem:[#allocation2 + $0x130] sm:$0x3] %vm401, 0.0
        %439 = vst.msk [vmem:[#allocation2 + $0x138] sm:$0xff] %vm398, 0.0
        %440 = vst.msk [vmem:[#allocation2 + $0x140] sm:$0xff] %vm398, 0.0
        %441 = vst.msk [vmem:[#allocation2 + $0x148] sm:$0x3] %vm401, 0.0
        %442 = vst.msk [vmem:[#allocation2 + $0x150] sm:$0xff] %vm398, 0.0
        %443 = vst.msk [vmem:[#allocation2 + $0x158] sm:$0xff] %vm398, 0.0
        %444 = vst.msk [vmem:[#allocation2 + $0x160] sm:$0x3] %vm401, 0.0
        %445 = vst.msk [vmem:[#allocation2 + $0x168] sm:$0xff] %vm398, 0.0
        %446 = vst.msk [vmem:[#allocation2 + $0x170] sm:$0xff] %vm398, 0.0
        %447 = vst.msk [vmem:[#allocation2 + $0x178] sm:$0x3] %vm401, 0.0
        %448 = vst.msk [vmem:[#allocation2 + $0x180] sm:$0xff] %vm398, 0.0
        %449 = vst.msk [vmem:[#allocation2 + $0x188] sm:$0xff] %vm398, 0.0
        %450 = vst.msk [vmem:[#allocation2 + $0x190] sm:$0x3] %vm401, 0.0
        %451 = vst.msk [vmem:[#allocation2 + $0x198] sm:$0xff] %vm398, 0.0
        %452 = vst.msk [vmem:[#allocation2 + $0x1a0] sm:$0xff] %vm398, 0.0
        %453 = vst.msk [vmem:[#allocation2 + $0x1a8] sm:$0x3] %vm401, 0.0
        %454 = vst.msk [vmem:[#allocation3] sm:$0xff] %vm398, 0.0
        %455 = vst.msk [vmem:[#allocation3 + $0x8] sm:$0xff] %vm398, 0.0
        %456 = vst.msk [vmem:[#allocation3 + $0x10] sm:$0x3] %vm401, 0.0
        %457 = vst.msk [vmem:[#allocation3 + $0x18] sm:$0xff] %vm398, 0.0
        %458 = vst.msk [vmem:[#allocation3 + $0x20] sm:$0xff] %vm398, 0.0
        %459 = vst.msk [vmem:[#allocation3 + $0x28] sm:$0x3] %vm401, 0.0
        %460 = vst.msk [vmem:[#allocation3 + $0x30] sm:$0xff] %vm398, 0.0
        %461 = vst.msk [vmem:[#allocation3 + $0x38] sm:$0xff] %vm398, 0.0
        %462 = vst.msk [vmem:[#allocation3 + $0x40] sm:$0x3] %vm401, 0.0
        %463 = vst.msk [vmem:[#allocation3 + $0x48] sm:$0xff] %vm398, 0.0
        %464 = vst.msk [vmem:[#allocation3 + $0x50] sm:$0xff] %vm398, 0.0
        %465 = vst.msk [vmem:[#allocation3 + $0x58] sm:$0x3] %vm401, 0.0
        %466 = vst.msk [vmem:[#allocation3 + $0x60] sm:$0xff] %vm398, 0.0
        %467 = vst.msk [vmem:[#allocation3 + $0x68] sm:$0xff] %vm398, 0.0
        %468 = vst.msk [vmem:[#allocation3 + $0x70] sm:$0x3] %vm401, 0.0
        %469 = vst.msk [vmem:[#allocation3 + $0x78] sm:$0xff] %vm398, 0.0
        %470 = vst.msk [vmem:[#allocation3 + $0x80] sm:$0xff] %vm398, 0.0
        %471 = vst.msk [vmem:[#allocation3 + $0x88] sm:$0x3] %vm401, 0.0
        %472 = vst.msk [vmem:[#allocation3 + $0x90] sm:$0xff] %vm398, 0.0
        %473 = vst.msk [vmem:[#allocation3 + $0x98] sm:$0xff] %vm398, 0.0
        %474 = vst.msk [vmem:[#allocation3 + $0xa0] sm:$0x3] %vm401, 0.0
        %475 = vst.msk [vmem:[#allocation3 + $0xa8] sm:$0xff] %vm398, 0.0
        %476 = vst.msk [vmem:[#allocation3 + $0xb0] sm:$0xff] %vm398, 0.0
        %477 = vst.msk [vmem:[#allocation3 + $0xb8] sm:$0x3] %vm401, 0.0
        %478 = vst.msk [vmem:[#allocation3 + $0xc0] sm:$0xff] %vm398, 0.0
        %479 = vst.msk [vmem:[#allocation3 + $0xc8] sm:$0xff] %vm398, 0.0
        %480 = vst.msk [vmem:[#allocation3 + $0xd0] sm:$0x3] %vm401, 0.0
        %481 = vst.msk [vmem:[#allocation3 + $0xd8] sm:$0xff] %vm398, 0.0
        %482 = vst.msk [vmem:[#allocation3 + $0xe0] sm:$0xff] %vm398, 0.0
        %483 = vst.msk [vmem:[#allocation3 + $0xe8] sm:$0x3] %vm401, 0.0
        %484 = vst.msk [vmem:[#allocation3 + $0xf0] sm:$0xff] %vm398, 0.0
        %485 = vst.msk [vmem:[#allocation3 + $0xf8] sm:$0xff] %vm398, 0.0
        %486 = vst.msk [vmem:[#allocation3 + $0x100] sm:$0x3] %vm401, 0.0
        %487 = vst.msk [vmem:[#allocation3 + $0x108] sm:$0xff] %vm398, 0.0
        %488 = vst.msk [vmem:[#allocation3 + $0x110] sm:$0xff] %vm398, 0.0
        %489 = vst.msk [vmem:[#allocation3 + $0x118] sm:$0x3] %vm401, 0.0
        %490 = vst.msk [vmem:[#allocation3 + $0x120] sm:$0xff] %vm398, 0.0
        %491 = vst.msk [vmem:[#allocation3 + $0x128] sm:$0xff] %vm398, 0.0
        %492 = vst.msk [vmem:[#allocation3 + $0x130] sm:$0x3] %vm401, 0.0
        %493 = vst.msk [vmem:[#allocation3 + $0x138] sm:$0xff] %vm398, 0.0
        %494 = vst.msk [vmem:[#allocation3 + $0x140] sm:$0xff] %vm398, 0.0
        %495 = vst.msk [vmem:[#allocation3 + $0x148] sm:$0x3] %vm401, 0.0
        %496 = vst.msk [vmem:[#allocation3 + $0x150] sm:$0xff] %vm398, 0.0
        %497 = vst.msk [vmem:[#allocation3 + $0x158] sm:$0xff] %vm398, 0.0
        %498 = vst.msk [vmem:[#allocation3 + $0x160] sm:$0x3] %vm401, 0.0
        %499 = vst.msk [vmem:[#allocation3 + $0x168] sm:$0xff] %vm398, 0.0
        %500 = vst.msk [vmem:[#allocation3 + $0x170] sm:$0xff] %vm398, 0.0
        %501 = vst.msk [vmem:[#allocation3 + $0x178] sm:$0x3] %vm401, 0.0
        %502 = vst.msk [vmem:[#allocation3 + $0x180] sm:$0xff] %vm398, 0.0
        %503 = vst.msk [vmem:[#allocation3 + $0x188] sm:$0xff] %vm398, 0.0
        %504 = vst.msk [vmem:[#allocation3 + $0x190] sm:$0x3] %vm401, 0.0
        %505 = vst.msk [vmem:[#allocation3 + $0x198] sm:$0xff] %vm398, 0.0
        %506 = vst.msk [vmem:[#allocation3 + $0x1a0] sm:$0xff] %vm398, 0.0
        %507 = vst.msk [vmem:[#allocation3 + $0x1a8] sm:$0x3] %vm401, 0.0
        %508 = vst.msk [vmem:[#allocation4] sm:$0xff] %vm398, 0.0
        %509 = vst.msk [vmem:[#allocation4 + $0x8] sm:$0xff] %vm398, 0.0
        %510 = vst.msk [vmem:[#allocation4 + $0x10] sm:$0x3] %vm401, 0.0
        %511 = vst.msk [vmem:[#allocation4 + $0x18] sm:$0xff] %vm398, 0.0
        %512 = vst.msk [vmem:[#allocation4 + $0x20] sm:$0xff] %vm398, 0.0
        %513 = vst.msk [vmem:[#allocation4 + $0x28] sm:$0x3] %vm401, 0.0
        %514 = vst.msk [vmem:[#allocation4 + $0x30] sm:$0xff] %vm398, 0.0
        %515 = vst.msk [vmem:[#allocation4 + $0x38] sm:$0xff] %vm398, 0.0
        %516 = vst.msk [vmem:[#allocation4 + $0x40] sm:$0x3] %vm401, 0.0
        %517 = vst.msk [vmem:[#allocation4 + $0x48] sm:$0xff] %vm398, 0.0
        %518 = vst.msk [vmem:[#allocation4 + $0x50] sm:$0xff] %vm398, 0.0
        %519 = vst.msk [vmem:[#allocation4 + $0x58] sm:$0x3] %vm401, 0.0
        %520 = vst.msk [vmem:[#allocation4 + $0x60] sm:$0xff] %vm398, 0.0
        %521 = vst.msk [vmem:[#allocation4 + $0x68] sm:$0xff] %vm398, 0.0
        %522 = vst.msk [vmem:[#allocation4 + $0x70] sm:$0x3] %vm401, 0.0
        %523 = vst.msk [vmem:[#allocation4 + $0x78] sm:$0xff] %vm398, 0.0
        %524 = vst.msk [vmem:[#allocation4 + $0x80] sm:$0xff] %vm398, 0.0
        %525 = vst.msk [vmem:[#allocation4 + $0x88] sm:$0x3] %vm401, 0.0
        %526 = vst.msk [vmem:[#allocation4 + $0x90] sm:$0xff] %vm398, 0.0
        %527 = vst.msk [vmem:[#allocation4 + $0x98] sm:$0xff] %vm398, 0.0
        %528 = vst.msk [vmem:[#allocation4 + $0xa0] sm:$0x3] %vm401, 0.0
        %529 = vst.msk [vmem:[#allocation4 + $0xa8] sm:$0xff] %vm398, 0.0
        %530 = vst.msk [vmem:[#allocation4 + $0xb0] sm:$0xff] %vm398, 0.0
        %531 = vst.msk [vmem:[#allocation4 + $0xb8] sm:$0x3] %vm401, 0.0
        %532 = vst.msk [vmem:[#allocation4 + $0xc0] sm:$0xff] %vm398, 0.0
        %533 = vst.msk [vmem:[#allocation4 + $0xc8] sm:$0xff] %vm398, 0.0
        %534 = vst.msk [vmem:[#allocation4 + $0xd0] sm:$0x3] %vm401, 0.0
        %535 = vst.msk [vmem:[#allocation4 + $0xd8] sm:$0xff] %vm398, 0.0
        %536 = vst.msk [vmem:[#allocation4 + $0xe0] sm:$0xff] %vm398, 0.0
        %537 = vst.msk [vmem:[#allocation4 + $0xe8] sm:$0x3] %vm401, 0.0
        %538 = vst.msk [vmem:[#allocation4 + $0xf0] sm:$0xff] %vm398, 0.0
        %539 = vst.msk [vmem:[#allocation4 + $0xf8] sm:$0xff] %vm398, 0.0
        %540 = vst.msk [vmem:[#allocation4 + $0x100] sm:$0x3] %vm401, 0.0
        %541 = vst.msk [vmem:[#allocation4 + $0x108] sm:$0xff] %vm398, 0.0
        %542 = vst.msk [vmem:[#allocation4 + $0x110] sm:$0xff] %vm398, 0.0
        %543 = vst.msk [vmem:[#allocation4 + $0x118] sm:$0x3] %vm401, 0.0
        %544 = vst.msk [vmem:[#allocation4 + $0x120] sm:$0xff] %vm398, 0.0
        %545 = vst.msk [vmem:[#allocation4 + $0x128] sm:$0xff] %vm398, 0.0
        %546 = vst.msk [vmem:[#allocation4 + $0x130] sm:$0x3] %vm401, 0.0
        %547 = vst.msk [vmem:[#allocation4 + $0x138] sm:$0xff] %vm398, 0.0
        %548 = vst.msk [vmem:[#allocation4 + $0x140] sm:$0xff] %vm398, 0.0
        %549 = vst.msk [vmem:[#allocation4 + $0x148] sm:$0x3] %vm401, 0.0
        %550 = vst.msk [vmem:[#allocation4 + $0x150] sm:$0xff] %vm398, 0.0
        %551 = vst.msk [vmem:[#allocation4 + $0x158] sm:$0xff] %vm398, 0.0
        %552 = vst.msk [vmem:[#allocation4 + $0x160] sm:$0x3] %vm401, 0.0
        %553 = vst.msk [vmem:[#allocation4 + $0x168] sm:$0xff] %vm398, 0.0
        %554 = vst.msk [vmem:[#allocation4 + $0x170] sm:$0xff] %vm398, 0.0
        %555 = vst.msk [vmem:[#allocation4 + $0x178] sm:$0x3] %vm401, 0.0
        %556 = vst.msk [vmem:[#allocation4 + $0x180] sm:$0xff] %vm398, 0.0
        %557 = vst.msk [vmem:[#allocation4 + $0x188] sm:$0xff] %vm398, 0.0
        %558 = vst.msk [vmem:[#allocation4 + $0x190] sm:$0x3] %vm401, 0.0
        %559 = vst.msk [vmem:[#allocation4 + $0x198] sm:$0xff] %vm398, 0.0
        %560 = vst.msk [vmem:[#allocation4 + $0x1a0] sm:$0xff] %vm398, 0.0
        %561 = vst.msk [vmem:[#allocation4 + $0x1a8] sm:$0x3] %vm401, 0.0
        %vm562 = vcmask 24576
        %563 = vst.msk [vmem:[#allocation7] sm:$0x1] %vm562, 0.0
        %564 = vst.msk [vmem:[#allocation8] sm:$0x1] %vm562, 0.0
        %565 = vst.msk [vmem:[#allocation9] sm:$0x1] %vm562, 0.0
        %566 = vst.msk [vmem:[#allocation10] sm:$0x1] %vm562, 0.0
      $region64: #{up_step.1} parent=59 // pred_fallthru
        _
      // Predicated region
      $region65: #{up_step.1} parent=59 // pred_check
        %p567 = pneg %p392
      $region66: #{up_step.1} parent=59 // pred_check_branch
        %569 = sbr.rel (%p567) target = $region68
      $region67: #{up_step.1} parent=59 // pred_region
        %v570 = vld [vmem:[%s381] sm:$0xff]
        %v571 = vld [vmem:[%s381 + $0x8] sm:$0xff]
        %v572 = vld [vmem:[%s381 + $0x18] sm:$0xff]
        %v573 = vld [vmem:[%s381 + $0x20] sm:$0xff]
        %v574 = vld [vmem:[%s381 + $0x30] sm:$0xff]
        %v575 = vld [vmem:[%s381 + $0x38] sm:$0xff]
        %v576 = vld [vmem:[%s381 + $0x48] sm:$0xff]
        %v577 = vld [vmem:[%s381 + $0x50] sm:$0xff]
        %v578 = vld [vmem:[%s381 + $0x60] sm:$0xff]
        %v579 = vld [vmem:[%s381 + $0x68] sm:$0xff]
        %v580 = vld [vmem:[%s381 + $0x78] sm:$0xff]
        %v581 = vld [vmem:[%s381 + $0x80] sm:$0xff]
        %v582 = vld [vmem:[%s381 + $0x90] sm:$0xff]
        %v583 = vld [vmem:[%s381 + $0x98] sm:$0xff]
        %v584 = vld [vmem:[%s381 + $0xa8] sm:$0xff]
        %v585 = vld [vmem:[%s381 + $0xb0] sm:$0xff]
        %v586 = vld [vmem:[%s381 + $0xc0] sm:$0xff]
        %v587 = vld [vmem:[%s381 + $0xc8] sm:$0xff]
        %v588 = vld [vmem:[%s381 + $0xd8] sm:$0xff]
        %v589 = vld [vmem:[%s381 + $0xe0] sm:$0xff]
        %v590 = vld [vmem:[%s381 + $0xf0] sm:$0xff]
        %v591 = vld [vmem:[%s381 + $0xf8] sm:$0xff]
        %v592 = vld [vmem:[%s381 + $0x108] sm:$0xff]
        %v593 = vld [vmem:[%s381 + $0x110] sm:$0xff]
        %v594 = vld [vmem:[%s381 + $0x120] sm:$0xff]
        %v595 = vld [vmem:[%s381 + $0x128] sm:$0xff]
        %v596 = vld [vmem:[%s381 + $0x138] sm:$0xff]
        %v597 = vld [vmem:[%s381 + $0x140] sm:$0xff]
        %v598 = vld [vmem:[%s381 + $0x150] sm:$0xff]
        %v599 = vld [vmem:[%s381 + $0x158] sm:$0xff]
        %v600 = vld [vmem:[%s381 + $0x168] sm:$0xff]
        %v601 = vld [vmem:[%s381 + $0x170] sm:$0xff]
        %v602 = vld [vmem:[%s381 + $0x1] sm:$0xff]
        %v603 = vld [vmem:[%s381 + $0x9] sm:$0xff]
        %v604 = vld [vmem:[%s381 + $0x19] sm:$0xff]
        %v605 = vld [vmem:[%s381 + $0x21] sm:$0xff]
        %v606 = vld [vmem:[%s381 + $0x31] sm:$0xff]
        %v607 = vld [vmem:[%s381 + $0x39] sm:$0xff]
        %v608 = vld [vmem:[%s381 + $0x49] sm:$0xff]
        %v609 = vld [vmem:[%s381 + $0x51] sm:$0xff]
        %v610 = vld [vmem:[%s381 + $0x61] sm:$0xff]
        %v611 = vld [vmem:[%s381 + $0x69] sm:$0xff]
        %v612 = vld [vmem:[%s381 + $0x79] sm:$0xff]
        %v613 = vld [vmem:[%s381 + $0x81] sm:$0xff]
        %v614 = vld [vmem:[%s381 + $0x91] sm:$0xff]
        %v615 = vld [vmem:[%s381 + $0x99] sm:$0xff]
        %v616 = vld [vmem:[%s381 + $0xa9] sm:$0xff]
        %v617 = vld [vmem:[%s381 + $0xb1] sm:$0xff]
        %v618 = vld [vmem:[%s381 + $0xc1] sm:$0xff]
        %v619 = vld [vmem:[%s381 + $0xc9] sm:$0xff]
        %v620 = vld [vmem:[%s381 + $0xd9] sm:$0xff]
        %v621 = vld [vmem:[%s381 + $0xe1] sm:$0xff]
        %v622 = vld [vmem:[%s381 + $0xf1] sm:$0xff]
        %v623 = vld [vmem:[%s381 + $0xf9] sm:$0xff]
        %v624 = vld [vmem:[%s381 + $0x109] sm:$0xff]
        %v625 = vld [vmem:[%s381 + $0x111] sm:$0xff]
        %v626 = vld [vmem:[%s381 + $0x121] sm:$0xff]
        %v627 = vld [vmem:[%s381 + $0x129] sm:$0xff]
        %v628 = vld [vmem:[%s381 + $0x139] sm:$0xff]
        %v629 = vld [vmem:[%s381 + $0x141] sm:$0xff]
        %v630 = vld [vmem:[%s381 + $0x151] sm:$0xff]
        %v631 = vld [vmem:[%s381 + $0x159] sm:$0xff]
        %v632 = vld [vmem:[%s381 + $0x169] sm:$0xff]
        %v633 = vld [vmem:[%s381 + $0x171] sm:$0xff]
        %s634 = scalar_lea.vmem %s381, 24
        %v635 = vld [vmem:[%s634] sm:$0xff]
        %v636 = vld [vmem:[%s634 + $0x8] sm:$0xff]
        %v637 = vld [vmem:[%s634 + $0x18] sm:$0xff]
        %v638 = vld [vmem:[%s634 + $0x20] sm:$0xff]
        %v639 = vld [vmem:[%s634 + $0x30] sm:$0xff]
        %v640 = vld [vmem:[%s634 + $0x38] sm:$0xff]
        %v641 = vld [vmem:[%s634 + $0x48] sm:$0xff]
        %v642 = vld [vmem:[%s634 + $0x50] sm:$0xff]
        %v643 = vld [vmem:[%s634 + $0x60] sm:$0xff]
        %v644 = vld [vmem:[%s634 + $0x68] sm:$0xff]
        %v645 = vld [vmem:[%s634 + $0x78] sm:$0xff]
        %v646 = vld [vmem:[%s634 + $0x80] sm:$0xff]
        %v647 = vld [vmem:[%s634 + $0x90] sm:$0xff]
        %v648 = vld [vmem:[%s634 + $0x98] sm:$0xff]
        %v649 = vld [vmem:[%s634 + $0xa8] sm:$0xff]
        %v650 = vld [vmem:[%s634 + $0xb0] sm:$0xff]
        %v651 = vld [vmem:[%s634 + $0xc0] sm:$0xff]
        %v652 = vld [vmem:[%s634 + $0xc8] sm:$0xff]
        %v653 = vld [vmem:[%s634 + $0xd8] sm:$0xff]
        %v654 = vld [vmem:[%s634 + $0xe0] sm:$0xff]
        %v655 = vld [vmem:[%s634 + $0xf0] sm:$0xff]
        %v656 = vld [vmem:[%s634 + $0xf8] sm:$0xff]
        %v657 = vld [vmem:[%s634 + $0x108] sm:$0xff]
        %v658 = vld [vmem:[%s634 + $0x110] sm:$0xff]
        %v659 = vld [vmem:[%s634 + $0x120] sm:$0xff]
        %v660 = vld [vmem:[%s634 + $0x128] sm:$0xff]
        %v661 = vld [vmem:[%s634 + $0x138] sm:$0xff]
        %v662 = vld [vmem:[%s634 + $0x140] sm:$0xff]
        %v663 = vld [vmem:[%s634 + $0x150] sm:$0xff]
        %v664 = vld [vmem:[%s634 + $0x158] sm:$0xff]
        %v665 = vld [vmem:[%s634 + $0x168] sm:$0xff]
        %v666 = vld [vmem:[%s634 + $0x170] sm:$0xff]
        %v667 = vld [vmem:[%s634 + $0x1] sm:$0xff]
        %v668 = vld [vmem:[%s634 + $0x9] sm:$0xff]
        %v669 = vld [vmem:[%s634 + $0x19] sm:$0xff]
        %v670 = vld [vmem:[%s634 + $0x21] sm:$0xff]
        %v671 = vld [vmem:[%s634 + $0x31] sm:$0xff]
        %v672 = vld [vmem:[%s634 + $0x39] sm:$0xff]
        %v673 = vld [vmem:[%s634 + $0x49] sm:$0xff]
        %v674 = vld [vmem:[%s634 + $0x51] sm:$0xff]
        %v675 = vld [vmem:[%s634 + $0x61] sm:$0xff]
        %v676 = vld [vmem:[%s634 + $0x69] sm:$0xff]
        %v677 = vld [vmem:[%s634 + $0x79] sm:$0xff]
        %v678 = vld [vmem:[%s634 + $0x81] sm:$0xff]
        %v679 = vld [vmem:[%s634 + $0x91] sm:$0xff]
        %v680 = vld [vmem:[%s634 + $0x99] sm:$0xff]
        %v681 = vld [vmem:[%s634 + $0xa9] sm:$0xff]
        %v682 = vld [vmem:[%s634 + $0xb1] sm:$0xff]
        %v683 = vld [vmem:[%s634 + $0xc1] sm:$0xff]
        %v684 = vld [vmem:[%s634 + $0xc9] sm:$0xff]
        %v685 = vld [vmem:[%s634 + $0xd9] sm:$0xff]
        %v686 = vld [vmem:[%s634 + $0xe1] sm:$0xff]
        %v687 = vld [vmem:[%s634 + $0xf1] sm:$0xff]
        %v688 = vld [vmem:[%s634 + $0xf9] sm:$0xff]
        %v689 = vld [vmem:[%s634 + $0x109] sm:$0xff]
        %v690 = vld [vmem:[%s634 + $0x111] sm:$0xff]
        %v691 = vld [vmem:[%s634 + $0x121] sm:$0xff]
        %v692 = vld [vmem:[%s634 + $0x129] sm:$0xff]
        %v693 = vld [vmem:[%s634 + $0x139] sm:$0xff]
        %v694 = vld [vmem:[%s634 + $0x141] sm:$0xff]
        %v695 = vld [vmem:[%s634 + $0x151] sm:$0xff]
        %v696 = vld [vmem:[%s634 + $0x159] sm:$0xff]
        %v697 = vld [vmem:[%s634 + $0x169] sm:$0xff]
        %v698 = vld [vmem:[%s634 + $0x171] sm:$0xff]
        %731 = vrot.lane.b32.xlu0 %v602, 8
        %v732 = vpop.permute.xlu0 %731
        %733 = vrot.lane.b32.xlu0 %v603, 8
        %v734 = vpop.permute.xlu0 %733
        %735 = vrot.lane.b32.xlu0 %v604, 8
        %v736 = vpop.permute.xlu0 %735
        %737 = vrot.lane.b32.xlu0 %v605, 8
        %v738 = vpop.permute.xlu0 %737
        %739 = vrot.lane.b32.xlu0 %v606, 8
        %v740 = vpop.permute.xlu0 %739
        %741 = vrot.lane.b32.xlu0 %v607, 8
        %v742 = vpop.permute.xlu0 %741
        %743 = vrot.lane.b32.xlu0 %v608, 8
        %v744 = vpop.permute.xlu0 %743
        %745 = vrot.lane.b32.xlu0 %v609, 8
        %v746 = vpop.permute.xlu0 %745
        %747 = vrot.lane.b32.xlu0 %v610, 8
        %v748 = vpop.permute.xlu0 %747
        %749 = vrot.lane.b32.xlu0 %v611, 8
        %v750 = vpop.permute.xlu0 %749
        %751 = vrot.lane.b32.xlu0 %v612, 8
        %v752 = vpop.permute.xlu0 %751
        %753 = vrot.lane.b32.xlu0 %v613, 8
        %v754 = vpop.permute.xlu0 %753
        %755 = vrot.lane.b32.xlu0 %v614, 8
        %v756 = vpop.permute.xlu0 %755
        %757 = vrot.lane.b32.xlu0 %v615, 8
        %v758 = vpop.permute.xlu0 %757
        %759 = vrot.lane.b32.xlu0 %v616, 8
        %v760 = vpop.permute.xlu0 %759
        %761 = vrot.lane.b32.xlu0 %v617, 8
        %v762 = vpop.permute.xlu0 %761
        %763 = vrot.lane.b32.xlu0 %v618, 8
        %v764 = vpop.permute.xlu0 %763
        %765 = vrot.lane.b32.xlu0 %v619, 8
        %v766 = vpop.permute.xlu0 %765
        %767 = vrot.lane.b32.xlu0 %v620, 8
        %v768 = vpop.permute.xlu0 %767
        %769 = vrot.lane.b32.xlu0 %v621, 8
        %v770 = vpop.permute.xlu0 %769
        %771 = vrot.lane.b32.xlu0 %v622, 8
        %v772 = vpop.permute.xlu0 %771
        %773 = vrot.lane.b32.xlu0 %v623, 8
        %v774 = vpop.permute.xlu0 %773
        %775 = vrot.lane.b32.xlu0 %v624, 8
        %v776 = vpop.permute.xlu0 %775
        %777 = vrot.lane.b32.xlu0 %v625, 8
        %v778 = vpop.permute.xlu0 %777
        %779 = vrot.lane.b32.xlu0 %v626, 8
        %v780 = vpop.permute.xlu0 %779
        %781 = vrot.lane.b32.xlu0 %v627, 8
        %v782 = vpop.permute.xlu0 %781
        %783 = vrot.lane.b32.xlu0 %v628, 8
        %v784 = vpop.permute.xlu0 %783
        %785 = vrot.lane.b32.xlu0 %v629, 8
        %v786 = vpop.permute.xlu0 %785
        %787 = vrot.lane.b32.xlu0 %v630, 8
        %v788 = vpop.permute.xlu0 %787
        %789 = vrot.lane.b32.xlu0 %v631, 8
        %v790 = vpop.permute.xlu0 %789
        %791 = vrot.lane.b32.xlu0 %v632, 8
        %v792 = vpop.permute.xlu0 %791
        %793 = vrot.lane.b32.xlu0 %v633, 8
        %v794 = vpop.permute.xlu0 %793
        %859 = vrot.lane.b32.xlu0 %v635, 16
        %v860 = vpop.permute.xlu0 %859
        %861 = vrot.lane.b32.xlu0 %v636, 16
        %v862 = vpop.permute.xlu0 %861
        %863 = vrot.lane.b32.xlu0 %v637, 16
        %v864 = vpop.permute.xlu0 %863
        %865 = vrot.lane.b32.xlu0 %v638, 16
        %v866 = vpop.permute.xlu0 %865
        %867 = vrot.lane.b32.xlu0 %v639, 16
        %v868 = vpop.permute.xlu0 %867
        %869 = vrot.lane.b32.xlu0 %v640, 16
        %v870 = vpop.permute.xlu0 %869
        %871 = vrot.lane.b32.xlu0 %v641, 16
        %v872 = vpop.permute.xlu0 %871
        %873 = vrot.lane.b32.xlu0 %v642, 16
        %v874 = vpop.permute.xlu0 %873
        %875 = vrot.lane.b32.xlu0 %v643, 16
        %v876 = vpop.permute.xlu0 %875
        %877 = vrot.lane.b32.xlu0 %v644, 16
        %v878 = vpop.permute.xlu0 %877
        %879 = vrot.lane.b32.xlu0 %v645, 16
        %v880 = vpop.permute.xlu0 %879
        %881 = vrot.lane.b32.xlu0 %v646, 16
        %v882 = vpop.permute.xlu0 %881
        %883 = vrot.lane.b32.xlu0 %v647, 16
        %v884 = vpop.permute.xlu0 %883
        %885 = vrot.lane.b32.xlu0 %v648, 16
        %v886 = vpop.permute.xlu0 %885
        %887 = vrot.lane.b32.xlu0 %v649, 16
        %v888 = vpop.permute.xlu0 %887
        %889 = vrot.lane.b32.xlu0 %v650, 16
        %v890 = vpop.permute.xlu0 %889
        %891 = vrot.lane.b32.xlu0 %v651, 16
        %v892 = vpop.permute.xlu0 %891
        %893 = vrot.lane.b32.xlu0 %v652, 16
        %v894 = vpop.permute.xlu0 %893
        %895 = vrot.lane.b32.xlu0 %v653, 16
        %v896 = vpop.permute.xlu0 %895
        %897 = vrot.lane.b32.xlu0 %v654, 16
        %v898 = vpop.permute.xlu0 %897
        %899 = vrot.lane.b32.xlu0 %v655, 16
        %v900 = vpop.permute.xlu0 %899
        %901 = vrot.lane.b32.xlu0 %v656, 16
        %v902 = vpop.permute.xlu0 %901
        %903 = vrot.lane.b32.xlu0 %v657, 16
        %v904 = vpop.permute.xlu0 %903
        %905 = vrot.lane.b32.xlu0 %v658, 16
        %v906 = vpop.permute.xlu0 %905
        %907 = vrot.lane.b32.xlu0 %v659, 16
        %v908 = vpop.permute.xlu0 %907
        %909 = vrot.lane.b32.xlu0 %v660, 16
        %v910 = vpop.permute.xlu0 %909
        %911 = vrot.lane.b32.xlu0 %v661, 16
        %v912 = vpop.permute.xlu0 %911
        %913 = vrot.lane.b32.xlu0 %v662, 16
        %v914 = vpop.permute.xlu0 %913
        %915 = vrot.lane.b32.xlu0 %v663, 16
        %v916 = vpop.permute.xlu0 %915
        %917 = vrot.lane.b32.xlu0 %v664, 16
        %v918 = vpop.permute.xlu0 %917
        %919 = vrot.lane.b32.xlu0 %v665, 16
        %v920 = vpop.permute.xlu0 %919
        %921 = vrot.lane.b32.xlu0 %v666, 16
        %v922 = vpop.permute.xlu0 %921
        %987 = vrot.lane.b32.xlu0 %v667, 24
        %v988 = vpop.permute.xlu0 %987
        %989 = vrot.lane.b32.xlu0 %v668, 24
        %v990 = vpop.permute.xlu0 %989
        %991 = vrot.lane.b32.xlu0 %v669, 24
        %v992 = vpop.permute.xlu0 %991
        %993 = vrot.lane.b32.xlu0 %v670, 24
        %v994 = vpop.permute.xlu0 %993
        %995 = vrot.lane.b32.xlu0 %v671, 24
        %v996 = vpop.permute.xlu0 %995
        %997 = vrot.lane.b32.xlu0 %v672, 24
        %v998 = vpop.permute.xlu0 %997
        %999 = vrot.lane.b32.xlu0 %v673, 24
        %v1000 = vpop.permute.xlu0 %999
        %1001 = vrot.lane.b32.xlu0 %v674, 24
        %v1002 = vpop.permute.xlu0 %1001
        %1003 = vrot.lane.b32.xlu0 %v675, 24
        %v1004 = vpop.permute.xlu0 %1003
        %1005 = vrot.lane.b32.xlu0 %v676, 24
        %v1006 = vpop.permute.xlu0 %1005
        %1007 = vrot.lane.b32.xlu0 %v677, 24
        %v1008 = vpop.permute.xlu0 %1007
        %1009 = vrot.lane.b32.xlu0 %v678, 24
        %v1010 = vpop.permute.xlu0 %1009
        %1011 = vrot.lane.b32.xlu0 %v679, 24
        %v1012 = vpop.permute.xlu0 %1011
        %1013 = vrot.lane.b32.xlu0 %v680, 24
        %v1014 = vpop.permute.xlu0 %1013
        %1015 = vrot.lane.b32.xlu0 %v681, 24
        %v1016 = vpop.permute.xlu0 %1015
        %1017 = vrot.lane.b32.xlu0 %v682, 24
        %v1018 = vpop.permute.xlu0 %1017
        %1019 = vrot.lane.b32.xlu0 %v683, 24
        %v1020 = vpop.permute.xlu0 %1019
        %1021 = vrot.lane.b32.xlu0 %v684, 24
        %v1022 = vpop.permute.xlu0 %1021
        %1023 = vrot.lane.b32.xlu0 %v685, 24
        %v1024 = vpop.permute.xlu0 %1023
        %1025 = vrot.lane.b32.xlu0 %v686, 24
        %v1026 = vpop.permute.xlu0 %1025
        %1027 = vrot.lane.b32.xlu0 %v687, 24
        %v1028 = vpop.permute.xlu0 %1027
        %1029 = vrot.lane.b32.xlu0 %v688, 24
        %v1030 = vpop.permute.xlu0 %1029
        %1031 = vrot.lane.b32.xlu0 %v689, 24
        %v1032 = vpop.permute.xlu0 %1031
        %1033 = vrot.lane.b32.xlu0 %v690, 24
        %v1034 = vpop.permute.xlu0 %1033
        %1035 = vrot.lane.b32.xlu0 %v691, 24
        %v1036 = vpop.permute.xlu0 %1035
        %1037 = vrot.lane.b32.xlu0 %v692, 24
        %v1038 = vpop.permute.xlu0 %1037
        %1039 = vrot.lane.b32.xlu0 %v693, 24
        %v1040 = vpop.permute.xlu0 %1039
        %1041 = vrot.lane.b32.xlu0 %v694, 24
        %v1042 = vpop.permute.xlu0 %1041
        %1043 = vrot.lane.b32.xlu0 %v695, 24
        %v1044 = vpop.permute.xlu0 %1043
        %1045 = vrot.lane.b32.xlu0 %v696, 24
        %v1046 = vpop.permute.xlu0 %1045
        %1047 = vrot.lane.b32.xlu0 %v697, 24
        %v1048 = vpop.permute.xlu0 %1047
        %1049 = vrot.lane.b32.xlu0 %v698, 24
        %v1050 = vpop.permute.xlu0 %1049
        %vm1083 = vcmask 64512
        %v1084 = vsel %vm1083, %v570, %v732
        %v1085 = vsel %vm1083, %v571, %v734
        %v1086 = vsel %vm1083, %v572, %v736
        %v1087 = vsel %vm1083, %v573, %v738
        %v1088 = vsel %vm1083, %v574, %v740
        %v1089 = vsel %vm1083, %v575, %v742
        %v1090 = vsel %vm1083, %v576, %v744
        %v1091 = vsel %vm1083, %v577, %v746
        %v1092 = vsel %vm1083, %v578, %v748
        %v1093 = vsel %vm1083, %v579, %v750
        %v1094 = vsel %vm1083, %v580, %v752
        %v1095 = vsel %vm1083, %v581, %v754
        %v1096 = vsel %vm1083, %v582, %v756
        %v1097 = vsel %vm1083, %v583, %v758
        %v1098 = vsel %vm1083, %v584, %v760
        %v1099 = vsel %vm1083, %v585, %v762
        %v1100 = vsel %vm1083, %v586, %v764
        %v1101 = vsel %vm1083, %v587, %v766
        %v1102 = vsel %vm1083, %v588, %v768
        %v1103 = vsel %vm1083, %v589, %v770
        %v1104 = vsel %vm1083, %v590, %v772
        %v1105 = vsel %vm1083, %v591, %v774
        %v1106 = vsel %vm1083, %v592, %v776
        %v1107 = vsel %vm1083, %v593, %v778
        %v1108 = vsel %vm1083, %v594, %v780
        %v1109 = vsel %vm1083, %v595, %v782
        %v1110 = vsel %vm1083, %v596, %v784
        %v1111 = vsel %vm1083, %v597, %v786
        %v1112 = vsel %vm1083, %v598, %v788
        %v1113 = vsel %vm1083, %v599, %v790
        %v1114 = vsel %vm1083, %v600, %v792
        %v1115 = vsel %vm1083, %v601, %v794
        %vm1116 = vcmask 130048
        %v1117 = vsel %vm1116, %v1084, %v860
        %v1118 = vsel %vm1116, %v1085, %v862
        %v1119 = vsel %vm1116, %v1086, %v864
        %v1120 = vsel %vm1116, %v1087, %v866
        %v1121 = vsel %vm1116, %v1088, %v868
        %v1122 = vsel %vm1116, %v1089, %v870
        %v1123 = vsel %vm1116, %v1090, %v872
        %v1124 = vsel %vm1116, %v1091, %v874
        %v1125 = vsel %vm1116, %v1092, %v876
        %v1126 = vsel %vm1116, %v1093, %v878
        %v1127 = vsel %vm1116, %v1094, %v880
        %v1128 = vsel %vm1116, %v1095, %v882
        %v1129 = vsel %vm1116, %v1096, %v884
        %v1130 = vsel %vm1116, %v1097, %v886
        %v1131 = vsel %vm1116, %v1098, %v888
        %v1132 = vsel %vm1116, %v1099, %v890
        %v1133 = vsel %vm1116, %v1100, %v892
        %v1134 = vsel %vm1116, %v1101, %v894
        %v1135 = vsel %vm1116, %v1102, %v896
        %v1136 = vsel %vm1116, %v1103, %v898
        %v1137 = vsel %vm1116, %v1104, %v900
        %v1138 = vsel %vm1116, %v1105, %v902
        %v1139 = vsel %vm1116, %v1106, %v904
        %v1140 = vsel %vm1116, %v1107, %v906
        %v1141 = vsel %vm1116, %v1108, %v908
        %v1142 = vsel %vm1116, %v1109, %v910
        %v1143 = vsel %vm1116, %v1110, %v912
        %v1144 = vsel %vm1116, %v1111, %v914
        %v1145 = vsel %vm1116, %v1112, %v916
        %v1146 = vsel %vm1116, %v1113, %v918
        %v1147 = vsel %vm1116, %v1114, %v920
        %v1148 = vsel %vm1116, %v1115, %v922
        %vm1149 = vcmask 195584
        %v1150 = vsel %vm1149, %v1117, %v988
        %v1151 = vsel %vm1149, %v1118, %v990
        %v1152 = vsel %vm1149, %v1119, %v992
        %v1153 = vsel %vm1149, %v1120, %v994
        %v1154 = vsel %vm1149, %v1121, %v996
        %v1155 = vsel %vm1149, %v1122, %v998
        %v1156 = vsel %vm1149, %v1123, %v1000
        %v1157 = vsel %vm1149, %v1124, %v1002
        %v1158 = vsel %vm1149, %v1125, %v1004
        %v1159 = vsel %vm1149, %v1126, %v1006
        %v1160 = vsel %vm1149, %v1127, %v1008
        %v1161 = vsel %vm1149, %v1128, %v1010
        %v1162 = vsel %vm1149, %v1129, %v1012
        %v1163 = vsel %vm1149, %v1130, %v1014
        %v1164 = vsel %vm1149, %v1131, %v1016
        %v1165 = vsel %vm1149, %v1132, %v1018
        %v1166 = vsel %vm1149, %v1133, %v1020
        %v1167 = vsel %vm1149, %v1134, %v1022
        %v1168 = vsel %vm1149, %v1135, %v1024
        %v1169 = vsel %vm1149, %v1136, %v1026
        %v1170 = vsel %vm1149, %v1137, %v1028
        %v1171 = vsel %vm1149, %v1138, %v1030
        %v1172 = vsel %vm1149, %v1139, %v1032
        %v1173 = vsel %vm1149, %v1140, %v1034
        %v1174 = vsel %vm1149, %v1141, %v1036
        %v1175 = vsel %vm1149, %v1142, %v1038
        %v1176 = vsel %vm1149, %v1143, %v1040
        %v1177 = vsel %vm1149, %v1144, %v1042
        %v1178 = vsel %vm1149, %v1145, %v1044
        %v1179 = vsel %vm1149, %v1146, %v1046
        %v1180 = vsel %vm1149, %v1147, %v1048
        %v1181 = vsel %vm1149, %v1148, %v1050
        %v1182 = vld [vmem:[%s2] sm:$0xff]
        %v1183 = vld [vmem:[%s2 + $0x8] sm:$0xff]
        %v1184 = vld [vmem:[%s2 + $0x10] sm:$0xff]
        %v1185 = vld [vmem:[%s2 + $0x18] sm:$0xff]
        %v1186 = vld [vmem:[%s3] sm:$0x1]
        %v1188 = vperm.slane %v1186, 0
        %vm1190 = vcmask 261120
        %v1192 = vsel %vm1190, %v1150, 0
        %v1195 = vsel %vm1190, %v1151, 0
        %v1198 = vsel %vm1190, %v1152, 0
        %v1201 = vsel %vm1190, %v1153, 0
        %v1204 = vsel %vm1190, %v1154, 0
        %v1207 = vsel %vm1190, %v1155, 0
        %v1210 = vsel %vm1190, %v1156, 0
        %v1213 = vsel %vm1190, %v1157, 0
        %v1216 = vsel %vm1190, %v1158, 0
        %v1219 = vsel %vm1190, %v1159, 0
        %v1222 = vsel %vm1190, %v1160, 0
        %v1225 = vsel %vm1190, %v1161, 0
        %v1228 = vsel %vm1190, %v1162, 0
        %v1231 = vsel %vm1190, %v1163, 0
        %v1234 = vsel %vm1190, %v1164, 0
        %v1237 = vsel %vm1190, %v1165, 0
        %v1240 = vsel %vm1190, %v1166, 0
        %v1243 = vsel %vm1190, %v1167, 0
        %v1246 = vsel %vm1190, %v1168, 0
        %v1249 = vsel %vm1190, %v1169, 0
        %v1252 = vsel %vm1190, %v1170, 0
        %v1255 = vsel %vm1190, %v1171, 0
        %v1258 = vsel %vm1190, %v1172, 0
        %v1261 = vsel %vm1190, %v1173, 0
        %v1264 = vsel %vm1190, %v1174, 0
        %v1267 = vsel %vm1190, %v1175, 0
        %v1270 = vsel %vm1190, %v1176, 0
        %v1273 = vsel %vm1190, %v1177, 0
        %v1276 = vsel %vm1190, %v1178, 0
        %v1279 = vsel %vm1190, %v1179, 0
        %v1282 = vsel %vm1190, %v1180, 0
        %v1285 = vsel %vm1190, %v1181, 0
        %1287 = vmatpush.msra.mxu0 0.0
        %1288 = vmatpush.msra.mxu0 0.0
        %1289 = vmatpush.msra.mxu0 0.0
        %1290 = vmatpush.msra.mxu0 0.0
        %1291 = vmatpush.msra.mxu0 0.0
        %1292 = vmatpush.msra.mxu0 0.0
        %1293 = vmatpush.msra.mxu0 0.0
        %1294 = vmatpush.msra.mxu0 0.0
        %1295 = vmatpush.msra.mxu0 0.0
        %1296 = vmatpush.msra.mxu0 0.0
        %1297 = vmatpush.msra.mxu0 0.0
        %1298 = vmatpush.msra.mxu0 0.0
        %1299 = vmatpush.msra.mxu0 %v1185
        %1300 = vmatpush.msra.mxu0 %v1184
        %1301 = vmatpush.msra.mxu0 %v1183
        %1302 = vmatpush.msra.mxu0 %v1182
        %1303 = vmatmul.f32.gmra.mxu0 %v1192
        %v1304 = vpop.f32.mrf.mxu0
        %v1305 = vadd.f32 %v1188, %v1304
        %1306 = vmatmul.f32.gmra.mxu0 %v1195
        %v1307 = vpop.f32.mrf.mxu0
        %v1308 = vadd.f32 %v1188, %v1307
        %1309 = vmatmul.f32.gmra.mxu0 %v1198
        %v1310 = vpop.f32.mrf.mxu0
        %v1311 = vadd.f32 %v1188, %v1310
        %1312 = vmatmul.f32.gmra.mxu0 %v1201
        %v1313 = vpop.f32.mrf.mxu0
        %v1314 = vadd.f32 %v1188, %v1313
        %1315 = vmatmul.f32.gmra.mxu0 %v1204
        %v1316 = vpop.f32.mrf.mxu0
        %v1317 = vadd.f32 %v1188, %v1316
        %1318 = vmatmul.f32.gmra.mxu0 %v1207
        %v1319 = vpop.f32.mrf.mxu0
        %v1320 = vadd.f32 %v1188, %v1319
        %1321 = vmatmul.f32.gmra.mxu0 %v1210
        %v1322 = vpop.f32.mrf.mxu0
        %v1323 = vadd.f32 %v1188, %v1322
        %1324 = vmatmul.f32.gmra.mxu0 %v1213
        %v1325 = vpop.f32.mrf.mxu0
        %v1326 = vadd.f32 %v1188, %v1325
        %1327 = vmatmul.f32.gmra.mxu0 %v1216
        %v1328 = vpop.f32.mrf.mxu0
        %v1329 = vadd.f32 %v1188, %v1328
        %1330 = vmatmul.f32.gmra.mxu0 %v1219
        %v1331 = vpop.f32.mrf.mxu0
        %v1332 = vadd.f32 %v1188, %v1331
        %1333 = vmatmul.f32.gmra.mxu0 %v1222
        %v1334 = vpop.f32.mrf.mxu0
        %v1335 = vadd.f32 %v1188, %v1334
        %1336 = vmatmul.f32.gmra.mxu0 %v1225
        %v1337 = vpop.f32.mrf.mxu0
        %v1338 = vadd.f32 %v1188, %v1337
        %1339 = vmatmul.f32.gmra.mxu0 %v1228
        %v1340 = vpop.f32.mrf.mxu0
        %v1341 = vadd.f32 %v1188, %v1340
        %1342 = vmatmul.f32.gmra.mxu0 %v1231
        %v1343 = vpop.f32.mrf.mxu0
        %v1344 = vadd.f32 %v1188, %v1343
        %1345 = vmatmul.f32.gmra.mxu0 %v1234
        %v1346 = vpop.f32.mrf.mxu0
        %v1347 = vadd.f32 %v1188, %v1346
        %1348 = vmatmul.f32.gmra.mxu0 %v1237
        %v1349 = vpop.f32.mrf.mxu0
        %v1350 = vadd.f32 %v1188, %v1349
        %1351 = vmatmul.f32.gmra.mxu0 %v1240
        %v1352 = vpop.f32.mrf.mxu0
        %v1353 = vadd.f32 %v1188, %v1352
        %1354 = vmatmul.f32.gmra.mxu0 %v1243
        %v1355 = vpop.f32.mrf.mxu0
        %v1356 = vadd.f32 %v1188, %v1355
        %1357 = vmatmul.f32.gmra.mxu0 %v1246
        %v1358 = vpop.f32.mrf.mxu0
        %v1359 = vadd.f32 %v1188, %v1358
        %1360 = vmatmul.f32.gmra.mxu0 %v1249
        %v1361 = vpop.f32.mrf.mxu0
        %v1362 = vadd.f32 %v1188, %v1361
        %1363 = vmatmul.f32.gmra.mxu0 %v1252
        %v1364 = vpop.f32.mrf.mxu0
        %v1365 = vadd.f32 %v1188, %v1364
        %1366 = vmatmul.f32.gmra.mxu0 %v1255
        %v1367 = vpop.f32.mrf.mxu0
        %v1368 = vadd.f32 %v1188, %v1367
        %1369 = vmatmul.f32.gmra.mxu0 %v1258
        %v1370 = vpop.f32.mrf.mxu0
        %v1371 = vadd.f32 %v1188, %v1370
        %1372 = vmatmul.f32.gmra.mxu0 %v1261
        %v1373 = vpop.f32.mrf.mxu0
        %v1374 = vadd.f32 %v1188, %v1373
        %1375 = vmatmul.f32.gmra.mxu0 %v1264
        %v1376 = vpop.f32.mrf.mxu0
        %v1377 = vadd.f32 %v1188, %v1376
        %1378 = vmatmul.f32.gmra.mxu0 %v1267
        %v1379 = vpop.f32.mrf.mxu0
        %v1380 = vadd.f32 %v1188, %v1379
        %1381 = vmatmul.f32.gmra.mxu0 %v1270
        %v1382 = vpop.f32.mrf.mxu0
        %v1383 = vadd.f32 %v1188, %v1382
        %1384 = vmatmul.f32.gmra.mxu0 %v1273
        %v1385 = vpop.f32.mrf.mxu0
        %v1386 = vadd.f32 %v1188, %v1385
        %1387 = vmatmul.f32.gmra.mxu0 %v1276
        %v1388 = vpop.f32.mrf.mxu0
        %v1389 = vadd.f32 %v1188, %v1388
        %1390 = vmatmul.f32.gmra.mxu0 %v1279
        %v1391 = vpop.f32.mrf.mxu0
        %v1392 = vadd.f32 %v1188, %v1391
        %1393 = vmatmul.f32.gmra.mxu0 %v1282
        %v1394 = vpop.f32.mrf.mxu0
        %v1395 = vadd.f32 %v1188, %v1394
        %1396 = vmatmul.f32.gmra.mxu0 %v1285
        %v1397 = vpop.f32.mrf.mxu0
        %v1398 = vadd.f32 %v1188, %v1397
        %1399 = vdwg.mxu0
        %v1400 = vld [vmem:[%s386] sm:$0xff]
        %v1401 = vld [vmem:[%s386 + $0x8] sm:$0xff]
        %v1402 = vld [vmem:[%s386 + $0x10] sm:$0xff]
        %v1403 = vld [vmem:[%s386 + $0x18] sm:$0xff]
        %v1404 = vld [vmem:[%s386 + $0x20] sm:$0xff]
        %v1405 = vld [vmem:[%s386 + $0x28] sm:$0xff]
        %v1406 = vld [vmem:[%s386 + $0x30] sm:$0xff]
        %v1407 = vld [vmem:[%s386 + $0x38] sm:$0xff]
        %v1408 = vld [vmem:[%s386 + $0x40] sm:$0xff]
        %v1409 = vld [vmem:[%s386 + $0x48] sm:$0xff]
        %v1410 = vld [vmem:[%s386 + $0x50] sm:$0xff]
        %v1411 = vld [vmem:[%s386 + $0x58] sm:$0xff]
        %v1412 = vld [vmem:[%s386 + $0x60] sm:$0xff]
        %v1413 = vld [vmem:[%s386 + $0x68] sm:$0xff]
        %v1414 = vld [vmem:[%s386 + $0x70] sm:$0xff]
        %v1415 = vld [vmem:[%s386 + $0x78] sm:$0xff]
        %v1416 = vld [vmem:[%s386 + $0x80] sm:$0xff]
        %v1417 = vld [vmem:[%s386 + $0x88] sm:$0xff]
        %v1418 = vld [vmem:[%s386 + $0x90] sm:$0xff]
        %v1419 = vld [vmem:[%s386 + $0x98] sm:$0xff]
        %v1420 = vld [vmem:[%s386 + $0xa0] sm:$0xff]
        %v1421 = vld [vmem:[%s386 + $0xa8] sm:$0xff]
        %v1422 = vld [vmem:[%s386 + $0xb0] sm:$0xff]
        %v1423 = vld [vmem:[%s386 + $0xb8] sm:$0xff]
        %v1424 = vld [vmem:[%s386 + $0xc0] sm:$0xff]
        %v1425 = vld [vmem:[%s386 + $0xc8] sm:$0xff]
        %v1426 = vld [vmem:[%s386 + $0xd0] sm:$0xff]
        %v1427 = vld [vmem:[%s386 + $0xd8] sm:$0xff]
        %v1428 = vld [vmem:[%s386 + $0xe0] sm:$0xff]
        %v1429 = vld [vmem:[%s386 + $0xe8] sm:$0xff]
        %v1430 = vld [vmem:[%s386 + $0xf0] sm:$0xff]
        %v1431 = vld [vmem:[%s386 + $0xf8] sm:$0xff]
        %s1432 = scalar_lea.vmem [#allocation2], 24
        %vm1433 = vcmask 31744
        %1434 = vst.msk [vmem:[%s1432 + $0x1] sm:$0xff] %vm1433, %v1400
        %1435 = vst.msk [vmem:[%s1432 + $0x9] sm:$0xff] %vm1433, %v1401
        %1436 = vst.msk [vmem:[%s1432 + $0x19] sm:$0xff] %vm1433, %v1402
        %1437 = vst.msk [vmem:[%s1432 + $0x21] sm:$0xff] %vm1433, %v1403
        %1438 = vst.msk [vmem:[%s1432 + $0x31] sm:$0xff] %vm1433, %v1404
        %1439 = vst.msk [vmem:[%s1432 + $0x39] sm:$0xff] %vm1433, %v1405
        %1440 = vst.msk [vmem:[%s1432 + $0x49] sm:$0xff] %vm1433, %v1406
        %1441 = vst.msk [vmem:[%s1432 + $0x51] sm:$0xff] %vm1433, %v1407
        %1442 = vst.msk [vmem:[%s1432 + $0x61] sm:$0xff] %vm1433, %v1408
        %1443 = vst.msk [vmem:[%s1432 + $0x69] sm:$0xff] %vm1433, %v1409
        %1444 = vst.msk [vmem:[%s1432 + $0x79] sm:$0xff] %vm1433, %v1410
        %1445 = vst.msk [vmem:[%s1432 + $0x81] sm:$0xff] %vm1433, %v1411
        %1446 = vst.msk [vmem:[%s1432 + $0x91] sm:$0xff] %vm1433, %v1412
        %1447 = vst.msk [vmem:[%s1432 + $0x99] sm:$0xff] %vm1433, %v1413
        %1448 = vst.msk [vmem:[%s1432 + $0xa9] sm:$0xff] %vm1433, %v1414
        %1449 = vst.msk [vmem:[%s1432 + $0xb1] sm:$0xff] %vm1433, %v1415
        %1450 = vst.msk [vmem:[%s1432 + $0xc1] sm:$0xff] %vm1433, %v1416
        %1451 = vst.msk [vmem:[%s1432 + $0xc9] sm:$0xff] %vm1433, %v1417
        %1452 = vst.msk [vmem:[%s1432 + $0xd9] sm:$0xff] %vm1433, %v1418
        %1453 = vst.msk [vmem:[%s1432 + $0xe1] sm:$0xff] %vm1433, %v1419
        %1454 = vst.msk [vmem:[%s1432 + $0xf1] sm:$0xff] %vm1433, %v1420
        %1455 = vst.msk [vmem:[%s1432 + $0xf9] sm:$0xff] %vm1433, %v1421
        %1456 = vst.msk [vmem:[%s1432 + $0x109] sm:$0xff] %vm1433, %v1422
        %1457 = vst.msk [vmem:[%s1432 + $0x111] sm:$0xff] %vm1433, %v1423
        %1458 = vst.msk [vmem:[%s1432 + $0x121] sm:$0xff] %vm1433, %v1424
        %1459 = vst.msk [vmem:[%s1432 + $0x129] sm:$0xff] %vm1433, %v1425
        %1460 = vst.msk [vmem:[%s1432 + $0x139] sm:$0xff] %vm1433, %v1426
        %1461 = vst.msk [vmem:[%s1432 + $0x141] sm:$0xff] %vm1433, %v1427
        %1462 = vst.msk [vmem:[%s1432 + $0x151] sm:$0xff] %vm1433, %v1428
        %1463 = vst.msk [vmem:[%s1432 + $0x159] sm:$0xff] %vm1433, %v1429
        %1464 = vst.msk [vmem:[%s1432 + $0x169] sm:$0xff] %vm1433, %v1430
        %1465 = vst.msk [vmem:[%s1432 + $0x171] sm:$0xff] %vm1433, %v1431
        %s1466 = scalar_lea.vmem [#allocation3], 24
        %1467 = vst.msk [vmem:[%s1466 + $0x1] sm:$0xff] %vm1433, %v1305
        %1468 = vst.msk [vmem:[%s1466 + $0x9] sm:$0xff] %vm1433, %v1308
        %1469 = vst.msk [vmem:[%s1466 + $0x19] sm:$0xff] %vm1433, %v1311
        %1470 = vst.msk [vmem:[%s1466 + $0x21] sm:$0xff] %vm1433, %v1314
        %1471 = vst.msk [vmem:[%s1466 + $0x31] sm:$0xff] %vm1433, %v1317
        %1472 = vst.msk [vmem:[%s1466 + $0x39] sm:$0xff] %vm1433, %v1320
        %1473 = vst.msk [vmem:[%s1466 + $0x49] sm:$0xff] %vm1433, %v1323
        %1474 = vst.msk [vmem:[%s1466 + $0x51] sm:$0xff] %vm1433, %v1326
        %1475 = vst.msk [vmem:[%s1466 + $0x61] sm:$0xff] %vm1433, %v1329
        %1476 = vst.msk [vmem:[%s1466 + $0x69] sm:$0xff] %vm1433, %v1332
        %1477 = vst.msk [vmem:[%s1466 + $0x79] sm:$0xff] %vm1433, %v1335
        %1478 = vst.msk [vmem:[%s1466 + $0x81] sm:$0xff] %vm1433, %v1338
        %1479 = vst.msk [vmem:[%s1466 + $0x91] sm:$0xff] %vm1433, %v1341
        %1480 = vst.msk [vmem:[%s1466 + $0x99] sm:$0xff] %vm1433, %v1344
        %1481 = vst.msk [vmem:[%s1466 + $0xa9] sm:$0xff] %vm1433, %v1347
        %1482 = vst.msk [vmem:[%s1466 + $0xb1] sm:$0xff] %vm1433, %v1350
        %1483 = vst.msk [vmem:[%s1466 + $0xc1] sm:$0xff] %vm1433, %v1353
        %1484 = vst.msk [vmem:[%s1466 + $0xc9] sm:$0xff] %vm1433, %v1356
        %1485 = vst.msk [vmem:[%s1466 + $0xd9] sm:$0xff] %vm1433, %v1359
        %1486 = vst.msk [vmem:[%s1466 + $0xe1] sm:$0xff] %vm1433, %v1362
        %1487 = vst.msk [vmem:[%s1466 + $0xf1] sm:$0xff] %vm1433, %v1365
        %1488 = vst.msk [vmem:[%s1466 + $0xf9] sm:$0xff] %vm1433, %v1368
        %1489 = vst.msk [vmem:[%s1466 + $0x109] sm:$0xff] %vm1433, %v1371
        %1490 = vst.msk [vmem:[%s1466 + $0x111] sm:$0xff] %vm1433, %v1374
        %1491 = vst.msk [vmem:[%s1466 + $0x121] sm:$0xff] %vm1433, %v1377
        %1492 = vst.msk [vmem:[%s1466 + $0x129] sm:$0xff] %vm1433, %v1380
        %1493 = vst.msk [vmem:[%s1466 + $0x139] sm:$0xff] %vm1433, %v1383
        %1494 = vst.msk [vmem:[%s1466 + $0x141] sm:$0xff] %vm1433, %v1386
        %1495 = vst.msk [vmem:[%s1466 + $0x151] sm:$0xff] %vm1433, %v1389
        %1496 = vst.msk [vmem:[%s1466 + $0x159] sm:$0xff] %vm1433, %v1392
        %1497 = vst.msk [vmem:[%s1466 + $0x169] sm:$0xff] %vm1433, %v1395
        %1498 = vst.msk [vmem:[%s1466 + $0x171] sm:$0xff] %vm1433, %v1398
        %v1499 = vld [vmem:[#allocation2] sm:$0xff]
        %v1500 = vld [vmem:[#allocation2 + $0x8] sm:$0xff]
        %v1501 = vld [vmem:[#allocation2 + $0x18] sm:$0xff]
        %v1502 = vld [vmem:[#allocation2 + $0x20] sm:$0xff]
        %v1503 = vld [vmem:[#allocation2 + $0x30] sm:$0xff]
        %v1504 = vld [vmem:[#allocation2 + $0x38] sm:$0xff]
        %v1505 = vld [vmem:[#allocation2 + $0x48] sm:$0xff]
        %v1506 = vld [vmem:[#allocation2 + $0x50] sm:$0xff]
        %v1507 = vld [vmem:[#allocation2 + $0x60] sm:$0xff]
        %v1508 = vld [vmem:[#allocation2 + $0x68] sm:$0xff]
        %v1509 = vld [vmem:[#allocation2 + $0x78] sm:$0xff]
        %v1510 = vld [vmem:[#allocation2 + $0x80] sm:$0xff]
        %v1511 = vld [vmem:[#allocation2 + $0x90] sm:$0xff]
        %v1512 = vld [vmem:[#allocation2 + $0x98] sm:$0xff]
        %v1513 = vld [vmem:[#allocation2 + $0xa8] sm:$0xff]
        %v1514 = vld [vmem:[#allocation2 + $0xb0] sm:$0xff]
        %v1515 = vld [vmem:[#allocation2 + $0xc0] sm:$0xff]
        %v1516 = vld [vmem:[#allocation2 + $0xc8] sm:$0xff]
        %v1517 = vld [vmem:[#allocation2 + $0xd8] sm:$0xff]
        %v1518 = vld [vmem:[#allocation2 + $0xe0] sm:$0xff]
        %v1519 = vld [vmem:[#allocation2 + $0xf0] sm:$0xff]
        %v1520 = vld [vmem:[#allocation2 + $0xf8] sm:$0xff]
        %v1521 = vld [vmem:[#allocation2 + $0x108] sm:$0xff]
        %v1522 = vld [vmem:[#allocation2 + $0x110] sm:$0xff]
        %v1523 = vld [vmem:[#allocation2 + $0x120] sm:$0xff]
        %v1524 = vld [vmem:[#allocation2 + $0x128] sm:$0xff]
        %v1525 = vld [vmem:[#allocation2 + $0x138] sm:$0xff]
        %v1526 = vld [vmem:[#allocation2 + $0x140] sm:$0xff]
        %v1527 = vld [vmem:[#allocation2 + $0x150] sm:$0xff]
        %v1528 = vld [vmem:[#allocation2 + $0x158] sm:$0xff]
        %v1529 = vld [vmem:[#allocation2 + $0x168] sm:$0xff]
        %v1530 = vld [vmem:[#allocation2 + $0x170] sm:$0xff]
        %v1531 = vld [vmem:[#allocation3] sm:$0xff]
        %v1532 = vld [vmem:[#allocation3 + $0x8] sm:$0xff]
        %v1533 = vld [vmem:[#allocation3 + $0x18] sm:$0xff]
        %v1534 = vld [vmem:[#allocation3 + $0x20] sm:$0xff]
        %v1535 = vld [vmem:[#allocation3 + $0x30] sm:$0xff]
        %v1536 = vld [vmem:[#allocation3 + $0x38] sm:$0xff]
        %v1537 = vld [vmem:[#allocation3 + $0x48] sm:$0xff]
        %v1538 = vld [vmem:[#allocation3 + $0x50] sm:$0xff]
        %v1539 = vld [vmem:[#allocation3 + $0x60] sm:$0xff]
        %v1540 = vld [vmem:[#allocation3 + $0x68] sm:$0xff]
        %v1541 = vld [vmem:[#allocation3 + $0x78] sm:$0xff]
        %v1542 = vld [vmem:[#allocation3 + $0x80] sm:$0xff]
        %v1543 = vld [vmem:[#allocation3 + $0x90] sm:$0xff]
        %v1544 = vld [vmem:[#allocation3 + $0x98] sm:$0xff]
        %v1545 = vld [vmem:[#allocation3 + $0xa8] sm:$0xff]
        %v1546 = vld [vmem:[#allocation3 + $0xb0] sm:$0xff]
        %v1547 = vld [vmem:[#allocation3 + $0xc0] sm:$0xff]
        %v1548 = vld [vmem:[#allocation3 + $0xc8] sm:$0xff]
        %v1549 = vld [vmem:[#allocation3 + $0xd8] sm:$0xff]
        %v1550 = vld [vmem:[#allocation3 + $0xe0] sm:$0xff]
        %v1551 = vld [vmem:[#allocation3 + $0xf0] sm:$0xff]
        %v1552 = vld [vmem:[#allocation3 + $0xf8] sm:$0xff]
        %v1553 = vld [vmem:[#allocation3 + $0x108] sm:$0xff]
        %v1554 = vld [vmem:[#allocation3 + $0x110] sm:$0xff]
        %v1555 = vld [vmem:[#allocation3 + $0x120] sm:$0xff]
        %v1556 = vld [vmem:[#allocation3 + $0x128] sm:$0xff]
        %v1557 = vld [vmem:[#allocation3 + $0x138] sm:$0xff]
        %v1558 = vld [vmem:[#allocation3 + $0x140] sm:$0xff]
        %v1559 = vld [vmem:[#allocation3 + $0x150] sm:$0xff]
        %v1560 = vld [vmem:[#allocation3 + $0x158] sm:$0xff]
        %v1561 = vld [vmem:[#allocation3 + $0x168] sm:$0xff]
        %v1562 = vld [vmem:[#allocation3 + $0x170] sm:$0xff]
        %v1563 = vld [vmem:[#allocation2 + $0x1] sm:$0xff]
        %v1564 = vld [vmem:[#allocation2 + $0x9] sm:$0xff]
        %v1565 = vld [vmem:[#allocation2 + $0x19] sm:$0xff]
        %v1566 = vld [vmem:[#allocation2 + $0x21] sm:$0xff]
        %v1567 = vld [vmem:[#allocation2 + $0x31] sm:$0xff]
        %v1568 = vld [vmem:[#allocation2 + $0x39] sm:$0xff]
        %v1569 = vld [vmem:[#allocation2 + $0x49] sm:$0xff]
        %v1570 = vld [vmem:[#allocation2 + $0x51] sm:$0xff]
        %v1571 = vld [vmem:[#allocation2 + $0x61] sm:$0xff]
        %v1572 = vld [vmem:[#allocation2 + $0x69] sm:$0xff]
        %v1573 = vld [vmem:[#allocation2 + $0x79] sm:$0xff]
        %v1574 = vld [vmem:[#allocation2 + $0x81] sm:$0xff]
        %v1575 = vld [vmem:[#allocation2 + $0x91] sm:$0xff]
        %v1576 = vld [vmem:[#allocation2 + $0x99] sm:$0xff]
        %v1577 = vld [vmem:[#allocation2 + $0xa9] sm:$0xff]
        %v1578 = vld [vmem:[#allocation2 + $0xb1] sm:$0xff]
        %v1579 = vld [vmem:[#allocation2 + $0xc1] sm:$0xff]
        %v1580 = vld [vmem:[#allocation2 + $0xc9] sm:$0xff]
        %v1581 = vld [vmem:[#allocation2 + $0xd9] sm:$0xff]
        %v1582 = vld [vmem:[#allocation2 + $0xe1] sm:$0xff]
        %v1583 = vld [vmem:[#allocation2 + $0xf1] sm:$0xff]
        %v1584 = vld [vmem:[#allocation2 + $0xf9] sm:$0xff]
        %v1585 = vld [vmem:[#allocation2 + $0x109] sm:$0xff]
        %v1586 = vld [vmem:[#allocation2 + $0x111] sm:$0xff]
        %v1587 = vld [vmem:[#allocation2 + $0x121] sm:$0xff]
        %v1588 = vld [vmem:[#allocation2 + $0x129] sm:$0xff]
        %v1589 = vld [vmem:[#allocation2 + $0x139] sm:$0xff]
        %v1590 = vld [vmem:[#allocation2 + $0x141] sm:$0xff]
        %v1591 = vld [vmem:[#allocation2 + $0x151] sm:$0xff]
        %v1592 = vld [vmem:[#allocation2 + $0x159] sm:$0xff]
        %v1593 = vld [vmem:[#allocation2 + $0x169] sm:$0xff]
        %v1594 = vld [vmem:[#allocation2 + $0x171] sm:$0xff]
        %v1595 = vld [vmem:[#allocation3 + $0x1] sm:$0xff]
        %v1596 = vld [vmem:[#allocation3 + $0x9] sm:$0xff]
        %v1597 = vld [vmem:[#allocation3 + $0x19] sm:$0xff]
        %v1598 = vld [vmem:[#allocation3 + $0x21] sm:$0xff]
        %v1599 = vld [vmem:[#allocation3 + $0x31] sm:$0xff]
        %v1600 = vld [vmem:[#allocation3 + $0x39] sm:$0xff]
        %v1601 = vld [vmem:[#allocation3 + $0x49] sm:$0xff]
        %v1602 = vld [vmem:[#allocation3 + $0x51] sm:$0xff]
        %v1603 = vld [vmem:[#allocation3 + $0x61] sm:$0xff]
        %v1604 = vld [vmem:[#allocation3 + $0x69] sm:$0xff]
        %v1605 = vld [vmem:[#allocation3 + $0x79] sm:$0xff]
        %v1606 = vld [vmem:[#allocation3 + $0x81] sm:$0xff]
        %v1607 = vld [vmem:[#allocation3 + $0x91] sm:$0xff]
        %v1608 = vld [vmem:[#allocation3 + $0x99] sm:$0xff]
        %v1609 = vld [vmem:[#allocation3 + $0xa9] sm:$0xff]
        %v1610 = vld [vmem:[#allocation3 + $0xb1] sm:$0xff]
        %v1611 = vld [vmem:[#allocation3 + $0xc1] sm:$0xff]
        %v1612 = vld [vmem:[#allocation3 + $0xc9] sm:$0xff]
        %v1613 = vld [vmem:[#allocation3 + $0xd9] sm:$0xff]
        %v1614 = vld [vmem:[#allocation3 + $0xe1] sm:$0xff]
        %v1615 = vld [vmem:[#allocation3 + $0xf1] sm:$0xff]
        %v1616 = vld [vmem:[#allocation3 + $0xf9] sm:$0xff]
        %v1617 = vld [vmem:[#allocation3 + $0x109] sm:$0xff]
        %v1618 = vld [vmem:[#allocation3 + $0x111] sm:$0xff]
        %v1619 = vld [vmem:[#allocation3 + $0x121] sm:$0xff]
        %v1620 = vld [vmem:[#allocation3 + $0x129] sm:$0xff]
        %v1621 = vld [vmem:[#allocation3 + $0x139] sm:$0xff]
        %v1622 = vld [vmem:[#allocation3 + $0x141] sm:$0xff]
        %v1623 = vld [vmem:[#allocation3 + $0x151] sm:$0xff]
        %v1624 = vld [vmem:[#allocation3 + $0x159] sm:$0xff]
        %v1625 = vld [vmem:[#allocation3 + $0x169] sm:$0xff]
        %v1626 = vld [vmem:[#allocation3 + $0x171] sm:$0xff]
        %v1627 = vld [vmem:[#allocation2 + $0x2] sm:$0xff]
        %v1628 = vld [vmem:[#allocation2 + $0xa] sm:$0xff]
        %v1629 = vld [vmem:[#allocation2 + $0x1a] sm:$0xff]
        %v1630 = vld [vmem:[#allocation2 + $0x22] sm:$0xff]
        %v1631 = vld [vmem:[#allocation2 + $0x32] sm:$0xff]
        %v1632 = vld [vmem:[#allocation2 + $0x3a] sm:$0xff]
        %v1633 = vld [vmem:[#allocation2 + $0x4a] sm:$0xff]
        %v1634 = vld [vmem:[#allocation2 + $0x52] sm:$0xff]
        %v1635 = vld [vmem:[#allocation2 + $0x62] sm:$0xff]
        %v1636 = vld [vmem:[#allocation2 + $0x6a] sm:$0xff]
        %v1637 = vld [vmem:[#allocation2 + $0x7a] sm:$0xff]
        %v1638 = vld [vmem:[#allocation2 + $0x82] sm:$0xff]
        %v1639 = vld [vmem:[#allocation2 + $0x92] sm:$0xff]
        %v1640 = vld [vmem:[#allocation2 + $0x9a] sm:$0xff]
        %v1641 = vld [vmem:[#allocation2 + $0xaa] sm:$0xff]
        %v1642 = vld [vmem:[#allocation2 + $0xb2] sm:$0xff]
        %v1643 = vld [vmem:[#allocation2 + $0xc2] sm:$0xff]
        %v1644 = vld [vmem:[#allocation2 + $0xca] sm:$0xff]
        %v1645 = vld [vmem:[#allocation2 + $0xda] sm:$0xff]
        %v1646 = vld [vmem:[#allocation2 + $0xe2] sm:$0xff]
        %v1647 = vld [vmem:[#allocation2 + $0xf2] sm:$0xff]
        %v1648 = vld [vmem:[#allocation2 + $0xfa] sm:$0xff]
        %v1649 = vld [vmem:[#allocation2 + $0x10a] sm:$0xff]
        %v1650 = vld [vmem:[#allocation2 + $0x112] sm:$0xff]
        %v1651 = vld [vmem:[#allocation2 + $0x122] sm:$0xff]
        %v1652 = vld [vmem:[#allocation2 + $0x12a] sm:$0xff]
        %v1653 = vld [vmem:[#allocation2 + $0x13a] sm:$0xff]
        %v1654 = vld [vmem:[#allocation2 + $0x142] sm:$0xff]
        %v1655 = vld [vmem:[#allocation2 + $0x152] sm:$0xff]
        %v1656 = vld [vmem:[#allocation2 + $0x15a] sm:$0xff]
        %v1657 = vld [vmem:[#allocation2 + $0x16a] sm:$0xff]
        %v1658 = vld [vmem:[#allocation2 + $0x172] sm:$0xff]
        %v1659 = vld [vmem:[#allocation3 + $0x2] sm:$0xff]
        %v1660 = vld [vmem:[#allocation3 + $0xa] sm:$0xff]
        %v1661 = vld [vmem:[#allocation3 + $0x1a] sm:$0xff]
        %v1662 = vld [vmem:[#allocation3 + $0x22] sm:$0xff]
        %v1663 = vld [vmem:[#allocation3 + $0x32] sm:$0xff]
        %v1664 = vld [vmem:[#allocation3 + $0x3a] sm:$0xff]
        %v1665 = vld [vmem:[#allocation3 + $0x4a] sm:$0xff]
        %v1666 = vld [vmem:[#allocation3 + $0x52] sm:$0xff]
        %v1667 = vld [vmem:[#allocation3 + $0x62] sm:$0xff]
        %v1668 = vld [vmem:[#allocation3 + $0x6a] sm:$0xff]
        %v1669 = vld [vmem:[#allocation3 + $0x7a] sm:$0xff]
        %v1670 = vld [vmem:[#allocation3 + $0x82] sm:$0xff]
        %v1671 = vld [vmem:[#allocation3 + $0x92] sm:$0xff]
        %v1672 = vld [vmem:[#allocation3 + $0x9a] sm:$0xff]
        %v1673 = vld [vmem:[#allocation3 + $0xaa] sm:$0xff]
        %v1674 = vld [vmem:[#allocation3 + $0xb2] sm:$0xff]
        %v1675 = vld [vmem:[#allocation3 + $0xc2] sm:$0xff]
        %v1676 = vld [vmem:[#allocation3 + $0xca] sm:$0xff]
        %v1677 = vld [vmem:[#allocation3 + $0xda] sm:$0xff]
        %v1678 = vld [vmem:[#allocation3 + $0xe2] sm:$0xff]
        %v1679 = vld [vmem:[#allocation3 + $0xf2] sm:$0xff]
        %v1680 = vld [vmem:[#allocation3 + $0xfa] sm:$0xff]
        %v1681 = vld [vmem:[#allocation3 + $0x10a] sm:$0xff]
        %v1682 = vld [vmem:[#allocation3 + $0x112] sm:$0xff]
        %v1683 = vld [vmem:[#allocation3 + $0x122] sm:$0xff]
        %v1684 = vld [vmem:[#allocation3 + $0x12a] sm:$0xff]
        %v1685 = vld [vmem:[#allocation3 + $0x13a] sm:$0xff]
        %v1686 = vld [vmem:[#allocation3 + $0x142] sm:$0xff]
        %v1687 = vld [vmem:[#allocation3 + $0x152] sm:$0xff]
        %v1688 = vld [vmem:[#allocation3 + $0x15a] sm:$0xff]
        %v1689 = vld [vmem:[#allocation3 + $0x16a] sm:$0xff]
        %v1690 = vld [vmem:[#allocation3 + $0x172] sm:$0xff]
        %v1691 = vld [vmem:[%s1432] sm:$0xff]
        %v1692 = vld [vmem:[%s1432 + $0x8] sm:$0xff]
        %v1693 = vld [vmem:[%s1432 + $0x18] sm:$0xff]
        %v1694 = vld [vmem:[%s1432 + $0x20] sm:$0xff]
        %v1695 = vld [vmem:[%s1432 + $0x30] sm:$0xff]
        %v1696 = vld [vmem:[%s1432 + $0x38] sm:$0xff]
        %v1697 = vld [vmem:[%s1432 + $0x48] sm:$0xff]
        %v1698 = vld [vmem:[%s1432 + $0x50] sm:$0xff]
        %v1699 = vld [vmem:[%s1432 + $0x60] sm:$0xff]
        %v1700 = vld [vmem:[%s1432 + $0x68] sm:$0xff]
        %v1701 = vld [vmem:[%s1432 + $0x78] sm:$0xff]
        %v1702 = vld [vmem:[%s1432 + $0x80] sm:$0xff]
        %v1703 = vld [vmem:[%s1432 + $0x90] sm:$0xff]
        %v1704 = vld [vmem:[%s1432 + $0x98] sm:$0xff]
        %v1705 = vld [vmem:[%s1432 + $0xa8] sm:$0xff]
        %v1706 = vld [vmem:[%s1432 + $0xb0] sm:$0xff]
        %v1707 = vld [vmem:[%s1432 + $0xc0] sm:$0xff]
        %v1708 = vld [vmem:[%s1432 + $0xc8] sm:$0xff]
        %v1709 = vld [vmem:[%s1432 + $0xd8] sm:$0xff]
        %v1710 = vld [vmem:[%s1432 + $0xe0] sm:$0xff]
        %v1711 = vld [vmem:[%s1432 + $0xf0] sm:$0xff]
        %v1712 = vld [vmem:[%s1432 + $0xf8] sm:$0xff]
        %v1713 = vld [vmem:[%s1432 + $0x108] sm:$0xff]
        %v1714 = vld [vmem:[%s1432 + $0x110] sm:$0xff]
        %v1715 = vld [vmem:[%s1432 + $0x120] sm:$0xff]
        %v1716 = vld [vmem:[%s1432 + $0x128] sm:$0xff]
        %v1717 = vld [vmem:[%s1432 + $0x138] sm:$0xff]
        %v1718 = vld [vmem:[%s1432 + $0x140] sm:$0xff]
        %v1719 = vld [vmem:[%s1432 + $0x150] sm:$0xff]
        %v1720 = vld [vmem:[%s1432 + $0x158] sm:$0xff]
        %v1721 = vld [vmem:[%s1432 + $0x168] sm:$0xff]
        %v1722 = vld [vmem:[%s1432 + $0x170] sm:$0xff]
        %v1723 = vld [vmem:[%s1466] sm:$0xff]
        %v1724 = vld [vmem:[%s1466 + $0x8] sm:$0xff]
        %v1725 = vld [vmem:[%s1466 + $0x18] sm:$0xff]
        %v1726 = vld [vmem:[%s1466 + $0x20] sm:$0xff]
        %v1727 = vld [vmem:[%s1466 + $0x30] sm:$0xff]
        %v1728 = vld [vmem:[%s1466 + $0x38] sm:$0xff]
        %v1729 = vld [vmem:[%s1466 + $0x48] sm:$0xff]
        %v1730 = vld [vmem:[%s1466 + $0x50] sm:$0xff]
        %v1731 = vld [vmem:[%s1466 + $0x60] sm:$0xff]
        %v1732 = vld [vmem:[%s1466 + $0x68] sm:$0xff]
        %v1733 = vld [vmem:[%s1466 + $0x78] sm:$0xff]
        %v1734 = vld [vmem:[%s1466 + $0x80] sm:$0xff]
        %v1735 = vld [vmem:[%s1466 + $0x90] sm:$0xff]
        %v1736 = vld [vmem:[%s1466 + $0x98] sm:$0xff]
        %v1737 = vld [vmem:[%s1466 + $0xa8] sm:$0xff]
        %v1738 = vld [vmem:[%s1466 + $0xb0] sm:$0xff]
        %v1739 = vld [vmem:[%s1466 + $0xc0] sm:$0xff]
        %v1740 = vld [vmem:[%s1466 + $0xc8] sm:$0xff]
        %v1741 = vld [vmem:[%s1466 + $0xd8] sm:$0xff]
        %v1742 = vld [vmem:[%s1466 + $0xe0] sm:$0xff]
        %v1743 = vld [vmem:[%s1466 + $0xf0] sm:$0xff]
        %v1744 = vld [vmem:[%s1466 + $0xf8] sm:$0xff]
        %v1745 = vld [vmem:[%s1466 + $0x108] sm:$0xff]
        %v1746 = vld [vmem:[%s1466 + $0x110] sm:$0xff]
        %v1747 = vld [vmem:[%s1466 + $0x120] sm:$0xff]
        %v1748 = vld [vmem:[%s1466 + $0x128] sm:$0xff]
        %v1749 = vld [vmem:[%s1466 + $0x138] sm:$0xff]
        %v1750 = vld [vmem:[%s1466 + $0x140] sm:$0xff]
        %v1751 = vld [vmem:[%s1466 + $0x150] sm:$0xff]
        %v1752 = vld [vmem:[%s1466 + $0x158] sm:$0xff]
        %v1753 = vld [vmem:[%s1466 + $0x168] sm:$0xff]
        %v1754 = vld [vmem:[%s1466 + $0x170] sm:$0xff]
        %v1755 = vld [vmem:[%s1432 + $0x1] sm:$0xff]
        %v1756 = vld [vmem:[%s1432 + $0x9] sm:$0xff]
        %v1757 = vld [vmem:[%s1432 + $0x19] sm:$0xff]
        %v1758 = vld [vmem:[%s1432 + $0x21] sm:$0xff]
        %v1759 = vld [vmem:[%s1432 + $0x31] sm:$0xff]
        %v1760 = vld [vmem:[%s1432 + $0x39] sm:$0xff]
        %v1761 = vld [vmem:[%s1432 + $0x49] sm:$0xff]
        %v1762 = vld [vmem:[%s1432 + $0x51] sm:$0xff]
        %v1763 = vld [vmem:[%s1432 + $0x61] sm:$0xff]
        %v1764 = vld [vmem:[%s1432 + $0x69] sm:$0xff]
        %v1765 = vld [vmem:[%s1432 + $0x79] sm:$0xff]
        %v1766 = vld [vmem:[%s1432 + $0x81] sm:$0xff]
        %v1767 = vld [vmem:[%s1432 + $0x91] sm:$0xff]
        %v1768 = vld [vmem:[%s1432 + $0x99] sm:$0xff]
        %v1769 = vld [vmem:[%s1432 + $0xa9] sm:$0xff]
        %v1770 = vld [vmem:[%s1432 + $0xb1] sm:$0xff]
        %v1771 = vld [vmem:[%s1432 + $0xc1] sm:$0xff]
        %v1772 = vld [vmem:[%s1432 + $0xc9] sm:$0xff]
        %v1773 = vld [vmem:[%s1432 + $0xd9] sm:$0xff]
        %v1774 = vld [vmem:[%s1432 + $0xe1] sm:$0xff]
        %v1775 = vld [vmem:[%s1432 + $0xf1] sm:$0xff]
        %v1776 = vld [vmem:[%s1432 + $0xf9] sm:$0xff]
        %v1777 = vld [vmem:[%s1432 + $0x109] sm:$0xff]
        %v1778 = vld [vmem:[%s1432 + $0x111] sm:$0xff]
        %v1779 = vld [vmem:[%s1432 + $0x121] sm:$0xff]
        %v1780 = vld [vmem:[%s1432 + $0x129] sm:$0xff]
        %v1781 = vld [vmem:[%s1432 + $0x139] sm:$0xff]
        %v1782 = vld [vmem:[%s1432 + $0x141] sm:$0xff]
        %v1783 = vld [vmem:[%s1432 + $0x151] sm:$0xff]
        %v1784 = vld [vmem:[%s1432 + $0x159] sm:$0xff]
        %v1785 = vld [vmem:[%s1432 + $0x169] sm:$0xff]
        %v1786 = vld [vmem:[%s1432 + $0x171] sm:$0xff]
        %v1787 = vld [vmem:[%s1466 + $0x1] sm:$0xff]
        %v1788 = vld [vmem:[%s1466 + $0x9] sm:$0xff]
        %v1789 = vld [vmem:[%s1466 + $0x19] sm:$0xff]
        %v1790 = vld [vmem:[%s1466 + $0x21] sm:$0xff]
        %v1791 = vld [vmem:[%s1466 + $0x31] sm:$0xff]
        %v1792 = vld [vmem:[%s1466 + $0x39] sm:$0xff]
        %v1793 = vld [vmem:[%s1466 + $0x49] sm:$0xff]
        %v1794 = vld [vmem:[%s1466 + $0x51] sm:$0xff]
        %v1795 = vld [vmem:[%s1466 + $0x61] sm:$0xff]
        %v1796 = vld [vmem:[%s1466 + $0x69] sm:$0xff]
        %v1797 = vld [vmem:[%s1466 + $0x79] sm:$0xff]
        %v1798 = vld [vmem:[%s1466 + $0x81] sm:$0xff]
        %v1799 = vld [vmem:[%s1466 + $0x91] sm:$0xff]
        %v1800 = vld [vmem:[%s1466 + $0x99] sm:$0xff]
        %v1801 = vld [vmem:[%s1466 + $0xa9] sm:$0xff]
        %v1802 = vld [vmem:[%s1466 + $0xb1] sm:$0xff]
        %v1803 = vld [vmem:[%s1466 + $0xc1] sm:$0xff]
        %v1804 = vld [vmem:[%s1466 + $0xc9] sm:$0xff]
        %v1805 = vld [vmem:[%s1466 + $0xd9] sm:$0xff]
        %v1806 = vld [vmem:[%s1466 + $0xe1] sm:$0xff]
        %v1807 = vld [vmem:[%s1466 + $0xf1] sm:$0xff]
        %v1808 = vld [vmem:[%s1466 + $0xf9] sm:$0xff]
        %v1809 = vld [vmem:[%s1466 + $0x109] sm:$0xff]
        %v1810 = vld [vmem:[%s1466 + $0x111] sm:$0xff]
        %v1811 = vld [vmem:[%s1466 + $0x121] sm:$0xff]
        %v1812 = vld [vmem:[%s1466 + $0x129] sm:$0xff]
        %v1813 = vld [vmem:[%s1466 + $0x139] sm:$0xff]
        %v1814 = vld [vmem:[%s1466 + $0x141] sm:$0xff]
        %v1815 = vld [vmem:[%s1466 + $0x151] sm:$0xff]
        %v1816 = vld [vmem:[%s1466 + $0x159] sm:$0xff]
        %v1817 = vld [vmem:[%s1466 + $0x169] sm:$0xff]
        %v1818 = vld [vmem:[%s1466 + $0x171] sm:$0xff]
        %v1819 = vld [vmem:[%s1432 + $0x2] sm:$0xff]
        %v1820 = vld [vmem:[%s1432 + $0xa] sm:$0xff]
        %v1821 = vld [vmem:[%s1432 + $0x1a] sm:$0xff]
        %v1822 = vld [vmem:[%s1432 + $0x22] sm:$0xff]
        %v1823 = vld [vmem:[%s1432 + $0x32] sm:$0xff]
        %v1824 = vld [vmem:[%s1432 + $0x3a] sm:$0xff]
        %v1825 = vld [vmem:[%s1432 + $0x4a] sm:$0xff]
        %v1826 = vld [vmem:[%s1432 + $0x52] sm:$0xff]
        %v1827 = vld [vmem:[%s1432 + $0x62] sm:$0xff]
        %v1828 = vld [vmem:[%s1432 + $0x6a] sm:$0xff]
        %v1829 = vld [vmem:[%s1432 + $0x7a] sm:$0xff]
        %v1830 = vld [vmem:[%s1432 + $0x82] sm:$0xff]
        %v1831 = vld [vmem:[%s1432 + $0x92] sm:$0xff]
        %v1832 = vld [vmem:[%s1432 + $0x9a] sm:$0xff]
        %v1833 = vld [vmem:[%s1432 + $0xaa] sm:$0xff]
        %v1834 = vld [vmem:[%s1432 + $0xb2] sm:$0xff]
        %v1835 = vld [vmem:[%s1432 + $0xc2] sm:$0xff]
        %v1836 = vld [vmem:[%s1432 + $0xca] sm:$0xff]
        %v1837 = vld [vmem:[%s1432 + $0xda] sm:$0xff]
        %v1838 = vld [vmem:[%s1432 + $0xe2] sm:$0xff]
        %v1839 = vld [vmem:[%s1432 + $0xf2] sm:$0xff]
        %v1840 = vld [vmem:[%s1432 + $0xfa] sm:$0xff]
        %v1841 = vld [vmem:[%s1432 + $0x10a] sm:$0xff]
        %v1842 = vld [vmem:[%s1432 + $0x112] sm:$0xff]
        %v1843 = vld [vmem:[%s1432 + $0x122] sm:$0xff]
        %v1844 = vld [vmem:[%s1432 + $0x12a] sm:$0xff]
        %v1845 = vld [vmem:[%s1432 + $0x13a] sm:$0xff]
        %v1846 = vld [vmem:[%s1432 + $0x142] sm:$0xff]
        %v1847 = vld [vmem:[%s1432 + $0x152] sm:$0xff]
        %v1848 = vld [vmem:[%s1432 + $0x15a] sm:$0xff]
        %v1849 = vld [vmem:[%s1432 + $0x16a] sm:$0xff]
        %v1850 = vld [vmem:[%s1432 + $0x172] sm:$0xff]
        %v1851 = vld [vmem:[%s1466 + $0x2] sm:$0xff]
        %v1852 = vld [vmem:[%s1466 + $0xa] sm:$0xff]
        %v1853 = vld [vmem:[%s1466 + $0x1a] sm:$0xff]
        %v1854 = vld [vmem:[%s1466 + $0x22] sm:$0xff]
        %v1855 = vld [vmem:[%s1466 + $0x32] sm:$0xff]
        %v1856 = vld [vmem:[%s1466 + $0x3a] sm:$0xff]
        %v1857 = vld [vmem:[%s1466 + $0x4a] sm:$0xff]
        %v1858 = vld [vmem:[%s1466 + $0x52] sm:$0xff]
        %v1859 = vld [vmem:[%s1466 + $0x62] sm:$0xff]
        %v1860 = vld [vmem:[%s1466 + $0x6a] sm:$0xff]
        %v1861 = vld [vmem:[%s1466 + $0x7a] sm:$0xff]
        %v1862 = vld [vmem:[%s1466 + $0x82] sm:$0xff]
        %v1863 = vld [vmem:[%s1466 + $0x92] sm:$0xff]
        %v1864 = vld [vmem:[%s1466 + $0x9a] sm:$0xff]
        %v1865 = vld [vmem:[%s1466 + $0xaa] sm:$0xff]
        %v1866 = vld [vmem:[%s1466 + $0xb2] sm:$0xff]
        %v1867 = vld [vmem:[%s1466 + $0xc2] sm:$0xff]
        %v1868 = vld [vmem:[%s1466 + $0xca] sm:$0xff]
        %v1869 = vld [vmem:[%s1466 + $0xda] sm:$0xff]
        %v1870 = vld [vmem:[%s1466 + $0xe2] sm:$0xff]
        %v1871 = vld [vmem:[%s1466 + $0xf2] sm:$0xff]
        %v1872 = vld [vmem:[%s1466 + $0xfa] sm:$0xff]
        %v1873 = vld [vmem:[%s1466 + $0x10a] sm:$0xff]
        %v1874 = vld [vmem:[%s1466 + $0x112] sm:$0xff]
        %v1875 = vld [vmem:[%s1466 + $0x122] sm:$0xff]
        %v1876 = vld [vmem:[%s1466 + $0x12a] sm:$0xff]
        %v1877 = vld [vmem:[%s1466 + $0x13a] sm:$0xff]
        %v1878 = vld [vmem:[%s1466 + $0x142] sm:$0xff]
        %v1879 = vld [vmem:[%s1466 + $0x152] sm:$0xff]
        %v1880 = vld [vmem:[%s1466 + $0x15a] sm:$0xff]
        %v1881 = vld [vmem:[%s1466 + $0x16a] sm:$0xff]
        %v1882 = vld [vmem:[%s1466 + $0x172] sm:$0xff]
        %s1883 = scalar_lea.vmem [#allocation2], 48
        %v1884 = vld [vmem:[%s1883] sm:$0xff]
        %v1885 = vld [vmem:[%s1883 + $0x8] sm:$0xff]
        %v1886 = vld [vmem:[%s1883 + $0x18] sm:$0xff]
        %v1887 = vld [vmem:[%s1883 + $0x20] sm:$0xff]
        %v1888 = vld [vmem:[%s1883 + $0x30] sm:$0xff]
        %v1889 = vld [vmem:[%s1883 + $0x38] sm:$0xff]
        %v1890 = vld [vmem:[%s1883 + $0x48] sm:$0xff]
        %v1891 = vld [vmem:[%s1883 + $0x50] sm:$0xff]
        %v1892 = vld [vmem:[%s1883 + $0x60] sm:$0xff]
        %v1893 = vld [vmem:[%s1883 + $0x68] sm:$0xff]
        %v1894 = vld [vmem:[%s1883 + $0x78] sm:$0xff]
        %v1895 = vld [vmem:[%s1883 + $0x80] sm:$0xff]
        %v1896 = vld [vmem:[%s1883 + $0x90] sm:$0xff]
        %v1897 = vld [vmem:[%s1883 + $0x98] sm:$0xff]
        %v1898 = vld [vmem:[%s1883 + $0xa8] sm:$0xff]
        %v1899 = vld [vmem:[%s1883 + $0xb0] sm:$0xff]
        %v1900 = vld [vmem:[%s1883 + $0xc0] sm:$0xff]
        %v1901 = vld [vmem:[%s1883 + $0xc8] sm:$0xff]
        %v1902 = vld [vmem:[%s1883 + $0xd8] sm:$0xff]
        %v1903 = vld [vmem:[%s1883 + $0xe0] sm:$0xff]
        %v1904 = vld [vmem:[%s1883 + $0xf0] sm:$0xff]
        %v1905 = vld [vmem:[%s1883 + $0xf8] sm:$0xff]
        %v1906 = vld [vmem:[%s1883 + $0x108] sm:$0xff]
        %v1907 = vld [vmem:[%s1883 + $0x110] sm:$0xff]
        %v1908 = vld [vmem:[%s1883 + $0x120] sm:$0xff]
        %v1909 = vld [vmem:[%s1883 + $0x128] sm:$0xff]
        %v1910 = vld [vmem:[%s1883 + $0x138] sm:$0xff]
        %v1911 = vld [vmem:[%s1883 + $0x140] sm:$0xff]
        %v1912 = vld [vmem:[%s1883 + $0x150] sm:$0xff]
        %v1913 = vld [vmem:[%s1883 + $0x158] sm:$0xff]
        %v1914 = vld [vmem:[%s1883 + $0x168] sm:$0xff]
        %v1915 = vld [vmem:[%s1883 + $0x170] sm:$0xff]
        %s1916 = scalar_lea.vmem [#allocation3], 48
        %v1917 = vld [vmem:[%s1916] sm:$0xff]
        %v1918 = vld [vmem:[%s1916 + $0x8] sm:$0xff]
        %v1919 = vld [vmem:[%s1916 + $0x18] sm:$0xff]
        %v1920 = vld [vmem:[%s1916 + $0x20] sm:$0xff]
        %v1921 = vld [vmem:[%s1916 + $0x30] sm:$0xff]
        %v1922 = vld [vmem:[%s1916 + $0x38] sm:$0xff]
        %v1923 = vld [vmem:[%s1916 + $0x48] sm:$0xff]
        %v1924 = vld [vmem:[%s1916 + $0x50] sm:$0xff]
        %v1925 = vld [vmem:[%s1916 + $0x60] sm:$0xff]
        %v1926 = vld [vmem:[%s1916 + $0x68] sm:$0xff]
        %v1927 = vld [vmem:[%s1916 + $0x78] sm:$0xff]
        %v1928 = vld [vmem:[%s1916 + $0x80] sm:$0xff]
        %v1929 = vld [vmem:[%s1916 + $0x90] sm:$0xff]
        %v1930 = vld [vmem:[%s1916 + $0x98] sm:$0xff]
        %v1931 = vld [vmem:[%s1916 + $0xa8] sm:$0xff]
        %v1932 = vld [vmem:[%s1916 + $0xb0] sm:$0xff]
        %v1933 = vld [vmem:[%s1916 + $0xc0] sm:$0xff]
        %v1934 = vld [vmem:[%s1916 + $0xc8] sm:$0xff]
        %v1935 = vld [vmem:[%s1916 + $0xd8] sm:$0xff]
        %v1936 = vld [vmem:[%s1916 + $0xe0] sm:$0xff]
        %v1937 = vld [vmem:[%s1916 + $0xf0] sm:$0xff]
        %v1938 = vld [vmem:[%s1916 + $0xf8] sm:$0xff]
        %v1939 = vld [vmem:[%s1916 + $0x108] sm:$0xff]
        %v1940 = vld [vmem:[%s1916 + $0x110] sm:$0xff]
        %v1941 = vld [vmem:[%s1916 + $0x120] sm:$0xff]
        %v1942 = vld [vmem:[%s1916 + $0x128] sm:$0xff]
        %v1943 = vld [vmem:[%s1916 + $0x138] sm:$0xff]
        %v1944 = vld [vmem:[%s1916 + $0x140] sm:$0xff]
        %v1945 = vld [vmem:[%s1916 + $0x150] sm:$0xff]
        %v1946 = vld [vmem:[%s1916 + $0x158] sm:$0xff]
        %v1947 = vld [vmem:[%s1916 + $0x168] sm:$0xff]
        %v1948 = vld [vmem:[%s1916 + $0x170] sm:$0xff]
        %v1949 = vld [vmem:[%s1883 + $0x1] sm:$0xff]
        %v1950 = vld [vmem:[%s1883 + $0x9] sm:$0xff]
        %v1951 = vld [vmem:[%s1883 + $0x19] sm:$0xff]
        %v1952 = vld [vmem:[%s1883 + $0x21] sm:$0xff]
        %v1953 = vld [vmem:[%s1883 + $0x31] sm:$0xff]
        %v1954 = vld [vmem:[%s1883 + $0x39] sm:$0xff]
        %v1955 = vld [vmem:[%s1883 + $0x49] sm:$0xff]
        %v1956 = vld [vmem:[%s1883 + $0x51] sm:$0xff]
        %v1957 = vld [vmem:[%s1883 + $0x61] sm:$0xff]
        %v1958 = vld [vmem:[%s1883 + $0x69] sm:$0xff]
        %v1959 = vld [vmem:[%s1883 + $0x79] sm:$0xff]
        %v1960 = vld [vmem:[%s1883 + $0x81] sm:$0xff]
        %v1961 = vld [vmem:[%s1883 + $0x91] sm:$0xff]
        %v1962 = vld [vmem:[%s1883 + $0x99] sm:$0xff]
        %v1963 = vld [vmem:[%s1883 + $0xa9] sm:$0xff]
        %v1964 = vld [vmem:[%s1883 + $0xb1] sm:$0xff]
        %v1965 = vld [vmem:[%s1883 + $0xc1] sm:$0xff]
        %v1966 = vld [vmem:[%s1883 + $0xc9] sm:$0xff]
        %v1967 = vld [vmem:[%s1883 + $0xd9] sm:$0xff]
        %v1968 = vld [vmem:[%s1883 + $0xe1] sm:$0xff]
        %v1969 = vld [vmem:[%s1883 + $0xf1] sm:$0xff]
        %v1970 = vld [vmem:[%s1883 + $0xf9] sm:$0xff]
        %v1971 = vld [vmem:[%s1883 + $0x109] sm:$0xff]
        %v1972 = vld [vmem:[%s1883 + $0x111] sm:$0xff]
        %v1973 = vld [vmem:[%s1883 + $0x121] sm:$0xff]
        %v1974 = vld [vmem:[%s1883 + $0x129] sm:$0xff]
        %v1975 = vld [vmem:[%s1883 + $0x139] sm:$0xff]
        %v1976 = vld [vmem:[%s1883 + $0x141] sm:$0xff]
        %v1977 = vld [vmem:[%s1883 + $0x151] sm:$0xff]
        %v1978 = vld [vmem:[%s1883 + $0x159] sm:$0xff]
        %v1979 = vld [vmem:[%s1883 + $0x169] sm:$0xff]
        %v1980 = vld [vmem:[%s1883 + $0x171] sm:$0xff]
        %v1981 = vld [vmem:[%s1916 + $0x1] sm:$0xff]
        %v1982 = vld [vmem:[%s1916 + $0x9] sm:$0xff]
        %v1983 = vld [vmem:[%s1916 + $0x19] sm:$0xff]
        %v1984 = vld [vmem:[%s1916 + $0x21] sm:$0xff]
        %v1985 = vld [vmem:[%s1916 + $0x31] sm:$0xff]
        %v1986 = vld [vmem:[%s1916 + $0x39] sm:$0xff]
        %v1987 = vld [vmem:[%s1916 + $0x49] sm:$0xff]
        %v1988 = vld [vmem:[%s1916 + $0x51] sm:$0xff]
        %v1989 = vld [vmem:[%s1916 + $0x61] sm:$0xff]
        %v1990 = vld [vmem:[%s1916 + $0x69] sm:$0xff]
        %v1991 = vld [vmem:[%s1916 + $0x79] sm:$0xff]
        %v1992 = vld [vmem:[%s1916 + $0x81] sm:$0xff]
        %v1993 = vld [vmem:[%s1916 + $0x91] sm:$0xff]
        %v1994 = vld [vmem:[%s1916 + $0x99] sm:$0xff]
        %v1995 = vld [vmem:[%s1916 + $0xa9] sm:$0xff]
        %v1996 = vld [vmem:[%s1916 + $0xb1] sm:$0xff]
        %v1997 = vld [vmem:[%s1916 + $0xc1] sm:$0xff]
        %v1998 = vld [vmem:[%s1916 + $0xc9] sm:$0xff]
        %v1999 = vld [vmem:[%s1916 + $0xd9] sm:$0xff]
        %v2000 = vld [vmem:[%s1916 + $0xe1] sm:$0xff]
        %v2001 = vld [vmem:[%s1916 + $0xf1] sm:$0xff]
        %v2002 = vld [vmem:[%s1916 + $0xf9] sm:$0xff]
        %v2003 = vld [vmem:[%s1916 + $0x109] sm:$0xff]
        %v2004 = vld [vmem:[%s1916 + $0x111] sm:$0xff]
        %v2005 = vld [vmem:[%s1916 + $0x121] sm:$0xff]
        %v2006 = vld [vmem:[%s1916 + $0x129] sm:$0xff]
        %v2007 = vld [vmem:[%s1916 + $0x139] sm:$0xff]
        %v2008 = vld [vmem:[%s1916 + $0x141] sm:$0xff]
        %v2009 = vld [vmem:[%s1916 + $0x151] sm:$0xff]
        %v2010 = vld [vmem:[%s1916 + $0x159] sm:$0xff]
        %v2011 = vld [vmem:[%s1916 + $0x169] sm:$0xff]
        %v2012 = vld [vmem:[%s1916 + $0x171] sm:$0xff]
        %v2013 = vld [vmem:[%s1883 + $0x2] sm:$0xff]
        %v2014 = vld [vmem:[%s1883 + $0xa] sm:$0xff]
        %v2015 = vld [vmem:[%s1883 + $0x1a] sm:$0xff]
        %v2016 = vld [vmem:[%s1883 + $0x22] sm:$0xff]
        %v2017 = vld [vmem:[%s1883 + $0x32] sm:$0xff]
        %v2018 = vld [vmem:[%s1883 + $0x3a] sm:$0xff]
        %v2019 = vld [vmem:[%s1883 + $0x4a] sm:$0xff]
        %v2020 = vld [vmem:[%s1883 + $0x52] sm:$0xff]
        %v2021 = vld [vmem:[%s1883 + $0x62] sm:$0xff]
        %v2022 = vld [vmem:[%s1883 + $0x6a] sm:$0xff]
        %v2023 = vld [vmem:[%s1883 + $0x7a] sm:$0xff]
        %v2024 = vld [vmem:[%s1883 + $0x82] sm:$0xff]
        %v2025 = vld [vmem:[%s1883 + $0x92] sm:$0xff]
        %v2026 = vld [vmem:[%s1883 + $0x9a] sm:$0xff]
        %v2027 = vld [vmem:[%s1883 + $0xaa] sm:$0xff]
        %v2028 = vld [vmem:[%s1883 + $0xb2] sm:$0xff]
        %v2029 = vld [vmem:[%s1883 + $0xc2] sm:$0xff]
        %v2030 = vld [vmem:[%s1883 + $0xca] sm:$0xff]
        %v2031 = vld [vmem:[%s1883 + $0xda] sm:$0xff]
        %v2032 = vld [vmem:[%s1883 + $0xe2] sm:$0xff]
        %v2033 = vld [vmem:[%s1883 + $0xf2] sm:$0xff]
        %v2034 = vld [vmem:[%s1883 + $0xfa] sm:$0xff]
        %v2035 = vld [vmem:[%s1883 + $0x10a] sm:$0xff]
        %v2036 = vld [vmem:[%s1883 + $0x112] sm:$0xff]
        %v2037 = vld [vmem:[%s1883 + $0x122] sm:$0xff]
        %v2038 = vld [vmem:[%s1883 + $0x12a] sm:$0xff]
        %v2039 = vld [vmem:[%s1883 + $0x13a] sm:$0xff]
        %v2040 = vld [vmem:[%s1883 + $0x142] sm:$0xff]
        %v2041 = vld [vmem:[%s1883 + $0x152] sm:$0xff]
        %v2042 = vld [vmem:[%s1883 + $0x15a] sm:$0xff]
        %v2043 = vld [vmem:[%s1883 + $0x16a] sm:$0xff]
        %v2044 = vld [vmem:[%s1883 + $0x172] sm:$0xff]
        %v2045 = vld [vmem:[%s1916 + $0x2] sm:$0xff]
        %v2046 = vld [vmem:[%s1916 + $0xa] sm:$0xff]
        %v2047 = vld [vmem:[%s1916 + $0x1a] sm:$0xff]
        %v2048 = vld [vmem:[%s1916 + $0x22] sm:$0xff]
        %v2049 = vld [vmem:[%s1916 + $0x32] sm:$0xff]
        %v2050 = vld [vmem:[%s1916 + $0x3a] sm:$0xff]
        %v2051 = vld [vmem:[%s1916 + $0x4a] sm:$0xff]
        %v2052 = vld [vmem:[%s1916 + $0x52] sm:$0xff]
        %v2053 = vld [vmem:[%s1916 + $0x62] sm:$0xff]
        %v2054 = vld [vmem:[%s1916 + $0x6a] sm:$0xff]
        %v2055 = vld [vmem:[%s1916 + $0x7a] sm:$0xff]
        %v2056 = vld [vmem:[%s1916 + $0x82] sm:$0xff]
        %v2057 = vld [vmem:[%s1916 + $0x92] sm:$0xff]
        %v2058 = vld [vmem:[%s1916 + $0x9a] sm:$0xff]
        %v2059 = vld [vmem:[%s1916 + $0xaa] sm:$0xff]
        %v2060 = vld [vmem:[%s1916 + $0xb2] sm:$0xff]
        %v2061 = vld [vmem:[%s1916 + $0xc2] sm:$0xff]
        %v2062 = vld [vmem:[%s1916 + $0xca] sm:$0xff]
        %v2063 = vld [vmem:[%s1916 + $0xda] sm:$0xff]
        %v2064 = vld [vmem:[%s1916 + $0xe2] sm:$0xff]
        %v2065 = vld [vmem:[%s1916 + $0xf2] sm:$0xff]
        %v2066 = vld [vmem:[%s1916 + $0xfa] sm:$0xff]
        %v2067 = vld [vmem:[%s1916 + $0x10a] sm:$0xff]
        %v2068 = vld [vmem:[%s1916 + $0x112] sm:$0xff]
        %v2069 = vld [vmem:[%s1916 + $0x122] sm:$0xff]
        %v2070 = vld [vmem:[%s1916 + $0x12a] sm:$0xff]
        %v2071 = vld [vmem:[%s1916 + $0x13a] sm:$0xff]
        %v2072 = vld [vmem:[%s1916 + $0x142] sm:$0xff]
        %v2073 = vld [vmem:[%s1916 + $0x152] sm:$0xff]
        %v2074 = vld [vmem:[%s1916 + $0x15a] sm:$0xff]
        %v2075 = vld [vmem:[%s1916 + $0x16a] sm:$0xff]
        %v2076 = vld [vmem:[%s1916 + $0x172] sm:$0xff]
        %2109 = vrot.lane.b32.xlu0 %v1531, 4
        %v2110 = vpop.permute.xlu0 %2109
        %2111 = vrot.lane.b32.xlu0 %v1532, 4
        %v2112 = vpop.permute.xlu0 %2111
        %2113 = vrot.lane.b32.xlu0 %v1533, 4
        %v2114 = vpop.permute.xlu0 %2113
        %2115 = vrot.lane.b32.xlu0 %v1534, 4
        %v2116 = vpop.permute.xlu0 %2115
        %2117 = vrot.lane.b32.xlu0 %v1535, 4
        %v2118 = vpop.permute.xlu0 %2117
        %2119 = vrot.lane.b32.xlu0 %v1536, 4
        %v2120 = vpop.permute.xlu0 %2119
        %2121 = vrot.lane.b32.xlu0 %v1537, 4
        %v2122 = vpop.permute.xlu0 %2121
        %2123 = vrot.lane.b32.xlu0 %v1538, 4
        %v2124 = vpop.permute.xlu0 %2123
        %2125 = vrot.lane.b32.xlu0 %v1539, 4
        %v2126 = vpop.permute.xlu0 %2125
        %2127 = vrot.lane.b32.xlu0 %v1540, 4
        %v2128 = vpop.permute.xlu0 %2127
        %2129 = vrot.lane.b32.xlu0 %v1541, 4
        %v2130 = vpop.permute.xlu0 %2129
        %2131 = vrot.lane.b32.xlu0 %v1542, 4
        %v2132 = vpop.permute.xlu0 %2131
        %2133 = vrot.lane.b32.xlu0 %v1543, 4
        %v2134 = vpop.permute.xlu0 %2133
        %2135 = vrot.lane.b32.xlu0 %v1544, 4
        %v2136 = vpop.permute.xlu0 %2135
        %2137 = vrot.lane.b32.xlu0 %v1545, 4
        %v2138 = vpop.permute.xlu0 %2137
        %2139 = vrot.lane.b32.xlu0 %v1546, 4
        %v2140 = vpop.permute.xlu0 %2139
        %2141 = vrot.lane.b32.xlu0 %v1547, 4
        %v2142 = vpop.permute.xlu0 %2141
        %2143 = vrot.lane.b32.xlu0 %v1548, 4
        %v2144 = vpop.permute.xlu0 %2143
        %2145 = vrot.lane.b32.xlu0 %v1549, 4
        %v2146 = vpop.permute.xlu0 %2145
        %2147 = vrot.lane.b32.xlu0 %v1550, 4
        %v2148 = vpop.permute.xlu0 %2147
        %2149 = vrot.lane.b32.xlu0 %v1551, 4
        %v2150 = vpop.permute.xlu0 %2149
        %2151 = vrot.lane.b32.xlu0 %v1552, 4
        %v2152 = vpop.permute.xlu0 %2151
        %2153 = vrot.lane.b32.xlu0 %v1553, 4
        %v2154 = vpop.permute.xlu0 %2153
        %2155 = vrot.lane.b32.xlu0 %v1554, 4
        %v2156 = vpop.permute.xlu0 %2155
        %2157 = vrot.lane.b32.xlu0 %v1555, 4
        %v2158 = vpop.permute.xlu0 %2157
        %2159 = vrot.lane.b32.xlu0 %v1556, 4
        %v2160 = vpop.permute.xlu0 %2159
        %2161 = vrot.lane.b32.xlu0 %v1557, 4
        %v2162 = vpop.permute.xlu0 %2161
        %2163 = vrot.lane.b32.xlu0 %v1558, 4
        %v2164 = vpop.permute.xlu0 %2163
        %2165 = vrot.lane.b32.xlu0 %v1559, 4
        %v2166 = vpop.permute.xlu0 %2165
        %2167 = vrot.lane.b32.xlu0 %v1560, 4
        %v2168 = vpop.permute.xlu0 %2167
        %2169 = vrot.lane.b32.xlu0 %v1561, 4
        %v2170 = vpop.permute.xlu0 %2169
        %2171 = vrot.lane.b32.xlu0 %v1562, 4
        %v2172 = vpop.permute.xlu0 %2171
        %2237 = vrot.lane.b32.xlu0 %v1563, 8
        %v2238 = vpop.permute.xlu0 %2237
        %2239 = vrot.lane.b32.xlu0 %v1564, 8
        %v2240 = vpop.permute.xlu0 %2239
        %2241 = vrot.lane.b32.xlu0 %v1565, 8
        %v2242 = vpop.permute.xlu0 %2241
        %2243 = vrot.lane.b32.xlu0 %v1566, 8
        %v2244 = vpop.permute.xlu0 %2243
        %2245 = vrot.lane.b32.xlu0 %v1567, 8
        %v2246 = vpop.permute.xlu0 %2245
        %2247 = vrot.lane.b32.xlu0 %v1568, 8
        %v2248 = vpop.permute.xlu0 %2247
        %2249 = vrot.lane.b32.xlu0 %v1569, 8
        %v2250 = vpop.permute.xlu0 %2249
        %2251 = vrot.lane.b32.xlu0 %v1570, 8
        %v2252 = vpop.permute.xlu0 %2251
        %2253 = vrot.lane.b32.xlu0 %v1571, 8
        %v2254 = vpop.permute.xlu0 %2253
        %2255 = vrot.lane.b32.xlu0 %v1572, 8
        %v2256 = vpop.permute.xlu0 %2255
        %2257 = vrot.lane.b32.xlu0 %v1573, 8
        %v2258 = vpop.permute.xlu0 %2257
        %2259 = vrot.lane.b32.xlu0 %v1574, 8
        %v2260 = vpop.permute.xlu0 %2259
        %2261 = vrot.lane.b32.xlu0 %v1575, 8
        %v2262 = vpop.permute.xlu0 %2261
        %2263 = vrot.lane.b32.xlu0 %v1576, 8
        %v2264 = vpop.permute.xlu0 %2263
        %2265 = vrot.lane.b32.xlu0 %v1577, 8
        %v2266 = vpop.permute.xlu0 %2265
        %2267 = vrot.lane.b32.xlu0 %v1578, 8
        %v2268 = vpop.permute.xlu0 %2267
        %2269 = vrot.lane.b32.xlu0 %v1579, 8
        %v2270 = vpop.permute.xlu0 %2269
        %2271 = vrot.lane.b32.xlu0 %v1580, 8
        %v2272 = vpop.permute.xlu0 %2271
        %2273 = vrot.lane.b32.xlu0 %v1581, 8
        %v2274 = vpop.permute.xlu0 %2273
        %2275 = vrot.lane.b32.xlu0 %v1582, 8
        %v2276 = vpop.permute.xlu0 %2275
        %2277 = vrot.lane.b32.xlu0 %v1583, 8
        %v2278 = vpop.permute.xlu0 %2277
        %2279 = vrot.lane.b32.xlu0 %v1584, 8
        %v2280 = vpop.permute.xlu0 %2279
        %2281 = vrot.lane.b32.xlu0 %v1585, 8
        %v2282 = vpop.permute.xlu0 %2281
        %2283 = vrot.lane.b32.xlu0 %v1586, 8
        %v2284 = vpop.permute.xlu0 %2283
        %2285 = vrot.lane.b32.xlu0 %v1587, 8
        %v2286 = vpop.permute.xlu0 %2285
        %2287 = vrot.lane.b32.xlu0 %v1588, 8
        %v2288 = vpop.permute.xlu0 %2287
        %2289 = vrot.lane.b32.xlu0 %v1589, 8
        %v2290 = vpop.permute.xlu0 %2289
        %2291 = vrot.lane.b32.xlu0 %v1590, 8
        %v2292 = vpop.permute.xlu0 %2291
        %2293 = vrot.lane.b32.xlu0 %v1591, 8
        %v2294 = vpop.permute.xlu0 %2293
        %2295 = vrot.lane.b32.xlu0 %v1592, 8
        %v2296 = vpop.permute.xlu0 %2295
        %2297 = vrot.lane.b32.xlu0 %v1593, 8
        %v2298 = vpop.permute.xlu0 %2297
        %2299 = vrot.lane.b32.xlu0 %v1594, 8
        %v2300 = vpop.permute.xlu0 %2299
        %2365 = vrot.lane.b32.xlu0 %v1595, 12
        %v2366 = vpop.permute.xlu0 %2365
        %2367 = vrot.lane.b32.xlu0 %v1596, 12
        %v2368 = vpop.permute.xlu0 %2367
        %2369 = vrot.lane.b32.xlu0 %v1597, 12
        %v2370 = vpop.permute.xlu0 %2369
        %2371 = vrot.lane.b32.xlu0 %v1598, 12
        %v2372 = vpop.permute.xlu0 %2371
        %2373 = vrot.lane.b32.xlu0 %v1599, 12
        %v2374 = vpop.permute.xlu0 %2373
        %2375 = vrot.lane.b32.xlu0 %v1600, 12
        %v2376 = vpop.permute.xlu0 %2375
        %2377 = vrot.lane.b32.xlu0 %v1601, 12
        %v2378 = vpop.permute.xlu0 %2377
        %2379 = vrot.lane.b32.xlu0 %v1602, 12
        %v2380 = vpop.permute.xlu0 %2379
        %2381 = vrot.lane.b32.xlu0 %v1603, 12
        %v2382 = vpop.permute.xlu0 %2381
        %2383 = vrot.lane.b32.xlu0 %v1604, 12
        %v2384 = vpop.permute.xlu0 %2383
        %2385 = vrot.lane.b32.xlu0 %v1605, 12
        %v2386 = vpop.permute.xlu0 %2385
        %2387 = vrot.lane.b32.xlu0 %v1606, 12
        %v2388 = vpop.permute.xlu0 %2387
        %2389 = vrot.lane.b32.xlu0 %v1607, 12
        %v2390 = vpop.permute.xlu0 %2389
        %2391 = vrot.lane.b32.xlu0 %v1608, 12
        %v2392 = vpop.permute.xlu0 %2391
        %2393 = vrot.lane.b32.xlu0 %v1609, 12
        %v2394 = vpop.permute.xlu0 %2393
        %2395 = vrot.lane.b32.xlu0 %v1610, 12
        %v2396 = vpop.permute.xlu0 %2395
        %2397 = vrot.lane.b32.xlu0 %v1611, 12
        %v2398 = vpop.permute.xlu0 %2397
        %2399 = vrot.lane.b32.xlu0 %v1612, 12
        %v2400 = vpop.permute.xlu0 %2399
        %2401 = vrot.lane.b32.xlu0 %v1613, 12
        %v2402 = vpop.permute.xlu0 %2401
        %2403 = vrot.lane.b32.xlu0 %v1614, 12
        %v2404 = vpop.permute.xlu0 %2403
        %2405 = vrot.lane.b32.xlu0 %v1615, 12
        %v2406 = vpop.permute.xlu0 %2405
        %2407 = vrot.lane.b32.xlu0 %v1616, 12
        %v2408 = vpop.permute.xlu0 %2407
        %2409 = vrot.lane.b32.xlu0 %v1617, 12
        %v2410 = vpop.permute.xlu0 %2409
        %2411 = vrot.lane.b32.xlu0 %v1618, 12
        %v2412 = vpop.permute.xlu0 %2411
        %2413 = vrot.lane.b32.xlu0 %v1619, 12
        %v2414 = vpop.permute.xlu0 %2413
        %2415 = vrot.lane.b32.xlu0 %v1620, 12
        %v2416 = vpop.permute.xlu0 %2415
        %2417 = vrot.lane.b32.xlu0 %v1621, 12
        %v2418 = vpop.permute.xlu0 %2417
        %2419 = vrot.lane.b32.xlu0 %v1622, 12
        %v2420 = vpop.permute.xlu0 %2419
        %2421 = vrot.lane.b32.xlu0 %v1623, 12
        %v2422 = vpop.permute.xlu0 %2421
        %2423 = vrot.lane.b32.xlu0 %v1624, 12
        %v2424 = vpop.permute.xlu0 %2423
        %2425 = vrot.lane.b32.xlu0 %v1625, 12
        %v2426 = vpop.permute.xlu0 %2425
        %2427 = vrot.lane.b32.xlu0 %v1626, 12
        %v2428 = vpop.permute.xlu0 %2427
        %2493 = vrot.lane.b32.xlu0 %v1627, 16
        %v2494 = vpop.permute.xlu0 %2493
        %2495 = vrot.lane.b32.xlu0 %v1628, 16
        %v2496 = vpop.permute.xlu0 %2495
        %2497 = vrot.lane.b32.xlu0 %v1629, 16
        %v2498 = vpop.permute.xlu0 %2497
        %2499 = vrot.lane.b32.xlu0 %v1630, 16
        %v2500 = vpop.permute.xlu0 %2499
        %2501 = vrot.lane.b32.xlu0 %v1631, 16
        %v2502 = vpop.permute.xlu0 %2501
        %2503 = vrot.lane.b32.xlu0 %v1632, 16
        %v2504 = vpop.permute.xlu0 %2503
        %2505 = vrot.lane.b32.xlu0 %v1633, 16
        %v2506 = vpop.permute.xlu0 %2505
        %2507 = vrot.lane.b32.xlu0 %v1634, 16
        %v2508 = vpop.permute.xlu0 %2507
        %2509 = vrot.lane.b32.xlu0 %v1635, 16
        %v2510 = vpop.permute.xlu0 %2509
        %2511 = vrot.lane.b32.xlu0 %v1636, 16
        %v2512 = vpop.permute.xlu0 %2511
        %2513 = vrot.lane.b32.xlu0 %v1637, 16
        %v2514 = vpop.permute.xlu0 %2513
        %2515 = vrot.lane.b32.xlu0 %v1638, 16
        %v2516 = vpop.permute.xlu0 %2515
        %2517 = vrot.lane.b32.xlu0 %v1639, 16
        %v2518 = vpop.permute.xlu0 %2517
        %2519 = vrot.lane.b32.xlu0 %v1640, 16
        %v2520 = vpop.permute.xlu0 %2519
        %2521 = vrot.lane.b32.xlu0 %v1641, 16
        %v2522 = vpop.permute.xlu0 %2521
        %2523 = vrot.lane.b32.xlu0 %v1642, 16
        %v2524 = vpop.permute.xlu0 %2523
        %2525 = vrot.lane.b32.xlu0 %v1643, 16
        %v2526 = vpop.permute.xlu0 %2525
        %2527 = vrot.lane.b32.xlu0 %v1644, 16
        %v2528 = vpop.permute.xlu0 %2527
        %2529 = vrot.lane.b32.xlu0 %v1645, 16
        %v2530 = vpop.permute.xlu0 %2529
        %2531 = vrot.lane.b32.xlu0 %v1646, 16
        %v2532 = vpop.permute.xlu0 %2531
        %2533 = vrot.lane.b32.xlu0 %v1647, 16
        %v2534 = vpop.permute.xlu0 %2533
        %2535 = vrot.lane.b32.xlu0 %v1648, 16
        %v2536 = vpop.permute.xlu0 %2535
        %2537 = vrot.lane.b32.xlu0 %v1649, 16
        %v2538 = vpop.permute.xlu0 %2537
        %2539 = vrot.lane.b32.xlu0 %v1650, 16
        %v2540 = vpop.permute.xlu0 %2539
        %2541 = vrot.lane.b32.xlu0 %v1651, 16
        %v2542 = vpop.permute.xlu0 %2541
        %2543 = vrot.lane.b32.xlu0 %v1652, 16
        %v2544 = vpop.permute.xlu0 %2543
        %2545 = vrot.lane.b32.xlu0 %v1653, 16
        %v2546 = vpop.permute.xlu0 %2545
        %2547 = vrot.lane.b32.xlu0 %v1654, 16
        %v2548 = vpop.permute.xlu0 %2547
        %2549 = vrot.lane.b32.xlu0 %v1655, 16
        %v2550 = vpop.permute.xlu0 %2549
        %2551 = vrot.lane.b32.xlu0 %v1656, 16
        %v2552 = vpop.permute.xlu0 %2551
        %2553 = vrot.lane.b32.xlu0 %v1657, 16
        %v2554 = vpop.permute.xlu0 %2553
        %2555 = vrot.lane.b32.xlu0 %v1658, 16
        %v2556 = vpop.permute.xlu0 %2555
        %2621 = vrot.lane.b32.xlu0 %v1659, 20
        %v2622 = vpop.permute.xlu0 %2621
        %2623 = vrot.lane.b32.xlu0 %v1660, 20
        %v2624 = vpop.permute.xlu0 %2623
        %2625 = vrot.lane.b32.xlu0 %v1661, 20
        %v2626 = vpop.permute.xlu0 %2625
        %2627 = vrot.lane.b32.xlu0 %v1662, 20
        %v2628 = vpop.permute.xlu0 %2627
        %2629 = vrot.lane.b32.xlu0 %v1663, 20
        %v2630 = vpop.permute.xlu0 %2629
        %2631 = vrot.lane.b32.xlu0 %v1664, 20
        %v2632 = vpop.permute.xlu0 %2631
        %2633 = vrot.lane.b32.xlu0 %v1665, 20
        %v2634 = vpop.permute.xlu0 %2633
        %2635 = vrot.lane.b32.xlu0 %v1666, 20
        %v2636 = vpop.permute.xlu0 %2635
        %2637 = vrot.lane.b32.xlu0 %v1667, 20
        %v2638 = vpop.permute.xlu0 %2637
        %2639 = vrot.lane.b32.xlu0 %v1668, 20
        %v2640 = vpop.permute.xlu0 %2639
        %2641 = vrot.lane.b32.xlu0 %v1669, 20
        %v2642 = vpop.permute.xlu0 %2641
        %2643 = vrot.lane.b32.xlu0 %v1670, 20
        %v2644 = vpop.permute.xlu0 %2643
        %2645 = vrot.lane.b32.xlu0 %v1671, 20
        %v2646 = vpop.permute.xlu0 %2645
        %2647 = vrot.lane.b32.xlu0 %v1672, 20
        %v2648 = vpop.permute.xlu0 %2647
        %2649 = vrot.lane.b32.xlu0 %v1673, 20
        %v2650 = vpop.permute.xlu0 %2649
        %2651 = vrot.lane.b32.xlu0 %v1674, 20
        %v2652 = vpop.permute.xlu0 %2651
        %2653 = vrot.lane.b32.xlu0 %v1675, 20
        %v2654 = vpop.permute.xlu0 %2653
        %2655 = vrot.lane.b32.xlu0 %v1676, 20
        %v2656 = vpop.permute.xlu0 %2655
        %2657 = vrot.lane.b32.xlu0 %v1677, 20
        %v2658 = vpop.permute.xlu0 %2657
        %2659 = vrot.lane.b32.xlu0 %v1678, 20
        %v2660 = vpop.permute.xlu0 %2659
        %2661 = vrot.lane.b32.xlu0 %v1679, 20
        %v2662 = vpop.permute.xlu0 %2661
        %2663 = vrot.lane.b32.xlu0 %v1680, 20
        %v2664 = vpop.permute.xlu0 %2663
        %2665 = vrot.lane.b32.xlu0 %v1681, 20
        %v2666 = vpop.permute.xlu0 %2665
        %2667 = vrot.lane.b32.xlu0 %v1682, 20
        %v2668 = vpop.permute.xlu0 %2667
        %2669 = vrot.lane.b32.xlu0 %v1683, 20
        %v2670 = vpop.permute.xlu0 %2669
        %2671 = vrot.lane.b32.xlu0 %v1684, 20
        %v2672 = vpop.permute.xlu0 %2671
        %2673 = vrot.lane.b32.xlu0 %v1685, 20
        %v2674 = vpop.permute.xlu0 %2673
        %2675 = vrot.lane.b32.xlu0 %v1686, 20
        %v2676 = vpop.permute.xlu0 %2675
        %2677 = vrot.lane.b32.xlu0 %v1687, 20
        %v2678 = vpop.permute.xlu0 %2677
        %2679 = vrot.lane.b32.xlu0 %v1688, 20
        %v2680 = vpop.permute.xlu0 %2679
        %2681 = vrot.lane.b32.xlu0 %v1689, 20
        %v2682 = vpop.permute.xlu0 %2681
        %2683 = vrot.lane.b32.xlu0 %v1690, 20
        %v2684 = vpop.permute.xlu0 %2683
        %2749 = vrot.lane.b32.xlu0 %v1691, 24
        %v2750 = vpop.permute.xlu0 %2749
        %2751 = vrot.lane.b32.xlu0 %v1692, 24
        %v2752 = vpop.permute.xlu0 %2751
        %2753 = vrot.lane.b32.xlu0 %v1693, 24
        %v2754 = vpop.permute.xlu0 %2753
        %2755 = vrot.lane.b32.xlu0 %v1694, 24
        %v2756 = vpop.permute.xlu0 %2755
        %2757 = vrot.lane.b32.xlu0 %v1695, 24
        %v2758 = vpop.permute.xlu0 %2757
        %2759 = vrot.lane.b32.xlu0 %v1696, 24
        %v2760 = vpop.permute.xlu0 %2759
        %2761 = vrot.lane.b32.xlu0 %v1697, 24
        %v2762 = vpop.permute.xlu0 %2761
        %2763 = vrot.lane.b32.xlu0 %v1698, 24
        %v2764 = vpop.permute.xlu0 %2763
        %2765 = vrot.lane.b32.xlu0 %v1699, 24
        %v2766 = vpop.permute.xlu0 %2765
        %2767 = vrot.lane.b32.xlu0 %v1700, 24
        %v2768 = vpop.permute.xlu0 %2767
        %2769 = vrot.lane.b32.xlu0 %v1701, 24
        %v2770 = vpop.permute.xlu0 %2769
        %2771 = vrot.lane.b32.xlu0 %v1702, 24
        %v2772 = vpop.permute.xlu0 %2771
        %2773 = vrot.lane.b32.xlu0 %v1703, 24
        %v2774 = vpop.permute.xlu0 %2773
        %2775 = vrot.lane.b32.xlu0 %v1704, 24
        %v2776 = vpop.permute.xlu0 %2775
        %2777 = vrot.lane.b32.xlu0 %v1705, 24
        %v2778 = vpop.permute.xlu0 %2777
        %2779 = vrot.lane.b32.xlu0 %v1706, 24
        %v2780 = vpop.permute.xlu0 %2779
        %2781 = vrot.lane.b32.xlu0 %v1707, 24
        %v2782 = vpop.permute.xlu0 %2781
        %2783 = vrot.lane.b32.xlu0 %v1708, 24
        %v2784 = vpop.permute.xlu0 %2783
        %2785 = vrot.lane.b32.xlu0 %v1709, 24
        %v2786 = vpop.permute.xlu0 %2785
        %2787 = vrot.lane.b32.xlu0 %v1710, 24
        %v2788 = vpop.permute.xlu0 %2787
        %2789 = vrot.lane.b32.xlu0 %v1711, 24
        %v2790 = vpop.permute.xlu0 %2789
        %2791 = vrot.lane.b32.xlu0 %v1712, 24
        %v2792 = vpop.permute.xlu0 %2791
        %2793 = vrot.lane.b32.xlu0 %v1713, 24
        %v2794 = vpop.permute.xlu0 %2793
        %2795 = vrot.lane.b32.xlu0 %v1714, 24
        %v2796 = vpop.permute.xlu0 %2795
        %2797 = vrot.lane.b32.xlu0 %v1715, 24
        %v2798 = vpop.permute.xlu0 %2797
        %2799 = vrot.lane.b32.xlu0 %v1716, 24
        %v2800 = vpop.permute.xlu0 %2799
        %2801 = vrot.lane.b32.xlu0 %v1717, 24
        %v2802 = vpop.permute.xlu0 %2801
        %2803 = vrot.lane.b32.xlu0 %v1718, 24
        %v2804 = vpop.permute.xlu0 %2803
        %2805 = vrot.lane.b32.xlu0 %v1719, 24
        %v2806 = vpop.permute.xlu0 %2805
        %2807 = vrot.lane.b32.xlu0 %v1720, 24
        %v2808 = vpop.permute.xlu0 %2807
        %2809 = vrot.lane.b32.xlu0 %v1721, 24
        %v2810 = vpop.permute.xlu0 %2809
        %2811 = vrot.lane.b32.xlu0 %v1722, 24
        %v2812 = vpop.permute.xlu0 %2811
        %2877 = vrot.lane.b32.xlu0 %v1723, 28
        %v2878 = vpop.permute.xlu0 %2877
        %2879 = vrot.lane.b32.xlu0 %v1724, 28
        %v2880 = vpop.permute.xlu0 %2879
        %2881 = vrot.lane.b32.xlu0 %v1725, 28
        %v2882 = vpop.permute.xlu0 %2881
        %2883 = vrot.lane.b32.xlu0 %v1726, 28
        %v2884 = vpop.permute.xlu0 %2883
        %2885 = vrot.lane.b32.xlu0 %v1727, 28
        %v2886 = vpop.permute.xlu0 %2885
        %2887 = vrot.lane.b32.xlu0 %v1728, 28
        %v2888 = vpop.permute.xlu0 %2887
        %2889 = vrot.lane.b32.xlu0 %v1729, 28
        %v2890 = vpop.permute.xlu0 %2889
        %2891 = vrot.lane.b32.xlu0 %v1730, 28
        %v2892 = vpop.permute.xlu0 %2891
        %2893 = vrot.lane.b32.xlu0 %v1731, 28
        %v2894 = vpop.permute.xlu0 %2893
        %2895 = vrot.lane.b32.xlu0 %v1732, 28
        %v2896 = vpop.permute.xlu0 %2895
        %2897 = vrot.lane.b32.xlu0 %v1733, 28
        %v2898 = vpop.permute.xlu0 %2897
        %2899 = vrot.lane.b32.xlu0 %v1734, 28
        %v2900 = vpop.permute.xlu0 %2899
        %2901 = vrot.lane.b32.xlu0 %v1735, 28
        %v2902 = vpop.permute.xlu0 %2901
        %2903 = vrot.lane.b32.xlu0 %v1736, 28
        %v2904 = vpop.permute.xlu0 %2903
        %2905 = vrot.lane.b32.xlu0 %v1737, 28
        %v2906 = vpop.permute.xlu0 %2905
        %2907 = vrot.lane.b32.xlu0 %v1738, 28
        %v2908 = vpop.permute.xlu0 %2907
        %2909 = vrot.lane.b32.xlu0 %v1739, 28
        %v2910 = vpop.permute.xlu0 %2909
        %2911 = vrot.lane.b32.xlu0 %v1740, 28
        %v2912 = vpop.permute.xlu0 %2911
        %2913 = vrot.lane.b32.xlu0 %v1741, 28
        %v2914 = vpop.permute.xlu0 %2913
        %2915 = vrot.lane.b32.xlu0 %v1742, 28
        %v2916 = vpop.permute.xlu0 %2915
        %2917 = vrot.lane.b32.xlu0 %v1743, 28
        %v2918 = vpop.permute.xlu0 %2917
        %2919 = vrot.lane.b32.xlu0 %v1744, 28
        %v2920 = vpop.permute.xlu0 %2919
        %2921 = vrot.lane.b32.xlu0 %v1745, 28
        %v2922 = vpop.permute.xlu0 %2921
        %2923 = vrot.lane.b32.xlu0 %v1746, 28
        %v2924 = vpop.permute.xlu0 %2923
        %2925 = vrot.lane.b32.xlu0 %v1747, 28
        %v2926 = vpop.permute.xlu0 %2925
        %2927 = vrot.lane.b32.xlu0 %v1748, 28
        %v2928 = vpop.permute.xlu0 %2927
        %2929 = vrot.lane.b32.xlu0 %v1749, 28
        %v2930 = vpop.permute.xlu0 %2929
        %2931 = vrot.lane.b32.xlu0 %v1750, 28
        %v2932 = vpop.permute.xlu0 %2931
        %2933 = vrot.lane.b32.xlu0 %v1751, 28
        %v2934 = vpop.permute.xlu0 %2933
        %2935 = vrot.lane.b32.xlu0 %v1752, 28
        %v2936 = vpop.permute.xlu0 %2935
        %2937 = vrot.lane.b32.xlu0 %v1753, 28
        %v2938 = vpop.permute.xlu0 %2937
        %2939 = vrot.lane.b32.xlu0 %v1754, 28
        %v2940 = vpop.permute.xlu0 %2939
        %3005 = vrot.lane.b32.xlu0 %v1755, 32
        %v3006 = vpop.permute.xlu0 %3005
        %3007 = vrot.lane.b32.xlu0 %v1756, 32
        %v3008 = vpop.permute.xlu0 %3007
        %3009 = vrot.lane.b32.xlu0 %v1757, 32
        %v3010 = vpop.permute.xlu0 %3009
        %3011 = vrot.lane.b32.xlu0 %v1758, 32
        %v3012 = vpop.permute.xlu0 %3011
        %3013 = vrot.lane.b32.xlu0 %v1759, 32
        %v3014 = vpop.permute.xlu0 %3013
        %3015 = vrot.lane.b32.xlu0 %v1760, 32
        %v3016 = vpop.permute.xlu0 %3015
        %3017 = vrot.lane.b32.xlu0 %v1761, 32
        %v3018 = vpop.permute.xlu0 %3017
        %3019 = vrot.lane.b32.xlu0 %v1762, 32
        %v3020 = vpop.permute.xlu0 %3019
        %3021 = vrot.lane.b32.xlu0 %v1763, 32
        %v3022 = vpop.permute.xlu0 %3021
        %3023 = vrot.lane.b32.xlu0 %v1764, 32
        %v3024 = vpop.permute.xlu0 %3023
        %3025 = vrot.lane.b32.xlu0 %v1765, 32
        %v3026 = vpop.permute.xlu0 %3025
        %3027 = vrot.lane.b32.xlu0 %v1766, 32
        %v3028 = vpop.permute.xlu0 %3027
        %3029 = vrot.lane.b32.xlu0 %v1767, 32
        %v3030 = vpop.permute.xlu0 %3029
        %3031 = vrot.lane.b32.xlu0 %v1768, 32
        %v3032 = vpop.permute.xlu0 %3031
        %3033 = vrot.lane.b32.xlu0 %v1769, 32
        %v3034 = vpop.permute.xlu0 %3033
        %3035 = vrot.lane.b32.xlu0 %v1770, 32
        %v3036 = vpop.permute.xlu0 %3035
        %3037 = vrot.lane.b32.xlu0 %v1771, 32
        %v3038 = vpop.permute.xlu0 %3037
        %3039 = vrot.lane.b32.xlu0 %v1772, 32
        %v3040 = vpop.permute.xlu0 %3039
        %3041 = vrot.lane.b32.xlu0 %v1773, 32
        %v3042 = vpop.permute.xlu0 %3041
        %3043 = vrot.lane.b32.xlu0 %v1774, 32
        %v3044 = vpop.permute.xlu0 %3043
        %3045 = vrot.lane.b32.xlu0 %v1775, 32
        %v3046 = vpop.permute.xlu0 %3045
        %3047 = vrot.lane.b32.xlu0 %v1776, 32
        %v3048 = vpop.permute.xlu0 %3047
        %3049 = vrot.lane.b32.xlu0 %v1777, 32
        %v3050 = vpop.permute.xlu0 %3049
        %3051 = vrot.lane.b32.xlu0 %v1778, 32
        %v3052 = vpop.permute.xlu0 %3051
        %3053 = vrot.lane.b32.xlu0 %v1779, 32
        %v3054 = vpop.permute.xlu0 %3053
        %3055 = vrot.lane.b32.xlu0 %v1780, 32
        %v3056 = vpop.permute.xlu0 %3055
        %3057 = vrot.lane.b32.xlu0 %v1781, 32
        %v3058 = vpop.permute.xlu0 %3057
        %3059 = vrot.lane.b32.xlu0 %v1782, 32
        %v3060 = vpop.permute.xlu0 %3059
        %3061 = vrot.lane.b32.xlu0 %v1783, 32
        %v3062 = vpop.permute.xlu0 %3061
        %3063 = vrot.lane.b32.xlu0 %v1784, 32
        %v3064 = vpop.permute.xlu0 %3063
        %3065 = vrot.lane.b32.xlu0 %v1785, 32
        %v3066 = vpop.permute.xlu0 %3065
        %3067 = vrot.lane.b32.xlu0 %v1786, 32
        %v3068 = vpop.permute.xlu0 %3067
        %3133 = vrot.lane.b32.xlu0 %v1787, 36
        %v3134 = vpop.permute.xlu0 %3133
        %3135 = vrot.lane.b32.xlu0 %v1788, 36
        %v3136 = vpop.permute.xlu0 %3135
        %3137 = vrot.lane.b32.xlu0 %v1789, 36
        %v3138 = vpop.permute.xlu0 %3137
        %3139 = vrot.lane.b32.xlu0 %v1790, 36
        %v3140 = vpop.permute.xlu0 %3139
        %3141 = vrot.lane.b32.xlu0 %v1791, 36
        %v3142 = vpop.permute.xlu0 %3141
        %3143 = vrot.lane.b32.xlu0 %v1792, 36
        %v3144 = vpop.permute.xlu0 %3143
        %3145 = vrot.lane.b32.xlu0 %v1793, 36
        %v3146 = vpop.permute.xlu0 %3145
        %3147 = vrot.lane.b32.xlu0 %v1794, 36
        %v3148 = vpop.permute.xlu0 %3147
        %3149 = vrot.lane.b32.xlu0 %v1795, 36
        %v3150 = vpop.permute.xlu0 %3149
        %3151 = vrot.lane.b32.xlu0 %v1796, 36
        %v3152 = vpop.permute.xlu0 %3151
        %3153 = vrot.lane.b32.xlu0 %v1797, 36
        %v3154 = vpop.permute.xlu0 %3153
        %3155 = vrot.lane.b32.xlu0 %v1798, 36
        %v3156 = vpop.permute.xlu0 %3155
        %3157 = vrot.lane.b32.xlu0 %v1799, 36
        %v3158 = vpop.permute.xlu0 %3157
        %3159 = vrot.lane.b32.xlu0 %v1800, 36
        %v3160 = vpop.permute.xlu0 %3159
        %3161 = vrot.lane.b32.xlu0 %v1801, 36
        %v3162 = vpop.permute.xlu0 %3161
        %3163 = vrot.lane.b32.xlu0 %v1802, 36
        %v3164 = vpop.permute.xlu0 %3163
        %3165 = vrot.lane.b32.xlu0 %v1803, 36
        %v3166 = vpop.permute.xlu0 %3165
        %3167 = vrot.lane.b32.xlu0 %v1804, 36
        %v3168 = vpop.permute.xlu0 %3167
        %3169 = vrot.lane.b32.xlu0 %v1805, 36
        %v3170 = vpop.permute.xlu0 %3169
        %3171 = vrot.lane.b32.xlu0 %v1806, 36
        %v3172 = vpop.permute.xlu0 %3171
        %3173 = vrot.lane.b32.xlu0 %v1807, 36
        %v3174 = vpop.permute.xlu0 %3173
        %3175 = vrot.lane.b32.xlu0 %v1808, 36
        %v3176 = vpop.permute.xlu0 %3175
        %3177 = vrot.lane.b32.xlu0 %v1809, 36
        %v3178 = vpop.permute.xlu0 %3177
        %3179 = vrot.lane.b32.xlu0 %v1810, 36
        %v3180 = vpop.permute.xlu0 %3179
        %3181 = vrot.lane.b32.xlu0 %v1811, 36
        %v3182 = vpop.permute.xlu0 %3181
        %3183 = vrot.lane.b32.xlu0 %v1812, 36
        %v3184 = vpop.permute.xlu0 %3183
        %3185 = vrot.lane.b32.xlu0 %v1813, 36
        %v3186 = vpop.permute.xlu0 %3185
        %3187 = vrot.lane.b32.xlu0 %v1814, 36
        %v3188 = vpop.permute.xlu0 %3187
        %3189 = vrot.lane.b32.xlu0 %v1815, 36
        %v3190 = vpop.permute.xlu0 %3189
        %3191 = vrot.lane.b32.xlu0 %v1816, 36
        %v3192 = vpop.permute.xlu0 %3191
        %3193 = vrot.lane.b32.xlu0 %v1817, 36
        %v3194 = vpop.permute.xlu0 %3193
        %3195 = vrot.lane.b32.xlu0 %v1818, 36
        %v3196 = vpop.permute.xlu0 %3195
        %3261 = vrot.lane.b32.xlu0 %v1819, 40
        %v3262 = vpop.permute.xlu0 %3261
        %3263 = vrot.lane.b32.xlu0 %v1820, 40
        %v3264 = vpop.permute.xlu0 %3263
        %3265 = vrot.lane.b32.xlu0 %v1821, 40
        %v3266 = vpop.permute.xlu0 %3265
        %3267 = vrot.lane.b32.xlu0 %v1822, 40
        %v3268 = vpop.permute.xlu0 %3267
        %3269 = vrot.lane.b32.xlu0 %v1823, 40
        %v3270 = vpop.permute.xlu0 %3269
        %3271 = vrot.lane.b32.xlu0 %v1824, 40
        %v3272 = vpop.permute.xlu0 %3271
        %3273 = vrot.lane.b32.xlu0 %v1825, 40
        %v3274 = vpop.permute.xlu0 %3273
        %3275 = vrot.lane.b32.xlu0 %v1826, 40
        %v3276 = vpop.permute.xlu0 %3275
        %3277 = vrot.lane.b32.xlu0 %v1827, 40
        %v3278 = vpop.permute.xlu0 %3277
        %3279 = vrot.lane.b32.xlu0 %v1828, 40
        %v3280 = vpop.permute.xlu0 %3279
        %3281 = vrot.lane.b32.xlu0 %v1829, 40
        %v3282 = vpop.permute.xlu0 %3281
        %3283 = vrot.lane.b32.xlu0 %v1830, 40
        %v3284 = vpop.permute.xlu0 %3283
        %3285 = vrot.lane.b32.xlu0 %v1831, 40
        %v3286 = vpop.permute.xlu0 %3285
        %3287 = vrot.lane.b32.xlu0 %v1832, 40
        %v3288 = vpop.permute.xlu0 %3287
        %3289 = vrot.lane.b32.xlu0 %v1833, 40
        %v3290 = vpop.permute.xlu0 %3289
        %3291 = vrot.lane.b32.xlu0 %v1834, 40
        %v3292 = vpop.permute.xlu0 %3291
        %3293 = vrot.lane.b32.xlu0 %v1835, 40
        %v3294 = vpop.permute.xlu0 %3293
        %3295 = vrot.lane.b32.xlu0 %v1836, 40
        %v3296 = vpop.permute.xlu0 %3295
        %3297 = vrot.lane.b32.xlu0 %v1837, 40
        %v3298 = vpop.permute.xlu0 %3297
        %3299 = vrot.lane.b32.xlu0 %v1838, 40
        %v3300 = vpop.permute.xlu0 %3299
        %3301 = vrot.lane.b32.xlu0 %v1839, 40
        %v3302 = vpop.permute.xlu0 %3301
        %3303 = vrot.lane.b32.xlu0 %v1840, 40
        %v3304 = vpop.permute.xlu0 %3303
        %3305 = vrot.lane.b32.xlu0 %v1841, 40
        %v3306 = vpop.permute.xlu0 %3305
        %3307 = vrot.lane.b32.xlu0 %v1842, 40
        %v3308 = vpop.permute.xlu0 %3307
        %3309 = vrot.lane.b32.xlu0 %v1843, 40
        %v3310 = vpop.permute.xlu0 %3309
        %3311 = vrot.lane.b32.xlu0 %v1844, 40
        %v3312 = vpop.permute.xlu0 %3311
        %3313 = vrot.lane.b32.xlu0 %v1845, 40
        %v3314 = vpop.permute.xlu0 %3313
        %3315 = vrot.lane.b32.xlu0 %v1846, 40
        %v3316 = vpop.permute.xlu0 %3315
        %3317 = vrot.lane.b32.xlu0 %v1847, 40
        %v3318 = vpop.permute.xlu0 %3317
        %3319 = vrot.lane.b32.xlu0 %v1848, 40
        %v3320 = vpop.permute.xlu0 %3319
        %3321 = vrot.lane.b32.xlu0 %v1849, 40
        %v3322 = vpop.permute.xlu0 %3321
        %3323 = vrot.lane.b32.xlu0 %v1850, 40
        %v3324 = vpop.permute.xlu0 %3323
        %3389 = vrot.lane.b32.xlu0 %v1851, 44
        %v3390 = vpop.permute.xlu0 %3389
        %3391 = vrot.lane.b32.xlu0 %v1852, 44
        %v3392 = vpop.permute.xlu0 %3391
        %3393 = vrot.lane.b32.xlu0 %v1853, 44
        %v3394 = vpop.permute.xlu0 %3393
        %3395 = vrot.lane.b32.xlu0 %v1854, 44
        %v3396 = vpop.permute.xlu0 %3395
        %3397 = vrot.lane.b32.xlu0 %v1855, 44
        %v3398 = vpop.permute.xlu0 %3397
        %3399 = vrot.lane.b32.xlu0 %v1856, 44
        %v3400 = vpop.permute.xlu0 %3399
        %3401 = vrot.lane.b32.xlu0 %v1857, 44
        %v3402 = vpop.permute.xlu0 %3401
        %3403 = vrot.lane.b32.xlu0 %v1858, 44
        %v3404 = vpop.permute.xlu0 %3403
        %3405 = vrot.lane.b32.xlu0 %v1859, 44
        %v3406 = vpop.permute.xlu0 %3405
        %3407 = vrot.lane.b32.xlu0 %v1860, 44
        %v3408 = vpop.permute.xlu0 %3407
        %3409 = vrot.lane.b32.xlu0 %v1861, 44
        %v3410 = vpop.permute.xlu0 %3409
        %3411 = vrot.lane.b32.xlu0 %v1862, 44
        %v3412 = vpop.permute.xlu0 %3411
        %3413 = vrot.lane.b32.xlu0 %v1863, 44
        %v3414 = vpop.permute.xlu0 %3413
        %3415 = vrot.lane.b32.xlu0 %v1864, 44
        %v3416 = vpop.permute.xlu0 %3415
        %3417 = vrot.lane.b32.xlu0 %v1865, 44
        %v3418 = vpop.permute.xlu0 %3417
        %3419 = vrot.lane.b32.xlu0 %v1866, 44
        %v3420 = vpop.permute.xlu0 %3419
        %3421 = vrot.lane.b32.xlu0 %v1867, 44
        %v3422 = vpop.permute.xlu0 %3421
        %3423 = vrot.lane.b32.xlu0 %v1868, 44
        %v3424 = vpop.permute.xlu0 %3423
        %3425 = vrot.lane.b32.xlu0 %v1869, 44
        %v3426 = vpop.permute.xlu0 %3425
        %3427 = vrot.lane.b32.xlu0 %v1870, 44
        %v3428 = vpop.permute.xlu0 %3427
        %3429 = vrot.lane.b32.xlu0 %v1871, 44
        %v3430 = vpop.permute.xlu0 %3429
        %3431 = vrot.lane.b32.xlu0 %v1872, 44
        %v3432 = vpop.permute.xlu0 %3431
        %3433 = vrot.lane.b32.xlu0 %v1873, 44
        %v3434 = vpop.permute.xlu0 %3433
        %3435 = vrot.lane.b32.xlu0 %v1874, 44
        %v3436 = vpop.permute.xlu0 %3435
        %3437 = vrot.lane.b32.xlu0 %v1875, 44
        %v3438 = vpop.permute.xlu0 %3437
        %3439 = vrot.lane.b32.xlu0 %v1876, 44
        %v3440 = vpop.permute.xlu0 %3439
        %3441 = vrot.lane.b32.xlu0 %v1877, 44
        %v3442 = vpop.permute.xlu0 %3441
        %3443 = vrot.lane.b32.xlu0 %v1878, 44
        %v3444 = vpop.permute.xlu0 %3443
        %3445 = vrot.lane.b32.xlu0 %v1879, 44
        %v3446 = vpop.permute.xlu0 %3445
        %3447 = vrot.lane.b32.xlu0 %v1880, 44
        %v3448 = vpop.permute.xlu0 %3447
        %3449 = vrot.lane.b32.xlu0 %v1881, 44
        %v3450 = vpop.permute.xlu0 %3449
        %3451 = vrot.lane.b32.xlu0 %v1882, 44
        %v3452 = vpop.permute.xlu0 %3451
        %3517 = vrot.lane.b32.xlu0 %v1884, 48
        %v3518 = vpop.permute.xlu0 %3517
        %3519 = vrot.lane.b32.xlu0 %v1885, 48
        %v3520 = vpop.permute.xlu0 %3519
        %3521 = vrot.lane.b32.xlu0 %v1886, 48
        %v3522 = vpop.permute.xlu0 %3521
        %3523 = vrot.lane.b32.xlu0 %v1887, 48
        %v3524 = vpop.permute.xlu0 %3523
        %3525 = vrot.lane.b32.xlu0 %v1888, 48
        %v3526 = vpop.permute.xlu0 %3525
        %3527 = vrot.lane.b32.xlu0 %v1889, 48
        %v3528 = vpop.permute.xlu0 %3527
        %3529 = vrot.lane.b32.xlu0 %v1890, 48
        %v3530 = vpop.permute.xlu0 %3529
        %3531 = vrot.lane.b32.xlu0 %v1891, 48
        %v3532 = vpop.permute.xlu0 %3531
        %3533 = vrot.lane.b32.xlu0 %v1892, 48
        %v3534 = vpop.permute.xlu0 %3533
        %3535 = vrot.lane.b32.xlu0 %v1893, 48
        %v3536 = vpop.permute.xlu0 %3535
        %3537 = vrot.lane.b32.xlu0 %v1894, 48
        %v3538 = vpop.permute.xlu0 %3537
        %3539 = vrot.lane.b32.xlu0 %v1895, 48
        %v3540 = vpop.permute.xlu0 %3539
        %3541 = vrot.lane.b32.xlu0 %v1896, 48
        %v3542 = vpop.permute.xlu0 %3541
        %3543 = vrot.lane.b32.xlu0 %v1897, 48
        %v3544 = vpop.permute.xlu0 %3543
        %3545 = vrot.lane.b32.xlu0 %v1898, 48
        %v3546 = vpop.permute.xlu0 %3545
        %3547 = vrot.lane.b32.xlu0 %v1899, 48
        %v3548 = vpop.permute.xlu0 %3547
        %3549 = vrot.lane.b32.xlu0 %v1900, 48
        %v3550 = vpop.permute.xlu0 %3549
        %3551 = vrot.lane.b32.xlu0 %v1901, 48
        %v3552 = vpop.permute.xlu0 %3551
        %3553 = vrot.lane.b32.xlu0 %v1902, 48
        %v3554 = vpop.permute.xlu0 %3553
        %3555 = vrot.lane.b32.xlu0 %v1903, 48
        %v3556 = vpop.permute.xlu0 %3555
        %3557 = vrot.lane.b32.xlu0 %v1904, 48
        %v3558 = vpop.permute.xlu0 %3557
        %3559 = vrot.lane.b32.xlu0 %v1905, 48
        %v3560 = vpop.permute.xlu0 %3559
        %3561 = vrot.lane.b32.xlu0 %v1906, 48
        %v3562 = vpop.permute.xlu0 %3561
        %3563 = vrot.lane.b32.xlu0 %v1907, 48
        %v3564 = vpop.permute.xlu0 %3563
        %3565 = vrot.lane.b32.xlu0 %v1908, 48
        %v3566 = vpop.permute.xlu0 %3565
        %3567 = vrot.lane.b32.xlu0 %v1909, 48
        %v3568 = vpop.permute.xlu0 %3567
        %3569 = vrot.lane.b32.xlu0 %v1910, 48
        %v3570 = vpop.permute.xlu0 %3569
        %3571 = vrot.lane.b32.xlu0 %v1911, 48
        %v3572 = vpop.permute.xlu0 %3571
        %3573 = vrot.lane.b32.xlu0 %v1912, 48
        %v3574 = vpop.permute.xlu0 %3573
        %3575 = vrot.lane.b32.xlu0 %v1913, 48
        %v3576 = vpop.permute.xlu0 %3575
        %3577 = vrot.lane.b32.xlu0 %v1914, 48
        %v3578 = vpop.permute.xlu0 %3577
        %3579 = vrot.lane.b32.xlu0 %v1915, 48
        %v3580 = vpop.permute.xlu0 %3579
        %3645 = vrot.lane.b32.xlu0 %v1917, 52
        %v3646 = vpop.permute.xlu0 %3645
        %3647 = vrot.lane.b32.xlu0 %v1918, 52
        %v3648 = vpop.permute.xlu0 %3647
        %3649 = vrot.lane.b32.xlu0 %v1919, 52
        %v3650 = vpop.permute.xlu0 %3649
        %3651 = vrot.lane.b32.xlu0 %v1920, 52
        %v3652 = vpop.permute.xlu0 %3651
        %3653 = vrot.lane.b32.xlu0 %v1921, 52
        %v3654 = vpop.permute.xlu0 %3653
        %3655 = vrot.lane.b32.xlu0 %v1922, 52
        %v3656 = vpop.permute.xlu0 %3655
        %3657 = vrot.lane.b32.xlu0 %v1923, 52
        %v3658 = vpop.permute.xlu0 %3657
        %3659 = vrot.lane.b32.xlu0 %v1924, 52
        %v3660 = vpop.permute.xlu0 %3659
        %3661 = vrot.lane.b32.xlu0 %v1925, 52
        %v3662 = vpop.permute.xlu0 %3661
        %3663 = vrot.lane.b32.xlu0 %v1926, 52
        %v3664 = vpop.permute.xlu0 %3663
        %3665 = vrot.lane.b32.xlu0 %v1927, 52
        %v3666 = vpop.permute.xlu0 %3665
        %3667 = vrot.lane.b32.xlu0 %v1928, 52
        %v3668 = vpop.permute.xlu0 %3667
        %3669 = vrot.lane.b32.xlu0 %v1929, 52
        %v3670 = vpop.permute.xlu0 %3669
        %3671 = vrot.lane.b32.xlu0 %v1930, 52
        %v3672 = vpop.permute.xlu0 %3671
        %3673 = vrot.lane.b32.xlu0 %v1931, 52
        %v3674 = vpop.permute.xlu0 %3673
        %3675 = vrot.lane.b32.xlu0 %v1932, 52
        %v3676 = vpop.permute.xlu0 %3675
        %3677 = vrot.lane.b32.xlu0 %v1933, 52
        %v3678 = vpop.permute.xlu0 %3677
        %3679 = vrot.lane.b32.xlu0 %v1934, 52
        %v3680 = vpop.permute.xlu0 %3679
        %3681 = vrot.lane.b32.xlu0 %v1935, 52
        %v3682 = vpop.permute.xlu0 %3681
        %3683 = vrot.lane.b32.xlu0 %v1936, 52
        %v3684 = vpop.permute.xlu0 %3683
        %3685 = vrot.lane.b32.xlu0 %v1937, 52
        %v3686 = vpop.permute.xlu0 %3685
        %3687 = vrot.lane.b32.xlu0 %v1938, 52
        %v3688 = vpop.permute.xlu0 %3687
        %3689 = vrot.lane.b32.xlu0 %v1939, 52
        %v3690 = vpop.permute.xlu0 %3689
        %3691 = vrot.lane.b32.xlu0 %v1940, 52
        %v3692 = vpop.permute.xlu0 %3691
        %3693 = vrot.lane.b32.xlu0 %v1941, 52
        %v3694 = vpop.permute.xlu0 %3693
        %3695 = vrot.lane.b32.xlu0 %v1942, 52
        %v3696 = vpop.permute.xlu0 %3695
        %3697 = vrot.lane.b32.xlu0 %v1943, 52
        %v3698 = vpop.permute.xlu0 %3697
        %3699 = vrot.lane.b32.xlu0 %v1944, 52
        %v3700 = vpop.permute.xlu0 %3699
        %3701 = vrot.lane.b32.xlu0 %v1945, 52
        %v3702 = vpop.permute.xlu0 %3701
        %3703 = vrot.lane.b32.xlu0 %v1946, 52
        %v3704 = vpop.permute.xlu0 %3703
        %3705 = vrot.lane.b32.xlu0 %v1947, 52
        %v3706 = vpop.permute.xlu0 %3705
        %3707 = vrot.lane.b32.xlu0 %v1948, 52
        %v3708 = vpop.permute.xlu0 %3707
        %3773 = vrot.lane.b32.xlu0 %v1949, 56
        %v3774 = vpop.permute.xlu0 %3773
        %3775 = vrot.lane.b32.xlu0 %v1950, 56
        %v3776 = vpop.permute.xlu0 %3775
        %3777 = vrot.lane.b32.xlu0 %v1951, 56
        %v3778 = vpop.permute.xlu0 %3777
        %3779 = vrot.lane.b32.xlu0 %v1952, 56
        %v3780 = vpop.permute.xlu0 %3779
        %3781 = vrot.lane.b32.xlu0 %v1953, 56
        %v3782 = vpop.permute.xlu0 %3781
        %3783 = vrot.lane.b32.xlu0 %v1954, 56
        %v3784 = vpop.permute.xlu0 %3783
        %3785 = vrot.lane.b32.xlu0 %v1955, 56
        %v3786 = vpop.permute.xlu0 %3785
        %3787 = vrot.lane.b32.xlu0 %v1956, 56
        %v3788 = vpop.permute.xlu0 %3787
        %3789 = vrot.lane.b32.xlu0 %v1957, 56
        %v3790 = vpop.permute.xlu0 %3789
        %3791 = vrot.lane.b32.xlu0 %v1958, 56
        %v3792 = vpop.permute.xlu0 %3791
        %3793 = vrot.lane.b32.xlu0 %v1959, 56
        %v3794 = vpop.permute.xlu0 %3793
        %3795 = vrot.lane.b32.xlu0 %v1960, 56
        %v3796 = vpop.permute.xlu0 %3795
        %3797 = vrot.lane.b32.xlu0 %v1961, 56
        %v3798 = vpop.permute.xlu0 %3797
        %3799 = vrot.lane.b32.xlu0 %v1962, 56
        %v3800 = vpop.permute.xlu0 %3799
        %3801 = vrot.lane.b32.xlu0 %v1963, 56
        %v3802 = vpop.permute.xlu0 %3801
        %3803 = vrot.lane.b32.xlu0 %v1964, 56
        %v3804 = vpop.permute.xlu0 %3803
        %3805 = vrot.lane.b32.xlu0 %v1965, 56
        %v3806 = vpop.permute.xlu0 %3805
        %3807 = vrot.lane.b32.xlu0 %v1966, 56
        %v3808 = vpop.permute.xlu0 %3807
        %3809 = vrot.lane.b32.xlu0 %v1967, 56
        %v3810 = vpop.permute.xlu0 %3809
        %3811 = vrot.lane.b32.xlu0 %v1968, 56
        %v3812 = vpop.permute.xlu0 %3811
        %3813 = vrot.lane.b32.xlu0 %v1969, 56
        %v3814 = vpop.permute.xlu0 %3813
        %3815 = vrot.lane.b32.xlu0 %v1970, 56
        %v3816 = vpop.permute.xlu0 %3815
        %3817 = vrot.lane.b32.xlu0 %v1971, 56
        %v3818 = vpop.permute.xlu0 %3817
        %3819 = vrot.lane.b32.xlu0 %v1972, 56
        %v3820 = vpop.permute.xlu0 %3819
        %3821 = vrot.lane.b32.xlu0 %v1973, 56
        %v3822 = vpop.permute.xlu0 %3821
        %3823 = vrot.lane.b32.xlu0 %v1974, 56
        %v3824 = vpop.permute.xlu0 %3823
        %3825 = vrot.lane.b32.xlu0 %v1975, 56
        %v3826 = vpop.permute.xlu0 %3825
        %3827 = vrot.lane.b32.xlu0 %v1976, 56
        %v3828 = vpop.permute.xlu0 %3827
        %3829 = vrot.lane.b32.xlu0 %v1977, 56
        %v3830 = vpop.permute.xlu0 %3829
        %3831 = vrot.lane.b32.xlu0 %v1978, 56
        %v3832 = vpop.permute.xlu0 %3831
        %3833 = vrot.lane.b32.xlu0 %v1979, 56
        %v3834 = vpop.permute.xlu0 %3833
        %3835 = vrot.lane.b32.xlu0 %v1980, 56
        %v3836 = vpop.permute.xlu0 %3835
        %3901 = vrot.lane.b32.xlu0 %v1981, 60
        %v3902 = vpop.permute.xlu0 %3901
        %3903 = vrot.lane.b32.xlu0 %v1982, 60
        %v3904 = vpop.permute.xlu0 %3903
        %3905 = vrot.lane.b32.xlu0 %v1983, 60
        %v3906 = vpop.permute.xlu0 %3905
        %3907 = vrot.lane.b32.xlu0 %v1984, 60
        %v3908 = vpop.permute.xlu0 %3907
        %3909 = vrot.lane.b32.xlu0 %v1985, 60
        %v3910 = vpop.permute.xlu0 %3909
        %3911 = vrot.lane.b32.xlu0 %v1986, 60
        %v3912 = vpop.permute.xlu0 %3911
        %3913 = vrot.lane.b32.xlu0 %v1987, 60
        %v3914 = vpop.permute.xlu0 %3913
        %3915 = vrot.lane.b32.xlu0 %v1988, 60
        %v3916 = vpop.permute.xlu0 %3915
        %3917 = vrot.lane.b32.xlu0 %v1989, 60
        %v3918 = vpop.permute.xlu0 %3917
        %3919 = vrot.lane.b32.xlu0 %v1990, 60
        %v3920 = vpop.permute.xlu0 %3919
        %3921 = vrot.lane.b32.xlu0 %v1991, 60
        %v3922 = vpop.permute.xlu0 %3921
        %3923 = vrot.lane.b32.xlu0 %v1992, 60
        %v3924 = vpop.permute.xlu0 %3923
        %3925 = vrot.lane.b32.xlu0 %v1993, 60
        %v3926 = vpop.permute.xlu0 %3925
        %3927 = vrot.lane.b32.xlu0 %v1994, 60
        %v3928 = vpop.permute.xlu0 %3927
        %3929 = vrot.lane.b32.xlu0 %v1995, 60
        %v3930 = vpop.permute.xlu0 %3929
        %3931 = vrot.lane.b32.xlu0 %v1996, 60
        %v3932 = vpop.permute.xlu0 %3931
        %3933 = vrot.lane.b32.xlu0 %v1997, 60
        %v3934 = vpop.permute.xlu0 %3933
        %3935 = vrot.lane.b32.xlu0 %v1998, 60
        %v3936 = vpop.permute.xlu0 %3935
        %3937 = vrot.lane.b32.xlu0 %v1999, 60
        %v3938 = vpop.permute.xlu0 %3937
        %3939 = vrot.lane.b32.xlu0 %v2000, 60
        %v3940 = vpop.permute.xlu0 %3939
        %3941 = vrot.lane.b32.xlu0 %v2001, 60
        %v3942 = vpop.permute.xlu0 %3941
        %3943 = vrot.lane.b32.xlu0 %v2002, 60
        %v3944 = vpop.permute.xlu0 %3943
        %3945 = vrot.lane.b32.xlu0 %v2003, 60
        %v3946 = vpop.permute.xlu0 %3945
        %3947 = vrot.lane.b32.xlu0 %v2004, 60
        %v3948 = vpop.permute.xlu0 %3947
        %3949 = vrot.lane.b32.xlu0 %v2005, 60
        %v3950 = vpop.permute.xlu0 %3949
        %3951 = vrot.lane.b32.xlu0 %v2006, 60
        %v3952 = vpop.permute.xlu0 %3951
        %3953 = vrot.lane.b32.xlu0 %v2007, 60
        %v3954 = vpop.permute.xlu0 %3953
        %3955 = vrot.lane.b32.xlu0 %v2008, 60
        %v3956 = vpop.permute.xlu0 %3955
        %3957 = vrot.lane.b32.xlu0 %v2009, 60
        %v3958 = vpop.permute.xlu0 %3957
        %3959 = vrot.lane.b32.xlu0 %v2010, 60
        %v3960 = vpop.permute.xlu0 %3959
        %3961 = vrot.lane.b32.xlu0 %v2011, 60
        %v3962 = vpop.permute.xlu0 %3961
        %3963 = vrot.lane.b32.xlu0 %v2012, 60
        %v3964 = vpop.permute.xlu0 %3963
        %v3997 = vsel %vm1433, %v1499, %v2110
        %v3998 = vsel %vm1433, %v1500, %v2112
        %v3999 = vsel %vm1433, %v1501, %v2114
        %v4000 = vsel %vm1433, %v1502, %v2116
        %v4001 = vsel %vm1433, %v1503, %v2118
        %v4002 = vsel %vm1433, %v1504, %v2120
        %v4003 = vsel %vm1433, %v1505, %v2122
        %v4004 = vsel %vm1433, %v1506, %v2124
        %v4005 = vsel %vm1433, %v1507, %v2126
        %v4006 = vsel %vm1433, %v1508, %v2128
        %v4007 = vsel %vm1433, %v1509, %v2130
        %v4008 = vsel %vm1433, %v1510, %v2132
        %v4009 = vsel %vm1433, %v1511, %v2134
        %v4010 = vsel %vm1433, %v1512, %v2136
        %v4011 = vsel %vm1433, %v1513, %v2138
        %v4012 = vsel %vm1433, %v1514, %v2140
        %v4013 = vsel %vm1433, %v1515, %v2142
        %v4014 = vsel %vm1433, %v1516, %v2144
        %v4015 = vsel %vm1433, %v1517, %v2146
        %v4016 = vsel %vm1433, %v1518, %v2148
        %v4017 = vsel %vm1433, %v1519, %v2150
        %v4018 = vsel %vm1433, %v1520, %v2152
        %v4019 = vsel %vm1433, %v1521, %v2154
        %v4020 = vsel %vm1433, %v1522, %v2156
        %v4021 = vsel %vm1433, %v1523, %v2158
        %v4022 = vsel %vm1433, %v1524, %v2160
        %v4023 = vsel %vm1433, %v1525, %v2162
        %v4024 = vsel %vm1433, %v1526, %v2164
        %v4025 = vsel %vm1433, %v1527, %v2166
        %v4026 = vsel %vm1433, %v1528, %v2168
        %v4027 = vsel %vm1433, %v1529, %v2170
        %v4028 = vsel %vm1433, %v1530, %v2172
        %v4029 = vsel %vm1083, %v3997, %v2238
        %v4030 = vsel %vm1083, %v3998, %v2240
        %v4031 = vsel %vm1083, %v3999, %v2242
        %v4032 = vsel %vm1083, %v4000, %v2244
        %v4033 = vsel %vm1083, %v4001, %v2246
        %v4034 = vsel %vm1083, %v4002, %v2248
        %v4035 = vsel %vm1083, %v4003, %v2250
        %v4036 = vsel %vm1083, %v4004, %v2252
        %v4037 = vsel %vm1083, %v4005, %v2254
        %v4038 = vsel %vm1083, %v4006, %v2256
        %v4039 = vsel %vm1083, %v4007, %v2258
        %v4040 = vsel %vm1083, %v4008, %v2260
        %v4041 = vsel %vm1083, %v4009, %v2262
        %v4042 = vsel %vm1083, %v4010, %v2264
        %v4043 = vsel %vm1083, %v4011, %v2266
        %v4044 = vsel %vm1083, %v4012, %v2268
        %v4045 = vsel %vm1083, %v4013, %v2270
        %v4046 = vsel %vm1083, %v4014, %v2272
        %v4047 = vsel %vm1083, %v4015, %v2274
        %v4048 = vsel %vm1083, %v4016, %v2276
        %v4049 = vsel %vm1083, %v4017, %v2278
        %v4050 = vsel %vm1083, %v4018, %v2280
        %v4051 = vsel %vm1083, %v4019, %v2282
        %v4052 = vsel %vm1083, %v4020, %v2284
        %v4053 = vsel %vm1083, %v4021, %v2286
        %v4054 = vsel %vm1083, %v4022, %v2288
        %v4055 = vsel %vm1083, %v4023, %v2290
        %v4056 = vsel %vm1083, %v4024, %v2292
        %v4057 = vsel %vm1083, %v4025, %v2294
        %v4058 = vsel %vm1083, %v4026, %v2296
        %v4059 = vsel %vm1083, %v4027, %v2298
        %v4060 = vsel %vm1083, %v4028, %v2300
        %vm4061 = vcmask 97280
        %v4062 = vsel %vm4061, %v4029, %v2366
        %v4063 = vsel %vm4061, %v4030, %v2368
        %v4064 = vsel %vm4061, %v4031, %v2370
        %v4065 = vsel %vm4061, %v4032, %v2372
        %v4066 = vsel %vm4061, %v4033, %v2374
        %v4067 = vsel %vm4061, %v4034, %v2376
        %v4068 = vsel %vm4061, %v4035, %v2378
        %v4069 = vsel %vm4061, %v4036, %v2380
        %v4070 = vsel %vm4061, %v4037, %v2382
        %v4071 = vsel %vm4061, %v4038, %v2384
        %v4072 = vsel %vm4061, %v4039, %v2386
        %v4073 = vsel %vm4061, %v4040, %v2388
        %v4074 = vsel %vm4061, %v4041, %v2390
        %v4075 = vsel %vm4061, %v4042, %v2392
        %v4076 = vsel %vm4061, %v4043, %v2394
        %v4077 = vsel %vm4061, %v4044, %v2396
        %v4078 = vsel %vm4061, %v4045, %v2398
        %v4079 = vsel %vm4061, %v4046, %v2400
        %v4080 = vsel %vm4061, %v4047, %v2402
        %v4081 = vsel %vm4061, %v4048, %v2404
        %v4082 = vsel %vm4061, %v4049, %v2406
        %v4083 = vsel %vm4061, %v4050, %v2408
        %v4084 = vsel %vm4061, %v4051, %v2410
        %v4085 = vsel %vm4061, %v4052, %v2412
        %v4086 = vsel %vm4061, %v4053, %v2414
        %v4087 = vsel %vm4061, %v4054, %v2416
        %v4088 = vsel %vm4061, %v4055, %v2418
        %v4089 = vsel %vm4061, %v4056, %v2420
        %v4090 = vsel %vm4061, %v4057, %v2422
        %v4091 = vsel %vm4061, %v4058, %v2424
        %v4092 = vsel %vm4061, %v4059, %v2426
        %v4093 = vsel %vm4061, %v4060, %v2428
        %v4094 = vsel %vm1116, %v4062, %v2494
        %v4095 = vsel %vm1116, %v4063, %v2496
        %v4096 = vsel %vm1116, %v4064, %v2498
        %v4097 = vsel %vm1116, %v4065, %v2500
        %v4098 = vsel %vm1116, %v4066, %v2502
        %v4099 = vsel %vm1116, %v4067, %v2504
        %v4100 = vsel %vm1116, %v4068, %v2506
        %v4101 = vsel %vm1116, %v4069, %v2508
        %v4102 = vsel %vm1116, %v4070, %v2510
        %v4103 = vsel %vm1116, %v4071, %v2512
        %v4104 = vsel %vm1116, %v4072, %v2514
        %v4105 = vsel %vm1116, %v4073, %v2516
        %v4106 = vsel %vm1116, %v4074, %v2518
        %v4107 = vsel %vm1116, %v4075, %v2520
        %v4108 = vsel %vm1116, %v4076, %v2522
        %v4109 = vsel %vm1116, %v4077, %v2524
        %v4110 = vsel %vm1116, %v4078, %v2526
        %v4111 = vsel %vm1116, %v4079, %v2528
        %v4112 = vsel %vm1116, %v4080, %v2530
        %v4113 = vsel %vm1116, %v4081, %v2532
        %v4114 = vsel %vm1116, %v4082, %v2534
        %v4115 = vsel %vm1116, %v4083, %v2536
        %v4116 = vsel %vm1116, %v4084, %v2538
        %v4117 = vsel %vm1116, %v4085, %v2540
        %v4118 = vsel %vm1116, %v4086, %v2542
        %v4119 = vsel %vm1116, %v4087, %v2544
        %v4120 = vsel %vm1116, %v4088, %v2546
        %v4121 = vsel %vm1116, %v4089, %v2548
        %v4122 = vsel %vm1116, %v4090, %v2550
        %v4123 = vsel %vm1116, %v4091, %v2552
        %v4124 = vsel %vm1116, %v4092, %v2554
        %v4125 = vsel %vm1116, %v4093, %v2556
        %vm4126 = vcmask 162816
        %v4127 = vsel %vm4126, %v4094, %v2622
        %v4128 = vsel %vm4126, %v4095, %v2624
        %v4129 = vsel %vm4126, %v4096, %v2626
        %v4130 = vsel %vm4126, %v4097, %v2628
        %v4131 = vsel %vm4126, %v4098, %v2630
        %v4132 = vsel %vm4126, %v4099, %v2632
        %v4133 = vsel %vm4126, %v4100, %v2634
        %v4134 = vsel %vm4126, %v4101, %v2636
        %v4135 = vsel %vm4126, %v4102, %v2638
        %v4136 = vsel %vm4126, %v4103, %v2640
        %v4137 = vsel %vm4126, %v4104, %v2642
        %v4138 = vsel %vm4126, %v4105, %v2644
        %v4139 = vsel %vm4126, %v4106, %v2646
        %v4140 = vsel %vm4126, %v4107, %v2648
        %v4141 = vsel %vm4126, %v4108, %v2650
        %v4142 = vsel %vm4126, %v4109, %v2652
        %v4143 = vsel %vm4126, %v4110, %v2654
        %v4144 = vsel %vm4126, %v4111, %v2656
        %v4145 = vsel %vm4126, %v4112, %v2658
        %v4146 = vsel %vm4126, %v4113, %v2660
        %v4147 = vsel %vm4126, %v4114, %v2662
        %v4148 = vsel %vm4126, %v4115, %v2664
        %v4149 = vsel %vm4126, %v4116, %v2666
        %v4150 = vsel %vm4126, %v4117, %v2668
        %v4151 = vsel %vm4126, %v4118, %v2670
        %v4152 = vsel %vm4126, %v4119, %v2672
        %v4153 = vsel %vm4126, %v4120, %v2674
        %v4154 = vsel %vm4126, %v4121, %v2676
        %v4155 = vsel %vm4126, %v4122, %v2678
        %v4156 = vsel %vm4126, %v4123, %v2680
        %v4157 = vsel %vm4126, %v4124, %v2682
        %v4158 = vsel %vm4126, %v4125, %v2684
        %v4159 = vsel %vm1149, %v4127, %v2750
        %v4160 = vsel %vm1149, %v4128, %v2752
        %v4161 = vsel %vm1149, %v4129, %v2754
        %v4162 = vsel %vm1149, %v4130, %v2756
        %v4163 = vsel %vm1149, %v4131, %v2758
        %v4164 = vsel %vm1149, %v4132, %v2760
        %v4165 = vsel %vm1149, %v4133, %v2762
        %v4166 = vsel %vm1149, %v4134, %v2764
        %v4167 = vsel %vm1149, %v4135, %v2766
        %v4168 = vsel %vm1149, %v4136, %v2768
        %v4169 = vsel %vm1149, %v4137, %v2770
        %v4170 = vsel %vm1149, %v4138, %v2772
        %v4171 = vsel %vm1149, %v4139, %v2774
        %v4172 = vsel %vm1149, %v4140, %v2776
        %v4173 = vsel %vm1149, %v4141, %v2778
        %v4174 = vsel %vm1149, %v4142, %v2780
        %v4175 = vsel %vm1149, %v4143, %v2782
        %v4176 = vsel %vm1149, %v4144, %v2784
        %v4177 = vsel %vm1149, %v4145, %v2786
        %v4178 = vsel %vm1149, %v4146, %v2788
        %v4179 = vsel %vm1149, %v4147, %v2790
        %v4180 = vsel %vm1149, %v4148, %v2792
        %v4181 = vsel %vm1149, %v4149, %v2794
        %v4182 = vsel %vm1149, %v4150, %v2796
        %v4183 = vsel %vm1149, %v4151, %v2798
        %v4184 = vsel %vm1149, %v4152, %v2800
        %v4185 = vsel %vm1149, %v4153, %v2802
        %v4186 = vsel %vm1149, %v4154, %v2804
        %v4187 = vsel %vm1149, %v4155, %v2806
        %v4188 = vsel %vm1149, %v4156, %v2808
        %v4189 = vsel %vm1149, %v4157, %v2810
        %v4190 = vsel %vm1149, %v4158, %v2812
        %vm4191 = vcmask 228352
        %v4192 = vsel %vm4191, %v4159, %v2878
        %v4193 = vsel %vm4191, %v4160, %v2880
        %v4194 = vsel %vm4191, %v4161, %v2882
        %v4195 = vsel %vm4191, %v4162, %v2884
        %v4196 = vsel %vm4191, %v4163, %v2886
        %v4197 = vsel %vm4191, %v4164, %v2888
        %v4198 = vsel %vm4191, %v4165, %v2890
        %v4199 = vsel %vm4191, %v4166, %v2892
        %v4200 = vsel %vm4191, %v4167, %v2894
        %v4201 = vsel %vm4191, %v4168, %v2896
        %v4202 = vsel %vm4191, %v4169, %v2898
        %v4203 = vsel %vm4191, %v4170, %v2900
        %v4204 = vsel %vm4191, %v4171, %v2902
        %v4205 = vsel %vm4191, %v4172, %v2904
        %v4206 = vsel %vm4191, %v4173, %v2906
        %v4207 = vsel %vm4191, %v4174, %v2908
        %v4208 = vsel %vm4191, %v4175, %v2910
        %v4209 = vsel %vm4191, %v4176, %v2912
        %v4210 = vsel %vm4191, %v4177, %v2914
        %v4211 = vsel %vm4191, %v4178, %v2916
        %v4212 = vsel %vm4191, %v4179, %v2918
        %v4213 = vsel %vm4191, %v4180, %v2920
        %v4214 = vsel %vm4191, %v4181, %v2922
        %v4215 = vsel %vm4191, %v4182, %v2924
        %v4216 = vsel %vm4191, %v4183, %v2926
        %v4217 = vsel %vm4191, %v4184, %v2928
        %v4218 = vsel %vm4191, %v4185, %v2930
        %v4219 = vsel %vm4191, %v4186, %v2932
        %v4220 = vsel %vm4191, %v4187, %v2934
        %v4221 = vsel %vm4191, %v4188, %v2936
        %v4222 = vsel %vm4191, %v4189, %v2938
        %v4223 = vsel %vm4191, %v4190, %v2940
        %v4224 = vsel %vm1190, %v4192, %v3006
        %v4225 = vsel %vm1190, %v4193, %v3008
        %v4226 = vsel %vm1190, %v4194, %v3010
        %v4227 = vsel %vm1190, %v4195, %v3012
        %v4228 = vsel %vm1190, %v4196, %v3014
        %v4229 = vsel %vm1190, %v4197, %v3016
        %v4230 = vsel %vm1190, %v4198, %v3018
        %v4231 = vsel %vm1190, %v4199, %v3020
        %v4232 = vsel %vm1190, %v4200, %v3022
        %v4233 = vsel %vm1190, %v4201, %v3024
        %v4234 = vsel %vm1190, %v4202, %v3026
        %v4235 = vsel %vm1190, %v4203, %v3028
        %v4236 = vsel %vm1190, %v4204, %v3030
        %v4237 = vsel %vm1190, %v4205, %v3032
        %v4238 = vsel %vm1190, %v4206, %v3034
        %v4239 = vsel %vm1190, %v4207, %v3036
        %v4240 = vsel %vm1190, %v4208, %v3038
        %v4241 = vsel %vm1190, %v4209, %v3040
        %v4242 = vsel %vm1190, %v4210, %v3042
        %v4243 = vsel %vm1190, %v4211, %v3044
        %v4244 = vsel %vm1190, %v4212, %v3046
        %v4245 = vsel %vm1190, %v4213, %v3048
        %v4246 = vsel %vm1190, %v4214, %v3050
        %v4247 = vsel %vm1190, %v4215, %v3052
        %v4248 = vsel %vm1190, %v4216, %v3054
        %v4249 = vsel %vm1190, %v4217, %v3056
        %v4250 = vsel %vm1190, %v4218, %v3058
        %v4251 = vsel %vm1190, %v4219, %v3060
        %v4252 = vsel %vm1190, %v4220, %v3062
        %v4253 = vsel %vm1190, %v4221, %v3064
        %v4254 = vsel %vm1190, %v4222, %v3066
        %v4255 = vsel %vm1190, %v4223, %v3068
        %vm4256 = vcmask 293888
        %v4257 = vsel %vm4256, %v4224, %v3134
        %v4258 = vsel %vm4256, %v4225, %v3136
        %v4259 = vsel %vm4256, %v4226, %v3138
        %v4260 = vsel %vm4256, %v4227, %v3140
        %v4261 = vsel %vm4256, %v4228, %v3142
        %v4262 = vsel %vm4256, %v4229, %v3144
        %v4263 = vsel %vm4256, %v4230, %v3146
        %v4264 = vsel %vm4256, %v4231, %v3148
        %v4265 = vsel %vm4256, %v4232, %v3150
        %v4266 = vsel %vm4256, %v4233, %v3152
        %v4267 = vsel %vm4256, %v4234, %v3154
        %v4268 = vsel %vm4256, %v4235, %v3156
        %v4269 = vsel %vm4256, %v4236, %v3158
        %v4270 = vsel %vm4256, %v4237, %v3160
        %v4271 = vsel %vm4256, %v4238, %v3162
        %v4272 = vsel %vm4256, %v4239, %v3164
        %v4273 = vsel %vm4256, %v4240, %v3166
        %v4274 = vsel %vm4256, %v4241, %v3168
        %v4275 = vsel %vm4256, %v4242, %v3170
        %v4276 = vsel %vm4256, %v4243, %v3172
        %v4277 = vsel %vm4256, %v4244, %v3174
        %v4278 = vsel %vm4256, %v4245, %v3176
        %v4279 = vsel %vm4256, %v4246, %v3178
        %v4280 = vsel %vm4256, %v4247, %v3180
        %v4281 = vsel %vm4256, %v4248, %v3182
        %v4282 = vsel %vm4256, %v4249, %v3184
        %v4283 = vsel %vm4256, %v4250, %v3186
        %v4284 = vsel %vm4256, %v4251, %v3188
        %v4285 = vsel %vm4256, %v4252, %v3190
        %v4286 = vsel %vm4256, %v4253, %v3192
        %v4287 = vsel %vm4256, %v4254, %v3194
        %v4288 = vsel %vm4256, %v4255, %v3196
        %vm4289 = vcmask 326656
        %v4290 = vsel %vm4289, %v4257, %v3262
        %v4291 = vsel %vm4289, %v4258, %v3264
        %v4292 = vsel %vm4289, %v4259, %v3266
        %v4293 = vsel %vm4289, %v4260, %v3268
        %v4294 = vsel %vm4289, %v4261, %v3270
        %v4295 = vsel %vm4289, %v4262, %v3272
        %v4296 = vsel %vm4289, %v4263, %v3274
        %v4297 = vsel %vm4289, %v4264, %v3276
        %v4298 = vsel %vm4289, %v4265, %v3278
        %v4299 = vsel %vm4289, %v4266, %v3280
        %v4300 = vsel %vm4289, %v4267, %v3282
        %v4301 = vsel %vm4289, %v4268, %v3284
        %v4302 = vsel %vm4289, %v4269, %v3286
        %v4303 = vsel %vm4289, %v4270, %v3288
        %v4304 = vsel %vm4289, %v4271, %v3290
        %v4305 = vsel %vm4289, %v4272, %v3292
        %v4306 = vsel %vm4289, %v4273, %v3294
        %v4307 = vsel %vm4289, %v4274, %v3296
        %v4308 = vsel %vm4289, %v4275, %v3298
        %v4309 = vsel %vm4289, %v4276, %v3300
        %v4310 = vsel %vm4289, %v4277, %v3302
        %v4311 = vsel %vm4289, %v4278, %v3304
        %v4312 = vsel %vm4289, %v4279, %v3306
        %v4313 = vsel %vm4289, %v4280, %v3308
        %v4314 = vsel %vm4289, %v4281, %v3310
        %v4315 = vsel %vm4289, %v4282, %v3312
        %v4316 = vsel %vm4289, %v4283, %v3314
        %v4317 = vsel %vm4289, %v4284, %v3316
        %v4318 = vsel %vm4289, %v4285, %v3318
        %v4319 = vsel %vm4289, %v4286, %v3320
        %v4320 = vsel %vm4289, %v4287, %v3322
        %v4321 = vsel %vm4289, %v4288, %v3324
        %vm4322 = vcmask 359424
        %v4323 = vsel %vm4322, %v4290, %v3390
        %v4324 = vsel %vm4322, %v4291, %v3392
        %v4325 = vsel %vm4322, %v4292, %v3394
        %v4326 = vsel %vm4322, %v4293, %v3396
        %v4327 = vsel %vm4322, %v4294, %v3398
        %v4328 = vsel %vm4322, %v4295, %v3400
        %v4329 = vsel %vm4322, %v4296, %v3402
        %v4330 = vsel %vm4322, %v4297, %v3404
        %v4331 = vsel %vm4322, %v4298, %v3406
        %v4332 = vsel %vm4322, %v4299, %v3408
        %v4333 = vsel %vm4322, %v4300, %v3410
        %v4334 = vsel %vm4322, %v4301, %v3412
        %v4335 = vsel %vm4322, %v4302, %v3414
        %v4336 = vsel %vm4322, %v4303, %v3416
        %v4337 = vsel %vm4322, %v4304, %v3418
        %v4338 = vsel %vm4322, %v4305, %v3420
        %v4339 = vsel %vm4322, %v4306, %v3422
        %v4340 = vsel %vm4322, %v4307, %v3424
        %v4341 = vsel %vm4322, %v4308, %v3426
        %v4342 = vsel %vm4322, %v4309, %v3428
        %v4343 = vsel %vm4322, %v4310, %v3430
        %v4344 = vsel %vm4322, %v4311, %v3432
        %v4345 = vsel %vm4322, %v4312, %v3434
        %v4346 = vsel %vm4322, %v4313, %v3436
        %v4347 = vsel %vm4322, %v4314, %v3438
        %v4348 = vsel %vm4322, %v4315, %v3440
        %v4349 = vsel %vm4322, %v4316, %v3442
        %v4350 = vsel %vm4322, %v4317, %v3444
        %v4351 = vsel %vm4322, %v4318, %v3446
        %v4352 = vsel %vm4322, %v4319, %v3448
        %v4353 = vsel %vm4322, %v4320, %v3450
        %v4354 = vsel %vm4322, %v4321, %v3452
        %vm4355 = vcmask 392192
        %v4356 = vsel %vm4355, %v4323, %v3518
        %v4357 = vsel %vm4355, %v4324, %v3520
        %v4358 = vsel %vm4355, %v4325, %v3522
        %v4359 = vsel %vm4355, %v4326, %v3524
        %v4360 = vsel %vm4355, %v4327, %v3526
        %v4361 = vsel %vm4355, %v4328, %v3528
        %v4362 = vsel %vm4355, %v4329, %v3530
        %v4363 = vsel %vm4355, %v4330, %v3532
        %v4364 = vsel %vm4355, %v4331, %v3534
        %v4365 = vsel %vm4355, %v4332, %v3536
        %v4366 = vsel %vm4355, %v4333, %v3538
        %v4367 = vsel %vm4355, %v4334, %v3540
        %v4368 = vsel %vm4355, %v4335, %v3542
        %v4369 = vsel %vm4355, %v4336, %v3544
        %v4370 = vsel %vm4355, %v4337, %v3546
        %v4371 = vsel %vm4355, %v4338, %v3548
        %v4372 = vsel %vm4355, %v4339, %v3550
        %v4373 = vsel %vm4355, %v4340, %v3552
        %v4374 = vsel %vm4355, %v4341, %v3554
        %v4375 = vsel %vm4355, %v4342, %v3556
        %v4376 = vsel %vm4355, %v4343, %v3558
        %v4377 = vsel %vm4355, %v4344, %v3560
        %v4378 = vsel %vm4355, %v4345, %v3562
        %v4379 = vsel %vm4355, %v4346, %v3564
        %v4380 = vsel %vm4355, %v4347, %v3566
        %v4381 = vsel %vm4355, %v4348, %v3568
        %v4382 = vsel %vm4355, %v4349, %v3570
        %v4383 = vsel %vm4355, %v4350, %v3572
        %v4384 = vsel %vm4355, %v4351, %v3574
        %v4385 = vsel %vm4355, %v4352, %v3576
        %v4386 = vsel %vm4355, %v4353, %v3578
        %v4387 = vsel %vm4355, %v4354, %v3580
        %vm4388 = vcmask 424960
        %v4389 = vsel %vm4388, %v4356, %v3646
        %v4390 = vsel %vm4388, %v4357, %v3648
        %v4391 = vsel %vm4388, %v4358, %v3650
        %v4392 = vsel %vm4388, %v4359, %v3652
        %v4393 = vsel %vm4388, %v4360, %v3654
        %v4394 = vsel %vm4388, %v4361, %v3656
        %v4395 = vsel %vm4388, %v4362, %v3658
        %v4396 = vsel %vm4388, %v4363, %v3660
        %v4397 = vsel %vm4388, %v4364, %v3662
        %v4398 = vsel %vm4388, %v4365, %v3664
        %v4399 = vsel %vm4388, %v4366, %v3666
        %v4400 = vsel %vm4388, %v4367, %v3668
        %v4401 = vsel %vm4388, %v4368, %v3670
        %v4402 = vsel %vm4388, %v4369, %v3672
        %v4403 = vsel %vm4388, %v4370, %v3674
        %v4404 = vsel %vm4388, %v4371, %v3676
        %v4405 = vsel %vm4388, %v4372, %v3678
        %v4406 = vsel %vm4388, %v4373, %v3680
        %v4407 = vsel %vm4388, %v4374, %v3682
        %v4408 = vsel %vm4388, %v4375, %v3684
        %v4409 = vsel %vm4388, %v4376, %v3686
        %v4410 = vsel %vm4388, %v4377, %v3688
        %v4411 = vsel %vm4388, %v4378, %v3690
        %v4412 = vsel %vm4388, %v4379, %v3692
        %v4413 = vsel %vm4388, %v4380, %v3694
        %v4414 = vsel %vm4388, %v4381, %v3696
        %v4415 = vsel %vm4388, %v4382, %v3698
        %v4416 = vsel %vm4388, %v4383, %v3700
        %v4417 = vsel %vm4388, %v4384, %v3702
        %v4418 = vsel %vm4388, %v4385, %v3704
        %v4419 = vsel %vm4388, %v4386, %v3706
        %v4420 = vsel %vm4388, %v4387, %v3708
        %vm4421 = vcmask 457728
        %v4422 = vsel %vm4421, %v4389, %v3774
        %v4423 = vsel %vm4421, %v4390, %v3776
        %v4424 = vsel %vm4421, %v4391, %v3778
        %v4425 = vsel %vm4421, %v4392, %v3780
        %v4426 = vsel %vm4421, %v4393, %v3782
        %v4427 = vsel %vm4421, %v4394, %v3784
        %v4428 = vsel %vm4421, %v4395, %v3786
        %v4429 = vsel %vm4421, %v4396, %v3788
        %v4430 = vsel %vm4421, %v4397, %v3790
        %v4431 = vsel %vm4421, %v4398, %v3792
        %v4432 = vsel %vm4421, %v4399, %v3794
        %v4433 = vsel %vm4421, %v4400, %v3796
        %v4434 = vsel %vm4421, %v4401, %v3798
        %v4435 = vsel %vm4421, %v4402, %v3800
        %v4436 = vsel %vm4421, %v4403, %v3802
        %v4437 = vsel %vm4421, %v4404, %v3804
        %v4438 = vsel %vm4421, %v4405, %v3806
        %v4439 = vsel %vm4421, %v4406, %v3808
        %v4440 = vsel %vm4421, %v4407, %v3810
        %v4441 = vsel %vm4421, %v4408, %v3812
        %v4442 = vsel %vm4421, %v4409, %v3814
        %v4443 = vsel %vm4421, %v4410, %v3816
        %v4444 = vsel %vm4421, %v4411, %v3818
        %v4445 = vsel %vm4421, %v4412, %v3820
        %v4446 = vsel %vm4421, %v4413, %v3822
        %v4447 = vsel %vm4421, %v4414, %v3824
        %v4448 = vsel %vm4421, %v4415, %v3826
        %v4449 = vsel %vm4421, %v4416, %v3828
        %v4450 = vsel %vm4421, %v4417, %v3830
        %v4451 = vsel %vm4421, %v4418, %v3832
        %v4452 = vsel %vm4421, %v4419, %v3834
        %v4453 = vsel %vm4421, %v4420, %v3836
        %vm4454 = vcmask 490496
        %v4455 = vsel %vm4454, %v4422, %v3902
        %v4456 = vsel %vm4454, %v4423, %v3904
        %v4457 = vsel %vm4454, %v4424, %v3906
        %v4458 = vsel %vm4454, %v4425, %v3908
        %v4459 = vsel %vm4454, %v4426, %v3910
        %v4460 = vsel %vm4454, %v4427, %v3912
        %v4461 = vsel %vm4454, %v4428, %v3914
        %v4462 = vsel %vm4454, %v4429, %v3916
        %v4463 = vsel %vm4454, %v4430, %v3918
        %v4464 = vsel %vm4454, %v4431, %v3920
        %v4465 = vsel %vm4454, %v4432, %v3922
        %v4466 = vsel %vm4454, %v4433, %v3924
        %v4467 = vsel %vm4454, %v4434, %v3926
        %v4468 = vsel %vm4454, %v4435, %v3928
        %v4469 = vsel %vm4454, %v4436, %v3930
        %v4470 = vsel %vm4454, %v4437, %v3932
        %v4471 = vsel %vm4454, %v4438, %v3934
        %v4472 = vsel %vm4454, %v4439, %v3936
        %v4473 = vsel %vm4454, %v4440, %v3938
        %v4474 = vsel %vm4454, %v4441, %v3940
        %v4475 = vsel %vm4454, %v4442, %v3942
        %v4476 = vsel %vm4454, %v4443, %v3944
        %v4477 = vsel %vm4454, %v4444, %v3946
        %v4478 = vsel %vm4454, %v4445, %v3948
        %v4479 = vsel %vm4454, %v4446, %v3950
        %v4480 = vsel %vm4454, %v4447, %v3952
        %v4481 = vsel %vm4454, %v4448, %v3954
        %v4482 = vsel %vm4454, %v4449, %v3956
        %v4483 = vsel %vm4454, %v4450, %v3958
        %v4484 = vsel %vm4454, %v4451, %v3960
        %v4485 = vsel %vm4454, %v4452, %v3962
        %v4486 = vsel %vm4454, %v4453, %v3964
        %4519 = vrot.lane.b32.xlu0 %v2045, 4
        %v4520 = vpop.permute.xlu0 %4519
        %4521 = vrot.lane.b32.xlu0 %v2046, 4
        %v4522 = vpop.permute.xlu0 %4521
        %4523 = vrot.lane.b32.xlu0 %v2047, 4
        %v4524 = vpop.permute.xlu0 %4523
        %4525 = vrot.lane.b32.xlu0 %v2048, 4
        %v4526 = vpop.permute.xlu0 %4525
        %4527 = vrot.lane.b32.xlu0 %v2049, 4
        %v4528 = vpop.permute.xlu0 %4527
        %4529 = vrot.lane.b32.xlu0 %v2050, 4
        %v4530 = vpop.permute.xlu0 %4529
        %4531 = vrot.lane.b32.xlu0 %v2051, 4
        %v4532 = vpop.permute.xlu0 %4531
        %4533 = vrot.lane.b32.xlu0 %v2052, 4
        %v4534 = vpop.permute.xlu0 %4533
        %4535 = vrot.lane.b32.xlu0 %v2053, 4
        %v4536 = vpop.permute.xlu0 %4535
        %4537 = vrot.lane.b32.xlu0 %v2054, 4
        %v4538 = vpop.permute.xlu0 %4537
        %4539 = vrot.lane.b32.xlu0 %v2055, 4
        %v4540 = vpop.permute.xlu0 %4539
        %4541 = vrot.lane.b32.xlu0 %v2056, 4
        %v4542 = vpop.permute.xlu0 %4541
        %4543 = vrot.lane.b32.xlu0 %v2057, 4
        %v4544 = vpop.permute.xlu0 %4543
        %4545 = vrot.lane.b32.xlu0 %v2058, 4
        %v4546 = vpop.permute.xlu0 %4545
        %4547 = vrot.lane.b32.xlu0 %v2059, 4
        %v4548 = vpop.permute.xlu0 %4547
        %4549 = vrot.lane.b32.xlu0 %v2060, 4
        %v4550 = vpop.permute.xlu0 %4549
        %4551 = vrot.lane.b32.xlu0 %v2061, 4
        %v4552 = vpop.permute.xlu0 %4551
        %4553 = vrot.lane.b32.xlu0 %v2062, 4
        %v4554 = vpop.permute.xlu0 %4553
        %4555 = vrot.lane.b32.xlu0 %v2063, 4
        %v4556 = vpop.permute.xlu0 %4555
        %4557 = vrot.lane.b32.xlu0 %v2064, 4
        %v4558 = vpop.permute.xlu0 %4557
        %4559 = vrot.lane.b32.xlu0 %v2065, 4
        %v4560 = vpop.permute.xlu0 %4559
        %4561 = vrot.lane.b32.xlu0 %v2066, 4
        %v4562 = vpop.permute.xlu0 %4561
        %4563 = vrot.lane.b32.xlu0 %v2067, 4
        %v4564 = vpop.permute.xlu0 %4563
        %4565 = vrot.lane.b32.xlu0 %v2068, 4
        %v4566 = vpop.permute.xlu0 %4565
        %4567 = vrot.lane.b32.xlu0 %v2069, 4
        %v4568 = vpop.permute.xlu0 %4567
        %4569 = vrot.lane.b32.xlu0 %v2070, 4
        %v4570 = vpop.permute.xlu0 %4569
        %4571 = vrot.lane.b32.xlu0 %v2071, 4
        %v4572 = vpop.permute.xlu0 %4571
        %4573 = vrot.lane.b32.xlu0 %v2072, 4
        %v4574 = vpop.permute.xlu0 %4573
        %4575 = vrot.lane.b32.xlu0 %v2073, 4
        %v4576 = vpop.permute.xlu0 %4575
        %4577 = vrot.lane.b32.xlu0 %v2074, 4
        %v4578 = vpop.permute.xlu0 %4577
        %4579 = vrot.lane.b32.xlu0 %v2075, 4
        %v4580 = vpop.permute.xlu0 %4579
        %4581 = vrot.lane.b32.xlu0 %v2076, 4
        %v4582 = vpop.permute.xlu0 %4581
        %v4615 = vsel %vm1433, %v2013, %v4520
        %v4616 = vsel %vm1433, %v2014, %v4522
        %v4617 = vsel %vm1433, %v2015, %v4524
        %v4618 = vsel %vm1433, %v2016, %v4526
        %v4619 = vsel %vm1433, %v2017, %v4528
        %v4620 = vsel %vm1433, %v2018, %v4530
        %v4621 = vsel %vm1433, %v2019, %v4532
        %v4622 = vsel %vm1433, %v2020, %v4534
        %v4623 = vsel %vm1433, %v2021, %v4536
        %v4624 = vsel %vm1433, %v2022, %v4538
        %v4625 = vsel %vm1433, %v2023, %v4540
        %v4626 = vsel %vm1433, %v2024, %v4542
        %v4627 = vsel %vm1433, %v2025, %v4544
        %v4628 = vsel %vm1433, %v2026, %v4546
        %v4629 = vsel %vm1433, %v2027, %v4548
        %v4630 = vsel %vm1433, %v2028, %v4550
        %v4631 = vsel %vm1433, %v2029, %v4552
        %v4632 = vsel %vm1433, %v2030, %v4554
        %v4633 = vsel %vm1433, %v2031, %v4556
        %v4634 = vsel %vm1433, %v2032, %v4558
        %v4635 = vsel %vm1433, %v2033, %v4560
        %v4636 = vsel %vm1433, %v2034, %v4562
        %v4637 = vsel %vm1433, %v2035, %v4564
        %v4638 = vsel %vm1433, %v2036, %v4566
        %v4639 = vsel %vm1433, %v2037, %v4568
        %v4640 = vsel %vm1433, %v2038, %v4570
        %v4641 = vsel %vm1433, %v2039, %v4572
        %v4642 = vsel %vm1433, %v2040, %v4574
        %v4643 = vsel %vm1433, %v2041, %v4576
        %v4644 = vsel %vm1433, %v2042, %v4578
        %v4645 = vsel %vm1433, %v2043, %v4580
        %v4646 = vsel %vm1433, %v2044, %v4582
        %4679 = vrot.lane.b32.xlu0 %v4615, 64
        %v4680 = vpop.permute.xlu0 %4679
        %4681 = vrot.lane.b32.xlu0 %v4616, 64
        %v4682 = vpop.permute.xlu0 %4681
        %4683 = vrot.lane.b32.xlu0 %v4617, 64
        %v4684 = vpop.permute.xlu0 %4683
        %4685 = vrot.lane.b32.xlu0 %v4618, 64
        %v4686 = vpop.permute.xlu0 %4685
        %4687 = vrot.lane.b32.xlu0 %v4619, 64
        %v4688 = vpop.permute.xlu0 %4687
        %4689 = vrot.lane.b32.xlu0 %v4620, 64
        %v4690 = vpop.permute.xlu0 %4689
        %4691 = vrot.lane.b32.xlu0 %v4621, 64
        %v4692 = vpop.permute.xlu0 %4691
        %4693 = vrot.lane.b32.xlu0 %v4622, 64
        %v4694 = vpop.permute.xlu0 %4693
        %4695 = vrot.lane.b32.xlu0 %v4623, 64
        %v4696 = vpop.permute.xlu0 %4695
        %4697 = vrot.lane.b32.xlu0 %v4624, 64
        %v4698 = vpop.permute.xlu0 %4697
        %4699 = vrot.lane.b32.xlu0 %v4625, 64
        %v4700 = vpop.permute.xlu0 %4699
        %4701 = vrot.lane.b32.xlu0 %v4626, 64
        %v4702 = vpop.permute.xlu0 %4701
        %4703 = vrot.lane.b32.xlu0 %v4627, 64
        %v4704 = vpop.permute.xlu0 %4703
        %4705 = vrot.lane.b32.xlu0 %v4628, 64
        %v4706 = vpop.permute.xlu0 %4705
        %4707 = vrot.lane.b32.xlu0 %v4629, 64
        %v4708 = vpop.permute.xlu0 %4707
        %4709 = vrot.lane.b32.xlu0 %v4630, 64
        %v4710 = vpop.permute.xlu0 %4709
        %4711 = vrot.lane.b32.xlu0 %v4631, 64
        %v4712 = vpop.permute.xlu0 %4711
        %4713 = vrot.lane.b32.xlu0 %v4632, 64
        %v4714 = vpop.permute.xlu0 %4713
        %4715 = vrot.lane.b32.xlu0 %v4633, 64
        %v4716 = vpop.permute.xlu0 %4715
        %4717 = vrot.lane.b32.xlu0 %v4634, 64
        %v4718 = vpop.permute.xlu0 %4717
        %4719 = vrot.lane.b32.xlu0 %v4635, 64
        %v4720 = vpop.permute.xlu0 %4719
        %4721 = vrot.lane.b32.xlu0 %v4636, 64
        %v4722 = vpop.permute.xlu0 %4721
        %4723 = vrot.lane.b32.xlu0 %v4637, 64
        %v4724 = vpop.permute.xlu0 %4723
        %4725 = vrot.lane.b32.xlu0 %v4638, 64
        %v4726 = vpop.permute.xlu0 %4725
        %4727 = vrot.lane.b32.xlu0 %v4639, 64
        %v4728 = vpop.permute.xlu0 %4727
        %4729 = vrot.lane.b32.xlu0 %v4640, 64
        %v4730 = vpop.permute.xlu0 %4729
        %4731 = vrot.lane.b32.xlu0 %v4641, 64
        %v4732 = vpop.permute.xlu0 %4731
        %4733 = vrot.lane.b32.xlu0 %v4642, 64
        %v4734 = vpop.permute.xlu0 %4733
        %4735 = vrot.lane.b32.xlu0 %v4643, 64
        %v4736 = vpop.permute.xlu0 %4735
        %4737 = vrot.lane.b32.xlu0 %v4644, 64
        %v4738 = vpop.permute.xlu0 %4737
        %4739 = vrot.lane.b32.xlu0 %v4645, 64
        %v4740 = vpop.permute.xlu0 %4739
        %4741 = vrot.lane.b32.xlu0 %v4646, 64
        %v4742 = vpop.permute.xlu0 %4741
        %vm4775 = vcmask 523264
        %v4776 = vsel %vm4775, %v4455, %v4680
        %v4777 = vsel %vm4775, %v4456, %v4682
        %v4778 = vsel %vm4775, %v4457, %v4684
        %v4779 = vsel %vm4775, %v4458, %v4686
        %v4780 = vsel %vm4775, %v4459, %v4688
        %v4781 = vsel %vm4775, %v4460, %v4690
        %v4782 = vsel %vm4775, %v4461, %v4692
        %v4783 = vsel %vm4775, %v4462, %v4694
        %v4784 = vsel %vm4775, %v4463, %v4696
        %v4785 = vsel %vm4775, %v4464, %v4698
        %v4786 = vsel %vm4775, %v4465, %v4700
        %v4787 = vsel %vm4775, %v4466, %v4702
        %v4788 = vsel %vm4775, %v4467, %v4704
        %v4789 = vsel %vm4775, %v4468, %v4706
        %v4790 = vsel %vm4775, %v4469, %v4708
        %v4791 = vsel %vm4775, %v4470, %v4710
        %v4792 = vsel %vm4775, %v4471, %v4712
        %v4793 = vsel %vm4775, %v4472, %v4714
        %v4794 = vsel %vm4775, %v4473, %v4716
        %v4795 = vsel %vm4775, %v4474, %v4718
        %v4796 = vsel %vm4775, %v4475, %v4720
        %v4797 = vsel %vm4775, %v4476, %v4722
        %v4798 = vsel %vm4775, %v4477, %v4724
        %v4799 = vsel %vm4775, %v4478, %v4726
        %v4800 = vsel %vm4775, %v4479, %v4728
        %v4801 = vsel %vm4775, %v4480, %v4730
        %v4802 = vsel %vm4775, %v4481, %v4732
        %v4803 = vsel %vm4775, %v4482, %v4734
        %v4804 = vsel %vm4775, %v4483, %v4736
        %v4805 = vsel %vm4775, %v4484, %v4738
        %v4806 = vsel %vm4775, %v4485, %v4740
        %v4807 = vsel %vm4775, %v4486, %v4742
        %v4808 = vld [vmem:[%s4] sm:$0xff]
        %v4809 = vld [vmem:[%s4 + $0x8] sm:$0xff]
        %v4810 = vld [vmem:[%s4 + $0x10] sm:$0xff]
        %v4811 = vld [vmem:[%s4 + $0x18] sm:$0xff]
        %v4812 = vld [vmem:[%s4 + $0x20] sm:$0xff]
        %v4813 = vld [vmem:[%s4 + $0x28] sm:$0xff]
        %v4814 = vld [vmem:[%s4 + $0x30] sm:$0xff]
        %v4815 = vld [vmem:[%s4 + $0x38] sm:$0xff]
        %v4816 = vld [vmem:[%s4 + $0x40] sm:$0xff]
        %vm4817 = vcmask 588800
        %v4819 = vsel %vm4817, %v4776, 0
        %v4822 = vsel %vm4817, %v4777, 0
        %v4825 = vsel %vm4817, %v4778, 0
        %v4828 = vsel %vm4817, %v4779, 0
        %v4831 = vsel %vm4817, %v4780, 0
        %v4834 = vsel %vm4817, %v4781, 0
        %v4837 = vsel %vm4817, %v4782, 0
        %v4840 = vsel %vm4817, %v4783, 0
        %v4843 = vsel %vm4817, %v4784, 0
        %v4846 = vsel %vm4817, %v4785, 0
        %v4849 = vsel %vm4817, %v4786, 0
        %v4852 = vsel %vm4817, %v4787, 0
        %v4855 = vsel %vm4817, %v4788, 0
        %v4858 = vsel %vm4817, %v4789, 0
        %v4861 = vsel %vm4817, %v4790, 0
        %v4864 = vsel %vm4817, %v4791, 0
        %v4867 = vsel %vm4817, %v4792, 0
        %v4870 = vsel %vm4817, %v4793, 0
        %v4873 = vsel %vm4817, %v4794, 0
        %v4876 = vsel %vm4817, %v4795, 0
        %v4879 = vsel %vm4817, %v4796, 0
        %v4882 = vsel %vm4817, %v4797, 0
        %v4885 = vsel %vm4817, %v4798, 0
        %v4888 = vsel %vm4817, %v4799, 0
        %v4891 = vsel %vm4817, %v4800, 0
        %v4894 = vsel %vm4817, %v4801, 0
        %v4897 = vsel %vm4817, %v4802, 0
        %v4900 = vsel %vm4817, %v4803, 0
        %v4903 = vsel %vm4817, %v4804, 0
        %v4906 = vsel %vm4817, %v4805, 0
        %v4909 = vsel %vm4817, %v4806, 0
        %v4912 = vsel %vm4817, %v4807, 0
        %4914 = vmatpush.msra.mxu0 0.0
        %4915 = vmatpush.msra.mxu0 0.0
        %4916 = vmatpush.msra.mxu0 0.0
        %4917 = vmatpush.msra.mxu0 0.0
        %4918 = vmatpush.msra.mxu0 0.0
        %4919 = vmatpush.msra.mxu0 0.0
        %4920 = vmatpush.msra.mxu0 0.0
        %4921 = vmatpush.msra.mxu0 %v4816
        %4922 = vmatpush.msra.mxu0 %v4815
        %4923 = vmatpush.msra.mxu0 %v4814
        %4924 = vmatpush.msra.mxu0 %v4813
        %4925 = vmatpush.msra.mxu0 %v4812
        %4926 = vmatpush.msra.mxu0 %v4811
        %4927 = vmatpush.msra.mxu0 %v4810
        %4928 = vmatpush.msra.mxu0 %v4809
        %4929 = vmatpush.msra.mxu0 %v4808
        %4930 = vmatmul.f32.gmra.mxu0 %v4819
        %v4931 = vpop.f32.mrf.mxu0
        %v4932 = vadd.f32 0.0, %v4931
        %4933 = vmatmul.f32.gmra.mxu0 %v4822
        %v4934 = vpop.f32.mrf.mxu0
        %v4935 = vadd.f32 0.0, %v4934
        %4936 = vmatmul.f32.gmra.mxu0 %v4825
        %v4937 = vpop.f32.mrf.mxu0
        %v4938 = vadd.f32 0.0, %v4937
        %4939 = vmatmul.f32.gmra.mxu0 %v4828
        %v4940 = vpop.f32.mrf.mxu0
        %v4941 = vadd.f32 0.0, %v4940
        %4942 = vmatmul.f32.gmra.mxu0 %v4831
        %v4943 = vpop.f32.mrf.mxu0
        %v4944 = vadd.f32 0.0, %v4943
        %4945 = vmatmul.f32.gmra.mxu0 %v4834
        %v4946 = vpop.f32.mrf.mxu0
        %v4947 = vadd.f32 0.0, %v4946
        %4948 = vmatmul.f32.gmra.mxu0 %v4837
        %v4949 = vpop.f32.mrf.mxu0
        %v4950 = vadd.f32 0.0, %v4949
        %4951 = vmatmul.f32.gmra.mxu0 %v4840
        %v4952 = vpop.f32.mrf.mxu0
        %v4953 = vadd.f32 0.0, %v4952
        %4954 = vmatmul.f32.gmra.mxu0 %v4843
        %v4955 = vpop.f32.mrf.mxu0
        %v4956 = vadd.f32 0.0, %v4955
        %4957 = vmatmul.f32.gmra.mxu0 %v4846
        %v4958 = vpop.f32.mrf.mxu0
        %v4959 = vadd.f32 0.0, %v4958
        %4960 = vmatmul.f32.gmra.mxu0 %v4849
        %v4961 = vpop.f32.mrf.mxu0
        %v4962 = vadd.f32 0.0, %v4961
        %4963 = vmatmul.f32.gmra.mxu0 %v4852
        %v4964 = vpop.f32.mrf.mxu0
        %v4965 = vadd.f32 0.0, %v4964
        %4966 = vmatmul.f32.gmra.mxu0 %v4855
        %v4967 = vpop.f32.mrf.mxu0
        %v4968 = vadd.f32 0.0, %v4967
        %4969 = vmatmul.f32.gmra.mxu0 %v4858
        %v4970 = vpop.f32.mrf.mxu0
        %v4971 = vadd.f32 0.0, %v4970
        %4972 = vmatmul.f32.gmra.mxu0 %v4861
        %v4973 = vpop.f32.mrf.mxu0
        %v4974 = vadd.f32 0.0, %v4973
        %4975 = vmatmul.f32.gmra.mxu0 %v4864
        %v4976 = vpop.f32.mrf.mxu0
        %v4977 = vadd.f32 0.0, %v4976
        %4978 = vmatmul.f32.gmra.mxu0 %v4867
        %v4979 = vpop.f32.mrf.mxu0
        %v4980 = vadd.f32 0.0, %v4979
        %4981 = vmatmul.f32.gmra.mxu0 %v4870
        %v4982 = vpop.f32.mrf.mxu0
        %v4983 = vadd.f32 0.0, %v4982
        %4984 = vmatmul.f32.gmra.mxu0 %v4873
        %v4985 = vpop.f32.mrf.mxu0
        %v4986 = vadd.f32 0.0, %v4985
        %4987 = vmatmul.f32.gmra.mxu0 %v4876
        %v4988 = vpop.f32.mrf.mxu0
        %v4989 = vadd.f32 0.0, %v4988
        %4990 = vmatmul.f32.gmra.mxu0 %v4879
        %v4991 = vpop.f32.mrf.mxu0
        %v4992 = vadd.f32 0.0, %v4991
        %4993 = vmatmul.f32.gmra.mxu0 %v4882
        %v4994 = vpop.f32.mrf.mxu0
        %v4995 = vadd.f32 0.0, %v4994
        %4996 = vmatmul.f32.gmra.mxu0 %v4885
        %v4997 = vpop.f32.mrf.mxu0
        %v4998 = vadd.f32 0.0, %v4997
        %4999 = vmatmul.f32.gmra.mxu0 %v4888
        %v5000 = vpop.f32.mrf.mxu0
        %v5001 = vadd.f32 0.0, %v5000
        %5002 = vmatmul.f32.gmra.mxu0 %v4891
        %v5003 = vpop.f32.mrf.mxu0
        %v5004 = vadd.f32 0.0, %v5003
        %5005 = vmatmul.f32.gmra.mxu0 %v4894
        %v5006 = vpop.f32.mrf.mxu0
        %v5007 = vadd.f32 0.0, %v5006
        %5008 = vmatmul.f32.gmra.mxu0 %v4897
        %v5009 = vpop.f32.mrf.mxu0
        %v5010 = vadd.f32 0.0, %v5009
        %5011 = vmatmul.f32.gmra.mxu0 %v4900
        %v5012 = vpop.f32.mrf.mxu0
        %v5013 = vadd.f32 0.0, %v5012
        %5014 = vmatmul.f32.gmra.mxu0 %v4903
        %v5015 = vpop.f32.mrf.mxu0
        %v5016 = vadd.f32 0.0, %v5015
        %5017 = vmatmul.f32.gmra.mxu0 %v4906
        %v5018 = vpop.f32.mrf.mxu0
        %v5019 = vadd.f32 0.0, %v5018
        %5020 = vmatmul.f32.gmra.mxu0 %v4909
        %v5021 = vpop.f32.mrf.mxu0
        %v5022 = vadd.f32 0.0, %v5021
        %5023 = vmatmul.f32.gmra.mxu0 %v4912
        %v5024 = vpop.f32.mrf.mxu0
        %v5025 = vadd.f32 0.0, %v5024
        %5026 = vdwg.mxu0
        %s5027 = smul.u32 %s26, 256
        %s5028 = scalar_lea.vmem [#allocation5], %s5027
        %5029 = vst.msk [vmem:[%s5028] sm:$0xff] %vm1433, %v4932
        %5030 = vst.msk [vmem:[%s5028 + $0x8] sm:$0xff] %vm1433, %v4935
        %5031 = vst.msk [vmem:[%s5028 + $0x10] sm:$0xff] %vm1433, %v4938
        %5032 = vst.msk [vmem:[%s5028 + $0x18] sm:$0xff] %vm1433, %v4941
        %5033 = vst.msk [vmem:[%s5028 + $0x20] sm:$0xff] %vm1433, %v4944
        %5034 = vst.msk [vmem:[%s5028 + $0x28] sm:$0xff] %vm1433, %v4947
        %5035 = vst.msk [vmem:[%s5028 + $0x30] sm:$0xff] %vm1433, %v4950
        %5036 = vst.msk [vmem:[%s5028 + $0x38] sm:$0xff] %vm1433, %v4953
        %5037 = vst.msk [vmem:[%s5028 + $0x40] sm:$0xff] %vm1433, %v4956
        %5038 = vst.msk [vmem:[%s5028 + $0x48] sm:$0xff] %vm1433, %v4959
        %5039 = vst.msk [vmem:[%s5028 + $0x50] sm:$0xff] %vm1433, %v4962
        %5040 = vst.msk [vmem:[%s5028 + $0x58] sm:$0xff] %vm1433, %v4965
        %5041 = vst.msk [vmem:[%s5028 + $0x60] sm:$0xff] %vm1433, %v4968
        %5042 = vst.msk [vmem:[%s5028 + $0x68] sm:$0xff] %vm1433, %v4971
        %5043 = vst.msk [vmem:[%s5028 + $0x70] sm:$0xff] %vm1433, %v4974
        %5044 = vst.msk [vmem:[%s5028 + $0x78] sm:$0xff] %vm1433, %v4977
        %5045 = vst.msk [vmem:[%s5028 + $0x80] sm:$0xff] %vm1433, %v4980
        %5046 = vst.msk [vmem:[%s5028 + $0x88] sm:$0xff] %vm1433, %v4983
        %5047 = vst.msk [vmem:[%s5028 + $0x90] sm:$0xff] %vm1433, %v4986
        %5048 = vst.msk [vmem:[%s5028 + $0x98] sm:$0xff] %vm1433, %v4989
        %5049 = vst.msk [vmem:[%s5028 + $0xa0] sm:$0xff] %vm1433, %v4992
        %5050 = vst.msk [vmem:[%s5028 + $0xa8] sm:$0xff] %vm1433, %v4995
        %5051 = vst.msk [vmem:[%s5028 + $0xb0] sm:$0xff] %vm1433, %v4998
        %5052 = vst.msk [vmem:[%s5028 + $0xb8] sm:$0xff] %vm1433, %v5001
        %5053 = vst.msk [vmem:[%s5028 + $0xc0] sm:$0xff] %vm1433, %v5004
        %5054 = vst.msk [vmem:[%s5028 + $0xc8] sm:$0xff] %vm1433, %v5007
        %5055 = vst.msk [vmem:[%s5028 + $0xd0] sm:$0xff] %vm1433, %v5010
        %5056 = vst.msk [vmem:[%s5028 + $0xd8] sm:$0xff] %vm1433, %v5013
        %5057 = vst.msk [vmem:[%s5028 + $0xe0] sm:$0xff] %vm1433, %v5016
        %5058 = vst.msk [vmem:[%s5028 + $0xe8] sm:$0xff] %vm1433, %v5019
        %5059 = vst.msk [vmem:[%s5028 + $0xf0] sm:$0xff] %vm1433, %v5022
        %5060 = vst.msk [vmem:[%s5028 + $0xf8] sm:$0xff] %vm1433, %v5025
        %v5061 = vld [vmem:[#allocation7] sm:$0x1]
        %v5062 = vsel %vm1433, %v4932, 0.0
        %v5063 = vsel %vm1433, %v4935, 0.0
        %v5064 = vadd.f32 %v5062, %v5063
        %v5065 = vsel %vm1433, %v4938, 0.0
        %v5066 = vadd.f32 %v5064, %v5065
        %v5067 = vsel %vm1433, %v4941, 0.0
        %v5068 = vadd.f32 %v5066, %v5067
        %v5069 = vsel %vm1433, %v4944, 0.0
        %v5070 = vadd.f32 %v5068, %v5069
        %v5071 = vsel %vm1433, %v4947, 0.0
        %v5072 = vadd.f32 %v5070, %v5071
        %v5073 = vsel %vm1433, %v4950, 0.0
        %v5074 = vadd.f32 %v5072, %v5073
        %v5075 = vsel %vm1433, %v4953, 0.0
        %v5076 = vadd.f32 %v5074, %v5075
        %v5077 = vsel %vm1433, %v4956, 0.0
        %v5078 = vadd.f32 %v5076, %v5077
        %v5079 = vsel %vm1433, %v4959, 0.0
        %v5080 = vadd.f32 %v5078, %v5079
        %v5081 = vsel %vm1433, %v4962, 0.0
        %v5082 = vadd.f32 %v5080, %v5081
        %v5083 = vsel %vm1433, %v4965, 0.0
        %v5084 = vadd.f32 %v5082, %v5083
        %v5085 = vsel %vm1433, %v4968, 0.0
        %v5086 = vadd.f32 %v5084, %v5085
        %v5087 = vsel %vm1433, %v4971, 0.0
        %v5088 = vadd.f32 %v5086, %v5087
        %v5089 = vsel %vm1433, %v4974, 0.0
        %v5090 = vadd.f32 %v5088, %v5089
        %v5091 = vsel %vm1433, %v4977, 0.0
        %v5092 = vadd.f32 %v5090, %v5091
        %v5093 = vsel %vm1433, %v4980, 0.0
        %v5094 = vadd.f32 %v5092, %v5093
        %v5095 = vsel %vm1433, %v4983, 0.0
        %v5096 = vadd.f32 %v5094, %v5095
        %v5097 = vsel %vm1433, %v4986, 0.0
        %v5098 = vadd.f32 %v5096, %v5097
        %v5099 = vsel %vm1433, %v4989, 0.0
        %v5100 = vadd.f32 %v5098, %v5099
        %v5101 = vsel %vm1433, %v4992, 0.0
        %v5102 = vadd.f32 %v5100, %v5101
        %v5103 = vsel %vm1433, %v4995, 0.0
        %v5104 = vadd.f32 %v5102, %v5103
        %v5105 = vsel %vm1433, %v4998, 0.0
        %v5106 = vadd.f32 %v5104, %v5105
        %v5107 = vsel %vm1433, %v5001, 0.0
        %v5108 = vadd.f32 %v5106, %v5107
        %v5109 = vsel %vm1433, %v5004, 0.0
        %v5110 = vadd.f32 %v5108, %v5109
        %v5111 = vsel %vm1433, %v5007, 0.0
        %v5112 = vadd.f32 %v5110, %v5111
        %v5113 = vsel %vm1433, %v5010, 0.0
        %v5114 = vadd.f32 %v5112, %v5113
        %v5115 = vsel %vm1433, %v5013, 0.0
        %v5116 = vadd.f32 %v5114, %v5115
        %v5117 = vsel %vm1433, %v5016, 0.0
        %v5118 = vadd.f32 %v5116, %v5117
        %v5119 = vsel %vm1433, %v5019, 0.0
        %v5120 = vadd.f32 %v5118, %v5119
        %v5121 = vsel %vm1433, %v5022, 0.0
        %v5122 = vadd.f32 %v5120, %v5121
        %v5123 = vsel %vm1433, %v5025, 0.0
        %v5124 = vadd.f32 %v5122, %v5123
        %v5125 = vrot.slane %v5124, 4
        %v5126 = vadd.f32 %v5124, %v5125
        %v5127 = vrot.slane %v5126, 2
        %v5128 = vadd.f32 %v5126, %v5127
        %v5129 = vrot.slane %v5128, 1
        %v5130 = vadd.f32 %v5128, %v5129
        %v5131 = vadd.f32 %v5061, %v5130
        %vm5132 = vcmask 24576
        %5133 = vst.msk [vmem:[#allocation7] sm:$0x1] %vm5132, %v5131
        %v5134 = vld [vmem:[#allocation8] sm:$0x1]
        %v5135 = vmul.f32 %v4932, %v4932
        %v5136 = vmul.f32 %v4935, %v4935
        %v5137 = vmul.f32 %v4938, %v4938
        %v5138 = vmul.f32 %v4941, %v4941
        %v5139 = vmul.f32 %v4944, %v4944
        %v5140 = vmul.f32 %v4947, %v4947
        %v5141 = vmul.f32 %v4950, %v4950
        %v5142 = vmul.f32 %v4953, %v4953
        %v5143 = vmul.f32 %v4956, %v4956
        %v5144 = vmul.f32 %v4959, %v4959
        %v5145 = vmul.f32 %v4962, %v4962
        %v5146 = vmul.f32 %v4965, %v4965
        %v5147 = vmul.f32 %v4968, %v4968
        %v5148 = vmul.f32 %v4971, %v4971
        %v5149 = vmul.f32 %v4974, %v4974
        %v5150 = vmul.f32 %v4977, %v4977
        %v5151 = vmul.f32 %v4980, %v4980
        %v5152 = vmul.f32 %v4983, %v4983
        %v5153 = vmul.f32 %v4986, %v4986
        %v5154 = vmul.f32 %v4989, %v4989
        %v5155 = vmul.f32 %v4992, %v4992
        %v5156 = vmul.f32 %v4995, %v4995
        %v5157 = vmul.f32 %v4998, %v4998
        %v5158 = vmul.f32 %v5001, %v5001
        %v5159 = vmul.f32 %v5004, %v5004
        %v5160 = vmul.f32 %v5007, %v5007
        %v5161 = vmul.f32 %v5010, %v5010
        %v5162 = vmul.f32 %v5013, %v5013
        %v5163 = vmul.f32 %v5016, %v5016
        %v5164 = vmul.f32 %v5019, %v5019
        %v5165 = vmul.f32 %v5022, %v5022
        %v5166 = vmul.f32 %v5025, %v5025
        %v5167 = vsel %vm1433, %v5135, 0.0
        %v5168 = vsel %vm1433, %v5136, 0.0
        %v5169 = vadd.f32 %v5167, %v5168
        %v5170 = vsel %vm1433, %v5137, 0.0
        %v5171 = vadd.f32 %v5169, %v5170
        %v5172 = vsel %vm1433, %v5138, 0.0
        %v5173 = vadd.f32 %v5171, %v5172
        %v5174 = vsel %vm1433, %v5139, 0.0
        %v5175 = vadd.f32 %v5173, %v5174
        %v5176 = vsel %vm1433, %v5140, 0.0
        %v5177 = vadd.f32 %v5175, %v5176
        %v5178 = vsel %vm1433, %v5141, 0.0
        %v5179 = vadd.f32 %v5177, %v5178
        %v5180 = vsel %vm1433, %v5142, 0.0
        %v5181 = vadd.f32 %v5179, %v5180
        %v5182 = vsel %vm1433, %v5143, 0.0
        %v5183 = vadd.f32 %v5181, %v5182
        %v5184 = vsel %vm1433, %v5144, 0.0
        %v5185 = vadd.f32 %v5183, %v5184
        %v5186 = vsel %vm1433, %v5145, 0.0
        %v5187 = vadd.f32 %v5185, %v5186
        %v5188 = vsel %vm1433, %v5146, 0.0
        %v5189 = vadd.f32 %v5187, %v5188
        %v5190 = vsel %vm1433, %v5147, 0.0
        %v5191 = vadd.f32 %v5189, %v5190
        %v5192 = vsel %vm1433, %v5148, 0.0
        %v5193 = vadd.f32 %v5191, %v5192
        %v5194 = vsel %vm1433, %v5149, 0.0
        %v5195 = vadd.f32 %v5193, %v5194
        %v5196 = vsel %vm1433, %v5150, 0.0
        %v5197 = vadd.f32 %v5195, %v5196
        %v5198 = vsel %vm1433, %v5151, 0.0
        %v5199 = vadd.f32 %v5197, %v5198
        %v5200 = vsel %vm1433, %v5152, 0.0
        %v5201 = vadd.f32 %v5199, %v5200
        %v5202 = vsel %vm1433, %v5153, 0.0
        %v5203 = vadd.f32 %v5201, %v5202
        %v5204 = vsel %vm1433, %v5154, 0.0
        %v5205 = vadd.f32 %v5203, %v5204
        %v5206 = vsel %vm1433, %v5155, 0.0
        %v5207 = vadd.f32 %v5205, %v5206
        %v5208 = vsel %vm1433, %v5156, 0.0
        %v5209 = vadd.f32 %v5207, %v5208
        %v5210 = vsel %vm1433, %v5157, 0.0
        %v5211 = vadd.f32 %v5209, %v5210
        %v5212 = vsel %vm1433, %v5158, 0.0
        %v5213 = vadd.f32 %v5211, %v5212
        %v5214 = vsel %vm1433, %v5159, 0.0
        %v5215 = vadd.f32 %v5213, %v5214
        %v5216 = vsel %vm1433, %v5160, 0.0
        %v5217 = vadd.f32 %v5215, %v5216
        %v5218 = vsel %vm1433, %v5161, 0.0
        %v5219 = vadd.f32 %v5217, %v5218
        %v5220 = vsel %vm1433, %v5162, 0.0
        %v5221 = vadd.f32 %v5219, %v5220
        %v5222 = vsel %vm1433, %v5163, 0.0
        %v5223 = vadd.f32 %v5221, %v5222
        %v5224 = vsel %vm1433, %v5164, 0.0
        %v5225 = vadd.f32 %v5223, %v5224
        %v5226 = vsel %vm1433, %v5165, 0.0
        %v5227 = vadd.f32 %v5225, %v5226
        %v5228 = vsel %vm1433, %v5166, 0.0
        %v5229 = vadd.f32 %v5227, %v5228
        %v5230 = vrot.slane %v5229, 4
        %v5231 = vadd.f32 %v5229, %v5230
        %v5232 = vrot.slane %v5231, 2
        %v5233 = vadd.f32 %v5231, %v5232
        %v5234 = vrot.slane %v5233, 1
        %v5235 = vadd.f32 %v5233, %v5234
        %v5236 = vadd.f32 %v5134, %v5235
        %5237 = vst.msk [vmem:[#allocation8] sm:$0x1] %vm5132, %v5236
      $region68: #{up_step.1} parent=59 // pred_fallthru
        _
      %p5238 = scmp.eq.s32.totalorder %s25, 1
      // Predicated region
      $region69: #{up_step.1} parent=59 // pred_check
        %p5239 = pneg %p5238
      $region70: #{up_step.1} parent=59 // pred_check_branch
        %5241 = sbr.rel (%p5239) target = $region72
      $region71: #{up_step.1} parent=59 // pred_region
        %v5242 = vld [vmem:[#allocation7] sm:$0x1]
        %v5243 = vmul.f32 %v5242, 0.001953125
        %v5244 = vld [vmem:[#allocation8] sm:$0x1]
        %v5245 = vmul.f32 %v5244, 0.001953125
        %v5246 = vmul.f32 %v5243, %v5243
        %v5247 = vsub.f32 %v5245, %v5246
        %s5248 = smul.u32 %s26, 256
        %s5249 = scalar_lea.vmem [#allocation5], %s5248
        %v5250 = vld [vmem:[%s5249] sm:$0xff]
        %v5251 = vld [vmem:[%s5249 + $0x8] sm:$0xff]
        %v5252 = vld [vmem:[%s5249 + $0x10] sm:$0xff]
        %v5253 = vld [vmem:[%s5249 + $0x18] sm:$0xff]
        %v5254 = vld [vmem:[%s5249 + $0x20] sm:$0xff]
        %v5255 = vld [vmem:[%s5249 + $0x28] sm:$0xff]
        %v5256 = vld [vmem:[%s5249 + $0x30] sm:$0xff]
        %v5257 = vld [vmem:[%s5249 + $0x38] sm:$0xff]
        %v5258 = vld [vmem:[%s5249 + $0x40] sm:$0xff]
        %v5259 = vld [vmem:[%s5249 + $0x48] sm:$0xff]
        %v5260 = vld [vmem:[%s5249 + $0x50] sm:$0xff]
        %v5261 = vld [vmem:[%s5249 + $0x58] sm:$0xff]
        %v5262 = vld [vmem:[%s5249 + $0x60] sm:$0xff]
        %v5263 = vld [vmem:[%s5249 + $0x68] sm:$0xff]
        %v5264 = vld [vmem:[%s5249 + $0x70] sm:$0xff]
        %v5265 = vld [vmem:[%s5249 + $0x78] sm:$0xff]
        %v5266 = vld [vmem:[%s5249 + $0x80] sm:$0xff]
        %v5267 = vld [vmem:[%s5249 + $0x88] sm:$0xff]
        %v5268 = vld [vmem:[%s5249 + $0x90] sm:$0xff]
        %v5269 = vld [vmem:[%s5249 + $0x98] sm:$0xff]
        %v5270 = vld [vmem:[%s5249 + $0xa0] sm:$0xff]
        %v5271 = vld [vmem:[%s5249 + $0xa8] sm:$0xff]
        %v5272 = vld [vmem:[%s5249 + $0xb0] sm:$0xff]
        %v5273 = vld [vmem:[%s5249 + $0xb8] sm:$0xff]
        %v5274 = vld [vmem:[%s5249 + $0xc0] sm:$0xff]
        %v5275 = vld [vmem:[%s5249 + $0xc8] sm:$0xff]
        %v5276 = vld [vmem:[%s5249 + $0xd0] sm:$0xff]
        %v5277 = vld [vmem:[%s5249 + $0xd8] sm:$0xff]
        %v5278 = vld [vmem:[%s5249 + $0xe0] sm:$0xff]
        %v5279 = vld [vmem:[%s5249 + $0xe8] sm:$0xff]
        %v5280 = vld [vmem:[%s5249 + $0xf0] sm:$0xff]
        %v5281 = vld [vmem:[%s5249 + $0xf8] sm:$0xff]
        %v5283 = vperm.slane %v5243, 0
        %v5285 = vsub.f32 %v5250, %v5283
        %v5286 = vsub.f32 %v5251, %v5283
        %v5287 = vsub.f32 %v5252, %v5283
        %v5288 = vsub.f32 %v5253, %v5283
        %v5289 = vsub.f32 %v5254, %v5283
        %v5290 = vsub.f32 %v5255, %v5283
        %v5291 = vsub.f32 %v5256, %v5283
        %v5292 = vsub.f32 %v5257, %v5283
        %v5293 = vsub.f32 %v5258, %v5283
        %v5294 = vsub.f32 %v5259, %v5283
        %v5295 = vsub.f32 %v5260, %v5283
        %v5296 = vsub.f32 %v5261, %v5283
        %v5297 = vsub.f32 %v5262, %v5283
        %v5298 = vsub.f32 %v5263, %v5283
        %v5299 = vsub.f32 %v5264, %v5283
        %v5300 = vsub.f32 %v5265, %v5283
        %v5301 = vsub.f32 %v5266, %v5283
        %v5302 = vsub.f32 %v5267, %v5283
        %v5303 = vsub.f32 %v5268, %v5283
        %v5304 = vsub.f32 %v5269, %v5283
        %v5305 = vsub.f32 %v5270, %v5283
        %v5306 = vsub.f32 %v5271, %v5283
        %v5307 = vsub.f32 %v5272, %v5283
        %v5308 = vsub.f32 %v5273, %v5283
        %v5309 = vsub.f32 %v5274, %v5283
        %v5310 = vsub.f32 %v5275, %v5283
        %v5311 = vsub.f32 %v5276, %v5283
        %v5312 = vsub.f32 %v5277, %v5283
        %v5313 = vsub.f32 %v5278, %v5283
        %v5314 = vsub.f32 %v5279, %v5283
        %v5315 = vsub.f32 %v5280, %v5283
        %v5316 = vsub.f32 %v5281, %v5283
        %v5317 = vadd.f32 %v5247, 1e-05
        %v5318 = vrsqrt.pop %v5317
        %v5319 = vmul.f32 %v5318, %v5317
        %v5320 = vmul.f32 %v5319, %v5318
        %v5321 = vmul.f32 0.5, %v5320
        %v5322 = vsub.f32 1.5, %v5321
        %v5323 = vmul.f32 %v5318, %v5322
        %vm5324 = vweird.f32 %v5317
        %vm5325 = vweird.f32 %v5318
        %vm5326 = vmor %vm5324, %vm5325
        %v5327 = vsel %vm5326, %v5318, %v5323
        %v5329 = vperm.slane %v5327, 0
        %v5331 = vmul.f32 %v5285, %v5329
        %v5332 = vmul.f32 %v5286, %v5329
        %v5333 = vmul.f32 %v5287, %v5329
        %v5334 = vmul.f32 %v5288, %v5329
        %v5335 = vmul.f32 %v5289, %v5329
        %v5336 = vmul.f32 %v5290, %v5329
        %v5337 = vmul.f32 %v5291, %v5329
        %v5338 = vmul.f32 %v5292, %v5329
        %v5339 = vmul.f32 %v5293, %v5329
        %v5340 = vmul.f32 %v5294, %v5329
        %v5341 = vmul.f32 %v5295, %v5329
        %v5342 = vmul.f32 %v5296, %v5329
        %v5343 = vmul.f32 %v5297, %v5329
        %v5344 = vmul.f32 %v5298, %v5329
        %v5345 = vmul.f32 %v5299, %v5329
        %v5346 = vmul.f32 %v5300, %v5329
        %v5347 = vmul.f32 %v5301, %v5329
        %v5348 = vmul.f32 %v5302, %v5329
        %v5349 = vmul.f32 %v5303, %v5329
        %v5350 = vmul.f32 %v5304, %v5329
        %v5351 = vmul.f32 %v5305, %v5329
        %v5352 = vmul.f32 %v5306, %v5329
        %v5353 = vmul.f32 %v5307, %v5329
        %v5354 = vmul.f32 %v5308, %v5329
        %v5355 = vmul.f32 %v5309, %v5329
        %v5356 = vmul.f32 %v5310, %v5329
        %v5357 = vmul.f32 %v5311, %v5329
        %v5358 = vmul.f32 %v5312, %v5329
        %v5359 = vmul.f32 %v5313, %v5329
        %v5360 = vmul.f32 %v5314, %v5329
        %v5361 = vmul.f32 %v5315, %v5329
        %v5362 = vmul.f32 %v5316, %v5329
        %v5363 = vld [vmem:[%s5] sm:$0x1]
        %v5365 = vperm.slane %v5363, 0
        %v5367 = vmul.f32 %v5331, %v5365
        %v5368 = vmul.f32 %v5332, %v5365
        %v5369 = vmul.f32 %v5333, %v5365
        %v5370 = vmul.f32 %v5334, %v5365
        %v5371 = vmul.f32 %v5335, %v5365
        %v5372 = vmul.f32 %v5336, %v5365
        %v5373 = vmul.f32 %v5337, %v5365
        %v5374 = vmul.f32 %v5338, %v5365
        %v5375 = vmul.f32 %v5339, %v5365
        %v5376 = vmul.f32 %v5340, %v5365
        %v5377 = vmul.f32 %v5341, %v5365
        %v5378 = vmul.f32 %v5342, %v5365
        %v5379 = vmul.f32 %v5343, %v5365
        %v5380 = vmul.f32 %v5344, %v5365
        %v5381 = vmul.f32 %v5345, %v5365
        %v5382 = vmul.f32 %v5346, %v5365
        %v5383 = vmul.f32 %v5347, %v5365
        %v5384 = vmul.f32 %v5348, %v5365
        %v5385 = vmul.f32 %v5349, %v5365
        %v5386 = vmul.f32 %v5350, %v5365
        %v5387 = vmul.f32 %v5351, %v5365
        %v5388 = vmul.f32 %v5352, %v5365
        %v5389 = vmul.f32 %v5353, %v5365
        %v5390 = vmul.f32 %v5354, %v5365
        %v5391 = vmul.f32 %v5355, %v5365
        %v5392 = vmul.f32 %v5356, %v5365
        %v5393 = vmul.f32 %v5357, %v5365
        %v5394 = vmul.f32 %v5358, %v5365
        %v5395 = vmul.f32 %v5359, %v5365
        %v5396 = vmul.f32 %v5360, %v5365
        %v5397 = vmul.f32 %v5361, %v5365
        %v5398 = vmul.f32 %v5362, %v5365
        %v5399 = vld [vmem:[%s6] sm:$0x1]
        %v5401 = vperm.slane %v5399, 0
        %v5403 = vadd.f32 %v5367, %v5401
        %v5404 = vadd.f32 %v5368, %v5401
        %v5405 = vadd.f32 %v5369, %v5401
        %v5406 = vadd.f32 %v5370, %v5401
        %v5407 = vadd.f32 %v5371, %v5401
        %v5408 = vadd.f32 %v5372, %v5401
        %v5409 = vadd.f32 %v5373, %v5401
        %v5410 = vadd.f32 %v5374, %v5401
        %v5411 = vadd.f32 %v5375, %v5401
        %v5412 = vadd.f32 %v5376, %v5401
        %v5413 = vadd.f32 %v5377, %v5401
        %v5414 = vadd.f32 %v5378, %v5401
        %v5415 = vadd.f32 %v5379, %v5401
        %v5416 = vadd.f32 %v5380, %v5401
        %v5417 = vadd.f32 %v5381, %v5401
        %v5418 = vadd.f32 %v5382, %v5401
        %v5419 = vadd.f32 %v5383, %v5401
        %v5420 = vadd.f32 %v5384, %v5401
        %v5421 = vadd.f32 %v5385, %v5401
        %v5422 = vadd.f32 %v5386, %v5401
        %v5423 = vadd.f32 %v5387, %v5401
        %v5424 = vadd.f32 %v5388, %v5401
        %v5425 = vadd.f32 %v5389, %v5401
        %v5426 = vadd.f32 %v5390, %v5401
        %v5427 = vadd.f32 %v5391, %v5401
        %v5428 = vadd.f32 %v5392, %v5401
        %v5429 = vadd.f32 %v5393, %v5401
        %v5430 = vadd.f32 %v5394, %v5401
        %v5431 = vadd.f32 %v5395, %v5401
        %v5432 = vadd.f32 %v5396, %v5401
        %v5433 = vadd.f32 %v5397, %v5401
        %v5434 = vadd.f32 %v5398, %v5401
        %v5435 = vmax.f32 %v5403, 0.0
        %v5436 = vmax.f32 %v5404, 0.0
        %v5437 = vmax.f32 %v5405, 0.0
        %v5438 = vmax.f32 %v5406, 0.0
        %v5439 = vmax.f32 %v5407, 0.0
        %v5440 = vmax.f32 %v5408, 0.0
        %v5441 = vmax.f32 %v5409, 0.0
        %v5442 = vmax.f32 %v5410, 0.0
        %v5443 = vmax.f32 %v5411, 0.0
        %v5444 = vmax.f32 %v5412, 0.0
        %v5445 = vmax.f32 %v5413, 0.0
        %v5446 = vmax.f32 %v5414, 0.0
        %v5447 = vmax.f32 %v5415, 0.0
        %v5448 = vmax.f32 %v5416, 0.0
        %v5449 = vmax.f32 %v5417, 0.0
        %v5450 = vmax.f32 %v5418, 0.0
        %v5451 = vmax.f32 %v5419, 0.0
        %v5452 = vmax.f32 %v5420, 0.0
        %v5453 = vmax.f32 %v5421, 0.0
        %v5454 = vmax.f32 %v5422, 0.0
        %v5455 = vmax.f32 %v5423, 0.0
        %v5456 = vmax.f32 %v5424, 0.0
        %v5457 = vmax.f32 %v5425, 0.0
        %v5458 = vmax.f32 %v5426, 0.0
        %v5459 = vmax.f32 %v5427, 0.0
        %v5460 = vmax.f32 %v5428, 0.0
        %v5461 = vmax.f32 %v5429, 0.0
        %v5462 = vmax.f32 %v5430, 0.0
        %v5463 = vmax.f32 %v5431, 0.0
        %v5464 = vmax.f32 %v5432, 0.0
        %v5465 = vmax.f32 %v5433, 0.0
        %v5466 = vmax.f32 %v5434, 0.0
        %s5467 = scalar_lea.vmem [#allocation4], 24
        %vm5468 = vcmask 31744
        %5469 = vst.msk [vmem:[%s5467 + $0x1] sm:$0xff] %vm5468, %v5435
        %5470 = vst.msk [vmem:[%s5467 + $0x9] sm:$0xff] %vm5468, %v5436
        %5471 = vst.msk [vmem:[%s5467 + $0x19] sm:$0xff] %vm5468, %v5437
        %5472 = vst.msk [vmem:[%s5467 + $0x21] sm:$0xff] %vm5468, %v5438
        %5473 = vst.msk [vmem:[%s5467 + $0x31] sm:$0xff] %vm5468, %v5439
        %5474 = vst.msk [vmem:[%s5467 + $0x39] sm:$0xff] %vm5468, %v5440
        %5475 = vst.msk [vmem:[%s5467 + $0x49] sm:$0xff] %vm5468, %v5441
        %5476 = vst.msk [vmem:[%s5467 + $0x51] sm:$0xff] %vm5468, %v5442
        %5477 = vst.msk [vmem:[%s5467 + $0x61] sm:$0xff] %vm5468, %v5443
        %5478 = vst.msk [vmem:[%s5467 + $0x69] sm:$0xff] %vm5468, %v5444
        %5479 = vst.msk [vmem:[%s5467 + $0x79] sm:$0xff] %vm5468, %v5445
        %5480 = vst.msk [vmem:[%s5467 + $0x81] sm:$0xff] %vm5468, %v5446
        %5481 = vst.msk [vmem:[%s5467 + $0x91] sm:$0xff] %vm5468, %v5447
        %5482 = vst.msk [vmem:[%s5467 + $0x99] sm:$0xff] %vm5468, %v5448
        %5483 = vst.msk [vmem:[%s5467 + $0xa9] sm:$0xff] %vm5468, %v5449
        %5484 = vst.msk [vmem:[%s5467 + $0xb1] sm:$0xff] %vm5468, %v5450
        %5485 = vst.msk [vmem:[%s5467 + $0xc1] sm:$0xff] %vm5468, %v5451
        %5486 = vst.msk [vmem:[%s5467 + $0xc9] sm:$0xff] %vm5468, %v5452
        %5487 = vst.msk [vmem:[%s5467 + $0xd9] sm:$0xff] %vm5468, %v5453
        %5488 = vst.msk [vmem:[%s5467 + $0xe1] sm:$0xff] %vm5468, %v5454
        %5489 = vst.msk [vmem:[%s5467 + $0xf1] sm:$0xff] %vm5468, %v5455
        %5490 = vst.msk [vmem:[%s5467 + $0xf9] sm:$0xff] %vm5468, %v5456
        %5491 = vst.msk [vmem:[%s5467 + $0x109] sm:$0xff] %vm5468, %v5457
        %5492 = vst.msk [vmem:[%s5467 + $0x111] sm:$0xff] %vm5468, %v5458
        %5493 = vst.msk [vmem:[%s5467 + $0x121] sm:$0xff] %vm5468, %v5459
        %5494 = vst.msk [vmem:[%s5467 + $0x129] sm:$0xff] %vm5468, %v5460
        %5495 = vst.msk [vmem:[%s5467 + $0x139] sm:$0xff] %vm5468, %v5461
        %5496 = vst.msk [vmem:[%s5467 + $0x141] sm:$0xff] %vm5468, %v5462
        %5497 = vst.msk [vmem:[%s5467 + $0x151] sm:$0xff] %vm5468, %v5463
        %5498 = vst.msk [vmem:[%s5467 + $0x159] sm:$0xff] %vm5468, %v5464
        %5499 = vst.msk [vmem:[%s5467 + $0x169] sm:$0xff] %vm5468, %v5465
        %5500 = vst.msk [vmem:[%s5467 + $0x171] sm:$0xff] %vm5468, %v5466
        %v5501 = vld [vmem:[#allocation4] sm:$0xff]
        %v5502 = vld [vmem:[#allocation4 + $0x8] sm:$0xff]
        %v5503 = vld [vmem:[#allocation4 + $0x18] sm:$0xff]
        %v5504 = vld [vmem:[#allocation4 + $0x20] sm:$0xff]
        %v5505 = vld [vmem:[#allocation4 + $0x30] sm:$0xff]
        %v5506 = vld [vmem:[#allocation4 + $0x38] sm:$0xff]
        %v5507 = vld [vmem:[#allocation4 + $0x48] sm:$0xff]
        %v5508 = vld [vmem:[#allocation4 + $0x50] sm:$0xff]
        %v5509 = vld [vmem:[#allocation4 + $0x60] sm:$0xff]
        %v5510 = vld [vmem:[#allocation4 + $0x68] sm:$0xff]
        %v5511 = vld [vmem:[#allocation4 + $0x78] sm:$0xff]
        %v5512 = vld [vmem:[#allocation4 + $0x80] sm:$0xff]
        %v5513 = vld [vmem:[#allocation4 + $0x90] sm:$0xff]
        %v5514 = vld [vmem:[#allocation4 + $0x98] sm:$0xff]
        %v5515 = vld [vmem:[#allocation4 + $0xa8] sm:$0xff]
        %v5516 = vld [vmem:[#allocation4 + $0xb0] sm:$0xff]
        %v5517 = vld [vmem:[#allocation4 + $0xc0] sm:$0xff]
        %v5518 = vld [vmem:[#allocation4 + $0xc8] sm:$0xff]
        %v5519 = vld [vmem:[#allocation4 + $0xd8] sm:$0xff]
        %v5520 = vld [vmem:[#allocation4 + $0xe0] sm:$0xff]
        %v5521 = vld [vmem:[#allocation4 + $0xf0] sm:$0xff]
        %v5522 = vld [vmem:[#allocation4 + $0xf8] sm:$0xff]
        %v5523 = vld [vmem:[#allocation4 + $0x108] sm:$0xff]
        %v5524 = vld [vmem:[#allocation4 + $0x110] sm:$0xff]
        %v5525 = vld [vmem:[#allocation4 + $0x120] sm:$0xff]
        %v5526 = vld [vmem:[#allocation4 + $0x128] sm:$0xff]
        %v5527 = vld [vmem:[#allocation4 + $0x138] sm:$0xff]
        %v5528 = vld [vmem:[#allocation4 + $0x140] sm:$0xff]
        %v5529 = vld [vmem:[#allocation4 + $0x150] sm:$0xff]
        %v5530 = vld [vmem:[#allocation4 + $0x158] sm:$0xff]
        %v5531 = vld [vmem:[#allocation4 + $0x168] sm:$0xff]
        %v5532 = vld [vmem:[#allocation4 + $0x170] sm:$0xff]
        %v5533 = vld [vmem:[#allocation4 + $0x1] sm:$0xff]
        %v5534 = vld [vmem:[#allocation4 + $0x9] sm:$0xff]
        %v5535 = vld [vmem:[#allocation4 + $0x19] sm:$0xff]
        %v5536 = vld [vmem:[#allocation4 + $0x21] sm:$0xff]
        %v5537 = vld [vmem:[#allocation4 + $0x31] sm:$0xff]
        %v5538 = vld [vmem:[#allocation4 + $0x39] sm:$0xff]
        %v5539 = vld [vmem:[#allocation4 + $0x49] sm:$0xff]
        %v5540 = vld [vmem:[#allocation4 + $0x51] sm:$0xff]
        %v5541 = vld [vmem:[#allocation4 + $0x61] sm:$0xff]
        %v5542 = vld [vmem:[#allocation4 + $0x69] sm:$0xff]
        %v5543 = vld [vmem:[#allocation4 + $0x79] sm:$0xff]
        %v5544 = vld [vmem:[#allocation4 + $0x81] sm:$0xff]
        %v5545 = vld [vmem:[#allocation4 + $0x91] sm:$0xff]
        %v5546 = vld [vmem:[#allocation4 + $0x99] sm:$0xff]
        %v5547 = vld [vmem:[#allocation4 + $0xa9] sm:$0xff]
        %v5548 = vld [vmem:[#allocation4 + $0xb1] sm:$0xff]
        %v5549 = vld [vmem:[#allocation4 + $0xc1] sm:$0xff]
        %v5550 = vld [vmem:[#allocation4 + $0xc9] sm:$0xff]
        %v5551 = vld [vmem:[#allocation4 + $0xd9] sm:$0xff]
        %v5552 = vld [vmem:[#allocation4 + $0xe1] sm:$0xff]
        %v5553 = vld [vmem:[#allocation4 + $0xf1] sm:$0xff]
        %v5554 = vld [vmem:[#allocation4 + $0xf9] sm:$0xff]
        %v5555 = vld [vmem:[#allocation4 + $0x109] sm:$0xff]
        %v5556 = vld [vmem:[#allocation4 + $0x111] sm:$0xff]
        %v5557 = vld [vmem:[#allocation4 + $0x121] sm:$0xff]
        %v5558 = vld [vmem:[#allocation4 + $0x129] sm:$0xff]
        %v5559 = vld [vmem:[#allocation4 + $0x139] sm:$0xff]
        %v5560 = vld [vmem:[#allocation4 + $0x141] sm:$0xff]
        %v5561 = vld [vmem:[#allocation4 + $0x151] sm:$0xff]
        %v5562 = vld [vmem:[#allocation4 + $0x159] sm:$0xff]
        %v5563 = vld [vmem:[#allocation4 + $0x169] sm:$0xff]
        %v5564 = vld [vmem:[#allocation4 + $0x171] sm:$0xff]
        %v5565 = vld [vmem:[#allocation4 + $0x2] sm:$0xff]
        %v5566 = vld [vmem:[#allocation4 + $0xa] sm:$0xff]
        %v5567 = vld [vmem:[#allocation4 + $0x1a] sm:$0xff]
        %v5568 = vld [vmem:[#allocation4 + $0x22] sm:$0xff]
        %v5569 = vld [vmem:[#allocation4 + $0x32] sm:$0xff]
        %v5570 = vld [vmem:[#allocation4 + $0x3a] sm:$0xff]
        %v5571 = vld [vmem:[#allocation4 + $0x4a] sm:$0xff]
        %v5572 = vld [vmem:[#allocation4 + $0x52] sm:$0xff]
        %v5573 = vld [vmem:[#allocation4 + $0x62] sm:$0xff]
        %v5574 = vld [vmem:[#allocation4 + $0x6a] sm:$0xff]
        %v5575 = vld [vmem:[#allocation4 + $0x7a] sm:$0xff]
        %v5576 = vld [vmem:[#allocation4 + $0x82] sm:$0xff]
        %v5577 = vld [vmem:[#allocation4 + $0x92] sm:$0xff]
        %v5578 = vld [vmem:[#allocation4 + $0x9a] sm:$0xff]
        %v5579 = vld [vmem:[#allocation4 + $0xaa] sm:$0xff]
        %v5580 = vld [vmem:[#allocation4 + $0xb2] sm:$0xff]
        %v5581 = vld [vmem:[#allocation4 + $0xc2] sm:$0xff]
        %v5582 = vld [vmem:[#allocation4 + $0xca] sm:$0xff]
        %v5583 = vld [vmem:[#allocation4 + $0xda] sm:$0xff]
        %v5584 = vld [vmem:[#allocation4 + $0xe2] sm:$0xff]
        %v5585 = vld [vmem:[#allocation4 + $0xf2] sm:$0xff]
        %v5586 = vld [vmem:[#allocation4 + $0xfa] sm:$0xff]
        %v5587 = vld [vmem:[#allocation4 + $0x10a] sm:$0xff]
        %v5588 = vld [vmem:[#allocation4 + $0x112] sm:$0xff]
        %v5589 = vld [vmem:[#allocation4 + $0x122] sm:$0xff]
        %v5590 = vld [vmem:[#allocation4 + $0x12a] sm:$0xff]
        %v5591 = vld [vmem:[#allocation4 + $0x13a] sm:$0xff]
        %v5592 = vld [vmem:[#allocation4 + $0x142] sm:$0xff]
        %v5593 = vld [vmem:[#allocation4 + $0x152] sm:$0xff]
        %v5594 = vld [vmem:[#allocation4 + $0x15a] sm:$0xff]
        %v5595 = vld [vmem:[#allocation4 + $0x16a] sm:$0xff]
        %v5596 = vld [vmem:[#allocation4 + $0x172] sm:$0xff]
        %v5597 = vld [vmem:[%s5467] sm:$0xff]
        %v5598 = vld [vmem:[%s5467 + $0x8] sm:$0xff]
        %v5599 = vld [vmem:[%s5467 + $0x18] sm:$0xff]
        %v5600 = vld [vmem:[%s5467 + $0x20] sm:$0xff]
        %v5601 = vld [vmem:[%s5467 + $0x30] sm:$0xff]
        %v5602 = vld [vmem:[%s5467 + $0x38] sm:$0xff]
        %v5603 = vld [vmem:[%s5467 + $0x48] sm:$0xff]
        %v5604 = vld [vmem:[%s5467 + $0x50] sm:$0xff]
        %v5605 = vld [vmem:[%s5467 + $0x60] sm:$0xff]
        %v5606 = vld [vmem:[%s5467 + $0x68] sm:$0xff]
        %v5607 = vld [vmem:[%s5467 + $0x78] sm:$0xff]
        %v5608 = vld [vmem:[%s5467 + $0x80] sm:$0xff]
        %v5609 = vld [vmem:[%s5467 + $0x90] sm:$0xff]
        %v5610 = vld [vmem:[%s5467 + $0x98] sm:$0xff]
        %v5611 = vld [vmem:[%s5467 + $0xa8] sm:$0xff]
        %v5612 = vld [vmem:[%s5467 + $0xb0] sm:$0xff]
        %v5613 = vld [vmem:[%s5467 + $0xc0] sm:$0xff]
        %v5614 = vld [vmem:[%s5467 + $0xc8] sm:$0xff]
        %v5615 = vld [vmem:[%s5467 + $0xd8] sm:$0xff]
        %v5616 = vld [vmem:[%s5467 + $0xe0] sm:$0xff]
        %v5617 = vld [vmem:[%s5467 + $0xf0] sm:$0xff]
        %v5618 = vld [vmem:[%s5467 + $0xf8] sm:$0xff]
        %v5619 = vld [vmem:[%s5467 + $0x108] sm:$0xff]
        %v5620 = vld [vmem:[%s5467 + $0x110] sm:$0xff]
        %v5621 = vld [vmem:[%s5467 + $0x120] sm:$0xff]
        %v5622 = vld [vmem:[%s5467 + $0x128] sm:$0xff]
        %v5623 = vld [vmem:[%s5467 + $0x138] sm:$0xff]
        %v5624 = vld [vmem:[%s5467 + $0x140] sm:$0xff]
        %v5625 = vld [vmem:[%s5467 + $0x150] sm:$0xff]
        %v5626 = vld [vmem:[%s5467 + $0x158] sm:$0xff]
        %v5627 = vld [vmem:[%s5467 + $0x168] sm:$0xff]
        %v5628 = vld [vmem:[%s5467 + $0x170] sm:$0xff]
        %v5629 = vld [vmem:[%s5467 + $0x1] sm:$0xff]
        %v5630 = vld [vmem:[%s5467 + $0x9] sm:$0xff]
        %v5631 = vld [vmem:[%s5467 + $0x19] sm:$0xff]
        %v5632 = vld [vmem:[%s5467 + $0x21] sm:$0xff]
        %v5633 = vld [vmem:[%s5467 + $0x31] sm:$0xff]
        %v5634 = vld [vmem:[%s5467 + $0x39] sm:$0xff]
        %v5635 = vld [vmem:[%s5467 + $0x49] sm:$0xff]
        %v5636 = vld [vmem:[%s5467 + $0x51] sm:$0xff]
        %v5637 = vld [vmem:[%s5467 + $0x61] sm:$0xff]
        %v5638 = vld [vmem:[%s5467 + $0x69] sm:$0xff]
        %v5639 = vld [vmem:[%s5467 + $0x79] sm:$0xff]
        %v5640 = vld [vmem:[%s5467 + $0x81] sm:$0xff]
        %v5641 = vld [vmem:[%s5467 + $0x91] sm:$0xff]
        %v5642 = vld [vmem:[%s5467 + $0x99] sm:$0xff]
        %v5643 = vld [vmem:[%s5467 + $0xa9] sm:$0xff]
        %v5644 = vld [vmem:[%s5467 + $0xb1] sm:$0xff]
        %v5645 = vld [vmem:[%s5467 + $0xc1] sm:$0xff]
        %v5646 = vld [vmem:[%s5467 + $0xc9] sm:$0xff]
        %v5647 = vld [vmem:[%s5467 + $0xd9] sm:$0xff]
        %v5648 = vld [vmem:[%s5467 + $0xe1] sm:$0xff]
        %v5649 = vld [vmem:[%s5467 + $0xf1] sm:$0xff]
        %v5650 = vld [vmem:[%s5467 + $0xf9] sm:$0xff]
        %v5651 = vld [vmem:[%s5467 + $0x109] sm:$0xff]
        %v5652 = vld [vmem:[%s5467 + $0x111] sm:$0xff]
        %v5653 = vld [vmem:[%s5467 + $0x121] sm:$0xff]
        %v5654 = vld [vmem:[%s5467 + $0x129] sm:$0xff]
        %v5655 = vld [vmem:[%s5467 + $0x139] sm:$0xff]
        %v5656 = vld [vmem:[%s5467 + $0x141] sm:$0xff]
        %v5657 = vld [vmem:[%s5467 + $0x151] sm:$0xff]
        %v5658 = vld [vmem:[%s5467 + $0x159] sm:$0xff]
        %v5659 = vld [vmem:[%s5467 + $0x169] sm:$0xff]
        %v5660 = vld [vmem:[%s5467 + $0x171] sm:$0xff]
        %v5661 = vld [vmem:[%s5467 + $0x2] sm:$0xff]
        %v5662 = vld [vmem:[%s5467 + $0xa] sm:$0xff]
        %v5663 = vld [vmem:[%s5467 + $0x1a] sm:$0xff]
        %v5664 = vld [vmem:[%s5467 + $0x22] sm:$0xff]
        %v5665 = vld [vmem:[%s5467 + $0x32] sm:$0xff]
        %v5666 = vld [vmem:[%s5467 + $0x3a] sm:$0xff]
        %v5667 = vld [vmem:[%s5467 + $0x4a] sm:$0xff]
        %v5668 = vld [vmem:[%s5467 + $0x52] sm:$0xff]
        %v5669 = vld [vmem:[%s5467 + $0x62] sm:$0xff]
        %v5670 = vld [vmem:[%s5467 + $0x6a] sm:$0xff]
        %v5671 = vld [vmem:[%s5467 + $0x7a] sm:$0xff]
        %v5672 = vld [vmem:[%s5467 + $0x82] sm:$0xff]
        %v5673 = vld [vmem:[%s5467 + $0x92] sm:$0xff]
        %v5674 = vld [vmem:[%s5467 + $0x9a] sm:$0xff]
        %v5675 = vld [vmem:[%s5467 + $0xaa] sm:$0xff]
        %v5676 = vld [vmem:[%s5467 + $0xb2] sm:$0xff]
        %v5677 = vld [vmem:[%s5467 + $0xc2] sm:$0xff]
        %v5678 = vld [vmem:[%s5467 + $0xca] sm:$0xff]
        %v5679 = vld [vmem:[%s5467 + $0xda] sm:$0xff]
        %v5680 = vld [vmem:[%s5467 + $0xe2] sm:$0xff]
        %v5681 = vld [vmem:[%s5467 + $0xf2] sm:$0xff]
        %v5682 = vld [vmem:[%s5467 + $0xfa] sm:$0xff]
        %v5683 = vld [vmem:[%s5467 + $0x10a] sm:$0xff]
        %v5684 = vld [vmem:[%s5467 + $0x112] sm:$0xff]
        %v5685 = vld [vmem:[%s5467 + $0x122] sm:$0xff]
        %v5686 = vld [vmem:[%s5467 + $0x12a] sm:$0xff]
        %v5687 = vld [vmem:[%s5467 + $0x13a] sm:$0xff]
        %v5688 = vld [vmem:[%s5467 + $0x142] sm:$0xff]
        %v5689 = vld [vmem:[%s5467 + $0x152] sm:$0xff]
        %v5690 = vld [vmem:[%s5467 + $0x15a] sm:$0xff]
        %v5691 = vld [vmem:[%s5467 + $0x16a] sm:$0xff]
        %v5692 = vld [vmem:[%s5467 + $0x172] sm:$0xff]
        %s5693 = scalar_lea.vmem [#allocation4], 48
        %v5694 = vld [vmem:[%s5693] sm:$0xff]
        %v5695 = vld [vmem:[%s5693 + $0x8] sm:$0xff]
        %v5696 = vld [vmem:[%s5693 + $0x18] sm:$0xff]
        %v5697 = vld [vmem:[%s5693 + $0x20] sm:$0xff]
        %v5698 = vld [vmem:[%s5693 + $0x30] sm:$0xff]
        %v5699 = vld [vmem:[%s5693 + $0x38] sm:$0xff]
        %v5700 = vld [vmem:[%s5693 + $0x48] sm:$0xff]
        %v5701 = vld [vmem:[%s5693 + $0x50] sm:$0xff]
        %v5702 = vld [vmem:[%s5693 + $0x60] sm:$0xff]
        %v5703 = vld [vmem:[%s5693 + $0x68] sm:$0xff]
        %v5704 = vld [vmem:[%s5693 + $0x78] sm:$0xff]
        %v5705 = vld [vmem:[%s5693 + $0x80] sm:$0xff]
        %v5706 = vld [vmem:[%s5693 + $0x90] sm:$0xff]
        %v5707 = vld [vmem:[%s5693 + $0x98] sm:$0xff]
        %v5708 = vld [vmem:[%s5693 + $0xa8] sm:$0xff]
        %v5709 = vld [vmem:[%s5693 + $0xb0] sm:$0xff]
        %v5710 = vld [vmem:[%s5693 + $0xc0] sm:$0xff]
        %v5711 = vld [vmem:[%s5693 + $0xc8] sm:$0xff]
        %v5712 = vld [vmem:[%s5693 + $0xd8] sm:$0xff]
        %v5713 = vld [vmem:[%s5693 + $0xe0] sm:$0xff]
        %v5714 = vld [vmem:[%s5693 + $0xf0] sm:$0xff]
        %v5715 = vld [vmem:[%s5693 + $0xf8] sm:$0xff]
        %v5716 = vld [vmem:[%s5693 + $0x108] sm:$0xff]
        %v5717 = vld [vmem:[%s5693 + $0x110] sm:$0xff]
        %v5718 = vld [vmem:[%s5693 + $0x120] sm:$0xff]
        %v5719 = vld [vmem:[%s5693 + $0x128] sm:$0xff]
        %v5720 = vld [vmem:[%s5693 + $0x138] sm:$0xff]
        %v5721 = vld [vmem:[%s5693 + $0x140] sm:$0xff]
        %v5722 = vld [vmem:[%s5693 + $0x150] sm:$0xff]
        %v5723 = vld [vmem:[%s5693 + $0x158] sm:$0xff]
        %v5724 = vld [vmem:[%s5693 + $0x168] sm:$0xff]
        %v5725 = vld [vmem:[%s5693 + $0x170] sm:$0xff]
        %v5726 = vld [vmem:[%s5693 + $0x1] sm:$0xff]
        %v5727 = vld [vmem:[%s5693 + $0x9] sm:$0xff]
        %v5728 = vld [vmem:[%s5693 + $0x19] sm:$0xff]
        %v5729 = vld [vmem:[%s5693 + $0x21] sm:$0xff]
        %v5730 = vld [vmem:[%s5693 + $0x31] sm:$0xff]
        %v5731 = vld [vmem:[%s5693 + $0x39] sm:$0xff]
        %v5732 = vld [vmem:[%s5693 + $0x49] sm:$0xff]
        %v5733 = vld [vmem:[%s5693 + $0x51] sm:$0xff]
        %v5734 = vld [vmem:[%s5693 + $0x61] sm:$0xff]
        %v5735 = vld [vmem:[%s5693 + $0x69] sm:$0xff]
        %v5736 = vld [vmem:[%s5693 + $0x79] sm:$0xff]
        %v5737 = vld [vmem:[%s5693 + $0x81] sm:$0xff]
        %v5738 = vld [vmem:[%s5693 + $0x91] sm:$0xff]
        %v5739 = vld [vmem:[%s5693 + $0x99] sm:$0xff]
        %v5740 = vld [vmem:[%s5693 + $0xa9] sm:$0xff]
        %v5741 = vld [vmem:[%s5693 + $0xb1] sm:$0xff]
        %v5742 = vld [vmem:[%s5693 + $0xc1] sm:$0xff]
        %v5743 = vld [vmem:[%s5693 + $0xc9] sm:$0xff]
        %v5744 = vld [vmem:[%s5693 + $0xd9] sm:$0xff]
        %v5745 = vld [vmem:[%s5693 + $0xe1] sm:$0xff]
        %v5746 = vld [vmem:[%s5693 + $0xf1] sm:$0xff]
        %v5747 = vld [vmem:[%s5693 + $0xf9] sm:$0xff]
        %v5748 = vld [vmem:[%s5693 + $0x109] sm:$0xff]
        %v5749 = vld [vmem:[%s5693 + $0x111] sm:$0xff]
        %v5750 = vld [vmem:[%s5693 + $0x121] sm:$0xff]
        %v5751 = vld [vmem:[%s5693 + $0x129] sm:$0xff]
        %v5752 = vld [vmem:[%s5693 + $0x139] sm:$0xff]
        %v5753 = vld [vmem:[%s5693 + $0x141] sm:$0xff]
        %v5754 = vld [vmem:[%s5693 + $0x151] sm:$0xff]
        %v5755 = vld [vmem:[%s5693 + $0x159] sm:$0xff]
        %v5756 = vld [vmem:[%s5693 + $0x169] sm:$0xff]
        %v5757 = vld [vmem:[%s5693 + $0x171] sm:$0xff]
        %v5758 = vld [vmem:[%s5693 + $0x2] sm:$0xff]
        %v5759 = vld [vmem:[%s5693 + $0xa] sm:$0xff]
        %v5760 = vld [vmem:[%s5693 + $0x1a] sm:$0xff]
        %v5761 = vld [vmem:[%s5693 + $0x22] sm:$0xff]
        %v5762 = vld [vmem:[%s5693 + $0x32] sm:$0xff]
        %v5763 = vld [vmem:[%s5693 + $0x3a] sm:$0xff]
        %v5764 = vld [vmem:[%s5693 + $0x4a] sm:$0xff]
        %v5765 = vld [vmem:[%s5693 + $0x52] sm:$0xff]
        %v5766 = vld [vmem:[%s5693 + $0x62] sm:$0xff]
        %v5767 = vld [vmem:[%s5693 + $0x6a] sm:$0xff]
        %v5768 = vld [vmem:[%s5693 + $0x7a] sm:$0xff]
        %v5769 = vld [vmem:[%s5693 + $0x82] sm:$0xff]
        %v5770 = vld [vmem:[%s5693 + $0x92] sm:$0xff]
        %v5771 = vld [vmem:[%s5693 + $0x9a] sm:$0xff]
        %v5772 = vld [vmem:[%s5693 + $0xaa] sm:$0xff]
        %v5773 = vld [vmem:[%s5693 + $0xb2] sm:$0xff]
        %v5774 = vld [vmem:[%s5693 + $0xc2] sm:$0xff]
        %v5775 = vld [vmem:[%s5693 + $0xca] sm:$0xff]
        %v5776 = vld [vmem:[%s5693 + $0xda] sm:$0xff]
        %v5777 = vld [vmem:[%s5693 + $0xe2] sm:$0xff]
        %v5778 = vld [vmem:[%s5693 + $0xf2] sm:$0xff]
        %v5779 = vld [vmem:[%s5693 + $0xfa] sm:$0xff]
        %v5780 = vld [vmem:[%s5693 + $0x10a] sm:$0xff]
        %v5781 = vld [vmem:[%s5693 + $0x112] sm:$0xff]
        %v5782 = vld [vmem:[%s5693 + $0x122] sm:$0xff]
        %v5783 = vld [vmem:[%s5693 + $0x12a] sm:$0xff]
        %v5784 = vld [vmem:[%s5693 + $0x13a] sm:$0xff]
        %v5785 = vld [vmem:[%s5693 + $0x142] sm:$0xff]
        %v5786 = vld [vmem:[%s5693 + $0x152] sm:$0xff]
        %v5787 = vld [vmem:[%s5693 + $0x15a] sm:$0xff]
        %v5788 = vld [vmem:[%s5693 + $0x16a] sm:$0xff]
        %v5789 = vld [vmem:[%s5693 + $0x172] sm:$0xff]
        %5822 = vrot.lane.b32.xlu0 %v5533, 4
        %v5823 = vpop.permute.xlu0 %5822
        %5824 = vrot.lane.b32.xlu0 %v5534, 4
        %v5825 = vpop.permute.xlu0 %5824
        %5826 = vrot.lane.b32.xlu0 %v5535, 4
        %v5827 = vpop.permute.xlu0 %5826
        %5828 = vrot.lane.b32.xlu0 %v5536, 4
        %v5829 = vpop.permute.xlu0 %5828
        %5830 = vrot.lane.b32.xlu0 %v5537, 4
        %v5831 = vpop.permute.xlu0 %5830
        %5832 = vrot.lane.b32.xlu0 %v5538, 4
        %v5833 = vpop.permute.xlu0 %5832
        %5834 = vrot.lane.b32.xlu0 %v5539, 4
        %v5835 = vpop.permute.xlu0 %5834
        %5836 = vrot.lane.b32.xlu0 %v5540, 4
        %v5837 = vpop.permute.xlu0 %5836
        %5838 = vrot.lane.b32.xlu0 %v5541, 4
        %v5839 = vpop.permute.xlu0 %5838
        %5840 = vrot.lane.b32.xlu0 %v5542, 4
        %v5841 = vpop.permute.xlu0 %5840
        %5842 = vrot.lane.b32.xlu0 %v5543, 4
        %v5843 = vpop.permute.xlu0 %5842
        %5844 = vrot.lane.b32.xlu0 %v5544, 4
        %v5845 = vpop.permute.xlu0 %5844
        %5846 = vrot.lane.b32.xlu0 %v5545, 4
        %v5847 = vpop.permute.xlu0 %5846
        %5848 = vrot.lane.b32.xlu0 %v5546, 4
        %v5849 = vpop.permute.xlu0 %5848
        %5850 = vrot.lane.b32.xlu0 %v5547, 4
        %v5851 = vpop.permute.xlu0 %5850
        %5852 = vrot.lane.b32.xlu0 %v5548, 4
        %v5853 = vpop.permute.xlu0 %5852
        %5854 = vrot.lane.b32.xlu0 %v5549, 4
        %v5855 = vpop.permute.xlu0 %5854
        %5856 = vrot.lane.b32.xlu0 %v5550, 4
        %v5857 = vpop.permute.xlu0 %5856
        %5858 = vrot.lane.b32.xlu0 %v5551, 4
        %v5859 = vpop.permute.xlu0 %5858
        %5860 = vrot.lane.b32.xlu0 %v5552, 4
        %v5861 = vpop.permute.xlu0 %5860
        %5862 = vrot.lane.b32.xlu0 %v5553, 4
        %v5863 = vpop.permute.xlu0 %5862
        %5864 = vrot.lane.b32.xlu0 %v5554, 4
        %v5865 = vpop.permute.xlu0 %5864
        %5866 = vrot.lane.b32.xlu0 %v5555, 4
        %v5867 = vpop.permute.xlu0 %5866
        %5868 = vrot.lane.b32.xlu0 %v5556, 4
        %v5869 = vpop.permute.xlu0 %5868
        %5870 = vrot.lane.b32.xlu0 %v5557, 4
        %v5871 = vpop.permute.xlu0 %5870
        %5872 = vrot.lane.b32.xlu0 %v5558, 4
        %v5873 = vpop.permute.xlu0 %5872
        %5874 = vrot.lane.b32.xlu0 %v5559, 4
        %v5875 = vpop.permute.xlu0 %5874
        %5876 = vrot.lane.b32.xlu0 %v5560, 4
        %v5877 = vpop.permute.xlu0 %5876
        %5878 = vrot.lane.b32.xlu0 %v5561, 4
        %v5879 = vpop.permute.xlu0 %5878
        %5880 = vrot.lane.b32.xlu0 %v5562, 4
        %v5881 = vpop.permute.xlu0 %5880
        %5882 = vrot.lane.b32.xlu0 %v5563, 4
        %v5883 = vpop.permute.xlu0 %5882
        %5884 = vrot.lane.b32.xlu0 %v5564, 4
        %v5885 = vpop.permute.xlu0 %5884
        %5950 = vrot.lane.b32.xlu0 %v5565, 8
        %v5951 = vpop.permute.xlu0 %5950
        %5952 = vrot.lane.b32.xlu0 %v5566, 8
        %v5953 = vpop.permute.xlu0 %5952
        %5954 = vrot.lane.b32.xlu0 %v5567, 8
        %v5955 = vpop.permute.xlu0 %5954
        %5956 = vrot.lane.b32.xlu0 %v5568, 8
        %v5957 = vpop.permute.xlu0 %5956
        %5958 = vrot.lane.b32.xlu0 %v5569, 8
        %v5959 = vpop.permute.xlu0 %5958
        %5960 = vrot.lane.b32.xlu0 %v5570, 8
        %v5961 = vpop.permute.xlu0 %5960
        %5962 = vrot.lane.b32.xlu0 %v5571, 8
        %v5963 = vpop.permute.xlu0 %5962
        %5964 = vrot.lane.b32.xlu0 %v5572, 8
        %v5965 = vpop.permute.xlu0 %5964
        %5966 = vrot.lane.b32.xlu0 %v5573, 8
        %v5967 = vpop.permute.xlu0 %5966
        %5968 = vrot.lane.b32.xlu0 %v5574, 8
        %v5969 = vpop.permute.xlu0 %5968
        %5970 = vrot.lane.b32.xlu0 %v5575, 8
        %v5971 = vpop.permute.xlu0 %5970
        %5972 = vrot.lane.b32.xlu0 %v5576, 8
        %v5973 = vpop.permute.xlu0 %5972
        %5974 = vrot.lane.b32.xlu0 %v5577, 8
        %v5975 = vpop.permute.xlu0 %5974
        %5976 = vrot.lane.b32.xlu0 %v5578, 8
        %v5977 = vpop.permute.xlu0 %5976
        %5978 = vrot.lane.b32.xlu0 %v5579, 8
        %v5979 = vpop.permute.xlu0 %5978
        %5980 = vrot.lane.b32.xlu0 %v5580, 8
        %v5981 = vpop.permute.xlu0 %5980
        %5982 = vrot.lane.b32.xlu0 %v5581, 8
        %v5983 = vpop.permute.xlu0 %5982
        %5984 = vrot.lane.b32.xlu0 %v5582, 8
        %v5985 = vpop.permute.xlu0 %5984
        %5986 = vrot.lane.b32.xlu0 %v5583, 8
        %v5987 = vpop.permute.xlu0 %5986
        %5988 = vrot.lane.b32.xlu0 %v5584, 8
        %v5989 = vpop.permute.xlu0 %5988
        %5990 = vrot.lane.b32.xlu0 %v5585, 8
        %v5991 = vpop.permute.xlu0 %5990
        %5992 = vrot.lane.b32.xlu0 %v5586, 8
        %v5993 = vpop.permute.xlu0 %5992
        %5994 = vrot.lane.b32.xlu0 %v5587, 8
        %v5995 = vpop.permute.xlu0 %5994
        %5996 = vrot.lane.b32.xlu0 %v5588, 8
        %v5997 = vpop.permute.xlu0 %5996
        %5998 = vrot.lane.b32.xlu0 %v5589, 8
        %v5999 = vpop.permute.xlu0 %5998
        %6000 = vrot.lane.b32.xlu0 %v5590, 8
        %v6001 = vpop.permute.xlu0 %6000
        %6002 = vrot.lane.b32.xlu0 %v5591, 8
        %v6003 = vpop.permute.xlu0 %6002
        %6004 = vrot.lane.b32.xlu0 %v5592, 8
        %v6005 = vpop.permute.xlu0 %6004
        %6006 = vrot.lane.b32.xlu0 %v5593, 8
        %v6007 = vpop.permute.xlu0 %6006
        %6008 = vrot.lane.b32.xlu0 %v5594, 8
        %v6009 = vpop.permute.xlu0 %6008
        %6010 = vrot.lane.b32.xlu0 %v5595, 8
        %v6011 = vpop.permute.xlu0 %6010
        %6012 = vrot.lane.b32.xlu0 %v5596, 8
        %v6013 = vpop.permute.xlu0 %6012
        %6078 = vrot.lane.b32.xlu0 %v5597, 12
        %v6079 = vpop.permute.xlu0 %6078
        %6080 = vrot.lane.b32.xlu0 %v5598, 12
        %v6081 = vpop.permute.xlu0 %6080
        %6082 = vrot.lane.b32.xlu0 %v5599, 12
        %v6083 = vpop.permute.xlu0 %6082
        %6084 = vrot.lane.b32.xlu0 %v5600, 12
        %v6085 = vpop.permute.xlu0 %6084
        %6086 = vrot.lane.b32.xlu0 %v5601, 12
        %v6087 = vpop.permute.xlu0 %6086
        %6088 = vrot.lane.b32.xlu0 %v5602, 12
        %v6089 = vpop.permute.xlu0 %6088
        %6090 = vrot.lane.b32.xlu0 %v5603, 12
        %v6091 = vpop.permute.xlu0 %6090
        %6092 = vrot.lane.b32.xlu0 %v5604, 12
        %v6093 = vpop.permute.xlu0 %6092
        %6094 = vrot.lane.b32.xlu0 %v5605, 12
        %v6095 = vpop.permute.xlu0 %6094
        %6096 = vrot.lane.b32.xlu0 %v5606, 12
        %v6097 = vpop.permute.xlu0 %6096
        %6098 = vrot.lane.b32.xlu0 %v5607, 12
        %v6099 = vpop.permute.xlu0 %6098
        %6100 = vrot.lane.b32.xlu0 %v5608, 12
        %v6101 = vpop.permute.xlu0 %6100
        %6102 = vrot.lane.b32.xlu0 %v5609, 12
        %v6103 = vpop.permute.xlu0 %6102
        %6104 = vrot.lane.b32.xlu0 %v5610, 12
        %v6105 = vpop.permute.xlu0 %6104
        %6106 = vrot.lane.b32.xlu0 %v5611, 12
        %v6107 = vpop.permute.xlu0 %6106
        %6108 = vrot.lane.b32.xlu0 %v5612, 12
        %v6109 = vpop.permute.xlu0 %6108
        %6110 = vrot.lane.b32.xlu0 %v5613, 12
        %v6111 = vpop.permute.xlu0 %6110
        %6112 = vrot.lane.b32.xlu0 %v5614, 12
        %v6113 = vpop.permute.xlu0 %6112
        %6114 = vrot.lane.b32.xlu0 %v5615, 12
        %v6115 = vpop.permute.xlu0 %6114
        %6116 = vrot.lane.b32.xlu0 %v5616, 12
        %v6117 = vpop.permute.xlu0 %6116
        %6118 = vrot.lane.b32.xlu0 %v5617, 12
        %v6119 = vpop.permute.xlu0 %6118
        %6120 = vrot.lane.b32.xlu0 %v5618, 12
        %v6121 = vpop.permute.xlu0 %6120
        %6122 = vrot.lane.b32.xlu0 %v5619, 12
        %v6123 = vpop.permute.xlu0 %6122
        %6124 = vrot.lane.b32.xlu0 %v5620, 12
        %v6125 = vpop.permute.xlu0 %6124
        %6126 = vrot.lane.b32.xlu0 %v5621, 12
        %v6127 = vpop.permute.xlu0 %6126
        %6128 = vrot.lane.b32.xlu0 %v5622, 12
        %v6129 = vpop.permute.xlu0 %6128
        %6130 = vrot.lane.b32.xlu0 %v5623, 12
        %v6131 = vpop.permute.xlu0 %6130
        %6132 = vrot.lane.b32.xlu0 %v5624, 12
        %v6133 = vpop.permute.xlu0 %6132
        %6134 = vrot.lane.b32.xlu0 %v5625, 12
        %v6135 = vpop.permute.xlu0 %6134
        %6136 = vrot.lane.b32.xlu0 %v5626, 12
        %v6137 = vpop.permute.xlu0 %6136
        %6138 = vrot.lane.b32.xlu0 %v5627, 12
        %v6139 = vpop.permute.xlu0 %6138
        %6140 = vrot.lane.b32.xlu0 %v5628, 12
        %v6141 = vpop.permute.xlu0 %6140
        %6206 = vrot.lane.b32.xlu0 %v5629, 16
        %v6207 = vpop.permute.xlu0 %6206
        %6208 = vrot.lane.b32.xlu0 %v5630, 16
        %v6209 = vpop.permute.xlu0 %6208
        %6210 = vrot.lane.b32.xlu0 %v5631, 16
        %v6211 = vpop.permute.xlu0 %6210
        %6212 = vrot.lane.b32.xlu0 %v5632, 16
        %v6213 = vpop.permute.xlu0 %6212
        %6214 = vrot.lane.b32.xlu0 %v5633, 16
        %v6215 = vpop.permute.xlu0 %6214
        %6216 = vrot.lane.b32.xlu0 %v5634, 16
        %v6217 = vpop.permute.xlu0 %6216
        %6218 = vrot.lane.b32.xlu0 %v5635, 16
        %v6219 = vpop.permute.xlu0 %6218
        %6220 = vrot.lane.b32.xlu0 %v5636, 16
        %v6221 = vpop.permute.xlu0 %6220
        %6222 = vrot.lane.b32.xlu0 %v5637, 16
        %v6223 = vpop.permute.xlu0 %6222
        %6224 = vrot.lane.b32.xlu0 %v5638, 16
        %v6225 = vpop.permute.xlu0 %6224
        %6226 = vrot.lane.b32.xlu0 %v5639, 16
        %v6227 = vpop.permute.xlu0 %6226
        %6228 = vrot.lane.b32.xlu0 %v5640, 16
        %v6229 = vpop.permute.xlu0 %6228
        %6230 = vrot.lane.b32.xlu0 %v5641, 16
        %v6231 = vpop.permute.xlu0 %6230
        %6232 = vrot.lane.b32.xlu0 %v5642, 16
        %v6233 = vpop.permute.xlu0 %6232
        %6234 = vrot.lane.b32.xlu0 %v5643, 16
        %v6235 = vpop.permute.xlu0 %6234
        %6236 = vrot.lane.b32.xlu0 %v5644, 16
        %v6237 = vpop.permute.xlu0 %6236
        %6238 = vrot.lane.b32.xlu0 %v5645, 16
        %v6239 = vpop.permute.xlu0 %6238
        %6240 = vrot.lane.b32.xlu0 %v5646, 16
        %v6241 = vpop.permute.xlu0 %6240
        %6242 = vrot.lane.b32.xlu0 %v5647, 16
        %v6243 = vpop.permute.xlu0 %6242
        %6244 = vrot.lane.b32.xlu0 %v5648, 16
        %v6245 = vpop.permute.xlu0 %6244
        %6246 = vrot.lane.b32.xlu0 %v5649, 16
        %v6247 = vpop.permute.xlu0 %6246
        %6248 = vrot.lane.b32.xlu0 %v5650, 16
        %v6249 = vpop.permute.xlu0 %6248
        %6250 = vrot.lane.b32.xlu0 %v5651, 16
        %v6251 = vpop.permute.xlu0 %6250
        %6252 = vrot.lane.b32.xlu0 %v5652, 16
        %v6253 = vpop.permute.xlu0 %6252
        %6254 = vrot.lane.b32.xlu0 %v5653, 16
        %v6255 = vpop.permute.xlu0 %6254
        %6256 = vrot.lane.b32.xlu0 %v5654, 16
        %v6257 = vpop.permute.xlu0 %6256
        %6258 = vrot.lane.b32.xlu0 %v5655, 16
        %v6259 = vpop.permute.xlu0 %6258
        %6260 = vrot.lane.b32.xlu0 %v5656, 16
        %v6261 = vpop.permute.xlu0 %6260
        %6262 = vrot.lane.b32.xlu0 %v5657, 16
        %v6263 = vpop.permute.xlu0 %6262
        %6264 = vrot.lane.b32.xlu0 %v5658, 16
        %v6265 = vpop.permute.xlu0 %6264
        %6266 = vrot.lane.b32.xlu0 %v5659, 16
        %v6267 = vpop.permute.xlu0 %6266
        %6268 = vrot.lane.b32.xlu0 %v5660, 16
        %v6269 = vpop.permute.xlu0 %6268
        %6334 = vrot.lane.b32.xlu0 %v5661, 20
        %v6335 = vpop.permute.xlu0 %6334
        %6336 = vrot.lane.b32.xlu0 %v5662, 20
        %v6337 = vpop.permute.xlu0 %6336
        %6338 = vrot.lane.b32.xlu0 %v5663, 20
        %v6339 = vpop.permute.xlu0 %6338
        %6340 = vrot.lane.b32.xlu0 %v5664, 20
        %v6341 = vpop.permute.xlu0 %6340
        %6342 = vrot.lane.b32.xlu0 %v5665, 20
        %v6343 = vpop.permute.xlu0 %6342
        %6344 = vrot.lane.b32.xlu0 %v5666, 20
        %v6345 = vpop.permute.xlu0 %6344
        %6346 = vrot.lane.b32.xlu0 %v5667, 20
        %v6347 = vpop.permute.xlu0 %6346
        %6348 = vrot.lane.b32.xlu0 %v5668, 20
        %v6349 = vpop.permute.xlu0 %6348
        %6350 = vrot.lane.b32.xlu0 %v5669, 20
        %v6351 = vpop.permute.xlu0 %6350
        %6352 = vrot.lane.b32.xlu0 %v5670, 20
        %v6353 = vpop.permute.xlu0 %6352
        %6354 = vrot.lane.b32.xlu0 %v5671, 20
        %v6355 = vpop.permute.xlu0 %6354
        %6356 = vrot.lane.b32.xlu0 %v5672, 20
        %v6357 = vpop.permute.xlu0 %6356
        %6358 = vrot.lane.b32.xlu0 %v5673, 20
        %v6359 = vpop.permute.xlu0 %6358
        %6360 = vrot.lane.b32.xlu0 %v5674, 20
        %v6361 = vpop.permute.xlu0 %6360
        %6362 = vrot.lane.b32.xlu0 %v5675, 20
        %v6363 = vpop.permute.xlu0 %6362
        %6364 = vrot.lane.b32.xlu0 %v5676, 20
        %v6365 = vpop.permute.xlu0 %6364
        %6366 = vrot.lane.b32.xlu0 %v5677, 20
        %v6367 = vpop.permute.xlu0 %6366
        %6368 = vrot.lane.b32.xlu0 %v5678, 20
        %v6369 = vpop.permute.xlu0 %6368
        %6370 = vrot.lane.b32.xlu0 %v5679, 20
        %v6371 = vpop.permute.xlu0 %6370
        %6372 = vrot.lane.b32.xlu0 %v5680, 20
        %v6373 = vpop.permute.xlu0 %6372
        %6374 = vrot.lane.b32.xlu0 %v5681, 20
        %v6375 = vpop.permute.xlu0 %6374
        %6376 = vrot.lane.b32.xlu0 %v5682, 20
        %v6377 = vpop.permute.xlu0 %6376
        %6378 = vrot.lane.b32.xlu0 %v5683, 20
        %v6379 = vpop.permute.xlu0 %6378
        %6380 = vrot.lane.b32.xlu0 %v5684, 20
        %v6381 = vpop.permute.xlu0 %6380
        %6382 = vrot.lane.b32.xlu0 %v5685, 20
        %v6383 = vpop.permute.xlu0 %6382
        %6384 = vrot.lane.b32.xlu0 %v5686, 20
        %v6385 = vpop.permute.xlu0 %6384
        %6386 = vrot.lane.b32.xlu0 %v5687, 20
        %v6387 = vpop.permute.xlu0 %6386
        %6388 = vrot.lane.b32.xlu0 %v5688, 20
        %v6389 = vpop.permute.xlu0 %6388
        %6390 = vrot.lane.b32.xlu0 %v5689, 20
        %v6391 = vpop.permute.xlu0 %6390
        %6392 = vrot.lane.b32.xlu0 %v5690, 20
        %v6393 = vpop.permute.xlu0 %6392
        %6394 = vrot.lane.b32.xlu0 %v5691, 20
        %v6395 = vpop.permute.xlu0 %6394
        %6396 = vrot.lane.b32.xlu0 %v5692, 20
        %v6397 = vpop.permute.xlu0 %6396
        %6462 = vrot.lane.b32.xlu0 %v5694, 24
        %v6463 = vpop.permute.xlu0 %6462
        %6464 = vrot.lane.b32.xlu0 %v5695, 24
        %v6465 = vpop.permute.xlu0 %6464
        %6466 = vrot.lane.b32.xlu0 %v5696, 24
        %v6467 = vpop.permute.xlu0 %6466
        %6468 = vrot.lane.b32.xlu0 %v5697, 24
        %v6469 = vpop.permute.xlu0 %6468
        %6470 = vrot.lane.b32.xlu0 %v5698, 24
        %v6471 = vpop.permute.xlu0 %6470
        %6472 = vrot.lane.b32.xlu0 %v5699, 24
        %v6473 = vpop.permute.xlu0 %6472
        %6474 = vrot.lane.b32.xlu0 %v5700, 24
        %v6475 = vpop.permute.xlu0 %6474
        %6476 = vrot.lane.b32.xlu0 %v5701, 24
        %v6477 = vpop.permute.xlu0 %6476
        %6478 = vrot.lane.b32.xlu0 %v5702, 24
        %v6479 = vpop.permute.xlu0 %6478
        %6480 = vrot.lane.b32.xlu0 %v5703, 24
        %v6481 = vpop.permute.xlu0 %6480
        %6482 = vrot.lane.b32.xlu0 %v5704, 24
        %v6483 = vpop.permute.xlu0 %6482
        %6484 = vrot.lane.b32.xlu0 %v5705, 24
        %v6485 = vpop.permute.xlu0 %6484
        %6486 = vrot.lane.b32.xlu0 %v5706, 24
        %v6487 = vpop.permute.xlu0 %6486
        %6488 = vrot.lane.b32.xlu0 %v5707, 24
        %v6489 = vpop.permute.xlu0 %6488
        %6490 = vrot.lane.b32.xlu0 %v5708, 24
        %v6491 = vpop.permute.xlu0 %6490
        %6492 = vrot.lane.b32.xlu0 %v5709, 24
        %v6493 = vpop.permute.xlu0 %6492
        %6494 = vrot.lane.b32.xlu0 %v5710, 24
        %v6495 = vpop.permute.xlu0 %6494
        %6496 = vrot.lane.b32.xlu0 %v5711, 24
        %v6497 = vpop.permute.xlu0 %6496
        %6498 = vrot.lane.b32.xlu0 %v5712, 24
        %v6499 = vpop.permute.xlu0 %6498
        %6500 = vrot.lane.b32.xlu0 %v5713, 24
        %v6501 = vpop.permute.xlu0 %6500
        %6502 = vrot.lane.b32.xlu0 %v5714, 24
        %v6503 = vpop.permute.xlu0 %6502
        %6504 = vrot.lane.b32.xlu0 %v5715, 24
        %v6505 = vpop.permute.xlu0 %6504
        %6506 = vrot.lane.b32.xlu0 %v5716, 24
        %v6507 = vpop.permute.xlu0 %6506
        %6508 = vrot.lane.b32.xlu0 %v5717, 24
        %v6509 = vpop.permute.xlu0 %6508
        %6510 = vrot.lane.b32.xlu0 %v5718, 24
        %v6511 = vpop.permute.xlu0 %6510
        %6512 = vrot.lane.b32.xlu0 %v5719, 24
        %v6513 = vpop.permute.xlu0 %6512
        %6514 = vrot.lane.b32.xlu0 %v5720, 24
        %v6515 = vpop.permute.xlu0 %6514
        %6516 = vrot.lane.b32.xlu0 %v5721, 24
        %v6517 = vpop.permute.xlu0 %6516
        %6518 = vrot.lane.b32.xlu0 %v5722, 24
        %v6519 = vpop.permute.xlu0 %6518
        %6520 = vrot.lane.b32.xlu0 %v5723, 24
        %v6521 = vpop.permute.xlu0 %6520
        %6522 = vrot.lane.b32.xlu0 %v5724, 24
        %v6523 = vpop.permute.xlu0 %6522
        %6524 = vrot.lane.b32.xlu0 %v5725, 24
        %v6525 = vpop.permute.xlu0 %6524
        %6590 = vrot.lane.b32.xlu0 %v5726, 28
        %v6591 = vpop.permute.xlu0 %6590
        %6592 = vrot.lane.b32.xlu0 %v5727, 28
        %v6593 = vpop.permute.xlu0 %6592
        %6594 = vrot.lane.b32.xlu0 %v5728, 28
        %v6595 = vpop.permute.xlu0 %6594
        %6596 = vrot.lane.b32.xlu0 %v5729, 28
        %v6597 = vpop.permute.xlu0 %6596
        %6598 = vrot.lane.b32.xlu0 %v5730, 28
        %v6599 = vpop.permute.xlu0 %6598
        %6600 = vrot.lane.b32.xlu0 %v5731, 28
        %v6601 = vpop.permute.xlu0 %6600
        %6602 = vrot.lane.b32.xlu0 %v5732, 28
        %v6603 = vpop.permute.xlu0 %6602
        %6604 = vrot.lane.b32.xlu0 %v5733, 28
        %v6605 = vpop.permute.xlu0 %6604
        %6606 = vrot.lane.b32.xlu0 %v5734, 28
        %v6607 = vpop.permute.xlu0 %6606
        %6608 = vrot.lane.b32.xlu0 %v5735, 28
        %v6609 = vpop.permute.xlu0 %6608
        %6610 = vrot.lane.b32.xlu0 %v5736, 28
        %v6611 = vpop.permute.xlu0 %6610
        %6612 = vrot.lane.b32.xlu0 %v5737, 28
        %v6613 = vpop.permute.xlu0 %6612
        %6614 = vrot.lane.b32.xlu0 %v5738, 28
        %v6615 = vpop.permute.xlu0 %6614
        %6616 = vrot.lane.b32.xlu0 %v5739, 28
        %v6617 = vpop.permute.xlu0 %6616
        %6618 = vrot.lane.b32.xlu0 %v5740, 28
        %v6619 = vpop.permute.xlu0 %6618
        %6620 = vrot.lane.b32.xlu0 %v5741, 28
        %v6621 = vpop.permute.xlu0 %6620
        %6622 = vrot.lane.b32.xlu0 %v5742, 28
        %v6623 = vpop.permute.xlu0 %6622
        %6624 = vrot.lane.b32.xlu0 %v5743, 28
        %v6625 = vpop.permute.xlu0 %6624
        %6626 = vrot.lane.b32.xlu0 %v5744, 28
        %v6627 = vpop.permute.xlu0 %6626
        %6628 = vrot.lane.b32.xlu0 %v5745, 28
        %v6629 = vpop.permute.xlu0 %6628
        %6630 = vrot.lane.b32.xlu0 %v5746, 28
        %v6631 = vpop.permute.xlu0 %6630
        %6632 = vrot.lane.b32.xlu0 %v5747, 28
        %v6633 = vpop.permute.xlu0 %6632
        %6634 = vrot.lane.b32.xlu0 %v5748, 28
        %v6635 = vpop.permute.xlu0 %6634
        %6636 = vrot.lane.b32.xlu0 %v5749, 28
        %v6637 = vpop.permute.xlu0 %6636
        %6638 = vrot.lane.b32.xlu0 %v5750, 28
        %v6639 = vpop.permute.xlu0 %6638
        %6640 = vrot.lane.b32.xlu0 %v5751, 28
        %v6641 = vpop.permute.xlu0 %6640
        %6642 = vrot.lane.b32.xlu0 %v5752, 28
        %v6643 = vpop.permute.xlu0 %6642
        %6644 = vrot.lane.b32.xlu0 %v5753, 28
        %v6645 = vpop.permute.xlu0 %6644
        %6646 = vrot.lane.b32.xlu0 %v5754, 28
        %v6647 = vpop.permute.xlu0 %6646
        %6648 = vrot.lane.b32.xlu0 %v5755, 28
        %v6649 = vpop.permute.xlu0 %6648
        %6650 = vrot.lane.b32.xlu0 %v5756, 28
        %v6651 = vpop.permute.xlu0 %6650
        %6652 = vrot.lane.b32.xlu0 %v5757, 28
        %v6653 = vpop.permute.xlu0 %6652
        %6718 = vrot.lane.b32.xlu0 %v5758, 32
        %v6719 = vpop.permute.xlu0 %6718
        %6720 = vrot.lane.b32.xlu0 %v5759, 32
        %v6721 = vpop.permute.xlu0 %6720
        %6722 = vrot.lane.b32.xlu0 %v5760, 32
        %v6723 = vpop.permute.xlu0 %6722
        %6724 = vrot.lane.b32.xlu0 %v5761, 32
        %v6725 = vpop.permute.xlu0 %6724
        %6726 = vrot.lane.b32.xlu0 %v5762, 32
        %v6727 = vpop.permute.xlu0 %6726
        %6728 = vrot.lane.b32.xlu0 %v5763, 32
        %v6729 = vpop.permute.xlu0 %6728
        %6730 = vrot.lane.b32.xlu0 %v5764, 32
        %v6731 = vpop.permute.xlu0 %6730
        %6732 = vrot.lane.b32.xlu0 %v5765, 32
        %v6733 = vpop.permute.xlu0 %6732
        %6734 = vrot.lane.b32.xlu0 %v5766, 32
        %v6735 = vpop.permute.xlu0 %6734
        %6736 = vrot.lane.b32.xlu0 %v5767, 32
        %v6737 = vpop.permute.xlu0 %6736
        %6738 = vrot.lane.b32.xlu0 %v5768, 32
        %v6739 = vpop.permute.xlu0 %6738
        %6740 = vrot.lane.b32.xlu0 %v5769, 32
        %v6741 = vpop.permute.xlu0 %6740
        %6742 = vrot.lane.b32.xlu0 %v5770, 32
        %v6743 = vpop.permute.xlu0 %6742
        %6744 = vrot.lane.b32.xlu0 %v5771, 32
        %v6745 = vpop.permute.xlu0 %6744
        %6746 = vrot.lane.b32.xlu0 %v5772, 32
        %v6747 = vpop.permute.xlu0 %6746
        %6748 = vrot.lane.b32.xlu0 %v5773, 32
        %v6749 = vpop.permute.xlu0 %6748
        %6750 = vrot.lane.b32.xlu0 %v5774, 32
        %v6751 = vpop.permute.xlu0 %6750
        %6752 = vrot.lane.b32.xlu0 %v5775, 32
        %v6753 = vpop.permute.xlu0 %6752
        %6754 = vrot.lane.b32.xlu0 %v5776, 32
        %v6755 = vpop.permute.xlu0 %6754
        %6756 = vrot.lane.b32.xlu0 %v5777, 32
        %v6757 = vpop.permute.xlu0 %6756
        %6758 = vrot.lane.b32.xlu0 %v5778, 32
        %v6759 = vpop.permute.xlu0 %6758
        %6760 = vrot.lane.b32.xlu0 %v5779, 32
        %v6761 = vpop.permute.xlu0 %6760
        %6762 = vrot.lane.b32.xlu0 %v5780, 32
        %v6763 = vpop.permute.xlu0 %6762
        %6764 = vrot.lane.b32.xlu0 %v5781, 32
        %v6765 = vpop.permute.xlu0 %6764
        %6766 = vrot.lane.b32.xlu0 %v5782, 32
        %v6767 = vpop.permute.xlu0 %6766
        %6768 = vrot.lane.b32.xlu0 %v5783, 32
        %v6769 = vpop.permute.xlu0 %6768
        %6770 = vrot.lane.b32.xlu0 %v5784, 32
        %v6771 = vpop.permute.xlu0 %6770
        %6772 = vrot.lane.b32.xlu0 %v5785, 32
        %v6773 = vpop.permute.xlu0 %6772
        %6774 = vrot.lane.b32.xlu0 %v5786, 32
        %v6775 = vpop.permute.xlu0 %6774
        %6776 = vrot.lane.b32.xlu0 %v5787, 32
        %v6777 = vpop.permute.xlu0 %6776
        %6778 = vrot.lane.b32.xlu0 %v5788, 32
        %v6779 = vpop.permute.xlu0 %6778
        %6780 = vrot.lane.b32.xlu0 %v5789, 32
        %v6781 = vpop.permute.xlu0 %6780
        %v6814 = vsel %vm5468, %v5501, %v5823
        %v6815 = vsel %vm5468, %v5502, %v5825
        %v6816 = vsel %vm5468, %v5503, %v5827
        %v6817 = vsel %vm5468, %v5504, %v5829
        %v6818 = vsel %vm5468, %v5505, %v5831
        %v6819 = vsel %vm5468, %v5506, %v5833
        %v6820 = vsel %vm5468, %v5507, %v5835
        %v6821 = vsel %vm5468, %v5508, %v5837
        %v6822 = vsel %vm5468, %v5509, %v5839
        %v6823 = vsel %vm5468, %v5510, %v5841
        %v6824 = vsel %vm5468, %v5511, %v5843
        %v6825 = vsel %vm5468, %v5512, %v5845
        %v6826 = vsel %vm5468, %v5513, %v5847
        %v6827 = vsel %vm5468, %v5514, %v5849
        %v6828 = vsel %vm5468, %v5515, %v5851
        %v6829 = vsel %vm5468, %v5516, %v5853
        %v6830 = vsel %vm5468, %v5517, %v5855
        %v6831 = vsel %vm5468, %v5518, %v5857
        %v6832 = vsel %vm5468, %v5519, %v5859
        %v6833 = vsel %vm5468, %v5520, %v5861
        %v6834 = vsel %vm5468, %v5521, %v5863
        %v6835 = vsel %vm5468, %v5522, %v5865
        %v6836 = vsel %vm5468, %v5523, %v5867
        %v6837 = vsel %vm5468, %v5524, %v5869
        %v6838 = vsel %vm5468, %v5525, %v5871
        %v6839 = vsel %vm5468, %v5526, %v5873
        %v6840 = vsel %vm5468, %v5527, %v5875
        %v6841 = vsel %vm5468, %v5528, %v5877
        %v6842 = vsel %vm5468, %v5529, %v5879
        %v6843 = vsel %vm5468, %v5530, %v5881
        %v6844 = vsel %vm5468, %v5531, %v5883
        %v6845 = vsel %vm5468, %v5532, %v5885
        %vm6846 = vcmask 64512
        %v6847 = vsel %vm6846, %v6814, %v5951
        %v6848 = vsel %vm6846, %v6815, %v5953
        %v6849 = vsel %vm6846, %v6816, %v5955
        %v6850 = vsel %vm6846, %v6817, %v5957
        %v6851 = vsel %vm6846, %v6818, %v5959
        %v6852 = vsel %vm6846, %v6819, %v5961
        %v6853 = vsel %vm6846, %v6820, %v5963
        %v6854 = vsel %vm6846, %v6821, %v5965
        %v6855 = vsel %vm6846, %v6822, %v5967
        %v6856 = vsel %vm6846, %v6823, %v5969
        %v6857 = vsel %vm6846, %v6824, %v5971
        %v6858 = vsel %vm6846, %v6825, %v5973
        %v6859 = vsel %vm6846, %v6826, %v5975
        %v6860 = vsel %vm6846, %v6827, %v5977
        %v6861 = vsel %vm6846, %v6828, %v5979
        %v6862 = vsel %vm6846, %v6829, %v5981
        %v6863 = vsel %vm6846, %v6830, %v5983
        %v6864 = vsel %vm6846, %v6831, %v5985
        %v6865 = vsel %vm6846, %v6832, %v5987
        %v6866 = vsel %vm6846, %v6833, %v5989
        %v6867 = vsel %vm6846, %v6834, %v5991
        %v6868 = vsel %vm6846, %v6835, %v5993
        %v6869 = vsel %vm6846, %v6836, %v5995
        %v6870 = vsel %vm6846, %v6837, %v5997
        %v6871 = vsel %vm6846, %v6838, %v5999
        %v6872 = vsel %vm6846, %v6839, %v6001
        %v6873 = vsel %vm6846, %v6840, %v6003
        %v6874 = vsel %vm6846, %v6841, %v6005
        %v6875 = vsel %vm6846, %v6842, %v6007
        %v6876 = vsel %vm6846, %v6843, %v6009
        %v6877 = vsel %vm6846, %v6844, %v6011
        %v6878 = vsel %vm6846, %v6845, %v6013
        %vm6879 = vcmask 97280
        %v6880 = vsel %vm6879, %v6847, %v6079
        %v6881 = vsel %vm6879, %v6848, %v6081
        %v6882 = vsel %vm6879, %v6849, %v6083
        %v6883 = vsel %vm6879, %v6850, %v6085
        %v6884 = vsel %vm6879, %v6851, %v6087
        %v6885 = vsel %vm6879, %v6852, %v6089
        %v6886 = vsel %vm6879, %v6853, %v6091
        %v6887 = vsel %vm6879, %v6854, %v6093
        %v6888 = vsel %vm6879, %v6855, %v6095
        %v6889 = vsel %vm6879, %v6856, %v6097
        %v6890 = vsel %vm6879, %v6857, %v6099
        %v6891 = vsel %vm6879, %v6858, %v6101
        %v6892 = vsel %vm6879, %v6859, %v6103
        %v6893 = vsel %vm6879, %v6860, %v6105
        %v6894 = vsel %vm6879, %v6861, %v6107
        %v6895 = vsel %vm6879, %v6862, %v6109
        %v6896 = vsel %vm6879, %v6863, %v6111
        %v6897 = vsel %vm6879, %v6864, %v6113
        %v6898 = vsel %vm6879, %v6865, %v6115
        %v6899 = vsel %vm6879, %v6866, %v6117
        %v6900 = vsel %vm6879, %v6867, %v6119
        %v6901 = vsel %vm6879, %v6868, %v6121
        %v6902 = vsel %vm6879, %v6869, %v6123
        %v6903 = vsel %vm6879, %v6870, %v6125
        %v6904 = vsel %vm6879, %v6871, %v6127
        %v6905 = vsel %vm6879, %v6872, %v6129
        %v6906 = vsel %vm6879, %v6873, %v6131
        %v6907 = vsel %vm6879, %v6874, %v6133
        %v6908 = vsel %vm6879, %v6875, %v6135
        %v6909 = vsel %vm6879, %v6876, %v6137
        %v6910 = vsel %vm6879, %v6877, %v6139
        %v6911 = vsel %vm6879, %v6878, %v6141
        %vm6912 = vcmask 130048
        %v6913 = vsel %vm6912, %v6880, %v6207
        %v6914 = vsel %vm6912, %v6881, %v6209
        %v6915 = vsel %vm6912, %v6882, %v6211
        %v6916 = vsel %vm6912, %v6883, %v6213
        %v6917 = vsel %vm6912, %v6884, %v6215
        %v6918 = vsel %vm6912, %v6885, %v6217
        %v6919 = vsel %vm6912, %v6886, %v6219
        %v6920 = vsel %vm6912, %v6887, %v6221
        %v6921 = vsel %vm6912, %v6888, %v6223
        %v6922 = vsel %vm6912, %v6889, %v6225
        %v6923 = vsel %vm6912, %v6890, %v6227
        %v6924 = vsel %vm6912, %v6891, %v6229
        %v6925 = vsel %vm6912, %v6892, %v6231
        %v6926 = vsel %vm6912, %v6893, %v6233
        %v6927 = vsel %vm6912, %v6894, %v6235
        %v6928 = vsel %vm6912, %v6895, %v6237
        %v6929 = vsel %vm6912, %v6896, %v6239
        %v6930 = vsel %vm6912, %v6897, %v6241
        %v6931 = vsel %vm6912, %v6898, %v6243
        %v6932 = vsel %vm6912, %v6899, %v6245
        %v6933 = vsel %vm6912, %v6900, %v6247
        %v6934 = vsel %vm6912, %v6901, %v6249
        %v6935 = vsel %vm6912, %v6902, %v6251
        %v6936 = vsel %vm6912, %v6903, %v6253
        %v6937 = vsel %vm6912, %v6904, %v6255
        %v6938 = vsel %vm6912, %v6905, %v6257
        %v6939 = vsel %vm6912, %v6906, %v6259
        %v6940 = vsel %vm6912, %v6907, %v6261
        %v6941 = vsel %vm6912, %v6908, %v6263
        %v6942 = vsel %vm6912, %v6909, %v6265
        %v6943 = vsel %vm6912, %v6910, %v6267
        %v6944 = vsel %vm6912, %v6911, %v6269
        %vm6945 = vcmask 162816
        %v6946 = vsel %vm6945, %v6913, %v6335
        %v6947 = vsel %vm6945, %v6914, %v6337
        %v6948 = vsel %vm6945, %v6915, %v6339
        %v6949 = vsel %vm6945, %v6916, %v6341
        %v6950 = vsel %vm6945, %v6917, %v6343
        %v6951 = vsel %vm6945, %v6918, %v6345
        %v6952 = vsel %vm6945, %v6919, %v6347
        %v6953 = vsel %vm6945, %v6920, %v6349
        %v6954 = vsel %vm6945, %v6921, %v6351
        %v6955 = vsel %vm6945, %v6922, %v6353
        %v6956 = vsel %vm6945, %v6923, %v6355
        %v6957 = vsel %vm6945, %v6924, %v6357
        %v6958 = vsel %vm6945, %v6925, %v6359
        %v6959 = vsel %vm6945, %v6926, %v6361
        %v6960 = vsel %vm6945, %v6927, %v6363
        %v6961 = vsel %vm6945, %v6928, %v6365
        %v6962 = vsel %vm6945, %v6929, %v6367
        %v6963 = vsel %vm6945, %v6930, %v6369
        %v6964 = vsel %vm6945, %v6931, %v6371
        %v6965 = vsel %vm6945, %v6932, %v6373
        %v6966 = vsel %vm6945, %v6933, %v6375
        %v6967 = vsel %vm6945, %v6934, %v6377
        %v6968 = vsel %vm6945, %v6935, %v6379
        %v6969 = vsel %vm6945, %v6936, %v6381
        %v6970 = vsel %vm6945, %v6937, %v6383
        %v6971 = vsel %vm6945, %v6938, %v6385
        %v6972 = vsel %vm6945, %v6939, %v6387
        %v6973 = vsel %vm6945, %v6940, %v6389
        %v6974 = vsel %vm6945, %v6941, %v6391
        %v6975 = vsel %vm6945, %v6942, %v6393
        %v6976 = vsel %vm6945, %v6943, %v6395
        %v6977 = vsel %vm6945, %v6944, %v6397
        %vm6978 = vcmask 195584
        %v6979 = vsel %vm6978, %v6946, %v6463
        %v6980 = vsel %vm6978, %v6947, %v6465
        %v6981 = vsel %vm6978, %v6948, %v6467
        %v6982 = vsel %vm6978, %v6949, %v6469
        %v6983 = vsel %vm6978, %v6950, %v6471
        %v6984 = vsel %vm6978, %v6951, %v6473
        %v6985 = vsel %vm6978, %v6952, %v6475
        %v6986 = vsel %vm6978, %v6953, %v6477
        %v6987 = vsel %vm6978, %v6954, %v6479
        %v6988 = vsel %vm6978, %v6955, %v6481
        %v6989 = vsel %vm6978, %v6956, %v6483
        %v6990 = vsel %vm6978, %v6957, %v6485
        %v6991 = vsel %vm6978, %v6958, %v6487
        %v6992 = vsel %vm6978, %v6959, %v6489
        %v6993 = vsel %vm6978, %v6960, %v6491
        %v6994 = vsel %vm6978, %v6961, %v6493
        %v6995 = vsel %vm6978, %v6962, %v6495
        %v6996 = vsel %vm6978, %v6963, %v6497
        %v6997 = vsel %vm6978, %v6964, %v6499
        %v6998 = vsel %vm6978, %v6965, %v6501
        %v6999 = vsel %vm6978, %v6966, %v6503
        %v7000 = vsel %vm6978, %v6967, %v6505
        %v7001 = vsel %vm6978, %v6968, %v6507
        %v7002 = vsel %vm6978, %v6969, %v6509
        %v7003 = vsel %vm6978, %v6970, %v6511
        %v7004 = vsel %vm6978, %v6971, %v6513
        %v7005 = vsel %vm6978, %v6972, %v6515
        %v7006 = vsel %vm6978, %v6973, %v6517
        %v7007 = vsel %vm6978, %v6974, %v6519
        %v7008 = vsel %vm6978, %v6975, %v6521
        %v7009 = vsel %vm6978, %v6976, %v6523
        %v7010 = vsel %vm6978, %v6977, %v6525
        %vm7011 = vcmask 228352
        %v7012 = vsel %vm7011, %v6979, %v6591
        %v7013 = vsel %vm7011, %v6980, %v6593
        %v7014 = vsel %vm7011, %v6981, %v6595
        %v7015 = vsel %vm7011, %v6982, %v6597
        %v7016 = vsel %vm7011, %v6983, %v6599
        %v7017 = vsel %vm7011, %v6984, %v6601
        %v7018 = vsel %vm7011, %v6985, %v6603
        %v7019 = vsel %vm7011, %v6986, %v6605
        %v7020 = vsel %vm7011, %v6987, %v6607
        %v7021 = vsel %vm7011, %v6988, %v6609
        %v7022 = vsel %vm7011, %v6989, %v6611
        %v7023 = vsel %vm7011, %v6990, %v6613
        %v7024 = vsel %vm7011, %v6991, %v6615
        %v7025 = vsel %vm7011, %v6992, %v6617
        %v7026 = vsel %vm7011, %v6993, %v6619
        %v7027 = vsel %vm7011, %v6994, %v6621
        %v7028 = vsel %vm7011, %v6995, %v6623
        %v7029 = vsel %vm7011, %v6996, %v6625
        %v7030 = vsel %vm7011, %v6997, %v6627
        %v7031 = vsel %vm7011, %v6998, %v6629
        %v7032 = vsel %vm7011, %v6999, %v6631
        %v7033 = vsel %vm7011, %v7000, %v6633
        %v7034 = vsel %vm7011, %v7001, %v6635
        %v7035 = vsel %vm7011, %v7002, %v6637
        %v7036 = vsel %vm7011, %v7003, %v6639
        %v7037 = vsel %vm7011, %v7004, %v6641
        %v7038 = vsel %vm7011, %v7005, %v6643
        %v7039 = vsel %vm7011, %v7006, %v6645
        %v7040 = vsel %vm7011, %v7007, %v6647
        %v7041 = vsel %vm7011, %v7008, %v6649
        %v7042 = vsel %vm7011, %v7009, %v6651
        %v7043 = vsel %vm7011, %v7010, %v6653
        %vm7044 = vcmask 261120
        %v7045 = vsel %vm7044, %v7012, %v6719
        %v7046 = vsel %vm7044, %v7013, %v6721
        %v7047 = vsel %vm7044, %v7014, %v6723
        %v7048 = vsel %vm7044, %v7015, %v6725
        %v7049 = vsel %vm7044, %v7016, %v6727
        %v7050 = vsel %vm7044, %v7017, %v6729
        %v7051 = vsel %vm7044, %v7018, %v6731
        %v7052 = vsel %vm7044, %v7019, %v6733
        %v7053 = vsel %vm7044, %v7020, %v6735
        %v7054 = vsel %vm7044, %v7021, %v6737
        %v7055 = vsel %vm7044, %v7022, %v6739
        %v7056 = vsel %vm7044, %v7023, %v6741
        %v7057 = vsel %vm7044, %v7024, %v6743
        %v7058 = vsel %vm7044, %v7025, %v6745
        %v7059 = vsel %vm7044, %v7026, %v6747
        %v7060 = vsel %vm7044, %v7027, %v6749
        %v7061 = vsel %vm7044, %v7028, %v6751
        %v7062 = vsel %vm7044, %v7029, %v6753
        %v7063 = vsel %vm7044, %v7030, %v6755
        %v7064 = vsel %vm7044, %v7031, %v6757
        %v7065 = vsel %vm7044, %v7032, %v6759
        %v7066 = vsel %vm7044, %v7033, %v6761
        %v7067 = vsel %vm7044, %v7034, %v6763
        %v7068 = vsel %vm7044, %v7035, %v6765
        %v7069 = vsel %vm7044, %v7036, %v6767
        %v7070 = vsel %vm7044, %v7037, %v6769
        %v7071 = vsel %vm7044, %v7038, %v6771
        %v7072 = vsel %vm7044, %v7039, %v6773
        %v7073 = vsel %vm7044, %v7040, %v6775
        %v7074 = vsel %vm7044, %v7041, %v6777
        %v7075 = vsel %vm7044, %v7042, %v6779
        %v7076 = vsel %vm7044, %v7043, %v6781
        %v7077 = vld [vmem:[%s7] sm:$0xff]
        %v7078 = vld [vmem:[%s7 + $0x8] sm:$0xff]
        %v7079 = vld [vmem:[%s7 + $0x10] sm:$0xff]
        %v7080 = vld [vmem:[%s7 + $0x18] sm:$0xff]
        %v7081 = vld [vmem:[%s7 + $0x20] sm:$0xf]
        %vm7082 = vcmask 293888
        %v7084 = vsel %vm7082, %v7045, 0
        %v7087 = vsel %vm7082, %v7046, 0
        %v7090 = vsel %vm7082, %v7047, 0
        %v7093 = vsel %vm7082, %v7048, 0
        %v7096 = vsel %vm7082, %v7049, 0
        %v7099 = vsel %vm7082, %v7050, 0
        %v7102 = vsel %vm7082, %v7051, 0
        %v7105 = vsel %vm7082, %v7052, 0
        %v7108 = vsel %vm7082, %v7053, 0
        %v7111 = vsel %vm7082, %v7054, 0
        %v7114 = vsel %vm7082, %v7055, 0
        %v7117 = vsel %vm7082, %v7056, 0
        %v7120 = vsel %vm7082, %v7057, 0
        %v7123 = vsel %vm7082, %v7058, 0
        %v7126 = vsel %vm7082, %v7059, 0
        %v7129 = vsel %vm7082, %v7060, 0
        %v7132 = vsel %vm7082, %v7061, 0
        %v7135 = vsel %vm7082, %v7062, 0
        %v7138 = vsel %vm7082, %v7063, 0
        %v7141 = vsel %vm7082, %v7064, 0
        %v7144 = vsel %vm7082, %v7065, 0
        %v7147 = vsel %vm7082, %v7066, 0
        %v7150 = vsel %vm7082, %v7067, 0
        %v7153 = vsel %vm7082, %v7068, 0
        %v7156 = vsel %vm7082, %v7069, 0
        %v7159 = vsel %vm7082, %v7070, 0
        %v7162 = vsel %vm7082, %v7071, 0
        %v7165 = vsel %vm7082, %v7072, 0
        %v7168 = vsel %vm7082, %v7073, 0
        %v7171 = vsel %vm7082, %v7074, 0
        %v7174 = vsel %vm7082, %v7075, 0
        %v7177 = vsel %vm7082, %v7076, 0
        %vm7179 = vcmask 1043456
        %v7181 = vsel %vm7179, %v7081, 0
        %7183 = vmatpush.msra.mxu0 0.0
        %7184 = vmatpush.msra.mxu0 0.0
        %7185 = vmatpush.msra.mxu0 0.0
        %7186 = vmatpush.msra.mxu0 0.0
        %7187 = vmatpush.msra.mxu0 0.0
        %7188 = vmatpush.msra.mxu0 0.0
        %7189 = vmatpush.msra.mxu0 0.0
        %7190 = vmatpush.msra.mxu0 0.0
        %7191 = vmatpush.msra.mxu0 0.0
        %7192 = vmatpush.msra.mxu0 0.0
        %7193 = vmatpush.msra.mxu0 0.0
        %7194 = vmatpush.msra.mxu0 %v7181
        %7195 = vmatpush.msra.mxu0 %v7080
        %7196 = vmatpush.msra.mxu0 %v7079
        %7197 = vmatpush.msra.mxu0 %v7078
        %7198 = vmatpush.msra.mxu0 %v7077
        %7199 = vmatmul.f32.gmra.mxu0 %v7084
        %v7200 = vpop.f32.mrf.mxu0
        %v7201 = vadd.f32 0.0, %v7200
        %7202 = vmatmul.f32.gmra.mxu0 %v7087
        %v7203 = vpop.f32.mrf.mxu0
        %v7204 = vadd.f32 0.0, %v7203
        %7205 = vmatmul.f32.gmra.mxu0 %v7090
        %v7206 = vpop.f32.mrf.mxu0
        %v7207 = vadd.f32 0.0, %v7206
        %7208 = vmatmul.f32.gmra.mxu0 %v7093
        %v7209 = vpop.f32.mrf.mxu0
        %v7210 = vadd.f32 0.0, %v7209
        %7211 = vmatmul.f32.gmra.mxu0 %v7096
        %v7212 = vpop.f32.mrf.mxu0
        %v7213 = vadd.f32 0.0, %v7212
        %7214 = vmatmul.f32.gmra.mxu0 %v7099
        %v7215 = vpop.f32.mrf.mxu0
        %v7216 = vadd.f32 0.0, %v7215
        %7217 = vmatmul.f32.gmra.mxu0 %v7102
        %v7218 = vpop.f32.mrf.mxu0
        %v7219 = vadd.f32 0.0, %v7218
        %7220 = vmatmul.f32.gmra.mxu0 %v7105
        %v7221 = vpop.f32.mrf.mxu0
        %v7222 = vadd.f32 0.0, %v7221
        %7223 = vmatmul.f32.gmra.mxu0 %v7108
        %v7224 = vpop.f32.mrf.mxu0
        %v7225 = vadd.f32 0.0, %v7224
        %7226 = vmatmul.f32.gmra.mxu0 %v7111
        %v7227 = vpop.f32.mrf.mxu0
        %v7228 = vadd.f32 0.0, %v7227
        %7229 = vmatmul.f32.gmra.mxu0 %v7114
        %v7230 = vpop.f32.mrf.mxu0
        %v7231 = vadd.f32 0.0, %v7230
        %7232 = vmatmul.f32.gmra.mxu0 %v7117
        %v7233 = vpop.f32.mrf.mxu0
        %v7234 = vadd.f32 0.0, %v7233
        %7235 = vmatmul.f32.gmra.mxu0 %v7120
        %v7236 = vpop.f32.mrf.mxu0
        %v7237 = vadd.f32 0.0, %v7236
        %7238 = vmatmul.f32.gmra.mxu0 %v7123
        %v7239 = vpop.f32.mrf.mxu0
        %v7240 = vadd.f32 0.0, %v7239
        %7241 = vmatmul.f32.gmra.mxu0 %v7126
        %v7242 = vpop.f32.mrf.mxu0
        %v7243 = vadd.f32 0.0, %v7242
        %7244 = vmatmul.f32.gmra.mxu0 %v7129
        %v7245 = vpop.f32.mrf.mxu0
        %v7246 = vadd.f32 0.0, %v7245
        %7247 = vmatmul.f32.gmra.mxu0 %v7132
        %v7248 = vpop.f32.mrf.mxu0
        %v7249 = vadd.f32 0.0, %v7248
        %7250 = vmatmul.f32.gmra.mxu0 %v7135
        %v7251 = vpop.f32.mrf.mxu0
        %v7252 = vadd.f32 0.0, %v7251
        %7253 = vmatmul.f32.gmra.mxu0 %v7138
        %v7254 = vpop.f32.mrf.mxu0
        %v7255 = vadd.f32 0.0, %v7254
        %7256 = vmatmul.f32.gmra.mxu0 %v7141
        %v7257 = vpop.f32.mrf.mxu0
        %v7258 = vadd.f32 0.0, %v7257
        %7259 = vmatmul.f32.gmra.mxu0 %v7144
        %v7260 = vpop.f32.mrf.mxu0
        %v7261 = vadd.f32 0.0, %v7260
        %7262 = vmatmul.f32.gmra.mxu0 %v7147
        %v7263 = vpop.f32.mrf.mxu0
        %v7264 = vadd.f32 0.0, %v7263
        %7265 = vmatmul.f32.gmra.mxu0 %v7150
        %v7266 = vpop.f32.mrf.mxu0
        %v7267 = vadd.f32 0.0, %v7266
        %7268 = vmatmul.f32.gmra.mxu0 %v7153
        %v7269 = vpop.f32.mrf.mxu0
        %v7270 = vadd.f32 0.0, %v7269
        %7271 = vmatmul.f32.gmra.mxu0 %v7156
        %v7272 = vpop.f32.mrf.mxu0
        %v7273 = vadd.f32 0.0, %v7272
        %7274 = vmatmul.f32.gmra.mxu0 %v7159
        %v7275 = vpop.f32.mrf.mxu0
        %v7276 = vadd.f32 0.0, %v7275
        %7277 = vmatmul.f32.gmra.mxu0 %v7162
        %v7278 = vpop.f32.mrf.mxu0
        %v7279 = vadd.f32 0.0, %v7278
        %7280 = vmatmul.f32.gmra.mxu0 %v7165
        %v7281 = vpop.f32.mrf.mxu0
        %v7282 = vadd.f32 0.0, %v7281
        %7283 = vmatmul.f32.gmra.mxu0 %v7168
        %v7284 = vpop.f32.mrf.mxu0
        %v7285 = vadd.f32 0.0, %v7284
        %7286 = vmatmul.f32.gmra.mxu0 %v7171
        %v7287 = vpop.f32.mrf.mxu0
        %v7288 = vadd.f32 0.0, %v7287
        %7289 = vmatmul.f32.gmra.mxu0 %v7174
        %v7290 = vpop.f32.mrf.mxu0
        %v7291 = vadd.f32 0.0, %v7290
        %7292 = vmatmul.f32.gmra.mxu0 %v7177
        %v7293 = vpop.f32.mrf.mxu0
        %v7294 = vadd.f32 0.0, %v7293
        %7295 = vdwg.mxu0
        %s7296 = scalar_lea.vmem [#allocation6], %s5248
        %7297 = vst.msk [vmem:[%s7296] sm:$0xff] %vm5468, %v7201
        %7298 = vst.msk [vmem:[%s7296 + $0x8] sm:$0xff] %vm5468, %v7204
        %7299 = vst.msk [vmem:[%s7296 + $0x10] sm:$0xff] %vm5468, %v7207
        %7300 = vst.msk [vmem:[%s7296 + $0x18] sm:$0xff] %vm5468, %v7210
        %7301 = vst.msk [vmem:[%s7296 + $0x20] sm:$0xff] %vm5468, %v7213
        %7302 = vst.msk [vmem:[%s7296 + $0x28] sm:$0xff] %vm5468, %v7216
        %7303 = vst.msk [vmem:[%s7296 + $0x30] sm:$0xff] %vm5468, %v7219
        %7304 = vst.msk [vmem:[%s7296 + $0x38] sm:$0xff] %vm5468, %v7222
        %7305 = vst.msk [vmem:[%s7296 + $0x40] sm:$0xff] %vm5468, %v7225
        %7306 = vst.msk [vmem:[%s7296 + $0x48] sm:$0xff] %vm5468, %v7228
        %7307 = vst.msk [vmem:[%s7296 + $0x50] sm:$0xff] %vm5468, %v7231
        %7308 = vst.msk [vmem:[%s7296 + $0x58] sm:$0xff] %vm5468, %v7234
        %7309 = vst.msk [vmem:[%s7296 + $0x60] sm:$0xff] %vm5468, %v7237
        %7310 = vst.msk [vmem:[%s7296 + $0x68] sm:$0xff] %vm5468, %v7240
        %7311 = vst.msk [vmem:[%s7296 + $0x70] sm:$0xff] %vm5468, %v7243
        %7312 = vst.msk [vmem:[%s7296 + $0x78] sm:$0xff] %vm5468, %v7246
        %7313 = vst.msk [vmem:[%s7296 + $0x80] sm:$0xff] %vm5468, %v7249
        %7314 = vst.msk [vmem:[%s7296 + $0x88] sm:$0xff] %vm5468, %v7252
        %7315 = vst.msk [vmem:[%s7296 + $0x90] sm:$0xff] %vm5468, %v7255
        %7316 = vst.msk [vmem:[%s7296 + $0x98] sm:$0xff] %vm5468, %v7258
        %7317 = vst.msk [vmem:[%s7296 + $0xa0] sm:$0xff] %vm5468, %v7261
        %7318 = vst.msk [vmem:[%s7296 + $0xa8] sm:$0xff] %vm5468, %v7264
        %7319 = vst.msk [vmem:[%s7296 + $0xb0] sm:$0xff] %vm5468, %v7267
        %7320 = vst.msk [vmem:[%s7296 + $0xb8] sm:$0xff] %vm5468, %v7270
        %7321 = vst.msk [vmem:[%s7296 + $0xc0] sm:$0xff] %vm5468, %v7273
        %7322 = vst.msk [vmem:[%s7296 + $0xc8] sm:$0xff] %vm5468, %v7276
        %7323 = vst.msk [vmem:[%s7296 + $0xd0] sm:$0xff] %vm5468, %v7279
        %7324 = vst.msk [vmem:[%s7296 + $0xd8] sm:$0xff] %vm5468, %v7282
        %7325 = vst.msk [vmem:[%s7296 + $0xe0] sm:$0xff] %vm5468, %v7285
        %7326 = vst.msk [vmem:[%s7296 + $0xe8] sm:$0xff] %vm5468, %v7288
        %7327 = vst.msk [vmem:[%s7296 + $0xf0] sm:$0xff] %vm5468, %v7291
        %7328 = vst.msk [vmem:[%s7296 + $0xf8] sm:$0xff] %vm5468, %v7294
        %v7329 = vld [vmem:[#allocation9] sm:$0x1]
        %v7330 = vsel %vm5468, %v7201, 0.0
        %v7331 = vsel %vm5468, %v7204, 0.0
        %v7332 = vadd.f32 %v7330, %v7331
        %v7333 = vsel %vm5468, %v7207, 0.0
        %v7334 = vadd.f32 %v7332, %v7333
        %v7335 = vsel %vm5468, %v7210, 0.0
        %v7336 = vadd.f32 %v7334, %v7335
        %v7337 = vsel %vm5468, %v7213, 0.0
        %v7338 = vadd.f32 %v7336, %v7337
        %v7339 = vsel %vm5468, %v7216, 0.0
        %v7340 = vadd.f32 %v7338, %v7339
        %v7341 = vsel %vm5468, %v7219, 0.0
        %v7342 = vadd.f32 %v7340, %v7341
        %v7343 = vsel %vm5468, %v7222, 0.0
        %v7344 = vadd.f32 %v7342, %v7343
        %v7345 = vsel %vm5468, %v7225, 0.0
        %v7346 = vadd.f32 %v7344, %v7345
        %v7347 = vsel %vm5468, %v7228, 0.0
        %v7348 = vadd.f32 %v7346, %v7347
        %v7349 = vsel %vm5468, %v7231, 0.0
        %v7350 = vadd.f32 %v7348, %v7349
        %v7351 = vsel %vm5468, %v7234, 0.0
        %v7352 = vadd.f32 %v7350, %v7351
        %v7353 = vsel %vm5468, %v7237, 0.0
        %v7354 = vadd.f32 %v7352, %v7353
        %v7355 = vsel %vm5468, %v7240, 0.0
        %v7356 = vadd.f32 %v7354, %v7355
        %v7357 = vsel %vm5468, %v7243, 0.0
        %v7358 = vadd.f32 %v7356, %v7357
        %v7359 = vsel %vm5468, %v7246, 0.0
        %v7360 = vadd.f32 %v7358, %v7359
        %v7361 = vsel %vm5468, %v7249, 0.0
        %v7362 = vadd.f32 %v7360, %v7361
        %v7363 = vsel %vm5468, %v7252, 0.0
        %v7364 = vadd.f32 %v7362, %v7363
        %v7365 = vsel %vm5468, %v7255, 0.0
        %v7366 = vadd.f32 %v7364, %v7365
        %v7367 = vsel %vm5468, %v7258, 0.0
        %v7368 = vadd.f32 %v7366, %v7367
        %v7369 = vsel %vm5468, %v7261, 0.0
        %v7370 = vadd.f32 %v7368, %v7369
        %v7371 = vsel %vm5468, %v7264, 0.0
        %v7372 = vadd.f32 %v7370, %v7371
        %v7373 = vsel %vm5468, %v7267, 0.0
        %v7374 = vadd.f32 %v7372, %v7373
        %v7375 = vsel %vm5468, %v7270, 0.0
        %v7376 = vadd.f32 %v7374, %v7375
        %v7377 = vsel %vm5468, %v7273, 0.0
        %v7378 = vadd.f32 %v7376, %v7377
        %v7379 = vsel %vm5468, %v7276, 0.0
        %v7380 = vadd.f32 %v7378, %v7379
        %v7381 = vsel %vm5468, %v7279, 0.0
        %v7382 = vadd.f32 %v7380, %v7381
        %v7383 = vsel %vm5468, %v7282, 0.0
        %v7384 = vadd.f32 %v7382, %v7383
        %v7385 = vsel %vm5468, %v7285, 0.0
        %v7386 = vadd.f32 %v7384, %v7385
        %v7387 = vsel %vm5468, %v7288, 0.0
        %v7388 = vadd.f32 %v7386, %v7387
        %v7389 = vsel %vm5468, %v7291, 0.0
        %v7390 = vadd.f32 %v7388, %v7389
        %v7391 = vsel %vm5468, %v7294, 0.0
        %v7392 = vadd.f32 %v7390, %v7391
        %v7393 = vrot.slane %v7392, 4
        %v7394 = vadd.f32 %v7392, %v7393
        %v7395 = vrot.slane %v7394, 2
        %v7396 = vadd.f32 %v7394, %v7395
        %v7397 = vrot.slane %v7396, 1
        %v7398 = vadd.f32 %v7396, %v7397
        %v7399 = vadd.f32 %v7329, %v7398
        %vm7400 = vcmask 24576
        %7401 = vst.msk [vmem:[#allocation9] sm:$0x1] %vm7400, %v7399
        %v7402 = vld [vmem:[#allocation10] sm:$0x1]
        %v7403 = vmul.f32 %v7201, %v7201
        %v7404 = vmul.f32 %v7204, %v7204
        %v7405 = vmul.f32 %v7207, %v7207
        %v7406 = vmul.f32 %v7210, %v7210
        %v7407 = vmul.f32 %v7213, %v7213
        %v7408 = vmul.f32 %v7216, %v7216
        %v7409 = vmul.f32 %v7219, %v7219
        %v7410 = vmul.f32 %v7222, %v7222
        %v7411 = vmul.f32 %v7225, %v7225
        %v7412 = vmul.f32 %v7228, %v7228
        %v7413 = vmul.f32 %v7231, %v7231
        %v7414 = vmul.f32 %v7234, %v7234
        %v7415 = vmul.f32 %v7237, %v7237
        %v7416 = vmul.f32 %v7240, %v7240
        %v7417 = vmul.f32 %v7243, %v7243
        %v7418 = vmul.f32 %v7246, %v7246
        %v7419 = vmul.f32 %v7249, %v7249
        %v7420 = vmul.f32 %v7252, %v7252
        %v7421 = vmul.f32 %v7255, %v7255
        %v7422 = vmul.f32 %v7258, %v7258
        %v7423 = vmul.f32 %v7261, %v7261
        %v7424 = vmul.f32 %v7264, %v7264
        %v7425 = vmul.f32 %v7267, %v7267
        %v7426 = vmul.f32 %v7270, %v7270
        %v7427 = vmul.f32 %v7273, %v7273
        %v7428 = vmul.f32 %v7276, %v7276
        %v7429 = vmul.f32 %v7279, %v7279
        %v7430 = vmul.f32 %v7282, %v7282
        %v7431 = vmul.f32 %v7285, %v7285
        %v7432 = vmul.f32 %v7288, %v7288
        %v7433 = vmul.f32 %v7291, %v7291
        %v7434 = vmul.f32 %v7294, %v7294
        %v7435 = vsel %vm5468, %v7403, 0.0
        %v7436 = vsel %vm5468, %v7404, 0.0
        %v7437 = vadd.f32 %v7435, %v7436
        %v7438 = vsel %vm5468, %v7405, 0.0
        %v7439 = vadd.f32 %v7437, %v7438
        %v7440 = vsel %vm5468, %v7406, 0.0
        %v7441 = vadd.f32 %v7439, %v7440
        %v7442 = vsel %vm5468, %v7407, 0.0
        %v7443 = vadd.f32 %v7441, %v7442
        %v7444 = vsel %vm5468, %v7408, 0.0
        %v7445 = vadd.f32 %v7443, %v7444
        %v7446 = vsel %vm5468, %v7409, 0.0
        %v7447 = vadd.f32 %v7445, %v7446
        %v7448 = vsel %vm5468, %v7410, 0.0
        %v7449 = vadd.f32 %v7447, %v7448
        %v7450 = vsel %vm5468, %v7411, 0.0
        %v7451 = vadd.f32 %v7449, %v7450
        %v7452 = vsel %vm5468, %v7412, 0.0
        %v7453 = vadd.f32 %v7451, %v7452
        %v7454 = vsel %vm5468, %v7413, 0.0
        %v7455 = vadd.f32 %v7453, %v7454
        %v7456 = vsel %vm5468, %v7414, 0.0
        %v7457 = vadd.f32 %v7455, %v7456
        %v7458 = vsel %vm5468, %v7415, 0.0
        %v7459 = vadd.f32 %v7457, %v7458
        %v7460 = vsel %vm5468, %v7416, 0.0
        %v7461 = vadd.f32 %v7459, %v7460
        %v7462 = vsel %vm5468, %v7417, 0.0
        %v7463 = vadd.f32 %v7461, %v7462
        %v7464 = vsel %vm5468, %v7418, 0.0
        %v7465 = vadd.f32 %v7463, %v7464
        %v7466 = vsel %vm5468, %v7419, 0.0
        %v7467 = vadd.f32 %v7465, %v7466
        %v7468 = vsel %vm5468, %v7420, 0.0
        %v7469 = vadd.f32 %v7467, %v7468
        %v7470 = vsel %vm5468, %v7421, 0.0
        %v7471 = vadd.f32 %v7469, %v7470
        %v7472 = vsel %vm5468, %v7422, 0.0
        %v7473 = vadd.f32 %v7471, %v7472
        %v7474 = vsel %vm5468, %v7423, 0.0
        %v7475 = vadd.f32 %v7473, %v7474
        %v7476 = vsel %vm5468, %v7424, 0.0
        %v7477 = vadd.f32 %v7475, %v7476
        %v7478 = vsel %vm5468, %v7425, 0.0
        %v7479 = vadd.f32 %v7477, %v7478
        %v7480 = vsel %vm5468, %v7426, 0.0
        %v7481 = vadd.f32 %v7479, %v7480
        %v7482 = vsel %vm5468, %v7427, 0.0
        %v7483 = vadd.f32 %v7481, %v7482
        %v7484 = vsel %vm5468, %v7428, 0.0
        %v7485 = vadd.f32 %v7483, %v7484
        %v7486 = vsel %vm5468, %v7429, 0.0
        %v7487 = vadd.f32 %v7485, %v7486
        %v7488 = vsel %vm5468, %v7430, 0.0
        %v7489 = vadd.f32 %v7487, %v7488
        %v7490 = vsel %vm5468, %v7431, 0.0
        %v7491 = vadd.f32 %v7489, %v7490
        %v7492 = vsel %vm5468, %v7432, 0.0
        %v7493 = vadd.f32 %v7491, %v7492
        %v7494 = vsel %vm5468, %v7433, 0.0
        %v7495 = vadd.f32 %v7493, %v7494
        %v7496 = vsel %vm5468, %v7434, 0.0
        %v7497 = vadd.f32 %v7495, %v7496
        %v7498 = vrot.slane %v7497, 4
        %v7499 = vadd.f32 %v7497, %v7498
        %v7500 = vrot.slane %v7499, 2
        %v7501 = vadd.f32 %v7499, %v7500
        %v7502 = vrot.slane %v7501, 1
        %v7503 = vadd.f32 %v7501, %v7502
        %v7504 = vadd.f32 %v7402, %v7503
        %7505 = vst.msk [vmem:[#allocation10] sm:$0x1] %vm7400, %v7504
      $region72: #{up_step.1} parent=59 // pred_fallthru
        _
      %p7506 = scmp.eq.s32.totalorder %s25, 2
      // Predicated region
      $region73: #{up_step.1} parent=59 // pred_check
        %p7507 = pneg %p7506
      $region74: #{up_step.1} parent=59 // pred_check_branch
        %7509 = sbr.rel (%p7507) target = $region76
      $region75: #{up_step.1} parent=59 // pred_region
        %v7510 = vld [vmem:[#allocation9] sm:$0x1]
        %v7511 = vmul.f32 %v7510, 0.001953125
        %v7512 = vld [vmem:[#allocation10] sm:$0x1]
        %v7513 = vmul.f32 %v7512, 0.001953125
        %v7514 = vmul.f32 %v7511, %v7511
        %v7515 = vsub.f32 %v7513, %v7514
        %s7516 = smul.u32 %s26, 256
        %s7517 = scalar_lea.vmem [#allocation6], %s7516
        %v7518 = vld [vmem:[%s7517] sm:$0xff]
        %v7519 = vld [vmem:[%s7517 + $0x8] sm:$0xff]
        %v7520 = vld [vmem:[%s7517 + $0x10] sm:$0xff]
        %v7521 = vld [vmem:[%s7517 + $0x18] sm:$0xff]
        %v7522 = vld [vmem:[%s7517 + $0x20] sm:$0xff]
        %v7523 = vld [vmem:[%s7517 + $0x28] sm:$0xff]
        %v7524 = vld [vmem:[%s7517 + $0x30] sm:$0xff]
        %v7525 = vld [vmem:[%s7517 + $0x38] sm:$0xff]
        %v7526 = vld [vmem:[%s7517 + $0x40] sm:$0xff]
        %v7527 = vld [vmem:[%s7517 + $0x48] sm:$0xff]
        %v7528 = vld [vmem:[%s7517 + $0x50] sm:$0xff]
        %v7529 = vld [vmem:[%s7517 + $0x58] sm:$0xff]
        %v7530 = vld [vmem:[%s7517 + $0x60] sm:$0xff]
        %v7531 = vld [vmem:[%s7517 + $0x68] sm:$0xff]
        %v7532 = vld [vmem:[%s7517 + $0x70] sm:$0xff]
        %v7533 = vld [vmem:[%s7517 + $0x78] sm:$0xff]
        %v7534 = vld [vmem:[%s7517 + $0x80] sm:$0xff]
        %v7535 = vld [vmem:[%s7517 + $0x88] sm:$0xff]
        %v7536 = vld [vmem:[%s7517 + $0x90] sm:$0xff]
        %v7537 = vld [vmem:[%s7517 + $0x98] sm:$0xff]
        %v7538 = vld [vmem:[%s7517 + $0xa0] sm:$0xff]
        %v7539 = vld [vmem:[%s7517 + $0xa8] sm:$0xff]
        %v7540 = vld [vmem:[%s7517 + $0xb0] sm:$0xff]
        %v7541 = vld [vmem:[%s7517 + $0xb8] sm:$0xff]
        %v7542 = vld [vmem:[%s7517 + $0xc0] sm:$0xff]
        %v7543 = vld [vmem:[%s7517 + $0xc8] sm:$0xff]
        %v7544 = vld [vmem:[%s7517 + $0xd0] sm:$0xff]
        %v7545 = vld [vmem:[%s7517 + $0xd8] sm:$0xff]
        %v7546 = vld [vmem:[%s7517 + $0xe0] sm:$0xff]
        %v7547 = vld [vmem:[%s7517 + $0xe8] sm:$0xff]
        %v7548 = vld [vmem:[%s7517 + $0xf0] sm:$0xff]
        %v7549 = vld [vmem:[%s7517 + $0xf8] sm:$0xff]
        %v7551 = vperm.slane %v7511, 0
        %v7553 = vsub.f32 %v7518, %v7551
        %v7554 = vsub.f32 %v7519, %v7551
        %v7555 = vsub.f32 %v7520, %v7551
        %v7556 = vsub.f32 %v7521, %v7551
        %v7557 = vsub.f32 %v7522, %v7551
        %v7558 = vsub.f32 %v7523, %v7551
        %v7559 = vsub.f32 %v7524, %v7551
        %v7560 = vsub.f32 %v7525, %v7551
        %v7561 = vsub.f32 %v7526, %v7551
        %v7562 = vsub.f32 %v7527, %v7551
        %v7563 = vsub.f32 %v7528, %v7551
        %v7564 = vsub.f32 %v7529, %v7551
        %v7565 = vsub.f32 %v7530, %v7551
        %v7566 = vsub.f32 %v7531, %v7551
        %v7567 = vsub.f32 %v7532, %v7551
        %v7568 = vsub.f32 %v7533, %v7551
        %v7569 = vsub.f32 %v7534, %v7551
        %v7570 = vsub.f32 %v7535, %v7551
        %v7571 = vsub.f32 %v7536, %v7551
        %v7572 = vsub.f32 %v7537, %v7551
        %v7573 = vsub.f32 %v7538, %v7551
        %v7574 = vsub.f32 %v7539, %v7551
        %v7575 = vsub.f32 %v7540, %v7551
        %v7576 = vsub.f32 %v7541, %v7551
        %v7577 = vsub.f32 %v7542, %v7551
        %v7578 = vsub.f32 %v7543, %v7551
        %v7579 = vsub.f32 %v7544, %v7551
        %v7580 = vsub.f32 %v7545, %v7551
        %v7581 = vsub.f32 %v7546, %v7551
        %v7582 = vsub.f32 %v7547, %v7551
        %v7583 = vsub.f32 %v7548, %v7551
        %v7584 = vsub.f32 %v7549, %v7551
        %v7585 = vadd.f32 %v7515, 1e-05
        %v7586 = vrsqrt.pop %v7585
        %v7587 = vmul.f32 %v7586, %v7585
        %v7588 = vmul.f32 %v7587, %v7586
        %v7589 = vmul.f32 0.5, %v7588
        %v7590 = vsub.f32 1.5, %v7589
        %v7591 = vmul.f32 %v7586, %v7590
        %vm7592 = vweird.f32 %v7585
        %vm7593 = vweird.f32 %v7586
        %vm7594 = vmor %vm7592, %vm7593
        %v7595 = vsel %vm7594, %v7586, %v7591
        %v7597 = vperm.slane %v7595, 0
        %v7599 = vmul.f32 %v7553, %v7597
        %v7600 = vmul.f32 %v7554, %v7597
        %v7601 = vmul.f32 %v7555, %v7597
        %v7602 = vmul.f32 %v7556, %v7597
        %v7603 = vmul.f32 %v7557, %v7597
        %v7604 = vmul.f32 %v7558, %v7597
        %v7605 = vmul.f32 %v7559, %v7597
        %v7606 = vmul.f32 %v7560, %v7597
        %v7607 = vmul.f32 %v7561, %v7597
        %v7608 = vmul.f32 %v7562, %v7597
        %v7609 = vmul.f32 %v7563, %v7597
        %v7610 = vmul.f32 %v7564, %v7597
        %v7611 = vmul.f32 %v7565, %v7597
        %v7612 = vmul.f32 %v7566, %v7597
        %v7613 = vmul.f32 %v7567, %v7597
        %v7614 = vmul.f32 %v7568, %v7597
        %v7615 = vmul.f32 %v7569, %v7597
        %v7616 = vmul.f32 %v7570, %v7597
        %v7617 = vmul.f32 %v7571, %v7597
        %v7618 = vmul.f32 %v7572, %v7597
        %v7619 = vmul.f32 %v7573, %v7597
        %v7620 = vmul.f32 %v7574, %v7597
        %v7621 = vmul.f32 %v7575, %v7597
        %v7622 = vmul.f32 %v7576, %v7597
        %v7623 = vmul.f32 %v7577, %v7597
        %v7624 = vmul.f32 %v7578, %v7597
        %v7625 = vmul.f32 %v7579, %v7597
        %v7626 = vmul.f32 %v7580, %v7597
        %v7627 = vmul.f32 %v7581, %v7597
        %v7628 = vmul.f32 %v7582, %v7597
        %v7629 = vmul.f32 %v7583, %v7597
        %v7630 = vmul.f32 %v7584, %v7597
        %v7631 = vld [vmem:[%s8] sm:$0x1]
        %v7633 = vperm.slane %v7631, 0
        %v7635 = vmul.f32 %v7599, %v7633
        %v7636 = vmul.f32 %v7600, %v7633
        %v7637 = vmul.f32 %v7601, %v7633
        %v7638 = vmul.f32 %v7602, %v7633
        %v7639 = vmul.f32 %v7603, %v7633
        %v7640 = vmul.f32 %v7604, %v7633
        %v7641 = vmul.f32 %v7605, %v7633
        %v7642 = vmul.f32 %v7606, %v7633
        %v7643 = vmul.f32 %v7607, %v7633
        %v7644 = vmul.f32 %v7608, %v7633
        %v7645 = vmul.f32 %v7609, %v7633
        %v7646 = vmul.f32 %v7610, %v7633
        %v7647 = vmul.f32 %v7611, %v7633
        %v7648 = vmul.f32 %v7612, %v7633
        %v7649 = vmul.f32 %v7613, %v7633
        %v7650 = vmul.f32 %v7614, %v7633
        %v7651 = vmul.f32 %v7615, %v7633
        %v7652 = vmul.f32 %v7616, %v7633
        %v7653 = vmul.f32 %v7617, %v7633
        %v7654 = vmul.f32 %v7618, %v7633
        %v7655 = vmul.f32 %v7619, %v7633
        %v7656 = vmul.f32 %v7620, %v7633
        %v7657 = vmul.f32 %v7621, %v7633
        %v7658 = vmul.f32 %v7622, %v7633
        %v7659 = vmul.f32 %v7623, %v7633
        %v7660 = vmul.f32 %v7624, %v7633
        %v7661 = vmul.f32 %v7625, %v7633
        %v7662 = vmul.f32 %v7626, %v7633
        %v7663 = vmul.f32 %v7627, %v7633
        %v7664 = vmul.f32 %v7628, %v7633
        %v7665 = vmul.f32 %v7629, %v7633
        %v7666 = vmul.f32 %v7630, %v7633
        %v7667 = vld [vmem:[%s9] sm:$0x1]
        %v7669 = vperm.slane %v7667, 0
        %v7671 = vadd.f32 %v7635, %v7669
        %v7672 = vadd.f32 %v7636, %v7669
        %v7673 = vadd.f32 %v7637, %v7669
        %v7674 = vadd.f32 %v7638, %v7669
        %v7675 = vadd.f32 %v7639, %v7669
        %v7676 = vadd.f32 %v7640, %v7669
        %v7677 = vadd.f32 %v7641, %v7669
        %v7678 = vadd.f32 %v7642, %v7669
        %v7679 = vadd.f32 %v7643, %v7669
        %v7680 = vadd.f32 %v7644, %v7669
        %v7681 = vadd.f32 %v7645, %v7669
        %v7682 = vadd.f32 %v7646, %v7669
        %v7683 = vadd.f32 %v7647, %v7669
        %v7684 = vadd.f32 %v7648, %v7669
        %v7685 = vadd.f32 %v7649, %v7669
        %v7686 = vadd.f32 %v7650, %v7669
        %v7687 = vadd.f32 %v7651, %v7669
        %v7688 = vadd.f32 %v7652, %v7669
        %v7689 = vadd.f32 %v7653, %v7669
        %v7690 = vadd.f32 %v7654, %v7669
        %v7691 = vadd.f32 %v7655, %v7669
        %v7692 = vadd.f32 %v7656, %v7669
        %v7693 = vadd.f32 %v7657, %v7669
        %v7694 = vadd.f32 %v7658, %v7669
        %v7695 = vadd.f32 %v7659, %v7669
        %v7696 = vadd.f32 %v7660, %v7669
        %v7697 = vadd.f32 %v7661, %v7669
        %v7698 = vadd.f32 %v7662, %v7669
        %v7699 = vadd.f32 %v7663, %v7669
        %v7700 = vadd.f32 %v7664, %v7669
        %v7701 = vadd.f32 %v7665, %v7669
        %v7702 = vadd.f32 %v7666, %v7669
        %v7703 = vmax.f32 %v7671, 0.0
        %v7704 = vmax.f32 %v7672, 0.0
        %v7705 = vmax.f32 %v7673, 0.0
        %v7706 = vmax.f32 %v7674, 0.0
        %v7707 = vmax.f32 %v7675, 0.0
        %v7708 = vmax.f32 %v7676, 0.0
        %v7709 = vmax.f32 %v7677, 0.0
        %v7710 = vmax.f32 %v7678, 0.0
        %v7711 = vmax.f32 %v7679, 0.0
        %v7712 = vmax.f32 %v7680, 0.0
        %v7713 = vmax.f32 %v7681, 0.0
        %v7714 = vmax.f32 %v7682, 0.0
        %v7715 = vmax.f32 %v7683, 0.0
        %v7716 = vmax.f32 %v7684, 0.0
        %v7717 = vmax.f32 %v7685, 0.0
        %v7718 = vmax.f32 %v7686, 0.0
        %v7719 = vmax.f32 %v7687, 0.0
        %v7720 = vmax.f32 %v7688, 0.0
        %v7721 = vmax.f32 %v7689, 0.0
        %v7722 = vmax.f32 %v7690, 0.0
        %v7723 = vmax.f32 %v7691, 0.0
        %v7724 = vmax.f32 %v7692, 0.0
        %v7725 = vmax.f32 %v7693, 0.0
        %v7726 = vmax.f32 %v7694, 0.0
        %v7727 = vmax.f32 %v7695, 0.0
        %v7728 = vmax.f32 %v7696, 0.0
        %v7729 = vmax.f32 %v7697, 0.0
        %v7730 = vmax.f32 %v7698, 0.0
        %v7731 = vmax.f32 %v7699, 0.0
        %v7732 = vmax.f32 %v7700, 0.0
        %v7733 = vmax.f32 %v7701, 0.0
        %v7734 = vmax.f32 %v7702, 0.0
        %7735 = vxpose.xlu0.b32.start [1/16] %v7703, 128
        %7736 = vxpose.xlu0.b32.cont [2/16] %v7704, 128
        %7737 = vxpose.xlu0.b32.cont [3/16] %v7705, 128
        %7738 = vxpose.xlu0.b32.cont [4/16] %v7706, 128
        %7739 = vxpose.xlu0.b32.cont [5/16] %v7707, 128
        %7740 = vxpose.xlu0.b32.cont [6/16] %v7708, 128
        %7741 = vxpose.xlu0.b32.cont [7/16] %v7709, 128
        %7742 = vxpose.xlu0.b32.cont [8/16] %v7710, 128
        %7743 = vxpose.xlu0.b32.cont [9/16] %v7711, 128
        %7744 = vxpose.xlu0.b32.cont [10/16] %v7712, 128
        %7745 = vxpose.xlu0.b32.cont [11/16] %v7713, 128
        %7746 = vxpose.xlu0.b32.cont [12/16] %v7714, 128
        %7747 = vxpose.xlu0.b32.cont [13/16] %v7715, 128
        %7748 = vxpose.xlu0.b32.cont [14/16] %v7716, 128
        %7749 = vxpose.xlu0.b32.cont [15/16] %v7717, 128
        %7750 = vxpose.xlu0.b32.end [16/16] %v7718, 128
        %v7751 = vpop.trf.xlu0
        %v7752 = vpop.trf.xlu0
        %v7753 = vpop.trf.xlu0
        %v7754 = vpop.trf.xlu0
        %v7755 = vpop.trf.xlu0
        %v7756 = vpop.trf.xlu0
        %v7757 = vpop.trf.xlu0
        %v7758 = vpop.trf.xlu0
        %v7759 = vpop.trf.xlu0
        %v7760 = vpop.trf.xlu0
        %v7761 = vpop.trf.xlu0
        %v7762 = vpop.trf.xlu0
        %v7763 = vpop.trf.xlu0
        %v7764 = vpop.trf.xlu0
        %v7765 = vpop.trf.xlu0
        %v7766 = vpop.trf.xlu0
        %7767 = vxpose.xlu0.b32.start [1/16] %v7719, 128
        %7768 = vxpose.xlu0.b32.cont [2/16] %v7720, 128
        %7769 = vxpose.xlu0.b32.cont [3/16] %v7721, 128
        %7770 = vxpose.xlu0.b32.cont [4/16] %v7722, 128
        %7771 = vxpose.xlu0.b32.cont [5/16] %v7723, 128
        %7772 = vxpose.xlu0.b32.cont [6/16] %v7724, 128
        %7773 = vxpose.xlu0.b32.cont [7/16] %v7725, 128
        %7774 = vxpose.xlu0.b32.cont [8/16] %v7726, 128
        %7775 = vxpose.xlu0.b32.cont [9/16] %v7727, 128
        %7776 = vxpose.xlu0.b32.cont [10/16] %v7728, 128
        %7777 = vxpose.xlu0.b32.cont [11/16] %v7729, 128
        %7778 = vxpose.xlu0.b32.cont [12/16] %v7730, 128
        %7779 = vxpose.xlu0.b32.cont [13/16] %v7731, 128
        %7780 = vxpose.xlu0.b32.cont [14/16] %v7732, 128
        %7781 = vxpose.xlu0.b32.cont [15/16] %v7733, 128
        %7782 = vxpose.xlu0.b32.end [16/16] %v7734, 128
        %v7783 = vpop.trf.xlu0
        %v7784 = vpop.trf.xlu0
        %v7785 = vpop.trf.xlu0
        %v7786 = vpop.trf.xlu0
        %v7787 = vpop.trf.xlu0
        %v7788 = vpop.trf.xlu0
        %v7789 = vpop.trf.xlu0
        %v7790 = vpop.trf.xlu0
        %v7791 = vpop.trf.xlu0
        %v7792 = vpop.trf.xlu0
        %v7793 = vpop.trf.xlu0
        %v7794 = vpop.trf.xlu0
        %v7795 = vpop.trf.xlu0
        %v7796 = vpop.trf.xlu0
        %v7797 = vpop.trf.xlu0
        %v7798 = vpop.trf.xlu0
        %v7801 = vrot.slane %v7783, 4
        %vm7802 = vcmask 1043456
        %v7803 = vsel %vm7802, %v7751, %v7801
        %7805 = vst [vmem:[%s391] sm:$0xff] %v7803
      $region76: #{up_step.1} parent=59 // pred_fallthru
        _
      %p7806 = scmp.lt.s32.totalorder %s26, 1
      %s7807 = scalar_select %p7806, %s26, 1
      %s7808 = smul.addr %s7807, 2
      %s7809 = smul.addr %s7808, 4
      %s7810 = scalar_lea.vmem %s10, %s7809
      // Predicated region
      $region77: #{up_step.1} parent=59 // pred_check
        %p7811 = pneg %p271
      $region78: #{up_step.1} parent=59 // pred_check_branch
        %7813 = sbr.rel (%p7811) target = $region80
      $region79: #{up_step.1} parent=59 // pred_region
        _
      $region80: #{up_step.1} parent=59 // pred_fallthru
        _
    $region60: #{up_step.1} parent=5 // pred_fallthru
      _
    %p7814 = scmp.le.s32.totalorder 2, %s16
    // Predicated region
    $region81: #{up_step.1} parent=5 // pred_check
      %p7815 = pneg %p7814
    $region82: #{up_step.1} parent=5 // pred_check_branch
      %7817 = sbr.rel (%p7815) target = $region84
    $region83: #{up_step.1} parent=5 // pred_region
      %s7818 = ssub.s32 %s16, 2
      // Predicated region
      $region85: #{up_step.1} parent=83 // pred_check
        %p7819 = pneg %p277
      $region86: #{up_step.1} parent=83 // pred_check_branch
        %7821 = sbr.rel (%p7819) target = $region88
      $region87: #{up_step.1} parent=83 // pred_region
        %p7822 = scmp.lt.s32.totalorder %s28, 1
        %s7823 = scalar_select %p7822, %s28, 1
        %s7824 = smul.addr %s7823, 2
        %s7825 = smul.addr %s7824, 4
        %s7826 = scalar_lea.vmem %s10, %s7825
      $region88: #{up_step.1} parent=83 // pred_fallthru
        _
    $region84: #{up_step.1} parent=5 // pred_fallthru
      _
  $region6: #{up_step.1} parent=0 // loop_footer
    %s20 = sadd.s32 1, %s16
  $region7: #{up_step.1} parent=0 // loop_footer_branch
    %15 = sbr.rel target = $region3
  $region8: #{up_step.1} parent=0 // loop_exit
    _

</llo_original>
